<compile_context>
chip_gen: v7x
topology: tpu7x:2x2x1
jax: 0.10.0
libtpu: 0.0.40
codegen_flags: <defaults>
</compile_context>

<pallas_src>
import functools

import jax
import jax.numpy as jnp
from jax.experimental import pallas as pl
from jax.experimental.pallas import tpu as pltpu


def _conv_block_kernel(x_ref, w1_ref, w2_ref, g1_ref, be1_ref, g2_ref, be2_ref,
                       o_ref, xpad_ref, hpad_ref, col1_ref, col2_ref, *, H, W, eps):
    """Fused (conv 3x3 pad=1 -> BN(batch stats) -> ReLU) x 2.

    x_ref:    (N, H, W, C1)        input activations (compute dtype)
    w1_ref:   (9*C1, C2)           stage-1 conv weight, im2col-reshaped
    w2_ref:   (9*C2, C2p)          stage-2 conv weight, Cout zero-padded to C2p
    g1/be1:   (1, C2)   f32        stage-1 BN gamma / beta
    g2/be2:   (1, C2p)  f32        stage-2 BN gamma / beta (pad: gamma=1, beta=0)
    o_ref:    (N*H*W, C2p) f32     lane-dense output slab
    xpad_ref: (N, H+2, W+2, C1)    VMEM scratch: zero-padded stage-1 input
    hpad_ref: (N, H+2, W+2, C2)    VMEM scratch: zero-padded stage-1 output
    col1_ref: (N*H*W, 9*C1)        VMEM scratch: stage-1 im2col slab
    col2_ref: (N*H*W, 9*C2)        VMEM scratch: stage-2 im2col slab
    """
    N = x_ref.shape[0]
    C1 = x_ref.shape[-1]
    C2 = hpad_ref.shape[-1]
    M = N * H * W
    inv_m = 1.0 / M

    def im2col(src_ref, col_ref, cin):
        # 9 shifted taps written into one contiguous (M, 9*cin) slab so the whole
        # 3x3 conv becomes a single MXU matmul (contraction K = 9*cin).
        for dy in range(3):
            for dx in range(3):
                k = (dy * 3 + dx) * cin
                col_ref[:, k:k + cin] = (
                    src_ref[:, dy:dy + H, dx:dx + W, :].reshape(M, cin))

    def batchnorm_relu(conv, gamma, beta):
        # Training-mode BN: biased batch variance, single pass (sum & sum-of-squares).
        s = jnp.sum(conv, axis=0, keepdims=True)
        ss = jnp.sum(conv * conv, axis=0, keepdims=True)
        mean = s * inv_m
        var = ss * inv_m - mean * mean
        scale = jax.lax.rsqrt(var + eps) * gamma            # rsqrt on the EUP, f32
        return jnp.maximum((conv - mean) * scale + beta, 0.0)

    # ---- Stage 1: build pad=1 halo in VMEM, im2col, one matmul, BN, ReLU -------
    xpad_ref[...] = jnp.zeros_like(xpad_ref)
    xpad_ref[:, 1:H + 1, 1:W + 1, :] = x_ref[...]
    im2col(xpad_ref, col1_ref, C1)
    conv1 = jnp.dot(col1_ref[...], w1_ref[...], preferred_element_type=jnp.float32)
    h = batchnorm_relu(conv1, g1_ref[...], be1_ref[...])

    # ---- Stage 2: intermediate stays in VMEM (never touches HBM) ---------------
    hpad_ref[...] = jnp.zeros_like(hpad_ref)
    hpad_ref[:, 1:H + 1, 1:W + 1, :] = h.reshape(N, H, W, C2).astype(hpad_ref.dtype)
    im2col(hpad_ref, col2_ref, C2)
    conv2 = jnp.dot(col2_ref[...], w2_ref[...], preferred_element_type=jnp.float32)
    o_ref[...] = batchnorm_relu(conv2, g2_ref[...], be2_ref[...])   # lane-dense store


def conv_block_forward(params, x_nchw, *, eps=1e-5, compute_dtype=jnp.bfloat16):
    """ConvBlock forward.  Input/output NCHW (PyTorch convention)."""
    N, C1, H, W = x_nchw.shape
    C2 = params["w1"].shape[-1]
    C2p = ((C2 + 127) // 128) * 128          # lane-dense output width (multiple of 128)
    M = N * H * W

    # NCHW -> NHWC; matmul operands in compute_dtype (bf16 by default: 2x MXU rate on
    # v6e/v7x and half the HBM bytes for x/w).  BN parameters stay f32.
    x = jnp.transpose(x_nchw, (0, 2, 3, 1)).astype(compute_dtype)
    # Weights reshaped to im2col layout (row index = (dy*3+dx)*Cin + cin), matching
    # the column order the kernel writes into its col slab.
    w1 = params["w1"].reshape(9 * C1, C2).astype(compute_dtype)
    # Zero-pad stage-2 Cout to C2p: padded MXU output columns are free and make the
    # kernel's final store lane-dense (unmasked vst).
    w2 = jnp.pad(params["w2"],
                 ((0, 0), (0, 0), (0, 0), (0, C2p - C2))
                 ).reshape(9 * C2, C2p).astype(compute_dtype)
    g1, be1 = params["g1"], params["be1"]
    g2 = jnp.pad(params["g2"], ((0, 0), (0, C2p - C2)), constant_values=1.0)
    be2 = jnp.pad(params["be2"], ((0, 0), (0, C2p - C2)))
    # NOTE: conv biases (params["b1"], params["b2"]) are intentionally not passed:
    # a per-channel constant added before training-mode BatchNorm is exactly
    # cancelled by the batch-mean subtraction.

    kernel = functools.partial(_conv_block_kernel, H=H, W=W, eps=eps)

    bpe = jnp.dtype(compute_dtype).itemsize
    cost = pl.CostEstimate(
        flops=2 * M * (9 * C1 * C2 + 9 * C2 * C2p),
        transcendentals=C2 + C2p,
        bytes_accessed=(x.size + w1.size + w2.size) * bpe
                       + (g1.size + be1.size + g2.size + be2.size) * 4
                       + M * C2p * 4)

    out2d = pl.pallas_call(
        kernel,
        out_shape=jax.ShapeDtypeStruct((M, C2p), jnp.float32),
        # TODO(synk): for realistic N/H/W this should become a spatially tiled grid
        # (parallel axis over row-blocks with a 1-row halo, to use v7x's 2nd
        # TensorCore and fit its 64 MiB VMEM) plus a two-phase cross-tile reduction
        # for the BatchNorm batch statistics; at these toy sizes a single fused
        # VMEM-resident block is latency-optimal and a split only adds per-step
        # overhead.
        grid=(1,),
        in_specs=[
            pl.BlockSpec((N, H, W, C1), lambda i: (0, 0, 0, 0)),
            pl.BlockSpec((9 * C1, C2), lambda i: (0, 0)),
            pl.BlockSpec((9 * C2, C2p), lambda i: (0, 0)),
            pl.BlockSpec((1, C2), lambda i: (0, 0)),
            pl.BlockSpec((1, C2), lambda i: (0, 0)),
            pl.BlockSpec((1, C2p), lambda i: (0, 0)),
            pl.BlockSpec((1, C2p), lambda i: (0, 0)),
        ],
        out_specs=pl.BlockSpec((M, C2p), lambda i: (0, 0)),
        scratch_shapes=[
            pltpu.VMEM((N, H + 2, W + 2, C1), compute_dtype),   # stage-1 halo buffer
            pltpu.VMEM((N, H + 2, W + 2, C2), compute_dtype),   # stage-2 halo buffer
            pltpu.VMEM((M, 9 * C1), compute_dtype),             # stage-1 im2col slab
            pltpu.VMEM((M, 9 * C2), compute_dtype),             # stage-2 im2col slab
        ],
        compiler_params=pltpu.CompilerParams(
            dimension_semantics=("arbitrary",),
            # Footprint here is well under 1 MiB; 32 MiB is safe on v5e/v6e/v7x alike.
            vmem_limit_bytes=32 * 1024 * 1024),
        cost_estimate=cost,
    )(x, w1, w2, g1, be1, g2, be2)

    # Un-pad lanes + reshape + NHWC->NCHW: cheap XLA glue outside the kernel.
    y = out2d[:, :C2].reshape(N, H, W, C2)
    return jnp.transpose(y, (0, 3, 1, 2))


def init_conv_block_params(key, in_channels, out_channels):
    """Deterministic synthetic parameters (shapes mirror ConvBlock.__init__)."""
    k1, k2, k3, k4 = jax.random.split(key, 4)
    # PyTorch conv weight is (Cout, Cin, 3, 3); we store HWIO = (3, 3, Cin, Cout).
    w1 = jax.random.normal(k1, (3, 3, in_channels, out_channels), jnp.float32) * 0.1
    b1 = jax.random.normal(k2, (1, out_channels), jnp.float32) * 0.1
    w2 = jax.random.normal(k3, (3, 3, out_channels, out_channels), jnp.float32) * 0.1
    b2 = jax.random.normal(k4, (1, out_channels), jnp.float32) * 0.1
    # BatchNorm2d default init: weight (gamma) = 1, bias (beta) = 0.
    g1 = jnp.ones((1, out_channels), jnp.float32)
    be1 = jnp.zeros((1, out_channels), jnp.float32)
    g2 = jnp.ones((1, out_channels), jnp.float32)
    be2 = jnp.zeros((1, out_channels), jnp.float32)
    return dict(w1=w1, b1=b1, g1=g1, be1=be1, w2=w2, b2=b2, g2=g2, be2=be2)


# ----------------------- pure-JAX f32 reference (for checking) -----------------------
def _ref_stage(x_nhwc, w_hwio, b, gamma, beta, eps=1e-5):
    conv = jax.lax.conv_general_dilated(
        x_nhwc, w_hwio, window_strides=(1, 1), padding="SAME",
        dimension_numbers=("NHWC", "HWIO", "NHWC")) + b[0]
    mean = jnp.mean(conv, axis=(0, 1, 2), keepdims=True)
    var = jnp.mean((conv - mean) ** 2, axis=(0, 1, 2), keepdims=True)
    xhat = (conv - mean) * jax.lax.rsqrt(var + eps)
    return jnp.maximum(xhat * gamma[0] + beta[0], 0.0)


def _ref_forward(params, x_nchw):
    x = jnp.transpose(x_nchw, (0, 2, 3, 1)).astype(jnp.float32)
    h = _ref_stage(x, params["w1"], params["b1"], params["g1"], params["be1"])
    y = _ref_stage(h, params["w2"], params["b2"], params["g2"], params["be2"])
    return jnp.transpose(y, (0, 3, 1, 2))


if __name__ == "__main__":
    key = jax.random.PRNGKey(0)
    kx, kp = jax.random.split(key)

    N, Cin, Cout, H, W = 2, 4, 8, 16, 16
    x = jax.random.normal(kx, (N, Cin, H, W), jnp.float32)   # NCHW, like PyTorch
    params = init_conv_block_params(kp, Cin, Cout)

    ref = jax.block_until_ready(_ref_forward(params, x))

    # f32 compute path: tight check (validates fused conv/BN/ReLU structure, in-kernel
    # halo + im2col handling, bias cancellation, and lane-padding logic).
    out_f32 = jax.block_until_ready(
        conv_block_forward(params, x, compute_dtype=jnp.float32))
    assert out_f32.shape == (N, Cout, H, W), out_f32.shape
    assert jnp.allclose(out_f32, ref, atol=2e-3, rtol=2e-3), \
        float(jnp.max(jnp.abs(out_f32 - ref)))

    # Default bf16 matmul-operand path: looser bound that only covers bf16 operand
    # rounding; BN math stays f32.
    out = jax.block_until_ready(conv_block_forward(params, x))
    assert out.shape == (N, Cout, H, W), out.shape
    assert jnp.allclose(out, ref, atol=5e-2, rtol=5e-2), \
        float(jnp.max(jnp.abs(out - ref)))

    print("KERNEL_OK")
</pallas_src>

<mosaic_0001>
module attributes {stable_mosaic.version = 11 : i64} {
  func.func @_conv_block_kernel(%arg0: i32, %arg1: memref<2x16x16x4xf32, #tpu.memory_space<vmem>>, %arg2: memref<36x8xf32, #tpu.memory_space<vmem>>, %arg3: memref<72x128xf32, #tpu.memory_space<vmem>>, %arg4: memref<1x8xf32, #tpu.memory_space<vmem>>, %arg5: memref<1x8xf32, #tpu.memory_space<vmem>>, %arg6: memref<1x128xf32, #tpu.memory_space<vmem>>, %arg7: memref<1x128xf32, #tpu.memory_space<vmem>>, %arg8: memref<512x128xf32, #tpu.memory_space<vmem>>, %arg9: memref<2x18x18x4xf32, #tpu.memory_space<vmem>>, %arg10: memref<2x18x18x8xf32, #tpu.memory_space<vmem>>, %arg11: memref<512x36xf32, #tpu.memory_space<vmem>>, %arg12: memref<512x72xf32, #tpu.memory_space<vmem>>) attributes {dimension_semantics = [#tpu.dimension_semantics<arbitrary>], iteration_bounds = array<i64: 1>, scalar_prefetch = 0 : i64, scratch_operands = 4 : i64, tpu.core_type = #tpu.core_type<tc>, window_params = [{pipeline_mode = #tpu.pipeline_mode<synchronous>, transform_indices = @transform_0, window_bounds = array<i64: 2, 16, 16, 4>}, {pipeline_mode = #tpu.pipeline_mode<synchronous>, transform_indices = @transform_1, window_bounds = array<i64: 36, 8>}, {pipeline_mode = #tpu.pipeline_mode<synchronous>, transform_indices = @transform_2, window_bounds = array<i64: 72, 128>}, {pipeline_mode = #tpu.pipeline_mode<synchronous>, transform_indices = @transform_3, window_bounds = array<i64: 1, 8>}, {pipeline_mode = #tpu.pipeline_mode<synchronous>, transform_indices = @transform_4, window_bounds = array<i64: 1, 8>}, {pipeline_mode = #tpu.pipeline_mode<synchronous>, transform_indices = @transform_5, window_bounds = array<i64: 1, 128>}, {pipeline_mode = #tpu.pipeline_mode<synchronous>, transform_indices = @transform_6, window_bounds = array<i64: 1, 128>}, {pipeline_mode = #tpu.pipeline_mode<synchronous>, transform_indices = @transform_7, window_bounds = array<i64: 512, 128>}]} {
    %cst = arith.constant 0.000000e+00 : f32
    %0 = vector.broadcast %cst : f32 to vector<2x18x18x4xf32>
    %c0 = arith.constant 0 : index
    %c0_0 = arith.constant 0 : index
    %c0_1 = arith.constant 0 : index
    %c0_2 = arith.constant 0 : index
    %1 = vector.load %arg9[%c0, %c0_0, %c0_1, %c0_2] : memref<2x18x18x4xf32, #tpu.memory_space<vmem>>, vector<2x18x18x4xf32>
    tpu.vector_store %arg9[%c0, %c0_0, %c0_1, %c0_2], %0 {strides = array<i32>} : memref<2x18x18x4xf32, #tpu.memory_space<vmem>>, vector<2x18x18x4xf32>,
    %c0_3 = arith.constant 0 : index
    %c0_4 = arith.constant 0 : index
    %c0_5 = arith.constant 0 : index
    %c0_6 = arith.constant 0 : index
    %2 = vector.load %arg1[%c0_3, %c0_4, %c0_5, %c0_6] : memref<2x16x16x4xf32, #tpu.memory_space<vmem>>, vector<2x16x16x4xf32>
    %c0_7 = arith.constant 0 : index
    %c1 = arith.constant 1 : index
    %c1_8 = arith.constant 1 : index
    %c0_9 = arith.constant 0 : index
    %3 = vector.load %arg9[%c0_7, %c1, %c1_8, %c0_9] : memref<2x18x18x4xf32, #tpu.memory_space<vmem>>, vector<2x16x16x4xf32>
    tpu.vector_store %arg9[%c0_7, %c1, %c1_8, %c0_9], %2 {strides = array<i32>} : memref<2x18x18x4xf32, #tpu.memory_space<vmem>>, vector<2x16x16x4xf32>,
    %c0_10 = arith.constant 0 : index
    %c0_11 = arith.constant 0 : index
    %c0_12 = arith.constant 0 : index
    %c0_13 = arith.constant 0 : index
    %4 = vector.load %arg9[%c0_10, %c0_11, %c0_12, %c0_13] : memref<2x18x18x4xf32, #tpu.memory_space<vmem>>, vector<2x16x16x4xf32>
    %5 = vector.shape_cast %4 : vector<2x16x16x4xf32> to vector<512x4xf32>
    %c0_14 = arith.constant 0 : index
    %c0_15 = arith.constant 0 : index
    %6 = vector.load %arg11[%c0_14, %c0_15] : memref<512x36xf32, #tpu.memory_space<vmem>>, vector<512x4xf32>
    tpu.vector_store %arg11[%c0_14, %c0_15], %5 {strides = array<i32>} : memref<512x36xf32, #tpu.memory_space<vmem>>, vector<512x4xf32>,
    %c0_16 = arith.constant 0 : index
    %c0_17 = arith.constant 0 : index
    %c1_18 = arith.constant 1 : index
    %c0_19 = arith.constant 0 : index
    %7 = vector.load %arg9[%c0_16, %c0_17, %c1_18, %c0_19] : memref<2x18x18x4xf32, #tpu.memory_space<vmem>>, vector<2x16x16x4xf32>
    %8 = vector.shape_cast %7 : vector<2x16x16x4xf32> to vector<512x4xf32>
    %c0_20 = arith.constant 0 : index
    %c4 = arith.constant 4 : index
    %9 = vector.load %arg11[%c0_20, %c4] : memref<512x36xf32, #tpu.memory_space<vmem>>, vector<512x4xf32>
    tpu.vector_store %arg11[%c0_20, %c4], %8 {strides = array<i32>} : memref<512x36xf32, #tpu.memory_space<vmem>>, vector<512x4xf32>,
    %c0_21 = arith.constant 0 : index
    %c0_22 = arith.constant 0 : index
    %c2 = arith.constant 2 : index
    %c0_23 = arith.constant 0 : index
    %10 = vector.load %arg9[%c0_21, %c0_22, %c2, %c0_23] : memref<2x18x18x4xf32, #tpu.memory_space<vmem>>, vector<2x16x16x4xf32>
    %11 = vector.shape_cast %10 : vector<2x16x16x4xf32> to vector<512x4xf32>
    %c0_24 = arith.constant 0 : index
    %c8 = arith.constant 8 : index
    %12 = vector.load %arg11[%c0_24, %c8] : memref<512x36xf32, #tpu.memory_space<vmem>>, vector<512x4xf32>
    tpu.vector_store %arg11[%c0_24, %c8], %11 {strides = array<i32>} : memref<512x36xf32, #tpu.memory_space<vmem>>, vector<512x4xf32>,
    %c0_25 = arith.constant 0 : index
    %c1_26 = arith.constant 1 : index
    %c0_27 = arith.constant 0 : index
    %c0_28 = arith.constant 0 : index
    %13 = vector.load %arg9[%c0_25, %c1_26, %c0_27, %c0_28] : memref<2x18x18x4xf32, #tpu.memory_space<vmem>>, vector<2x16x16x4xf32>
    %14 = vector.shape_cast %13 : vector<2x16x16x4xf32> to vector<512x4xf32>
    %c0_29 = arith.constant 0 : index
    %c12 = arith.constant 12 : index
    %15 = vector.load %arg11[%c0_29, %c12] : memref<512x36xf32, #tpu.memory_space<vmem>>, vector<512x4xf32>
    tpu.vector_store %arg11[%c0_29, %c12], %14 {strides = array<i32>} : memref<512x36xf32, #tpu.memory_space<vmem>>, vector<512x4xf32>,
    %c0_30 = arith.constant 0 : index
    %c1_31 = arith.constant 1 : index
    %c1_32 = arith.constant 1 : index
    %c0_33 = arith.constant 0 : index
    %16 = vector.load %arg9[%c0_30, %c1_31, %c1_32, %c0_33] : memref<2x18x18x4xf32, #tpu.memory_space<vmem>>, vector<2x16x16x4xf32>
    %17 = vector.shape_cast %16 : vector<2x16x16x4xf32> to vector<512x4xf32>
    %c0_34 = arith.constant 0 : index
    %c16 = arith.constant 16 : index
    %18 = vector.load %arg11[%c0_34, %c16] : memref<512x36xf32, #tpu.memory_space<vmem>>, vector<512x4xf32>
    tpu.vector_store %arg11[%c0_34, %c16], %17 {strides = array<i32>} : memref<512x36xf32, #tpu.memory_space<vmem>>, vector<512x4xf32>,
    %c0_35 = arith.constant 0 : index
    %c1_36 = arith.constant 1 : index
    %c2_37 = arith.constant 2 : index
    %c0_38 = arith.constant 0 : index
    %19 = vector.load %arg9[%c0_35, %c1_36, %c2_37, %c0_38] : memref<2x18x18x4xf32, #tpu.memory_space<vmem>>, vector<2x16x16x4xf32>
    %20 = vector.shape_cast %19 : vector<2x16x16x4xf32> to vector<512x4xf32>
    %c0_39 = arith.constant 0 : index
    %c20 = arith.constant 20 : index
    %21 = vector.load %arg11[%c0_39, %c20] : memref<512x36xf32, #tpu.memory_space<vmem>>, vector<512x4xf32>
    tpu.vector_store %arg11[%c0_39, %c20], %20 {strides = array<i32>} : memref<512x36xf32, #tpu.memory_space<vmem>>, vector<512x4xf32>,
    %c0_40 = arith.constant 0 : index
    %c2_41 = arith.constant 2 : index
    %c0_42 = arith.constant 0 : index
    %c0_43 = arith.constant 0 : index
    %22 = vector.load %arg9[%c0_40, %c2_41, %c0_42, %c0_43] : memref<2x18x18x4xf32, #tpu.memory_space<vmem>>, vector<2x16x16x4xf32>
    %23 = vector.shape_cast %22 : vector<2x16x16x4xf32> to vector<512x4xf32>
    %c0_44 = arith.constant 0 : index
    %c24 = arith.constant 24 : index
    %24 = vector.load %arg11[%c0_44, %c24] : memref<512x36xf32, #tpu.memory_space<vmem>>, vector<512x4xf32>
    tpu.vector_store %arg11[%c0_44, %c24], %23 {strides = array<i32>} : memref<512x36xf32, #tpu.memory_space<vmem>>, vector<512x4xf32>,
    %c0_45 = arith.constant 0 : index
    %c2_46 = arith.constant 2 : index
    %c1_47 = arith.constant 1 : index
    %c0_48 = arith.constant 0 : index
    %25 = vector.load %arg9[%c0_45, %c2_46, %c1_47, %c0_48] : memref<2x18x18x4xf32, #tpu.memory_space<vmem>>, vector<2x16x16x4xf32>
    %26 = vector.shape_cast %25 : vector<2x16x16x4xf32> to vector<512x4xf32>
    %c0_49 = arith.constant 0 : index
    %c28 = arith.constant 28 : index
    %27 = vector.load %arg11[%c0_49, %c28] : memref<512x36xf32, #tpu.memory_space<vmem>>, vector<512x4xf32>
    tpu.vector_store %arg11[%c0_49, %c28], %26 {strides = array<i32>} : memref<512x36xf32, #tpu.memory_space<vmem>>, vector<512x4xf32>,
    %c0_50 = arith.constant 0 : index
    %c2_51 = arith.constant 2 : index
    %c2_52 = arith.constant 2 : index
    %c0_53 = arith.constant 0 : index
    %28 = vector.load %arg9[%c0_50, %c2_51, %c2_52, %c0_53] : memref<2x18x18x4xf32, #tpu.memory_space<vmem>>, vector<2x16x16x4xf32>
    %29 = vector.shape_cast %28 : vector<2x16x16x4xf32> to vector<512x4xf32>
    %c0_54 = arith.constant 0 : index
    %c32 = arith.constant 32 : index
    %30 = vector.load %arg11[%c0_54, %c32] : memref<512x36xf32, #tpu.memory_space<vmem>>, vector<512x4xf32>
    tpu.vector_store %arg11[%c0_54, %c32], %29 {strides = array<i32>} : memref<512x36xf32, #tpu.memory_space<vmem>>, vector<512x4xf32>,
    %c0_55 = arith.constant 0 : index
    %c0_56 = arith.constant 0 : index
    %31 = vector.load %arg11[%c0_55, %c0_56] : memref<512x36xf32, #tpu.memory_space<vmem>>, vector<512x36xf32>
    %c0_57 = arith.constant 0 : index
    %c0_58 = arith.constant 0 : index
    %32 = vector.load %arg2[%c0_57, %c0_58] : memref<36x8xf32, #tpu.memory_space<vmem>>, vector<36x8xf32>
    %cst_59 = arith.constant dense<0.000000e+00> : vector<512x8xf32>
    %33 = tpu.matmul %31, %32, %cst_59 {dimension_numbers = #tpu.dot_dimension_numbers<[1], [0], [0], [1], [0, 0, 1, 1], [], []>} : vector<512x36xf32>, vector<36x8xf32>, vector<512x8xf32> -> vector<512x8xf32>
    %c0_60 = arith.constant 0 : index
    %c0_61 = arith.constant 0 : index
    %34 = vector.load %arg4[%c0_60, %c0_61] : memref<1x8xf32, #tpu.memory_space<vmem>>, vector<1x8xf32>
    %c0_62 = arith.constant 0 : index
    %c0_63 = arith.constant 0 : index
    %35 = vector.load %arg5[%c0_62, %c0_63] : memref<1x8xf32, #tpu.memory_space<vmem>>, vector<1x8xf32>
    %cst_64 = arith.constant dense<0.000000e+00> : vector<8xf32>
    %36 = vector.multi_reduction <add>, %33, %cst_64 [0] : vector<512x8xf32> to vector<8xf32>
    %37 = vector.shape_cast %36 : vector<8xf32> to vector<1x8xf32>
    %38 = arith.mulf %33, %33 : vector<512x8xf32>
    %cst_65 = arith.constant dense<0.000000e+00> : vector<8xf32>
    %39 = vector.multi_reduction <add>, %38, %cst_65 [0] : vector<512x8xf32> to vector<8xf32>
    %40 = vector.shape_cast %39 : vector<8xf32> to vector<1x8xf32>
    %cst_66 = arith.constant 0.001953125 : f32
    %41 = vector.broadcast %cst_66 : f32 to vector<1x8xf32>
    %42 = arith.mulf %37, %41 : vector<1x8xf32>
    %cst_67 = arith.constant 0.001953125 : f32
    %43 = vector.broadcast %cst_67 : f32 to vector<1x8xf32>
    %44 = arith.mulf %40, %43 : vector<1x8xf32>
    %45 = arith.mulf %42, %42 : vector<1x8xf32>
    %46 = arith.subf %44, %45 : vector<1x8xf32>
    %cst_68 = arith.constant 9.99999974E-6 : f32
    %47 = vector.broadcast %cst_68 : f32 to vector<1x8xf32>
    %48 = arith.addf %46, %47 : vector<1x8xf32>
    %49 = math.rsqrt %48 : vector<1x8xf32>
    %50 = arith.mulf %49, %34 : vector<1x8xf32>
    %51 = vector.broadcast %42 : vector<1x8xf32> to vector<512x8xf32>
    %52 = arith.subf %33, %51 : vector<512x8xf32>
    %53 = vector.broadcast %50 : vector<1x8xf32> to vector<512x8xf32>
    %54 = arith.mulf %52, %53 : vector<512x8xf32>
    %55 = vector.broadcast %35 : vector<1x8xf32> to vector<512x8xf32>
    %56 = arith.addf %54, %55 : vector<512x8xf32>
    %cst_69 = arith.constant 0.000000e+00 : f32
    %57 = vector.broadcast %cst_69 : f32 to vector<512x8xf32>
    %58 = arith.maximumf %56, %57 : vector<512x8xf32>
    %cst_70 = arith.constant 0.000000e+00 : f32
    %59 = vector.broadcast %cst_70 : f32 to vector<2x18x18x8xf32>
    %c0_71 = arith.constant 0 : index
    %c0_72 = arith.constant 0 : index
    %c0_73 = arith.constant 0 : index
    %c0_74 = arith.constant 0 : index
    %60 = vector.load %arg10[%c0_71, %c0_72, %c0_73, %c0_74] : memref<2x18x18x8xf32, #tpu.memory_space<vmem>>, vector<2x18x18x8xf32>
    tpu.vector_store %arg10[%c0_71, %c0_72, %c0_73, %c0_74], %59 {strides = array<i32>} : memref<2x18x18x8xf32, #tpu.memory_space<vmem>>, vector<2x18x18x8xf32>,
    %61 = vector.shape_cast %58 : vector<512x8xf32> to vector<2x16x16x8xf32>
    %c0_75 = arith.constant 0 : index
    %c1_76 = arith.constant 1 : index
    %c1_77 = arith.constant 1 : index
    %c0_78 = arith.constant 0 : index
    %62 = vector.load %arg10[%c0_75, %c1_76, %c1_77, %c0_78] : memref<2x18x18x8xf32, #tpu.memory_space<vmem>>, vector<2x16x16x8xf32>
    tpu.vector_store %arg10[%c0_75, %c1_76, %c1_77, %c0_78], %61 {strides = array<i32>} : memref<2x18x18x8xf32, #tpu.memory_space<vmem>>, vector<2x16x16x8xf32>,
    %c0_79 = arith.constant 0 : index
    %c0_80 = arith.constant 0 : index
    %c0_81 = arith.constant 0 : index
    %c0_82 = arith.constant 0 : index
    %63 = vector.load %arg10[%c0_79, %c0_80, %c0_81, %c0_82] : memref<2x18x18x8xf32, #tpu.memory_space<vmem>>, vector<2x16x16x8xf32>
    %64 = vector.shape_cast %63 : vector<2x16x16x8xf32> to vector<512x8xf32>
    %c0_83 = arith.constant 0 : index
    %c0_84 = arith.constant 0 : index
    %65 = vector.load %arg12[%c0_83, %c0_84] : memref<512x72xf32, #tpu.memory_space<vmem>>, vector<512x8xf32>
    tpu.vector_store %arg12[%c0_83, %c0_84], %64 {strides = array<i32>} : memref<512x72xf32, #tpu.memory_space<vmem>>, vector<512x8xf32>,
    %c0_85 = arith.constant 0 : index
    %c0_86 = arith.constant 0 : index
    %c1_87 = arith.constant 1 : index
    %c0_88 = arith.constant 0 : index
    %66 = vector.load %arg10[%c0_85, %c0_86, %c1_87, %c0_88] : memref<2x18x18x8xf32, #tpu.memory_space<vmem>>, vector<2x16x16x8xf32>
    %67 = vector.shape_cast %66 : vector<2x16x16x8xf32> to vector<512x8xf32>
    %c0_89 = arith.constant 0 : index
    %c8_90 = arith.constant 8 : index
    %68 = vector.load %arg12[%c0_89, %c8_90] : memref<512x72xf32, #tpu.memory_space<vmem>>, vector<512x8xf32>
    tpu.vector_store %arg12[%c0_89, %c8_90], %67 {strides = array<i32>} : memref<512x72xf32, #tpu.memory_space<vmem>>, vector<512x8xf32>,
    %c0_91 = arith.constant 0 : index
    %c0_92 = arith.constant 0 : index
    %c2_93 = arith.constant 2 : index
    %c0_94 = arith.constant 0 : index
    %69 = vector.load %arg10[%c0_91, %c0_92, %c2_93, %c0_94] : memref<2x18x18x8xf32, #tpu.memory_space<vmem>>, vector<2x16x16x8xf32>
    %70 = vector.shape_cast %69 : vector<2x16x16x8xf32> to vector<512x8xf32>
    %c0_95 = arith.constant 0 : index
    %c16_96 = arith.constant 16 : index
    %71 = vector.load %arg12[%c0_95, %c16_96] : memref<512x72xf32, #tpu.memory_space<vmem>>, vector<512x8xf32>
    tpu.vector_store %arg12[%c0_95, %c16_96], %70 {strides = array<i32>} : memref<512x72xf32, #tpu.memory_space<vmem>>, vector<512x8xf32>,
    %c0_97 = arith.constant 0 : index
    %c1_98 = arith.constant 1 : index
    %c0_99 = arith.constant 0 : index
    %c0_100 = arith.constant 0 : index
    %72 = vector.load %arg10[%c0_97, %c1_98, %c0_99, %c0_100] : memref<2x18x18x8xf32, #tpu.memory_space<vmem>>, vector<2x16x16x8xf32>
    %73 = vector.shape_cast %72 : vector<2x16x16x8xf32> to vector<512x8xf32>
    %c0_101 = arith.constant 0 : index
    %c24_102 = arith.constant 24 : index
    %74 = vector.load %arg12[%c0_101, %c24_102] : memref<512x72xf32, #tpu.memory_space<vmem>>, vector<512x8xf32>
    tpu.vector_store %arg12[%c0_101, %c24_102], %73 {strides = array<i32>} : memref<512x72xf32, #tpu.memory_space<vmem>>, vector<512x8xf32>,
    %c0_103 = arith.constant 0 : index
    %c1_104 = arith.constant 1 : index
    %c1_105 = arith.constant 1 : index
    %c0_106 = arith.constant 0 : index
    %75 = vector.load %arg10[%c0_103, %c1_104, %c1_105, %c0_106] : memref<2x18x18x8xf32, #tpu.memory_space<vmem>>, vector<2x16x16x8xf32>
    %76 = vector.shape_cast %75 : vector<2x16x16x8xf32> to vector<512x8xf32>
    %c0_107 = arith.constant 0 : index
    %c32_108 = arith.constant 32 : index
    %77 = vector.load %arg12[%c0_107, %c32_108] : memref<512x72xf32, #tpu.memory_space<vmem>>, vector<512x8xf32>
    tpu.vector_store %arg12[%c0_107, %c32_108], %76 {strides = array<i32>} : memref<512x72xf32, #tpu.memory_space<vmem>>, vector<512x8xf32>,
    %c0_109 = arith.constant 0 : index
    %c1_110 = arith.constant 1 : index
    %c2_111 = arith.constant 2 : index
    %c0_112 = arith.constant 0 : index
    %78 = vector.load %arg10[%c0_109, %c1_110, %c2_111, %c0_112] : memref<2x18x18x8xf32, #tpu.memory_space<vmem>>, vector<2x16x16x8xf32>
    %79 = vector.shape_cast %78 : vector<2x16x16x8xf32> to vector<512x8xf32>
    %c0_113 = arith.constant 0 : index
    %c40 = arith.constant 40 : index
    %80 = vector.load %arg12[%c0_113, %c40] : memref<512x72xf32, #tpu.memory_space<vmem>>, vector<512x8xf32>
    tpu.vector_store %arg12[%c0_113, %c40], %79 {strides = array<i32>} : memref<512x72xf32, #tpu.memory_space<vmem>>, vector<512x8xf32>,
    %c0_114 = arith.constant 0 : index
    %c2_115 = arith.constant 2 : index
    %c0_116 = arith.constant 0 : index
    %c0_117 = arith.constant 0 : index
    %81 = vector.load %arg10[%c0_114, %c2_115, %c0_116, %c0_117] : memref<2x18x18x8xf32, #tpu.memory_space<vmem>>, vector<2x16x16x8xf32>
    %82 = vector.shape_cast %81 : vector<2x16x16x8xf32> to vector<512x8xf32>
    %c0_118 = arith.constant 0 : index
    %c48 = arith.constant 48 : index
    %83 = vector.load %arg12[%c0_118, %c48] : memref<512x72xf32, #tpu.memory_space<vmem>>, vector<512x8xf32>
    tpu.vector_store %arg12[%c0_118, %c48], %82 {strides = array<i32>} : memref<512x72xf32, #tpu.memory_space<vmem>>, vector<512x8xf32>,
    %c0_119 = arith.constant 0 : index
    %c2_120 = arith.constant 2 : index
    %c1_121 = arith.constant 1 : index
    %c0_122 = arith.constant 0 : index
    %84 = vector.load %arg10[%c0_119, %c2_120, %c1_121, %c0_122] : memref<2x18x18x8xf32, #tpu.memory_space<vmem>>, vector<2x16x16x8xf32>
    %85 = vector.shape_cast %84 : vector<2x16x16x8xf32> to vector<512x8xf32>
    %c0_123 = arith.constant 0 : index
    %c56 = arith.constant 56 : index
    %86 = vector.load %arg12[%c0_123, %c56] : memref<512x72xf32, #tpu.memory_space<vmem>>, vector<512x8xf32>
    tpu.vector_store %arg12[%c0_123, %c56], %85 {strides = array<i32>} : memref<512x72xf32, #tpu.memory_space<vmem>>, vector<512x8xf32>,
    %c0_124 = arith.constant 0 : index
    %c2_125 = arith.constant 2 : index
    %c2_126 = arith.constant 2 : index
    %c0_127 = arith.constant 0 : index
    %87 = vector.load %arg10[%c0_124, %c2_125, %c2_126, %c0_127] : memref<2x18x18x8xf32, #tpu.memory_space<vmem>>, vector<2x16x16x8xf32>
    %88 = vector.shape_cast %87 : vector<2x16x16x8xf32> to vector<512x8xf32>
    %c0_128 = arith.constant 0 : index
    %c64 = arith.constant 64 : index
    %89 = vector.load %arg12[%c0_128, %c64] : memref<512x72xf32, #tpu.memory_space<vmem>>, vector<512x8xf32>
    tpu.vector_store %arg12[%c0_128, %c64], %88 {strides = array<i32>} : memref<512x72xf32, #tpu.memory_space<vmem>>, vector<512x8xf32>,
    %c0_129 = arith.constant 0 : index
    %c0_130 = arith.constant 0 : index
    %90 = vector.load %arg12[%c0_129, %c0_130] : memref<512x72xf32, #tpu.memory_space<vmem>>, vector<512x72xf32>
    %c0_131 = arith.constant 0 : index
    %c0_132 = arith.constant 0 : index
    %91 = vector.load %arg3[%c0_131, %c0_132] : memref<72x128xf32, #tpu.memory_space<vmem>>, vector<72x128xf32>
    %cst_133 = arith.constant dense<0.000000e+00> : vector<512x128xf32>
    %92 = tpu.matmul %90, %91, %cst_133 {dimension_numbers = #tpu.dot_dimension_numbers<[1], [0], [0], [1], [0, 0, 1, 1], [], []>} : vector<512x72xf32>, vector<72x128xf32>, vector<512x128xf32> -> vector<512x128xf32>
    %c0_134 = arith.constant 0 : index
    %c0_135 = arith.constant 0 : index
    %93 = vector.load %arg6[%c0_134, %c0_135] : memref<1x128xf32, #tpu.memory_space<vmem>>, vector<1x128xf32>
    %c0_136 = arith.constant 0 : index
    %c0_137 = arith.constant 0 : index
    %94 = vector.load %arg7[%c0_136, %c0_137] : memref<1x128xf32, #tpu.memory_space<vmem>>, vector<1x128xf32>
    %cst_138 = arith.constant dense<0.000000e+00> : vector<128xf32>
    %95 = vector.multi_reduction <add>, %92, %cst_138 [0] : vector<512x128xf32> to vector<128xf32>
    %96 = vector.shape_cast %95 : vector<128xf32> to vector<1x128xf32>
    %97 = arith.mulf %92, %92 : vector<512x128xf32>
    %cst_139 = arith.constant dense<0.000000e+00> : vector<128xf32>
    %98 = vector.multi_reduction <add>, %97, %cst_139 [0] : vector<512x128xf32> to vector<128xf32>
    %99 = vector.shape_cast %98 : vector<128xf32> to vector<1x128xf32>
    %cst_140 = arith.constant 0.001953125 : f32
    %100 = vector.broadcast %cst_140 : f32 to vector<1x128xf32>
    %101 = arith.mulf %96, %100 : vector<1x128xf32>
    %cst_141 = arith.constant 0.001953125 : f32
    %102 = vector.broadcast %cst_141 : f32 to vector<1x128xf32>
    %103 = arith.mulf %99, %102 : vector<1x128xf32>
    %104 = arith.mulf %101, %101 : vector<1x128xf32>
    %105 = arith.subf %103, %104 : vector<1x128xf32>
    %cst_142 = arith.constant 9.99999974E-6 : f32
    %106 = vector.broadcast %cst_142 : f32 to vector<1x128xf32>
    %107 = arith.addf %105, %106 : vector<1x128xf32>
    %108 = math.rsqrt %107 : vector<1x128xf32>
    %109 = arith.mulf %108, %93 : vector<1x128xf32>
    %110 = vector.broadcast %101 : vector<1x128xf32> to vector<512x128xf32>
    %111 = arith.subf %92, %110 : vector<512x128xf32>
    %112 = vector.broadcast %109 : vector<1x128xf32> to vector<512x128xf32>
    %113 = arith.mulf %111, %112 : vector<512x128xf32>
    %114 = vector.broadcast %94 : vector<1x128xf32> to vector<512x128xf32>
    %115 = arith.addf %113, %114 : vector<512x128xf32>
    %cst_143 = arith.constant 0.000000e+00 : f32
    %116 = vector.broadcast %cst_143 : f32 to vector<512x128xf32>
    %117 = arith.maximumf %115, %116 : vector<512x128xf32>
    %c0_144 = arith.constant 0 : index
    %c0_145 = arith.constant 0 : index
    %118 = vector.load %arg8[%c0_144, %c0_145] : memref<512x128xf32, #tpu.memory_space<vmem>>, vector<512x128xf32>
    tpu.vector_store %arg8[%c0_144, %c0_145], %117 {strides = array<i32>} : memref<512x128xf32, #tpu.memory_space<vmem>>, vector<512x128xf32>,
    return
  }
  func.func @transform_0(%arg0: i32) -> (i32, i32, i32, i32) {
    %c0_i32 = arith.constant 0 : i32
    %c0_i32_0 = arith.constant 0 : i32
    %c0_i32_1 = arith.constant 0 : i32
    %c0_i32_2 = arith.constant 0 : i32
    %c0_i32_3 = arith.constant 0 : i32
    return %c0_i32, %c0_i32_0, %c0_i32_1, %c0_i32_2 : i32, i32, i32, i32
  }
  func.func @transform_1(%arg0: i32) -> (i32, i32) {
    %c0_i32 = arith.constant 0 : i32
    %c0_i32_0 = arith.constant 0 : i32
    %c0_i32_1 = arith.constant 0 : i32
    return %c0_i32, %c0_i32_0 : i32, i32
  }
  func.func @transform_2(%arg0: i32) -> (i32, i32) {
    %c0_i32 = arith.constant 0 : i32
    %c0_i32_0 = arith.constant 0 : i32
    %c0_i32_1 = arith.constant 0 : i32
    return %c0_i32, %c0_i32_0 : i32, i32
  }
  func.func @transform_3(%arg0: i32) -> (i32, i32) {
    %c0_i32 = arith.constant 0 : i32
    %c0_i32_0 = arith.constant 0 : i32
    %c0_i32_1 = arith.constant 0 : i32
    return %c0_i32, %c0_i32_0 : i32, i32
  }
  func.func @transform_4(%arg0: i32) -> (i32, i32) {
    %c0_i32 = arith.constant 0 : i32
    %c0_i32_0 = arith.constant 0 : i32
    %c0_i32_1 = arith.constant 0 : i32
    return %c0_i32, %c0_i32_0 : i32, i32
  }
  func.func @transform_5(%arg0: i32) -> (i32, i32) {
    %c0_i32 = arith.constant 0 : i32
    %c0_i32_0 = arith.constant 0 : i32
    %c0_i32_1 = arith.constant 0 : i32
    return %c0_i32, %c0_i32_0 : i32, i32
  }
  func.func @transform_6(%arg0: i32) -> (i32, i32) {
    %c0_i32 = arith.constant 0 : i32
    %c0_i32_0 = arith.constant 0 : i32
    %c0_i32_1 = arith.constant 0 : i32
    return %c0_i32, %c0_i32_0 : i32, i32
  }
  func.func @transform_7(%arg0: i32) -> (i32, i32) {
    %c0_i32 = arith.constant 0 : i32
    %c0_i32_0 = arith.constant 0 : i32
    %c0_i32_1 = arith.constant 0 : i32
    return %c0_i32, %c0_i32_0 : i32, i32
  }
}

</mosaic_0001>

<llo_original>
// kernel: tpu_custom_call.1
$region0: #{tpu_custom_call.1}
  #allocation0 [shape = 'u32[]', space=smem, size = 0x4, offset = 0x4, fixed_abs, tag = 'smem constant byte address 0x4 - core index']
  #allocation1 [shape = 'u32[144,128]{1,0:T(1,128)}', space=vmem, size = 0x12000, scoped, tag = 'internal scratch']
  #allocation2 [shape = 'f32[2,18,18,4]{3,2,1,0:T(8,128)}', space=vmem, size = 0x6c000, scoped, tag = 'scratch operand']
  #allocation3 [shape = 'f32[2,18,18,8]{3,2,1,0:T(8,128)}', space=vmem, size = 0x6c000, scoped, tag = 'scratch operand']
  #allocation4 [shape = 'f32[512,36]{1,0:T(8,128)}', space=vmem, size = 0x40000, scoped, tag = 'scratch operand']
  #allocation5 [shape = 'f32[512,72]{1,0:T(8,128)}', space=vmem, size = 0x40000, scoped, tag = 'scratch operand']
  %s0 = inlined_call_operand.vmem [shape: f32[2,16,16,4], index: 0, kind: input, shape index: {}]
  %s1 = inlined_call_operand.vmem [shape: f32[36,8], index: 1, kind: input, shape index: {}]
  %s2 = inlined_call_operand.vmem [shape: f32[72,128], index: 2, kind: input, shape index: {}]
  %s3 = inlined_call_operand.vmem [shape: f32[1,8], index: 3, kind: input, shape index: {}]
  %s4 = inlined_call_operand.vmem [shape: f32[1,8], index: 4, kind: input, shape index: {}]
  %s5 = inlined_call_operand.vmem [shape: f32[1,128], index: 5, kind: input, shape index: {}]
  %s6 = inlined_call_operand.vmem [shape: f32[1,128], index: 6, kind: input, shape index: {}]
  %s7 = inlined_call_operand.hbm [shape: f32[512,128], index: 7, kind: output, shape index: {}]
  %s8 = sld [smem:[#allocation0]]
  $region38: #{tpu_custom_call.1} parent=0
    _
  %s10 = ssub.s32 1, %s8
  %s11 = scalar_select 0, %s10, %s8
  $region1: #{tpu_custom_call.1} parent=0
    #allocation6 [shape = 'u8[262144]{0}', space=vmem, size = 0x40000, scoped, tag = 'output window, operand 0, single buffered']
    #allocation7 [shape = 's32[1]{0}', space=sflag, size = 0x4, scoped, tag = 'scoped memory for tpu_custom_call.1']
    %12 = vsyncpa [#allocation7], 0
    // Predicated region
    $region2: #{tpu_custom_call.1} parent=1 // pred_check
      _
    $region3: #{tpu_custom_call.1} parent=1 // pred_check_branch
      %14 = sbr.rel (0) target = $region5
    $region4: #{tpu_custom_call.1} parent=1 // pred_region
      _
    $region5: #{tpu_custom_call.1} parent=1 // pred_fallthru
      _
    // Predicated region
    $region6: #{tpu_custom_call.1} parent=1 // pred_check
      _
    $region7: #{tpu_custom_call.1} parent=1 // pred_check_branch
      %16 = sbr.rel (0) target = $region9
    $region8: #{tpu_custom_call.1} parent=1 // pred_region
      _
    $region9: #{tpu_custom_call.1} parent=1 // pred_fallthru
      _
    // Predicated region
    $region10: #{tpu_custom_call.1} parent=1 // pred_check
      _
    $region11: #{tpu_custom_call.1} parent=1 // pred_check_branch
      %18 = sbr.rel (0) target = $region13
    $region12: #{tpu_custom_call.1} parent=1 // pred_region
      _
    $region13: #{tpu_custom_call.1} parent=1 // pred_fallthru
      _
    // Predicated region
    $region14: #{tpu_custom_call.1} parent=1 // pred_check
      _
    $region15: #{tpu_custom_call.1} parent=1 // pred_check_branch
      %20 = sbr.rel (0) target = $region17
    $region16: #{tpu_custom_call.1} parent=1 // pred_region
      _
    $region17: #{tpu_custom_call.1} parent=1 // pred_fallthru
      _
    // Predicated region
    $region18: #{tpu_custom_call.1} parent=1 // pred_check
      _
    $region19: #{tpu_custom_call.1} parent=1 // pred_check_branch
      %22 = sbr.rel (0) target = $region21
    $region20: #{tpu_custom_call.1} parent=1 // pred_region
      _
    $region21: #{tpu_custom_call.1} parent=1 // pred_fallthru
      _
    // Predicated region
    $region22: #{tpu_custom_call.1} parent=1 // pred_check
      _
    $region23: #{tpu_custom_call.1} parent=1 // pred_check_branch
      %24 = sbr.rel (0) target = $region25
    $region24: #{tpu_custom_call.1} parent=1 // pred_region
      _
    $region25: #{tpu_custom_call.1} parent=1 // pred_fallthru
      _
    // Predicated region
    $region26: #{tpu_custom_call.1} parent=1 // pred_check
      _
    $region27: #{tpu_custom_call.1} parent=1 // pred_check_branch
      %26 = sbr.rel (0) target = $region29
    $region28: #{tpu_custom_call.1} parent=1 // pred_region
      _
    $region29: #{tpu_custom_call.1} parent=1 // pred_fallthru
      _
    %vm27 = vcmask 31744
    %28 = vst.msk [vmem:[#allocation2] sm:$0xff] %vm27, 0.0
    %29 = vst.msk [vmem:[#allocation2 + $0x8] sm:$0xff] %vm27, 0.0
    %vm30 = vcmask 25600
    %31 = vst.msk [vmem:[#allocation2 + $0x10] sm:$0x3] %vm30, 0.0
    %32 = vst.msk [vmem:[#allocation2 + $0x18] sm:$0xff] %vm27, 0.0
    %33 = vst.msk [vmem:[#allocation2 + $0x20] sm:$0xff] %vm27, 0.0
    %34 = vst.msk [vmem:[#allocation2 + $0x28] sm:$0x3] %vm30, 0.0
    %35 = vst.msk [vmem:[#allocation2 + $0x30] sm:$0xff] %vm27, 0.0
    %36 = vst.msk [vmem:[#allocation2 + $0x38] sm:$0xff] %vm27, 0.0
    %37 = vst.msk [vmem:[#allocation2 + $0x40] sm:$0x3] %vm30, 0.0
    %38 = vst.msk [vmem:[#allocation2 + $0x48] sm:$0xff] %vm27, 0.0
    %39 = vst.msk [vmem:[#allocation2 + $0x50] sm:$0xff] %vm27, 0.0
    %40 = vst.msk [vmem:[#allocation2 + $0x58] sm:$0x3] %vm30, 0.0
    %41 = vst.msk [vmem:[#allocation2 + $0x60] sm:$0xff] %vm27, 0.0
    %42 = vst.msk [vmem:[#allocation2 + $0x68] sm:$0xff] %vm27, 0.0
    %43 = vst.msk [vmem:[#allocation2 + $0x70] sm:$0x3] %vm30, 0.0
    %44 = vst.msk [vmem:[#allocation2 + $0x78] sm:$0xff] %vm27, 0.0
    %45 = vst.msk [vmem:[#allocation2 + $0x80] sm:$0xff] %vm27, 0.0
    %46 = vst.msk [vmem:[#allocation2 + $0x88] sm:$0x3] %vm30, 0.0
    %47 = vst.msk [vmem:[#allocation2 + $0x90] sm:$0xff] %vm27, 0.0
    %48 = vst.msk [vmem:[#allocation2 + $0x98] sm:$0xff] %vm27, 0.0
    %49 = vst.msk [vmem:[#allocation2 + $0xa0] sm:$0x3] %vm30, 0.0
    %50 = vst.msk [vmem:[#allocation2 + $0xa8] sm:$0xff] %vm27, 0.0
    %51 = vst.msk [vmem:[#allocation2 + $0xb0] sm:$0xff] %vm27, 0.0
    %52 = vst.msk [vmem:[#allocation2 + $0xb8] sm:$0x3] %vm30, 0.0
    %53 = vst.msk [vmem:[#allocation2 + $0xc0] sm:$0xff] %vm27, 0.0
    %54 = vst.msk [vmem:[#allocation2 + $0xc8] sm:$0xff] %vm27, 0.0
    %55 = vst.msk [vmem:[#allocation2 + $0xd0] sm:$0x3] %vm30, 0.0
    %56 = vst.msk [vmem:[#allocation2 + $0xd8] sm:$0xff] %vm27, 0.0
    %57 = vst.msk [vmem:[#allocation2 + $0xe0] sm:$0xff] %vm27, 0.0
    %58 = vst.msk [vmem:[#allocation2 + $0xe8] sm:$0x3] %vm30, 0.0
    %59 = vst.msk [vmem:[#allocation2 + $0xf0] sm:$0xff] %vm27, 0.0
    %60 = vst.msk [vmem:[#allocation2 + $0xf8] sm:$0xff] %vm27, 0.0
    %61 = vst.msk [vmem:[#allocation2 + $0x100] sm:$0x3] %vm30, 0.0
    %62 = vst.msk [vmem:[#allocation2 + $0x108] sm:$0xff] %vm27, 0.0
    %63 = vst.msk [vmem:[#allocation2 + $0x110] sm:$0xff] %vm27, 0.0
    %64 = vst.msk [vmem:[#allocation2 + $0x118] sm:$0x3] %vm30, 0.0
    %65 = vst.msk [vmem:[#allocation2 + $0x120] sm:$0xff] %vm27, 0.0
    %66 = vst.msk [vmem:[#allocation2 + $0x128] sm:$0xff] %vm27, 0.0
    %67 = vst.msk [vmem:[#allocation2 + $0x130] sm:$0x3] %vm30, 0.0
    %68 = vst.msk [vmem:[#allocation2 + $0x138] sm:$0xff] %vm27, 0.0
    %69 = vst.msk [vmem:[#allocation2 + $0x140] sm:$0xff] %vm27, 0.0
    %70 = vst.msk [vmem:[#allocation2 + $0x148] sm:$0x3] %vm30, 0.0
    %71 = vst.msk [vmem:[#allocation2 + $0x150] sm:$0xff] %vm27, 0.0
    %72 = vst.msk [vmem:[#allocation2 + $0x158] sm:$0xff] %vm27, 0.0
    %73 = vst.msk [vmem:[#allocation2 + $0x160] sm:$0x3] %vm30, 0.0
    %74 = vst.msk [vmem:[#allocation2 + $0x168] sm:$0xff] %vm27, 0.0
    %75 = vst.msk [vmem:[#allocation2 + $0x170] sm:$0xff] %vm27, 0.0
    %76 = vst.msk [vmem:[#allocation2 + $0x178] sm:$0x3] %vm30, 0.0
    %77 = vst.msk [vmem:[#allocation2 + $0x180] sm:$0xff] %vm27, 0.0
    %78 = vst.msk [vmem:[#allocation2 + $0x188] sm:$0xff] %vm27, 0.0
    %79 = vst.msk [vmem:[#allocation2 + $0x190] sm:$0x3] %vm30, 0.0
    %80 = vst.msk [vmem:[#allocation2 + $0x198] sm:$0xff] %vm27, 0.0
    %81 = vst.msk [vmem:[#allocation2 + $0x1a0] sm:$0xff] %vm27, 0.0
    %82 = vst.msk [vmem:[#allocation2 + $0x1a8] sm:$0x3] %vm30, 0.0
    %83 = vst.msk [vmem:[#allocation2 + $0x1b0] sm:$0xff] %vm27, 0.0
    %84 = vst.msk [vmem:[#allocation2 + $0x1b8] sm:$0xff] %vm27, 0.0
    %85 = vst.msk [vmem:[#allocation2 + $0x1c0] sm:$0x3] %vm30, 0.0
    %86 = vst.msk [vmem:[#allocation2 + $0x1c8] sm:$0xff] %vm27, 0.0
    %87 = vst.msk [vmem:[#allocation2 + $0x1d0] sm:$0xff] %vm27, 0.0
    %88 = vst.msk [vmem:[#allocation2 + $0x1d8] sm:$0x3] %vm30, 0.0
    %89 = vst.msk [vmem:[#allocation2 + $0x1e0] sm:$0xff] %vm27, 0.0
    %90 = vst.msk [vmem:[#allocation2 + $0x1e8] sm:$0xff] %vm27, 0.0
    %91 = vst.msk [vmem:[#allocation2 + $0x1f0] sm:$0x3] %vm30, 0.0
    %92 = vst.msk [vmem:[#allocation2 + $0x1f8] sm:$0xff] %vm27, 0.0
    %93 = vst.msk [vmem:[#allocation2 + $0x200] sm:$0xff] %vm27, 0.0
    %94 = vst.msk [vmem:[#allocation2 + $0x208] sm:$0x3] %vm30, 0.0
    %95 = vst.msk [vmem:[#allocation2 + $0x210] sm:$0xff] %vm27, 0.0
    %96 = vst.msk [vmem:[#allocation2 + $0x218] sm:$0xff] %vm27, 0.0
    %97 = vst.msk [vmem:[#allocation2 + $0x220] sm:$0x3] %vm30, 0.0
    %98 = vst.msk [vmem:[#allocation2 + $0x228] sm:$0xff] %vm27, 0.0
    %99 = vst.msk [vmem:[#allocation2 + $0x230] sm:$0xff] %vm27, 0.0
    %100 = vst.msk [vmem:[#allocation2 + $0x238] sm:$0x3] %vm30, 0.0
    %101 = vst.msk [vmem:[#allocation2 + $0x240] sm:$0xff] %vm27, 0.0
    %102 = vst.msk [vmem:[#allocation2 + $0x248] sm:$0xff] %vm27, 0.0
    %103 = vst.msk [vmem:[#allocation2 + $0x250] sm:$0x3] %vm30, 0.0
    %104 = vst.msk [vmem:[#allocation2 + $0x258] sm:$0xff] %vm27, 0.0
    %105 = vst.msk [vmem:[#allocation2 + $0x260] sm:$0xff] %vm27, 0.0
    %106 = vst.msk [vmem:[#allocation2 + $0x268] sm:$0x3] %vm30, 0.0
    %107 = vst.msk [vmem:[#allocation2 + $0x270] sm:$0xff] %vm27, 0.0
    %108 = vst.msk [vmem:[#allocation2 + $0x278] sm:$0xff] %vm27, 0.0
    %109 = vst.msk [vmem:[#allocation2 + $0x280] sm:$0x3] %vm30, 0.0
    %110 = vst.msk [vmem:[#allocation2 + $0x288] sm:$0xff] %vm27, 0.0
    %111 = vst.msk [vmem:[#allocation2 + $0x290] sm:$0xff] %vm27, 0.0
    %112 = vst.msk [vmem:[#allocation2 + $0x298] sm:$0x3] %vm30, 0.0
    %113 = vst.msk [vmem:[#allocation2 + $0x2a0] sm:$0xff] %vm27, 0.0
    %114 = vst.msk [vmem:[#allocation2 + $0x2a8] sm:$0xff] %vm27, 0.0
    %115 = vst.msk [vmem:[#allocation2 + $0x2b0] sm:$0x3] %vm30, 0.0
    %116 = vst.msk [vmem:[#allocation2 + $0x2b8] sm:$0xff] %vm27, 0.0
    %117 = vst.msk [vmem:[#allocation2 + $0x2c0] sm:$0xff] %vm27, 0.0
    %118 = vst.msk [vmem:[#allocation2 + $0x2c8] sm:$0x3] %vm30, 0.0
    %119 = vst.msk [vmem:[#allocation2 + $0x2d0] sm:$0xff] %vm27, 0.0
    %120 = vst.msk [vmem:[#allocation2 + $0x2d8] sm:$0xff] %vm27, 0.0
    %121 = vst.msk [vmem:[#allocation2 + $0x2e0] sm:$0x3] %vm30, 0.0
    %122 = vst.msk [vmem:[#allocation2 + $0x2e8] sm:$0xff] %vm27, 0.0
    %123 = vst.msk [vmem:[#allocation2 + $0x2f0] sm:$0xff] %vm27, 0.0
    %124 = vst.msk [vmem:[#allocation2 + $0x2f8] sm:$0x3] %vm30, 0.0
    %125 = vst.msk [vmem:[#allocation2 + $0x300] sm:$0xff] %vm27, 0.0
    %126 = vst.msk [vmem:[#allocation2 + $0x308] sm:$0xff] %vm27, 0.0
    %127 = vst.msk [vmem:[#allocation2 + $0x310] sm:$0x3] %vm30, 0.0
    %128 = vst.msk [vmem:[#allocation2 + $0x318] sm:$0xff] %vm27, 0.0
    %129 = vst.msk [vmem:[#allocation2 + $0x320] sm:$0xff] %vm27, 0.0
    %130 = vst.msk [vmem:[#allocation2 + $0x328] sm:$0x3] %vm30, 0.0
    %131 = vst.msk [vmem:[#allocation2 + $0x330] sm:$0xff] %vm27, 0.0
    %132 = vst.msk [vmem:[#allocation2 + $0x338] sm:$0xff] %vm27, 0.0
    %133 = vst.msk [vmem:[#allocation2 + $0x340] sm:$0x3] %vm30, 0.0
    %134 = vst.msk [vmem:[#allocation2 + $0x348] sm:$0xff] %vm27, 0.0
    %135 = vst.msk [vmem:[#allocation2 + $0x350] sm:$0xff] %vm27, 0.0
    %136 = vst.msk [vmem:[#allocation2 + $0x358] sm:$0x3] %vm30, 0.0
    %v137 = vld [vmem:[%s0] sm:$0xff]
    %v138 = vld [vmem:[%s0 + $0x8] sm:$0xff]
    %v139 = vld [vmem:[%s0 + $0x10] sm:$0xff]
    %v140 = vld [vmem:[%s0 + $0x18] sm:$0xff]
    %v141 = vld [vmem:[%s0 + $0x20] sm:$0xff]
    %v142 = vld [vmem:[%s0 + $0x28] sm:$0xff]
    %v143 = vld [vmem:[%s0 + $0x30] sm:$0xff]
    %v144 = vld [vmem:[%s0 + $0x38] sm:$0xff]
    %v145 = vld [vmem:[%s0 + $0x40] sm:$0xff]
    %v146 = vld [vmem:[%s0 + $0x48] sm:$0xff]
    %v147 = vld [vmem:[%s0 + $0x50] sm:$0xff]
    %v148 = vld [vmem:[%s0 + $0x58] sm:$0xff]
    %v149 = vld [vmem:[%s0 + $0x60] sm:$0xff]
    %v150 = vld [vmem:[%s0 + $0x68] sm:$0xff]
    %v151 = vld [vmem:[%s0 + $0x70] sm:$0xff]
    %v152 = vld [vmem:[%s0 + $0x78] sm:$0xff]
    %v153 = vld [vmem:[%s0 + $0x80] sm:$0xff]
    %v154 = vld [vmem:[%s0 + $0x88] sm:$0xff]
    %v155 = vld [vmem:[%s0 + $0x90] sm:$0xff]
    %v156 = vld [vmem:[%s0 + $0x98] sm:$0xff]
    %v157 = vld [vmem:[%s0 + $0xa0] sm:$0xff]
    %v158 = vld [vmem:[%s0 + $0xa8] sm:$0xff]
    %v159 = vld [vmem:[%s0 + $0xb0] sm:$0xff]
    %v160 = vld [vmem:[%s0 + $0xb8] sm:$0xff]
    %v161 = vld [vmem:[%s0 + $0xc0] sm:$0xff]
    %v162 = vld [vmem:[%s0 + $0xc8] sm:$0xff]
    %v163 = vld [vmem:[%s0 + $0xd0] sm:$0xff]
    %v164 = vld [vmem:[%s0 + $0xd8] sm:$0xff]
    %v165 = vld [vmem:[%s0 + $0xe0] sm:$0xff]
    %v166 = vld [vmem:[%s0 + $0xe8] sm:$0xff]
    %v167 = vld [vmem:[%s0 + $0xf0] sm:$0xff]
    %v168 = vld [vmem:[%s0 + $0xf8] sm:$0xff]
    %v169 = vld [vmem:[%s0 + $0x100] sm:$0xff]
    %v170 = vld [vmem:[%s0 + $0x108] sm:$0xff]
    %v171 = vld [vmem:[%s0 + $0x110] sm:$0xff]
    %v172 = vld [vmem:[%s0 + $0x118] sm:$0xff]
    %v173 = vld [vmem:[%s0 + $0x120] sm:$0xff]
    %v174 = vld [vmem:[%s0 + $0x128] sm:$0xff]
    %v175 = vld [vmem:[%s0 + $0x130] sm:$0xff]
    %v176 = vld [vmem:[%s0 + $0x138] sm:$0xff]
    %v177 = vld [vmem:[%s0 + $0x140] sm:$0xff]
    %v178 = vld [vmem:[%s0 + $0x148] sm:$0xff]
    %v179 = vld [vmem:[%s0 + $0x150] sm:$0xff]
    %v180 = vld [vmem:[%s0 + $0x158] sm:$0xff]
    %v181 = vld [vmem:[%s0 + $0x160] sm:$0xff]
    %v182 = vld [vmem:[%s0 + $0x168] sm:$0xff]
    %v183 = vld [vmem:[%s0 + $0x170] sm:$0xff]
    %v184 = vld [vmem:[%s0 + $0x178] sm:$0xff]
    %v185 = vld [vmem:[%s0 + $0x180] sm:$0xff]
    %v186 = vld [vmem:[%s0 + $0x188] sm:$0xff]
    %v187 = vld [vmem:[%s0 + $0x190] sm:$0xff]
    %v188 = vld [vmem:[%s0 + $0x198] sm:$0xff]
    %v189 = vld [vmem:[%s0 + $0x1a0] sm:$0xff]
    %v190 = vld [vmem:[%s0 + $0x1a8] sm:$0xff]
    %v191 = vld [vmem:[%s0 + $0x1b0] sm:$0xff]
    %v192 = vld [vmem:[%s0 + $0x1b8] sm:$0xff]
    %v193 = vld [vmem:[%s0 + $0x1c0] sm:$0xff]
    %v194 = vld [vmem:[%s0 + $0x1c8] sm:$0xff]
    %v195 = vld [vmem:[%s0 + $0x1d0] sm:$0xff]
    %v196 = vld [vmem:[%s0 + $0x1d8] sm:$0xff]
    %v197 = vld [vmem:[%s0 + $0x1e0] sm:$0xff]
    %v198 = vld [vmem:[%s0 + $0x1e8] sm:$0xff]
    %v199 = vld [vmem:[%s0 + $0x1f0] sm:$0xff]
    %v200 = vld [vmem:[%s0 + $0x1f8] sm:$0xff]
    %s201 = scalar_lea.vmem [#allocation2], 24
    %202 = vst.msk [vmem:[%s201 + $0x1] sm:$0xff] %vm27, %v137
    %203 = vst.msk [vmem:[%s201 + $0x9] sm:$0xff] %vm27, %v138
    %204 = vst.msk [vmem:[%s201 + $0x19] sm:$0xff] %vm27, %v139
    %205 = vst.msk [vmem:[%s201 + $0x21] sm:$0xff] %vm27, %v140
    %206 = vst.msk [vmem:[%s201 + $0x31] sm:$0xff] %vm27, %v141
    %207 = vst.msk [vmem:[%s201 + $0x39] sm:$0xff] %vm27, %v142
    %208 = vst.msk [vmem:[%s201 + $0x49] sm:$0xff] %vm27, %v143
    %209 = vst.msk [vmem:[%s201 + $0x51] sm:$0xff] %vm27, %v144
    %210 = vst.msk [vmem:[%s201 + $0x61] sm:$0xff] %vm27, %v145
    %211 = vst.msk [vmem:[%s201 + $0x69] sm:$0xff] %vm27, %v146
    %212 = vst.msk [vmem:[%s201 + $0x79] sm:$0xff] %vm27, %v147
    %213 = vst.msk [vmem:[%s201 + $0x81] sm:$0xff] %vm27, %v148
    %214 = vst.msk [vmem:[%s201 + $0x91] sm:$0xff] %vm27, %v149
    %215 = vst.msk [vmem:[%s201 + $0x99] sm:$0xff] %vm27, %v150
    %216 = vst.msk [vmem:[%s201 + $0xa9] sm:$0xff] %vm27, %v151
    %217 = vst.msk [vmem:[%s201 + $0xb1] sm:$0xff] %vm27, %v152
    %218 = vst.msk [vmem:[%s201 + $0xc1] sm:$0xff] %vm27, %v153
    %219 = vst.msk [vmem:[%s201 + $0xc9] sm:$0xff] %vm27, %v154
    %220 = vst.msk [vmem:[%s201 + $0xd9] sm:$0xff] %vm27, %v155
    %221 = vst.msk [vmem:[%s201 + $0xe1] sm:$0xff] %vm27, %v156
    %222 = vst.msk [vmem:[%s201 + $0xf1] sm:$0xff] %vm27, %v157
    %223 = vst.msk [vmem:[%s201 + $0xf9] sm:$0xff] %vm27, %v158
    %224 = vst.msk [vmem:[%s201 + $0x109] sm:$0xff] %vm27, %v159
    %225 = vst.msk [vmem:[%s201 + $0x111] sm:$0xff] %vm27, %v160
    %226 = vst.msk [vmem:[%s201 + $0x121] sm:$0xff] %vm27, %v161
    %227 = vst.msk [vmem:[%s201 + $0x129] sm:$0xff] %vm27, %v162
    %228 = vst.msk [vmem:[%s201 + $0x139] sm:$0xff] %vm27, %v163
    %229 = vst.msk [vmem:[%s201 + $0x141] sm:$0xff] %vm27, %v164
    %230 = vst.msk [vmem:[%s201 + $0x151] sm:$0xff] %vm27, %v165
    %231 = vst.msk [vmem:[%s201 + $0x159] sm:$0xff] %vm27, %v166
    %232 = vst.msk [vmem:[%s201 + $0x169] sm:$0xff] %vm27, %v167
    %233 = vst.msk [vmem:[%s201 + $0x171] sm:$0xff] %vm27, %v168
    %234 = vst.msk [vmem:[%s201 + $0x1b1] sm:$0xff] %vm27, %v169
    %235 = vst.msk [vmem:[%s201 + $0x1b9] sm:$0xff] %vm27, %v170
    %236 = vst.msk [vmem:[%s201 + $0x1c9] sm:$0xff] %vm27, %v171
    %237 = vst.msk [vmem:[%s201 + $0x1d1] sm:$0xff] %vm27, %v172
    %238 = vst.msk [vmem:[%s201 + $0x1e1] sm:$0xff] %vm27, %v173
    %239 = vst.msk [vmem:[%s201 + $0x1e9] sm:$0xff] %vm27, %v174
    %240 = vst.msk [vmem:[%s201 + $0x1f9] sm:$0xff] %vm27, %v175
    %241 = vst.msk [vmem:[%s201 + $0x201] sm:$0xff] %vm27, %v176
    %242 = vst.msk [vmem:[%s201 + $0x211] sm:$0xff] %vm27, %v177
    %243 = vst.msk [vmem:[%s201 + $0x219] sm:$0xff] %vm27, %v178
    %244 = vst.msk [vmem:[%s201 + $0x229] sm:$0xff] %vm27, %v179
    %245 = vst.msk [vmem:[%s201 + $0x231] sm:$0xff] %vm27, %v180
    %246 = vst.msk [vmem:[%s201 + $0x241] sm:$0xff] %vm27, %v181
    %247 = vst.msk [vmem:[%s201 + $0x249] sm:$0xff] %vm27, %v182
    %248 = vst.msk [vmem:[%s201 + $0x259] sm:$0xff] %vm27, %v183
    %249 = vst.msk [vmem:[%s201 + $0x261] sm:$0xff] %vm27, %v184
    %250 = vst.msk [vmem:[%s201 + $0x271] sm:$0xff] %vm27, %v185
    %251 = vst.msk [vmem:[%s201 + $0x279] sm:$0xff] %vm27, %v186
    %252 = vst.msk [vmem:[%s201 + $0x289] sm:$0xff] %vm27, %v187
    %253 = vst.msk [vmem:[%s201 + $0x291] sm:$0xff] %vm27, %v188
    %254 = vst.msk [vmem:[%s201 + $0x2a1] sm:$0xff] %vm27, %v189
    %255 = vst.msk [vmem:[%s201 + $0x2a9] sm:$0xff] %vm27, %v190
    %256 = vst.msk [vmem:[%s201 + $0x2b9] sm:$0xff] %vm27, %v191
    %257 = vst.msk [vmem:[%s201 + $0x2c1] sm:$0xff] %vm27, %v192
    %258 = vst.msk [vmem:[%s201 + $0x2d1] sm:$0xff] %vm27, %v193
    %259 = vst.msk [vmem:[%s201 + $0x2d9] sm:$0xff] %vm27, %v194
    %260 = vst.msk [vmem:[%s201 + $0x2e9] sm:$0xff] %vm27, %v195
    %261 = vst.msk [vmem:[%s201 + $0x2f1] sm:$0xff] %vm27, %v196
    %262 = vst.msk [vmem:[%s201 + $0x301] sm:$0xff] %vm27, %v197
    %263 = vst.msk [vmem:[%s201 + $0x309] sm:$0xff] %vm27, %v198
    %264 = vst.msk [vmem:[%s201 + $0x319] sm:$0xff] %vm27, %v199
    %265 = vst.msk [vmem:[%s201 + $0x321] sm:$0xff] %vm27, %v200
    %v266 = vld [vmem:[#allocation2] sm:$0xff]
    %v267 = vld [vmem:[#allocation2 + $0x8] sm:$0xff]
    %v268 = vld [vmem:[#allocation2 + $0x18] sm:$0xff]
    %v269 = vld [vmem:[#allocation2 + $0x20] sm:$0xff]
    %v270 = vld [vmem:[#allocation2 + $0x30] sm:$0xff]
    %v271 = vld [vmem:[#allocation2 + $0x38] sm:$0xff]
    %v272 = vld [vmem:[#allocation2 + $0x48] sm:$0xff]
    %v273 = vld [vmem:[#allocation2 + $0x50] sm:$0xff]
    %v274 = vld [vmem:[#allocation2 + $0x60] sm:$0xff]
    %v275 = vld [vmem:[#allocation2 + $0x68] sm:$0xff]
    %v276 = vld [vmem:[#allocation2 + $0x78] sm:$0xff]
    %v277 = vld [vmem:[#allocation2 + $0x80] sm:$0xff]
    %v278 = vld [vmem:[#allocation2 + $0x90] sm:$0xff]
    %v279 = vld [vmem:[#allocation2 + $0x98] sm:$0xff]
    %v280 = vld [vmem:[#allocation2 + $0xa8] sm:$0xff]
    %v281 = vld [vmem:[#allocation2 + $0xb0] sm:$0xff]
    %v282 = vld [vmem:[#allocation2 + $0xc0] sm:$0xff]
    %v283 = vld [vmem:[#allocation2 + $0xc8] sm:$0xff]
    %v284 = vld [vmem:[#allocation2 + $0xd8] sm:$0xff]
    %v285 = vld [vmem:[#allocation2 + $0xe0] sm:$0xff]
    %v286 = vld [vmem:[#allocation2 + $0xf0] sm:$0xff]
    %v287 = vld [vmem:[#allocation2 + $0xf8] sm:$0xff]
    %v288 = vld [vmem:[#allocation2 + $0x108] sm:$0xff]
    %v289 = vld [vmem:[#allocation2 + $0x110] sm:$0xff]
    %v290 = vld [vmem:[#allocation2 + $0x120] sm:$0xff]
    %v291 = vld [vmem:[#allocation2 + $0x128] sm:$0xff]
    %v292 = vld [vmem:[#allocation2 + $0x138] sm:$0xff]
    %v293 = vld [vmem:[#allocation2 + $0x140] sm:$0xff]
    %v294 = vld [vmem:[#allocation2 + $0x150] sm:$0xff]
    %v295 = vld [vmem:[#allocation2 + $0x158] sm:$0xff]
    %v296 = vld [vmem:[#allocation2 + $0x168] sm:$0xff]
    %v297 = vld [vmem:[#allocation2 + $0x170] sm:$0xff]
    %v298 = vld [vmem:[#allocation2 + $0x1b0] sm:$0xff]
    %v299 = vld [vmem:[#allocation2 + $0x1b8] sm:$0xff]
    %v300 = vld [vmem:[#allocation2 + $0x1c8] sm:$0xff]
    %v301 = vld [vmem:[#allocation2 + $0x1d0] sm:$0xff]
    %v302 = vld [vmem:[#allocation2 + $0x1e0] sm:$0xff]
    %v303 = vld [vmem:[#allocation2 + $0x1e8] sm:$0xff]
    %v304 = vld [vmem:[#allocation2 + $0x1f8] sm:$0xff]
    %v305 = vld [vmem:[#allocation2 + $0x200] sm:$0xff]
    %v306 = vld [vmem:[#allocation2 + $0x210] sm:$0xff]
    %v307 = vld [vmem:[#allocation2 + $0x218] sm:$0xff]
    %v308 = vld [vmem:[#allocation2 + $0x228] sm:$0xff]
    %v309 = vld [vmem:[#allocation2 + $0x230] sm:$0xff]
    %v310 = vld [vmem:[#allocation2 + $0x240] sm:$0xff]
    %v311 = vld [vmem:[#allocation2 + $0x248] sm:$0xff]
    %v312 = vld [vmem:[#allocation2 + $0x258] sm:$0xff]
    %v313 = vld [vmem:[#allocation2 + $0x260] sm:$0xff]
    %v314 = vld [vmem:[#allocation2 + $0x270] sm:$0xff]
    %v315 = vld [vmem:[#allocation2 + $0x278] sm:$0xff]
    %v316 = vld [vmem:[#allocation2 + $0x288] sm:$0xff]
    %v317 = vld [vmem:[#allocation2 + $0x290] sm:$0xff]
    %v318 = vld [vmem:[#allocation2 + $0x2a0] sm:$0xff]
    %v319 = vld [vmem:[#allocation2 + $0x2a8] sm:$0xff]
    %v320 = vld [vmem:[#allocation2 + $0x2b8] sm:$0xff]
    %v321 = vld [vmem:[#allocation2 + $0x2c0] sm:$0xff]
    %v322 = vld [vmem:[#allocation2 + $0x2d0] sm:$0xff]
    %v323 = vld [vmem:[#allocation2 + $0x2d8] sm:$0xff]
    %v324 = vld [vmem:[#allocation2 + $0x2e8] sm:$0xff]
    %v325 = vld [vmem:[#allocation2 + $0x2f0] sm:$0xff]
    %v326 = vld [vmem:[#allocation2 + $0x300] sm:$0xff]
    %v327 = vld [vmem:[#allocation2 + $0x308] sm:$0xff]
    %v328 = vld [vmem:[#allocation2 + $0x318] sm:$0xff]
    %v329 = vld [vmem:[#allocation2 + $0x320] sm:$0xff]
    %330 = vst.msk [vmem:[#allocation4] sm:$0xff] %vm27, %v266
    %331 = vst.msk [vmem:[#allocation4 + $0x8] sm:$0xff] %vm27, %v267
    %332 = vst.msk [vmem:[#allocation4 + $0x10] sm:$0xff] %vm27, %v268
    %333 = vst.msk [vmem:[#allocation4 + $0x18] sm:$0xff] %vm27, %v269
    %334 = vst.msk [vmem:[#allocation4 + $0x20] sm:$0xff] %vm27, %v270
    %335 = vst.msk [vmem:[#allocation4 + $0x28] sm:$0xff] %vm27, %v271
    %336 = vst.msk [vmem:[#allocation4 + $0x30] sm:$0xff] %vm27, %v272
    %337 = vst.msk [vmem:[#allocation4 + $0x38] sm:$0xff] %vm27, %v273
    %338 = vst.msk [vmem:[#allocation4 + $0x40] sm:$0xff] %vm27, %v274
    %339 = vst.msk [vmem:[#allocation4 + $0x48] sm:$0xff] %vm27, %v275
    %340 = vst.msk [vmem:[#allocation4 + $0x50] sm:$0xff] %vm27, %v276
    %341 = vst.msk [vmem:[#allocation4 + $0x58] sm:$0xff] %vm27, %v277
    %342 = vst.msk [vmem:[#allocation4 + $0x60] sm:$0xff] %vm27, %v278
    %343 = vst.msk [vmem:[#allocation4 + $0x68] sm:$0xff] %vm27, %v279
    %344 = vst.msk [vmem:[#allocation4 + $0x70] sm:$0xff] %vm27, %v280
    %345 = vst.msk [vmem:[#allocation4 + $0x78] sm:$0xff] %vm27, %v281
    %346 = vst.msk [vmem:[#allocation4 + $0x80] sm:$0xff] %vm27, %v282
    %347 = vst.msk [vmem:[#allocation4 + $0x88] sm:$0xff] %vm27, %v283
    %348 = vst.msk [vmem:[#allocation4 + $0x90] sm:$0xff] %vm27, %v284
    %349 = vst.msk [vmem:[#allocation4 + $0x98] sm:$0xff] %vm27, %v285
    %350 = vst.msk [vmem:[#allocation4 + $0xa0] sm:$0xff] %vm27, %v286
    %351 = vst.msk [vmem:[#allocation4 + $0xa8] sm:$0xff] %vm27, %v287
    %352 = vst.msk [vmem:[#allocation4 + $0xb0] sm:$0xff] %vm27, %v288
    %353 = vst.msk [vmem:[#allocation4 + $0xb8] sm:$0xff] %vm27, %v289
    %354 = vst.msk [vmem:[#allocation4 + $0xc0] sm:$0xff] %vm27, %v290
    %355 = vst.msk [vmem:[#allocation4 + $0xc8] sm:$0xff] %vm27, %v291
    %356 = vst.msk [vmem:[#allocation4 + $0xd0] sm:$0xff] %vm27, %v292
    %357 = vst.msk [vmem:[#allocation4 + $0xd8] sm:$0xff] %vm27, %v293
    %358 = vst.msk [vmem:[#allocation4 + $0xe0] sm:$0xff] %vm27, %v294
    %359 = vst.msk [vmem:[#allocation4 + $0xe8] sm:$0xff] %vm27, %v295
    %360 = vst.msk [vmem:[#allocation4 + $0xf0] sm:$0xff] %vm27, %v296
    %361 = vst.msk [vmem:[#allocation4 + $0xf8] sm:$0xff] %vm27, %v297
    %362 = vst.msk [vmem:[#allocation4 + $0x100] sm:$0xff] %vm27, %v298
    %363 = vst.msk [vmem:[#allocation4 + $0x108] sm:$0xff] %vm27, %v299
    %364 = vst.msk [vmem:[#allocation4 + $0x110] sm:$0xff] %vm27, %v300
    %365 = vst.msk [vmem:[#allocation4 + $0x118] sm:$0xff] %vm27, %v301
    %366 = vst.msk [vmem:[#allocation4 + $0x120] sm:$0xff] %vm27, %v302
    %367 = vst.msk [vmem:[#allocation4 + $0x128] sm:$0xff] %vm27, %v303
    %368 = vst.msk [vmem:[#allocation4 + $0x130] sm:$0xff] %vm27, %v304
    %369 = vst.msk [vmem:[#allocation4 + $0x138] sm:$0xff] %vm27, %v305
    %370 = vst.msk [vmem:[#allocation4 + $0x140] sm:$0xff] %vm27, %v306
    %371 = vst.msk [vmem:[#allocation4 + $0x148] sm:$0xff] %vm27, %v307
    %372 = vst.msk [vmem:[#allocation4 + $0x150] sm:$0xff] %vm27, %v308
    %373 = vst.msk [vmem:[#allocation4 + $0x158] sm:$0xff] %vm27, %v309
    %374 = vst.msk [vmem:[#allocation4 + $0x160] sm:$0xff] %vm27, %v310
    %375 = vst.msk [vmem:[#allocation4 + $0x168] sm:$0xff] %vm27, %v311
    %376 = vst.msk [vmem:[#allocation4 + $0x170] sm:$0xff] %vm27, %v312
    %377 = vst.msk [vmem:[#allocation4 + $0x178] sm:$0xff] %vm27, %v313
    %378 = vst.msk [vmem:[#allocation4 + $0x180] sm:$0xff] %vm27, %v314
    %379 = vst.msk [vmem:[#allocation4 + $0x188] sm:$0xff] %vm27, %v315
    %380 = vst.msk [vmem:[#allocation4 + $0x190] sm:$0xff] %vm27, %v316
    %381 = vst.msk [vmem:[#allocation4 + $0x198] sm:$0xff] %vm27, %v317
    %382 = vst.msk [vmem:[#allocation4 + $0x1a0] sm:$0xff] %vm27, %v318
    %383 = vst.msk [vmem:[#allocation4 + $0x1a8] sm:$0xff] %vm27, %v319
    %384 = vst.msk [vmem:[#allocation4 + $0x1b0] sm:$0xff] %vm27, %v320
    %385 = vst.msk [vmem:[#allocation4 + $0x1b8] sm:$0xff] %vm27, %v321
    %386 = vst.msk [vmem:[#allocation4 + $0x1c0] sm:$0xff] %vm27, %v322
    %387 = vst.msk [vmem:[#allocation4 + $0x1c8] sm:$0xff] %vm27, %v323
    %388 = vst.msk [vmem:[#allocation4 + $0x1d0] sm:$0xff] %vm27, %v324
    %389 = vst.msk [vmem:[#allocation4 + $0x1d8] sm:$0xff] %vm27, %v325
    %390 = vst.msk [vmem:[#allocation4 + $0x1e0] sm:$0xff] %vm27, %v326
    %391 = vst.msk [vmem:[#allocation4 + $0x1e8] sm:$0xff] %vm27, %v327
    %392 = vst.msk [vmem:[#allocation4 + $0x1f0] sm:$0xff] %vm27, %v328
    %393 = vst.msk [vmem:[#allocation4 + $0x1f8] sm:$0xff] %vm27, %v329
    %v394 = vld [vmem:[#allocation2 + $0x1] sm:$0xff]
    %v395 = vld [vmem:[#allocation2 + $0x9] sm:$0xff]
    %v396 = vld [vmem:[#allocation2 + $0x19] sm:$0xff]
    %v397 = vld [vmem:[#allocation2 + $0x21] sm:$0xff]
    %v398 = vld [vmem:[#allocation2 + $0x31] sm:$0xff]
    %v399 = vld [vmem:[#allocation2 + $0x39] sm:$0xff]
    %v400 = vld [vmem:[#allocation2 + $0x49] sm:$0xff]
    %v401 = vld [vmem:[#allocation2 + $0x51] sm:$0xff]
    %v402 = vld [vmem:[#allocation2 + $0x61] sm:$0xff]
    %v403 = vld [vmem:[#allocation2 + $0x69] sm:$0xff]
    %v404 = vld [vmem:[#allocation2 + $0x79] sm:$0xff]
    %v405 = vld [vmem:[#allocation2 + $0x81] sm:$0xff]
    %v406 = vld [vmem:[#allocation2 + $0x91] sm:$0xff]
    %v407 = vld [vmem:[#allocation2 + $0x99] sm:$0xff]
    %v408 = vld [vmem:[#allocation2 + $0xa9] sm:$0xff]
    %v409 = vld [vmem:[#allocation2 + $0xb1] sm:$0xff]
    %v410 = vld [vmem:[#allocation2 + $0xc1] sm:$0xff]
    %v411 = vld [vmem:[#allocation2 + $0xc9] sm:$0xff]
    %v412 = vld [vmem:[#allocation2 + $0xd9] sm:$0xff]
    %v413 = vld [vmem:[#allocation2 + $0xe1] sm:$0xff]
    %v414 = vld [vmem:[#allocation2 + $0xf1] sm:$0xff]
    %v415 = vld [vmem:[#allocation2 + $0xf9] sm:$0xff]
    %v416 = vld [vmem:[#allocation2 + $0x109] sm:$0xff]
    %v417 = vld [vmem:[#allocation2 + $0x111] sm:$0xff]
    %v418 = vld [vmem:[#allocation2 + $0x121] sm:$0xff]
    %v419 = vld [vmem:[#allocation2 + $0x129] sm:$0xff]
    %v420 = vld [vmem:[#allocation2 + $0x139] sm:$0xff]
    %v421 = vld [vmem:[#allocation2 + $0x141] sm:$0xff]
    %v422 = vld [vmem:[#allocation2 + $0x151] sm:$0xff]
    %v423 = vld [vmem:[#allocation2 + $0x159] sm:$0xff]
    %v424 = vld [vmem:[#allocation2 + $0x169] sm:$0xff]
    %v425 = vld [vmem:[#allocation2 + $0x171] sm:$0xff]
    %v426 = vld [vmem:[#allocation2 + $0x1b1] sm:$0xff]
    %v427 = vld [vmem:[#allocation2 + $0x1b9] sm:$0xff]
    %v428 = vld [vmem:[#allocation2 + $0x1c9] sm:$0xff]
    %v429 = vld [vmem:[#allocation2 + $0x1d1] sm:$0xff]
    %v430 = vld [vmem:[#allocation2 + $0x1e1] sm:$0xff]
    %v431 = vld [vmem:[#allocation2 + $0x1e9] sm:$0xff]
    %v432 = vld [vmem:[#allocation2 + $0x1f9] sm:$0xff]
    %v433 = vld [vmem:[#allocation2 + $0x201] sm:$0xff]
    %v434 = vld [vmem:[#allocation2 + $0x211] sm:$0xff]
    %v435 = vld [vmem:[#allocation2 + $0x219] sm:$0xff]
    %v436 = vld [vmem:[#allocation2 + $0x229] sm:$0xff]
    %v437 = vld [vmem:[#allocation2 + $0x231] sm:$0xff]
    %v438 = vld [vmem:[#allocation2 + $0x241] sm:$0xff]
    %v439 = vld [vmem:[#allocation2 + $0x249] sm:$0xff]
    %v440 = vld [vmem:[#allocation2 + $0x259] sm:$0xff]
    %v441 = vld [vmem:[#allocation2 + $0x261] sm:$0xff]
    %v442 = vld [vmem:[#allocation2 + $0x271] sm:$0xff]
    %v443 = vld [vmem:[#allocation2 + $0x279] sm:$0xff]
    %v444 = vld [vmem:[#allocation2 + $0x289] sm:$0xff]
    %v445 = vld [vmem:[#allocation2 + $0x291] sm:$0xff]
    %v446 = vld [vmem:[#allocation2 + $0x2a1] sm:$0xff]
    %v447 = vld [vmem:[#allocation2 + $0x2a9] sm:$0xff]
    %v448 = vld [vmem:[#allocation2 + $0x2b9] sm:$0xff]
    %v449 = vld [vmem:[#allocation2 + $0x2c1] sm:$0xff]
    %v450 = vld [vmem:[#allocation2 + $0x2d1] sm:$0xff]
    %v451 = vld [vmem:[#allocation2 + $0x2d9] sm:$0xff]
    %v452 = vld [vmem:[#allocation2 + $0x2e9] sm:$0xff]
    %v453 = vld [vmem:[#allocation2 + $0x2f1] sm:$0xff]
    %v454 = vld [vmem:[#allocation2 + $0x301] sm:$0xff]
    %v455 = vld [vmem:[#allocation2 + $0x309] sm:$0xff]
    %v456 = vld [vmem:[#allocation2 + $0x319] sm:$0xff]
    %v457 = vld [vmem:[#allocation2 + $0x321] sm:$0xff]
    %522 = vrot.lane.b32.xlu0 %v394, 4
    %v523 = vpop.permute.xlu0 %522
    %524 = vrot.lane.b32.xlu0 %v395, 4
    %v525 = vpop.permute.xlu0 %524
    %526 = vrot.lane.b32.xlu0 %v396, 4
    %v527 = vpop.permute.xlu0 %526
    %528 = vrot.lane.b32.xlu0 %v397, 4
    %v529 = vpop.permute.xlu0 %528
    %530 = vrot.lane.b32.xlu0 %v398, 4
    %v531 = vpop.permute.xlu0 %530
    %532 = vrot.lane.b32.xlu0 %v399, 4
    %v533 = vpop.permute.xlu0 %532
    %534 = vrot.lane.b32.xlu0 %v400, 4
    %v535 = vpop.permute.xlu0 %534
    %536 = vrot.lane.b32.xlu0 %v401, 4
    %v537 = vpop.permute.xlu0 %536
    %538 = vrot.lane.b32.xlu0 %v402, 4
    %v539 = vpop.permute.xlu0 %538
    %540 = vrot.lane.b32.xlu0 %v403, 4
    %v541 = vpop.permute.xlu0 %540
    %542 = vrot.lane.b32.xlu0 %v404, 4
    %v543 = vpop.permute.xlu0 %542
    %544 = vrot.lane.b32.xlu0 %v405, 4
    %v545 = vpop.permute.xlu0 %544
    %546 = vrot.lane.b32.xlu0 %v406, 4
    %v547 = vpop.permute.xlu0 %546
    %548 = vrot.lane.b32.xlu0 %v407, 4
    %v549 = vpop.permute.xlu0 %548
    %550 = vrot.lane.b32.xlu0 %v408, 4
    %v551 = vpop.permute.xlu0 %550
    %552 = vrot.lane.b32.xlu0 %v409, 4
    %v553 = vpop.permute.xlu0 %552
    %554 = vrot.lane.b32.xlu0 %v410, 4
    %v555 = vpop.permute.xlu0 %554
    %556 = vrot.lane.b32.xlu0 %v411, 4
    %v557 = vpop.permute.xlu0 %556
    %558 = vrot.lane.b32.xlu0 %v412, 4
    %v559 = vpop.permute.xlu0 %558
    %560 = vrot.lane.b32.xlu0 %v413, 4
    %v561 = vpop.permute.xlu0 %560
    %562 = vrot.lane.b32.xlu0 %v414, 4
    %v563 = vpop.permute.xlu0 %562
    %564 = vrot.lane.b32.xlu0 %v415, 4
    %v565 = vpop.permute.xlu0 %564
    %566 = vrot.lane.b32.xlu0 %v416, 4
    %v567 = vpop.permute.xlu0 %566
    %568 = vrot.lane.b32.xlu0 %v417, 4
    %v569 = vpop.permute.xlu0 %568
    %570 = vrot.lane.b32.xlu0 %v418, 4
    %v571 = vpop.permute.xlu0 %570
    %572 = vrot.lane.b32.xlu0 %v419, 4
    %v573 = vpop.permute.xlu0 %572
    %574 = vrot.lane.b32.xlu0 %v420, 4
    %v575 = vpop.permute.xlu0 %574
    %576 = vrot.lane.b32.xlu0 %v421, 4
    %v577 = vpop.permute.xlu0 %576
    %578 = vrot.lane.b32.xlu0 %v422, 4
    %v579 = vpop.permute.xlu0 %578
    %580 = vrot.lane.b32.xlu0 %v423, 4
    %v581 = vpop.permute.xlu0 %580
    %582 = vrot.lane.b32.xlu0 %v424, 4
    %v583 = vpop.permute.xlu0 %582
    %584 = vrot.lane.b32.xlu0 %v425, 4
    %v585 = vpop.permute.xlu0 %584
    %586 = vrot.lane.b32.xlu0 %v426, 4
    %v587 = vpop.permute.xlu0 %586
    %588 = vrot.lane.b32.xlu0 %v427, 4
    %v589 = vpop.permute.xlu0 %588
    %590 = vrot.lane.b32.xlu0 %v428, 4
    %v591 = vpop.permute.xlu0 %590
    %592 = vrot.lane.b32.xlu0 %v429, 4
    %v593 = vpop.permute.xlu0 %592
    %594 = vrot.lane.b32.xlu0 %v430, 4
    %v595 = vpop.permute.xlu0 %594
    %596 = vrot.lane.b32.xlu0 %v431, 4
    %v597 = vpop.permute.xlu0 %596
    %598 = vrot.lane.b32.xlu0 %v432, 4
    %v599 = vpop.permute.xlu0 %598
    %600 = vrot.lane.b32.xlu0 %v433, 4
    %v601 = vpop.permute.xlu0 %600
    %602 = vrot.lane.b32.xlu0 %v434, 4
    %v603 = vpop.permute.xlu0 %602
    %604 = vrot.lane.b32.xlu0 %v435, 4
    %v605 = vpop.permute.xlu0 %604
    %606 = vrot.lane.b32.xlu0 %v436, 4
    %v607 = vpop.permute.xlu0 %606
    %608 = vrot.lane.b32.xlu0 %v437, 4
    %v609 = vpop.permute.xlu0 %608
    %610 = vrot.lane.b32.xlu0 %v438, 4
    %v611 = vpop.permute.xlu0 %610
    %612 = vrot.lane.b32.xlu0 %v439, 4
    %v613 = vpop.permute.xlu0 %612
    %614 = vrot.lane.b32.xlu0 %v440, 4
    %v615 = vpop.permute.xlu0 %614
    %616 = vrot.lane.b32.xlu0 %v441, 4
    %v617 = vpop.permute.xlu0 %616
    %618 = vrot.lane.b32.xlu0 %v442, 4
    %v619 = vpop.permute.xlu0 %618
    %620 = vrot.lane.b32.xlu0 %v443, 4
    %v621 = vpop.permute.xlu0 %620
    %622 = vrot.lane.b32.xlu0 %v444, 4
    %v623 = vpop.permute.xlu0 %622
    %624 = vrot.lane.b32.xlu0 %v445, 4
    %v625 = vpop.permute.xlu0 %624
    %626 = vrot.lane.b32.xlu0 %v446, 4
    %v627 = vpop.permute.xlu0 %626
    %628 = vrot.lane.b32.xlu0 %v447, 4
    %v629 = vpop.permute.xlu0 %628
    %630 = vrot.lane.b32.xlu0 %v448, 4
    %v631 = vpop.permute.xlu0 %630
    %632 = vrot.lane.b32.xlu0 %v449, 4
    %v633 = vpop.permute.xlu0 %632
    %634 = vrot.lane.b32.xlu0 %v450, 4
    %v635 = vpop.permute.xlu0 %634
    %636 = vrot.lane.b32.xlu0 %v451, 4
    %v637 = vpop.permute.xlu0 %636
    %638 = vrot.lane.b32.xlu0 %v452, 4
    %v639 = vpop.permute.xlu0 %638
    %640 = vrot.lane.b32.xlu0 %v453, 4
    %v641 = vpop.permute.xlu0 %640
    %642 = vrot.lane.b32.xlu0 %v454, 4
    %v643 = vpop.permute.xlu0 %642
    %644 = vrot.lane.b32.xlu0 %v455, 4
    %v645 = vpop.permute.xlu0 %644
    %646 = vrot.lane.b32.xlu0 %v456, 4
    %v647 = vpop.permute.xlu0 %646
    %648 = vrot.lane.b32.xlu0 %v457, 4
    %v649 = vpop.permute.xlu0 %648
    %vm714 = vcmask 64544
    %715 = vst.msk [vmem:[#allocation4] sm:$0xff] %vm714, %v523
    %716 = vst.msk [vmem:[#allocation4 + $0x8] sm:$0xff] %vm714, %v525
    %717 = vst.msk [vmem:[#allocation4 + $0x10] sm:$0xff] %vm714, %v527
    %718 = vst.msk [vmem:[#allocation4 + $0x18] sm:$0xff] %vm714, %v529
    %719 = vst.msk [vmem:[#allocation4 + $0x20] sm:$0xff] %vm714, %v531
    %720 = vst.msk [vmem:[#allocation4 + $0x28] sm:$0xff] %vm714, %v533
    %721 = vst.msk [vmem:[#allocation4 + $0x30] sm:$0xff] %vm714, %v535
    %722 = vst.msk [vmem:[#allocation4 + $0x38] sm:$0xff] %vm714, %v537
    %723 = vst.msk [vmem:[#allocation4 + $0x40] sm:$0xff] %vm714, %v539
    %724 = vst.msk [vmem:[#allocation4 + $0x48] sm:$0xff] %vm714, %v541
    %725 = vst.msk [vmem:[#allocation4 + $0x50] sm:$0xff] %vm714, %v543
    %726 = vst.msk [vmem:[#allocation4 + $0x58] sm:$0xff] %vm714, %v545
    %727 = vst.msk [vmem:[#allocation4 + $0x60] sm:$0xff] %vm714, %v547
    %728 = vst.msk [vmem:[#allocation4 + $0x68] sm:$0xff] %vm714, %v549
    %729 = vst.msk [vmem:[#allocation4 + $0x70] sm:$0xff] %vm714, %v551
    %730 = vst.msk [vmem:[#allocation4 + $0x78] sm:$0xff] %vm714, %v553
    %731 = vst.msk [vmem:[#allocation4 + $0x80] sm:$0xff] %vm714, %v555
    %732 = vst.msk [vmem:[#allocation4 + $0x88] sm:$0xff] %vm714, %v557
    %733 = vst.msk [vmem:[#allocation4 + $0x90] sm:$0xff] %vm714, %v559
    %734 = vst.msk [vmem:[#allocation4 + $0x98] sm:$0xff] %vm714, %v561
    %735 = vst.msk [vmem:[#allocation4 + $0xa0] sm:$0xff] %vm714, %v563
    %736 = vst.msk [vmem:[#allocation4 + $0xa8] sm:$0xff] %vm714, %v565
    %737 = vst.msk [vmem:[#allocation4 + $0xb0] sm:$0xff] %vm714, %v567
    %738 = vst.msk [vmem:[#allocation4 + $0xb8] sm:$0xff] %vm714, %v569
    %739 = vst.msk [vmem:[#allocation4 + $0xc0] sm:$0xff] %vm714, %v571
    %740 = vst.msk [vmem:[#allocation4 + $0xc8] sm:$0xff] %vm714, %v573
    %741 = vst.msk [vmem:[#allocation4 + $0xd0] sm:$0xff] %vm714, %v575
    %742 = vst.msk [vmem:[#allocation4 + $0xd8] sm:$0xff] %vm714, %v577
    %743 = vst.msk [vmem:[#allocation4 + $0xe0] sm:$0xff] %vm714, %v579
    %744 = vst.msk [vmem:[#allocation4 + $0xe8] sm:$0xff] %vm714, %v581
    %745 = vst.msk [vmem:[#allocation4 + $0xf0] sm:$0xff] %vm714, %v583
    %746 = vst.msk [vmem:[#allocation4 + $0xf8] sm:$0xff] %vm714, %v585
    %747 = vst.msk [vmem:[#allocation4 + $0x100] sm:$0xff] %vm714, %v587
    %748 = vst.msk [vmem:[#allocation4 + $0x108] sm:$0xff] %vm714, %v589
    %749 = vst.msk [vmem:[#allocation4 + $0x110] sm:$0xff] %vm714, %v591
    %750 = vst.msk [vmem:[#allocation4 + $0x118] sm:$0xff] %vm714, %v593
    %751 = vst.msk [vmem:[#allocation4 + $0x120] sm:$0xff] %vm714, %v595
    %752 = vst.msk [vmem:[#allocation4 + $0x128] sm:$0xff] %vm714, %v597
    %753 = vst.msk [vmem:[#allocation4 + $0x130] sm:$0xff] %vm714, %v599
    %754 = vst.msk [vmem:[#allocation4 + $0x138] sm:$0xff] %vm714, %v601
    %755 = vst.msk [vmem:[#allocation4 + $0x140] sm:$0xff] %vm714, %v603
    %756 = vst.msk [vmem:[#allocation4 + $0x148] sm:$0xff] %vm714, %v605
    %757 = vst.msk [vmem:[#allocation4 + $0x150] sm:$0xff] %vm714, %v607
    %758 = vst.msk [vmem:[#allocation4 + $0x158] sm:$0xff] %vm714, %v609
    %759 = vst.msk [vmem:[#allocation4 + $0x160] sm:$0xff] %vm714, %v611
    %760 = vst.msk [vmem:[#allocation4 + $0x168] sm:$0xff] %vm714, %v613
    %761 = vst.msk [vmem:[#allocation4 + $0x170] sm:$0xff] %vm714, %v615
    %762 = vst.msk [vmem:[#allocation4 + $0x178] sm:$0xff] %vm714, %v617
    %763 = vst.msk [vmem:[#allocation4 + $0x180] sm:$0xff] %vm714, %v619
    %764 = vst.msk [vmem:[#allocation4 + $0x188] sm:$0xff] %vm714, %v621
    %765 = vst.msk [vmem:[#allocation4 + $0x190] sm:$0xff] %vm714, %v623
    %766 = vst.msk [vmem:[#allocation4 + $0x198] sm:$0xff] %vm714, %v625
    %767 = vst.msk [vmem:[#allocation4 + $0x1a0] sm:$0xff] %vm714, %v627
    %768 = vst.msk [vmem:[#allocation4 + $0x1a8] sm:$0xff] %vm714, %v629
    %769 = vst.msk [vmem:[#allocation4 + $0x1b0] sm:$0xff] %vm714, %v631
    %770 = vst.msk [vmem:[#allocation4 + $0x1b8] sm:$0xff] %vm714, %v633
    %771 = vst.msk [vmem:[#allocation4 + $0x1c0] sm:$0xff] %vm714, %v635
    %772 = vst.msk [vmem:[#allocation4 + $0x1c8] sm:$0xff] %vm714, %v637
    %773 = vst.msk [vmem:[#allocation4 + $0x1d0] sm:$0xff] %vm714, %v639
    %774 = vst.msk [vmem:[#allocation4 + $0x1d8] sm:$0xff] %vm714, %v641
    %775 = vst.msk [vmem:[#allocation4 + $0x1e0] sm:$0xff] %vm714, %v643
    %776 = vst.msk [vmem:[#allocation4 + $0x1e8] sm:$0xff] %vm714, %v645
    %777 = vst.msk [vmem:[#allocation4 + $0x1f0] sm:$0xff] %vm714, %v647
    %778 = vst.msk [vmem:[#allocation4 + $0x1f8] sm:$0xff] %vm714, %v649
    %v779 = vld [vmem:[#allocation2 + $0x2] sm:$0xff]
    %v780 = vld [vmem:[#allocation2 + $0xa] sm:$0xff]
    %v781 = vld [vmem:[#allocation2 + $0x1a] sm:$0xff]
    %v782 = vld [vmem:[#allocation2 + $0x22] sm:$0xff]
    %v783 = vld [vmem:[#allocation2 + $0x32] sm:$0xff]
    %v784 = vld [vmem:[#allocation2 + $0x3a] sm:$0xff]
    %v785 = vld [vmem:[#allocation2 + $0x4a] sm:$0xff]
    %v786 = vld [vmem:[#allocation2 + $0x52] sm:$0xff]
    %v787 = vld [vmem:[#allocation2 + $0x62] sm:$0xff]
    %v788 = vld [vmem:[#allocation2 + $0x6a] sm:$0xff]
    %v789 = vld [vmem:[#allocation2 + $0x7a] sm:$0xff]
    %v790 = vld [vmem:[#allocation2 + $0x82] sm:$0xff]
    %v791 = vld [vmem:[#allocation2 + $0x92] sm:$0xff]
    %v792 = vld [vmem:[#allocation2 + $0x9a] sm:$0xff]
    %v793 = vld [vmem:[#allocation2 + $0xaa] sm:$0xff]
    %v794 = vld [vmem:[#allocation2 + $0xb2] sm:$0xff]
    %v795 = vld [vmem:[#allocation2 + $0xc2] sm:$0xff]
    %v796 = vld [vmem:[#allocation2 + $0xca] sm:$0xff]
    %v797 = vld [vmem:[#allocation2 + $0xda] sm:$0xff]
    %v798 = vld [vmem:[#allocation2 + $0xe2] sm:$0xff]
    %v799 = vld [vmem:[#allocation2 + $0xf2] sm:$0xff]
    %v800 = vld [vmem:[#allocation2 + $0xfa] sm:$0xff]
    %v801 = vld [vmem:[#allocation2 + $0x10a] sm:$0xff]
    %v802 = vld [vmem:[#allocation2 + $0x112] sm:$0xff]
    %v803 = vld [vmem:[#allocation2 + $0x122] sm:$0xff]
    %v804 = vld [vmem:[#allocation2 + $0x12a] sm:$0xff]
    %v805 = vld [vmem:[#allocation2 + $0x13a] sm:$0xff]
    %v806 = vld [vmem:[#allocation2 + $0x142] sm:$0xff]
    %v807 = vld [vmem:[#allocation2 + $0x152] sm:$0xff]
    %v808 = vld [vmem:[#allocation2 + $0x15a] sm:$0xff]
    %v809 = vld [vmem:[#allocation2 + $0x16a] sm:$0xff]
    %v810 = vld [vmem:[#allocation2 + $0x172] sm:$0xff]
    %v811 = vld [vmem:[#allocation2 + $0x1b2] sm:$0xff]
    %v812 = vld [vmem:[#allocation2 + $0x1ba] sm:$0xff]
    %v813 = vld [vmem:[#allocation2 + $0x1ca] sm:$0xff]
    %v814 = vld [vmem:[#allocation2 + $0x1d2] sm:$0xff]
    %v815 = vld [vmem:[#allocation2 + $0x1e2] sm:$0xff]
    %v816 = vld [vmem:[#allocation2 + $0x1ea] sm:$0xff]
    %v817 = vld [vmem:[#allocation2 + $0x1fa] sm:$0xff]
    %v818 = vld [vmem:[#allocation2 + $0x202] sm:$0xff]
    %v819 = vld [vmem:[#allocation2 + $0x212] sm:$0xff]
    %v820 = vld [vmem:[#allocation2 + $0x21a] sm:$0xff]
    %v821 = vld [vmem:[#allocation2 + $0x22a] sm:$0xff]
    %v822 = vld [vmem:[#allocation2 + $0x232] sm:$0xff]
    %v823 = vld [vmem:[#allocation2 + $0x242] sm:$0xff]
    %v824 = vld [vmem:[#allocation2 + $0x24a] sm:$0xff]
    %v825 = vld [vmem:[#allocation2 + $0x25a] sm:$0xff]
    %v826 = vld [vmem:[#allocation2 + $0x262] sm:$0xff]
    %v827 = vld [vmem:[#allocation2 + $0x272] sm:$0xff]
    %v828 = vld [vmem:[#allocation2 + $0x27a] sm:$0xff]
    %v829 = vld [vmem:[#allocation2 + $0x28a] sm:$0xff]
    %v830 = vld [vmem:[#allocation2 + $0x292] sm:$0xff]
    %v831 = vld [vmem:[#allocation2 + $0x2a2] sm:$0xff]
    %v832 = vld [vmem:[#allocation2 + $0x2aa] sm:$0xff]
    %v833 = vld [vmem:[#allocation2 + $0x2ba] sm:$0xff]
    %v834 = vld [vmem:[#allocation2 + $0x2c2] sm:$0xff]
    %v835 = vld [vmem:[#allocation2 + $0x2d2] sm:$0xff]
    %v836 = vld [vmem:[#allocation2 + $0x2da] sm:$0xff]
    %v837 = vld [vmem:[#allocation2 + $0x2ea] sm:$0xff]
    %v838 = vld [vmem:[#allocation2 + $0x2f2] sm:$0xff]
    %v839 = vld [vmem:[#allocation2 + $0x302] sm:$0xff]
    %v840 = vld [vmem:[#allocation2 + $0x30a] sm:$0xff]
    %v841 = vld [vmem:[#allocation2 + $0x31a] sm:$0xff]
    %v842 = vld [vmem:[#allocation2 + $0x322] sm:$0xff]
    %907 = vrot.lane.b32.xlu0 %v779, 8
    %v908 = vpop.permute.xlu0 %907
    %909 = vrot.lane.b32.xlu0 %v780, 8
    %v910 = vpop.permute.xlu0 %909
    %911 = vrot.lane.b32.xlu0 %v781, 8
    %v912 = vpop.permute.xlu0 %911
    %913 = vrot.lane.b32.xlu0 %v782, 8
    %v914 = vpop.permute.xlu0 %913
    %915 = vrot.lane.b32.xlu0 %v783, 8
    %v916 = vpop.permute.xlu0 %915
    %917 = vrot.lane.b32.xlu0 %v784, 8
    %v918 = vpop.permute.xlu0 %917
    %919 = vrot.lane.b32.xlu0 %v785, 8
    %v920 = vpop.permute.xlu0 %919
    %921 = vrot.lane.b32.xlu0 %v786, 8
    %v922 = vpop.permute.xlu0 %921
    %923 = vrot.lane.b32.xlu0 %v787, 8
    %v924 = vpop.permute.xlu0 %923
    %925 = vrot.lane.b32.xlu0 %v788, 8
    %v926 = vpop.permute.xlu0 %925
    %927 = vrot.lane.b32.xlu0 %v789, 8
    %v928 = vpop.permute.xlu0 %927
    %929 = vrot.lane.b32.xlu0 %v790, 8
    %v930 = vpop.permute.xlu0 %929
    %931 = vrot.lane.b32.xlu0 %v791, 8
    %v932 = vpop.permute.xlu0 %931
    %933 = vrot.lane.b32.xlu0 %v792, 8
    %v934 = vpop.permute.xlu0 %933
    %935 = vrot.lane.b32.xlu0 %v793, 8
    %v936 = vpop.permute.xlu0 %935
    %937 = vrot.lane.b32.xlu0 %v794, 8
    %v938 = vpop.permute.xlu0 %937
    %939 = vrot.lane.b32.xlu0 %v795, 8
    %v940 = vpop.permute.xlu0 %939
    %941 = vrot.lane.b32.xlu0 %v796, 8
    %v942 = vpop.permute.xlu0 %941
    %943 = vrot.lane.b32.xlu0 %v797, 8
    %v944 = vpop.permute.xlu0 %943
    %945 = vrot.lane.b32.xlu0 %v798, 8
    %v946 = vpop.permute.xlu0 %945
    %947 = vrot.lane.b32.xlu0 %v799, 8
    %v948 = vpop.permute.xlu0 %947
    %949 = vrot.lane.b32.xlu0 %v800, 8
    %v950 = vpop.permute.xlu0 %949
    %951 = vrot.lane.b32.xlu0 %v801, 8
    %v952 = vpop.permute.xlu0 %951
    %953 = vrot.lane.b32.xlu0 %v802, 8
    %v954 = vpop.permute.xlu0 %953
    %955 = vrot.lane.b32.xlu0 %v803, 8
    %v956 = vpop.permute.xlu0 %955
    %957 = vrot.lane.b32.xlu0 %v804, 8
    %v958 = vpop.permute.xlu0 %957
    %959 = vrot.lane.b32.xlu0 %v805, 8
    %v960 = vpop.permute.xlu0 %959
    %961 = vrot.lane.b32.xlu0 %v806, 8
    %v962 = vpop.permute.xlu0 %961
    %963 = vrot.lane.b32.xlu0 %v807, 8
    %v964 = vpop.permute.xlu0 %963
    %965 = vrot.lane.b32.xlu0 %v808, 8
    %v966 = vpop.permute.xlu0 %965
    %967 = vrot.lane.b32.xlu0 %v809, 8
    %v968 = vpop.permute.xlu0 %967
    %969 = vrot.lane.b32.xlu0 %v810, 8
    %v970 = vpop.permute.xlu0 %969
    %971 = vrot.lane.b32.xlu0 %v811, 8
    %v972 = vpop.permute.xlu0 %971
    %973 = vrot.lane.b32.xlu0 %v812, 8
    %v974 = vpop.permute.xlu0 %973
    %975 = vrot.lane.b32.xlu0 %v813, 8
    %v976 = vpop.permute.xlu0 %975
    %977 = vrot.lane.b32.xlu0 %v814, 8
    %v978 = vpop.permute.xlu0 %977
    %979 = vrot.lane.b32.xlu0 %v815, 8
    %v980 = vpop.permute.xlu0 %979
    %981 = vrot.lane.b32.xlu0 %v816, 8
    %v982 = vpop.permute.xlu0 %981
    %983 = vrot.lane.b32.xlu0 %v817, 8
    %v984 = vpop.permute.xlu0 %983
    %985 = vrot.lane.b32.xlu0 %v818, 8
    %v986 = vpop.permute.xlu0 %985
    %987 = vrot.lane.b32.xlu0 %v819, 8
    %v988 = vpop.permute.xlu0 %987
    %989 = vrot.lane.b32.xlu0 %v820, 8
    %v990 = vpop.permute.xlu0 %989
    %991 = vrot.lane.b32.xlu0 %v821, 8
    %v992 = vpop.permute.xlu0 %991
    %993 = vrot.lane.b32.xlu0 %v822, 8
    %v994 = vpop.permute.xlu0 %993
    %995 = vrot.lane.b32.xlu0 %v823, 8
    %v996 = vpop.permute.xlu0 %995
    %997 = vrot.lane.b32.xlu0 %v824, 8
    %v998 = vpop.permute.xlu0 %997
    %999 = vrot.lane.b32.xlu0 %v825, 8
    %v1000 = vpop.permute.xlu0 %999
    %1001 = vrot.lane.b32.xlu0 %v826, 8
    %v1002 = vpop.permute.xlu0 %1001
    %1003 = vrot.lane.b32.xlu0 %v827, 8
    %v1004 = vpop.permute.xlu0 %1003
    %1005 = vrot.lane.b32.xlu0 %v828, 8
    %v1006 = vpop.permute.xlu0 %1005
    %1007 = vrot.lane.b32.xlu0 %v829, 8
    %v1008 = vpop.permute.xlu0 %1007
    %1009 = vrot.lane.b32.xlu0 %v830, 8
    %v1010 = vpop.permute.xlu0 %1009
    %1011 = vrot.lane.b32.xlu0 %v831, 8
    %v1012 = vpop.permute.xlu0 %1011
    %1013 = vrot.lane.b32.xlu0 %v832, 8
    %v1014 = vpop.permute.xlu0 %1013
    %1015 = vrot.lane.b32.xlu0 %v833, 8
    %v1016 = vpop.permute.xlu0 %1015
    %1017 = vrot.lane.b32.xlu0 %v834, 8
    %v1018 = vpop.permute.xlu0 %1017
    %1019 = vrot.lane.b32.xlu0 %v835, 8
    %v1020 = vpop.permute.xlu0 %1019
    %1021 = vrot.lane.b32.xlu0 %v836, 8
    %v1022 = vpop.permute.xlu0 %1021
    %1023 = vrot.lane.b32.xlu0 %v837, 8
    %v1024 = vpop.permute.xlu0 %1023
    %1025 = vrot.lane.b32.xlu0 %v838, 8
    %v1026 = vpop.permute.xlu0 %1025
    %1027 = vrot.lane.b32.xlu0 %v839, 8
    %v1028 = vpop.permute.xlu0 %1027
    %1029 = vrot.lane.b32.xlu0 %v840, 8
    %v1030 = vpop.permute.xlu0 %1029
    %1031 = vrot.lane.b32.xlu0 %v841, 8
    %v1032 = vpop.permute.xlu0 %1031
    %1033 = vrot.lane.b32.xlu0 %v842, 8
    %v1034 = vpop.permute.xlu0 %1033
    %vm1099 = vcmask 97344
    %1100 = vst.msk [vmem:[#allocation4] sm:$0xff] %vm1099, %v908
    %1101 = vst.msk [vmem:[#allocation4 + $0x8] sm:$0xff] %vm1099, %v910
    %1102 = vst.msk [vmem:[#allocation4 + $0x10] sm:$0xff] %vm1099, %v912
    %1103 = vst.msk [vmem:[#allocation4 + $0x18] sm:$0xff] %vm1099, %v914
    %1104 = vst.msk [vmem:[#allocation4 + $0x20] sm:$0xff] %vm1099, %v916
    %1105 = vst.msk [vmem:[#allocation4 + $0x28] sm:$0xff] %vm1099, %v918
    %1106 = vst.msk [vmem:[#allocation4 + $0x30] sm:$0xff] %vm1099, %v920
    %1107 = vst.msk [vmem:[#allocation4 + $0x38] sm:$0xff] %vm1099, %v922
    %1108 = vst.msk [vmem:[#allocation4 + $0x40] sm:$0xff] %vm1099, %v924
    %1109 = vst.msk [vmem:[#allocation4 + $0x48] sm:$0xff] %vm1099, %v926
    %1110 = vst.msk [vmem:[#allocation4 + $0x50] sm:$0xff] %vm1099, %v928
    %1111 = vst.msk [vmem:[#allocation4 + $0x58] sm:$0xff] %vm1099, %v930
    %1112 = vst.msk [vmem:[#allocation4 + $0x60] sm:$0xff] %vm1099, %v932
    %1113 = vst.msk [vmem:[#allocation4 + $0x68] sm:$0xff] %vm1099, %v934
    %1114 = vst.msk [vmem:[#allocation4 + $0x70] sm:$0xff] %vm1099, %v936
    %1115 = vst.msk [vmem:[#allocation4 + $0x78] sm:$0xff] %vm1099, %v938
    %1116 = vst.msk [vmem:[#allocation4 + $0x80] sm:$0xff] %vm1099, %v940
    %1117 = vst.msk [vmem:[#allocation4 + $0x88] sm:$0xff] %vm1099, %v942
    %1118 = vst.msk [vmem:[#allocation4 + $0x90] sm:$0xff] %vm1099, %v944
    %1119 = vst.msk [vmem:[#allocation4 + $0x98] sm:$0xff] %vm1099, %v946
    %1120 = vst.msk [vmem:[#allocation4 + $0xa0] sm:$0xff] %vm1099, %v948
    %1121 = vst.msk [vmem:[#allocation4 + $0xa8] sm:$0xff] %vm1099, %v950
    %1122 = vst.msk [vmem:[#allocation4 + $0xb0] sm:$0xff] %vm1099, %v952
    %1123 = vst.msk [vmem:[#allocation4 + $0xb8] sm:$0xff] %vm1099, %v954
    %1124 = vst.msk [vmem:[#allocation4 + $0xc0] sm:$0xff] %vm1099, %v956
    %1125 = vst.msk [vmem:[#allocation4 + $0xc8] sm:$0xff] %vm1099, %v958
    %1126 = vst.msk [vmem:[#allocation4 + $0xd0] sm:$0xff] %vm1099, %v960
    %1127 = vst.msk [vmem:[#allocation4 + $0xd8] sm:$0xff] %vm1099, %v962
    %1128 = vst.msk [vmem:[#allocation4 + $0xe0] sm:$0xff] %vm1099, %v964
    %1129 = vst.msk [vmem:[#allocation4 + $0xe8] sm:$0xff] %vm1099, %v966
    %1130 = vst.msk [vmem:[#allocation4 + $0xf0] sm:$0xff] %vm1099, %v968
    %1131 = vst.msk [vmem:[#allocation4 + $0xf8] sm:$0xff] %vm1099, %v970
    %1132 = vst.msk [vmem:[#allocation4 + $0x100] sm:$0xff] %vm1099, %v972
    %1133 = vst.msk [vmem:[#allocation4 + $0x108] sm:$0xff] %vm1099, %v974
    %1134 = vst.msk [vmem:[#allocation4 + $0x110] sm:$0xff] %vm1099, %v976
    %1135 = vst.msk [vmem:[#allocation4 + $0x118] sm:$0xff] %vm1099, %v978
    %1136 = vst.msk [vmem:[#allocation4 + $0x120] sm:$0xff] %vm1099, %v980
    %1137 = vst.msk [vmem:[#allocation4 + $0x128] sm:$0xff] %vm1099, %v982
    %1138 = vst.msk [vmem:[#allocation4 + $0x130] sm:$0xff] %vm1099, %v984
    %1139 = vst.msk [vmem:[#allocation4 + $0x138] sm:$0xff] %vm1099, %v986
    %1140 = vst.msk [vmem:[#allocation4 + $0x140] sm:$0xff] %vm1099, %v988
    %1141 = vst.msk [vmem:[#allocation4 + $0x148] sm:$0xff] %vm1099, %v990
    %1142 = vst.msk [vmem:[#allocation4 + $0x150] sm:$0xff] %vm1099, %v992
    %1143 = vst.msk [vmem:[#allocation4 + $0x158] sm:$0xff] %vm1099, %v994
    %1144 = vst.msk [vmem:[#allocation4 + $0x160] sm:$0xff] %vm1099, %v996
    %1145 = vst.msk [vmem:[#allocation4 + $0x168] sm:$0xff] %vm1099, %v998
    %1146 = vst.msk [vmem:[#allocation4 + $0x170] sm:$0xff] %vm1099, %v1000
    %1147 = vst.msk [vmem:[#allocation4 + $0x178] sm:$0xff] %vm1099, %v1002
    %1148 = vst.msk [vmem:[#allocation4 + $0x180] sm:$0xff] %vm1099, %v1004
    %1149 = vst.msk [vmem:[#allocation4 + $0x188] sm:$0xff] %vm1099, %v1006
    %1150 = vst.msk [vmem:[#allocation4 + $0x190] sm:$0xff] %vm1099, %v1008
    %1151 = vst.msk [vmem:[#allocation4 + $0x198] sm:$0xff] %vm1099, %v1010
    %1152 = vst.msk [vmem:[#allocation4 + $0x1a0] sm:$0xff] %vm1099, %v1012
    %1153 = vst.msk [vmem:[#allocation4 + $0x1a8] sm:$0xff] %vm1099, %v1014
    %1154 = vst.msk [vmem:[#allocation4 + $0x1b0] sm:$0xff] %vm1099, %v1016
    %1155 = vst.msk [vmem:[#allocation4 + $0x1b8] sm:$0xff] %vm1099, %v1018
    %1156 = vst.msk [vmem:[#allocation4 + $0x1c0] sm:$0xff] %vm1099, %v1020
    %1157 = vst.msk [vmem:[#allocation4 + $0x1c8] sm:$0xff] %vm1099, %v1022
    %1158 = vst.msk [vmem:[#allocation4 + $0x1d0] sm:$0xff] %vm1099, %v1024
    %1159 = vst.msk [vmem:[#allocation4 + $0x1d8] sm:$0xff] %vm1099, %v1026
    %1160 = vst.msk [vmem:[#allocation4 + $0x1e0] sm:$0xff] %vm1099, %v1028
    %1161 = vst.msk [vmem:[#allocation4 + $0x1e8] sm:$0xff] %vm1099, %v1030
    %1162 = vst.msk [vmem:[#allocation4 + $0x1f0] sm:$0xff] %vm1099, %v1032
    %1163 = vst.msk [vmem:[#allocation4 + $0x1f8] sm:$0xff] %vm1099, %v1034
    %v1164 = vld [vmem:[%s201] sm:$0xff]
    %v1165 = vld [vmem:[%s201 + $0x8] sm:$0xff]
    %v1166 = vld [vmem:[%s201 + $0x18] sm:$0xff]
    %v1167 = vld [vmem:[%s201 + $0x20] sm:$0xff]
    %v1168 = vld [vmem:[%s201 + $0x30] sm:$0xff]
    %v1169 = vld [vmem:[%s201 + $0x38] sm:$0xff]
    %v1170 = vld [vmem:[%s201 + $0x48] sm:$0xff]
    %v1171 = vld [vmem:[%s201 + $0x50] sm:$0xff]
    %v1172 = vld [vmem:[%s201 + $0x60] sm:$0xff]
    %v1173 = vld [vmem:[%s201 + $0x68] sm:$0xff]
    %v1174 = vld [vmem:[%s201 + $0x78] sm:$0xff]
    %v1175 = vld [vmem:[%s201 + $0x80] sm:$0xff]
    %v1176 = vld [vmem:[%s201 + $0x90] sm:$0xff]
    %v1177 = vld [vmem:[%s201 + $0x98] sm:$0xff]
    %v1178 = vld [vmem:[%s201 + $0xa8] sm:$0xff]
    %v1179 = vld [vmem:[%s201 + $0xb0] sm:$0xff]
    %v1180 = vld [vmem:[%s201 + $0xc0] sm:$0xff]
    %v1181 = vld [vmem:[%s201 + $0xc8] sm:$0xff]
    %v1182 = vld [vmem:[%s201 + $0xd8] sm:$0xff]
    %v1183 = vld [vmem:[%s201 + $0xe0] sm:$0xff]
    %v1184 = vld [vmem:[%s201 + $0xf0] sm:$0xff]
    %v1185 = vld [vmem:[%s201 + $0xf8] sm:$0xff]
    %v1186 = vld [vmem:[%s201 + $0x108] sm:$0xff]
    %v1187 = vld [vmem:[%s201 + $0x110] sm:$0xff]
    %v1188 = vld [vmem:[%s201 + $0x120] sm:$0xff]
    %v1189 = vld [vmem:[%s201 + $0x128] sm:$0xff]
    %v1190 = vld [vmem:[%s201 + $0x138] sm:$0xff]
    %v1191 = vld [vmem:[%s201 + $0x140] sm:$0xff]
    %v1192 = vld [vmem:[%s201 + $0x150] sm:$0xff]
    %v1193 = vld [vmem:[%s201 + $0x158] sm:$0xff]
    %v1194 = vld [vmem:[%s201 + $0x168] sm:$0xff]
    %v1195 = vld [vmem:[%s201 + $0x170] sm:$0xff]
    %v1196 = vld [vmem:[%s201 + $0x1b0] sm:$0xff]
    %v1197 = vld [vmem:[%s201 + $0x1b8] sm:$0xff]
    %v1198 = vld [vmem:[%s201 + $0x1c8] sm:$0xff]
    %v1199 = vld [vmem:[%s201 + $0x1d0] sm:$0xff]
    %v1200 = vld [vmem:[%s201 + $0x1e0] sm:$0xff]
    %v1201 = vld [vmem:[%s201 + $0x1e8] sm:$0xff]
    %v1202 = vld [vmem:[%s201 + $0x1f8] sm:$0xff]
    %v1203 = vld [vmem:[%s201 + $0x200] sm:$0xff]
    %v1204 = vld [vmem:[%s201 + $0x210] sm:$0xff]
    %v1205 = vld [vmem:[%s201 + $0x218] sm:$0xff]
    %v1206 = vld [vmem:[%s201 + $0x228] sm:$0xff]
    %v1207 = vld [vmem:[%s201 + $0x230] sm:$0xff]
    %v1208 = vld [vmem:[%s201 + $0x240] sm:$0xff]
    %v1209 = vld [vmem:[%s201 + $0x248] sm:$0xff]
    %v1210 = vld [vmem:[%s201 + $0x258] sm:$0xff]
    %v1211 = vld [vmem:[%s201 + $0x260] sm:$0xff]
    %v1212 = vld [vmem:[%s201 + $0x270] sm:$0xff]
    %v1213 = vld [vmem:[%s201 + $0x278] sm:$0xff]
    %v1214 = vld [vmem:[%s201 + $0x288] sm:$0xff]
    %v1215 = vld [vmem:[%s201 + $0x290] sm:$0xff]
    %v1216 = vld [vmem:[%s201 + $0x2a0] sm:$0xff]
    %v1217 = vld [vmem:[%s201 + $0x2a8] sm:$0xff]
    %v1218 = vld [vmem:[%s201 + $0x2b8] sm:$0xff]
    %v1219 = vld [vmem:[%s201 + $0x2c0] sm:$0xff]
    %v1220 = vld [vmem:[%s201 + $0x2d0] sm:$0xff]
    %v1221 = vld [vmem:[%s201 + $0x2d8] sm:$0xff]
    %v1222 = vld [vmem:[%s201 + $0x2e8] sm:$0xff]
    %v1223 = vld [vmem:[%s201 + $0x2f0] sm:$0xff]
    %v1224 = vld [vmem:[%s201 + $0x300] sm:$0xff]
    %v1225 = vld [vmem:[%s201 + $0x308] sm:$0xff]
    %v1226 = vld [vmem:[%s201 + $0x318] sm:$0xff]
    %v1227 = vld [vmem:[%s201 + $0x320] sm:$0xff]
    %1292 = vrot.lane.b32.xlu0 %v1164, 12
    %v1293 = vpop.permute.xlu0 %1292
    %1294 = vrot.lane.b32.xlu0 %v1165, 12
    %v1295 = vpop.permute.xlu0 %1294
    %1296 = vrot.lane.b32.xlu0 %v1166, 12
    %v1297 = vpop.permute.xlu0 %1296
    %1298 = vrot.lane.b32.xlu0 %v1167, 12
    %v1299 = vpop.permute.xlu0 %1298
    %1300 = vrot.lane.b32.xlu0 %v1168, 12
    %v1301 = vpop.permute.xlu0 %1300
    %1302 = vrot.lane.b32.xlu0 %v1169, 12
    %v1303 = vpop.permute.xlu0 %1302
    %1304 = vrot.lane.b32.xlu0 %v1170, 12
    %v1305 = vpop.permute.xlu0 %1304
    %1306 = vrot.lane.b32.xlu0 %v1171, 12
    %v1307 = vpop.permute.xlu0 %1306
    %1308 = vrot.lane.b32.xlu0 %v1172, 12
    %v1309 = vpop.permute.xlu0 %1308
    %1310 = vrot.lane.b32.xlu0 %v1173, 12
    %v1311 = vpop.permute.xlu0 %1310
    %1312 = vrot.lane.b32.xlu0 %v1174, 12
    %v1313 = vpop.permute.xlu0 %1312
    %1314 = vrot.lane.b32.xlu0 %v1175, 12
    %v1315 = vpop.permute.xlu0 %1314
    %1316 = vrot.lane.b32.xlu0 %v1176, 12
    %v1317 = vpop.permute.xlu0 %1316
    %1318 = vrot.lane.b32.xlu0 %v1177, 12
    %v1319 = vpop.permute.xlu0 %1318
    %1320 = vrot.lane.b32.xlu0 %v1178, 12
    %v1321 = vpop.permute.xlu0 %1320
    %1322 = vrot.lane.b32.xlu0 %v1179, 12
    %v1323 = vpop.permute.xlu0 %1322
    %1324 = vrot.lane.b32.xlu0 %v1180, 12
    %v1325 = vpop.permute.xlu0 %1324
    %1326 = vrot.lane.b32.xlu0 %v1181, 12
    %v1327 = vpop.permute.xlu0 %1326
    %1328 = vrot.lane.b32.xlu0 %v1182, 12
    %v1329 = vpop.permute.xlu0 %1328
    %1330 = vrot.lane.b32.xlu0 %v1183, 12
    %v1331 = vpop.permute.xlu0 %1330
    %1332 = vrot.lane.b32.xlu0 %v1184, 12
    %v1333 = vpop.permute.xlu0 %1332
    %1334 = vrot.lane.b32.xlu0 %v1185, 12
    %v1335 = vpop.permute.xlu0 %1334
    %1336 = vrot.lane.b32.xlu0 %v1186, 12
    %v1337 = vpop.permute.xlu0 %1336
    %1338 = vrot.lane.b32.xlu0 %v1187, 12
    %v1339 = vpop.permute.xlu0 %1338
    %1340 = vrot.lane.b32.xlu0 %v1188, 12
    %v1341 = vpop.permute.xlu0 %1340
    %1342 = vrot.lane.b32.xlu0 %v1189, 12
    %v1343 = vpop.permute.xlu0 %1342
    %1344 = vrot.lane.b32.xlu0 %v1190, 12
    %v1345 = vpop.permute.xlu0 %1344
    %1346 = vrot.lane.b32.xlu0 %v1191, 12
    %v1347 = vpop.permute.xlu0 %1346
    %1348 = vrot.lane.b32.xlu0 %v1192, 12
    %v1349 = vpop.permute.xlu0 %1348
    %1350 = vrot.lane.b32.xlu0 %v1193, 12
    %v1351 = vpop.permute.xlu0 %1350
    %1352 = vrot.lane.b32.xlu0 %v1194, 12
    %v1353 = vpop.permute.xlu0 %1352
    %1354 = vrot.lane.b32.xlu0 %v1195, 12
    %v1355 = vpop.permute.xlu0 %1354
    %1356 = vrot.lane.b32.xlu0 %v1196, 12
    %v1357 = vpop.permute.xlu0 %1356
    %1358 = vrot.lane.b32.xlu0 %v1197, 12
    %v1359 = vpop.permute.xlu0 %1358
    %1360 = vrot.lane.b32.xlu0 %v1198, 12
    %v1361 = vpop.permute.xlu0 %1360
    %1362 = vrot.lane.b32.xlu0 %v1199, 12
    %v1363 = vpop.permute.xlu0 %1362
    %1364 = vrot.lane.b32.xlu0 %v1200, 12
    %v1365 = vpop.permute.xlu0 %1364
    %1366 = vrot.lane.b32.xlu0 %v1201, 12
    %v1367 = vpop.permute.xlu0 %1366
    %1368 = vrot.lane.b32.xlu0 %v1202, 12
    %v1369 = vpop.permute.xlu0 %1368
    %1370 = vrot.lane.b32.xlu0 %v1203, 12
    %v1371 = vpop.permute.xlu0 %1370
    %1372 = vrot.lane.b32.xlu0 %v1204, 12
    %v1373 = vpop.permute.xlu0 %1372
    %1374 = vrot.lane.b32.xlu0 %v1205, 12
    %v1375 = vpop.permute.xlu0 %1374
    %1376 = vrot.lane.b32.xlu0 %v1206, 12
    %v1377 = vpop.permute.xlu0 %1376
    %1378 = vrot.lane.b32.xlu0 %v1207, 12
    %v1379 = vpop.permute.xlu0 %1378
    %1380 = vrot.lane.b32.xlu0 %v1208, 12
    %v1381 = vpop.permute.xlu0 %1380
    %1382 = vrot.lane.b32.xlu0 %v1209, 12
    %v1383 = vpop.permute.xlu0 %1382
    %1384 = vrot.lane.b32.xlu0 %v1210, 12
    %v1385 = vpop.permute.xlu0 %1384
    %1386 = vrot.lane.b32.xlu0 %v1211, 12
    %v1387 = vpop.permute.xlu0 %1386
    %1388 = vrot.lane.b32.xlu0 %v1212, 12
    %v1389 = vpop.permute.xlu0 %1388
    %1390 = vrot.lane.b32.xlu0 %v1213, 12
    %v1391 = vpop.permute.xlu0 %1390
    %1392 = vrot.lane.b32.xlu0 %v1214, 12
    %v1393 = vpop.permute.xlu0 %1392
    %1394 = vrot.lane.b32.xlu0 %v1215, 12
    %v1395 = vpop.permute.xlu0 %1394
    %1396 = vrot.lane.b32.xlu0 %v1216, 12
    %v1397 = vpop.permute.xlu0 %1396
    %1398 = vrot.lane.b32.xlu0 %v1217, 12
    %v1399 = vpop.permute.xlu0 %1398
    %1400 = vrot.lane.b32.xlu0 %v1218, 12
    %v1401 = vpop.permute.xlu0 %1400
    %1402 = vrot.lane.b32.xlu0 %v1219, 12
    %v1403 = vpop.permute.xlu0 %1402
    %1404 = vrot.lane.b32.xlu0 %v1220, 12
    %v1405 = vpop.permute.xlu0 %1404
    %1406 = vrot.lane.b32.xlu0 %v1221, 12
    %v1407 = vpop.permute.xlu0 %1406
    %1408 = vrot.lane.b32.xlu0 %v1222, 12
    %v1409 = vpop.permute.xlu0 %1408
    %1410 = vrot.lane.b32.xlu0 %v1223, 12
    %v1411 = vpop.permute.xlu0 %1410
    %1412 = vrot.lane.b32.xlu0 %v1224, 12
    %v1413 = vpop.permute.xlu0 %1412
    %1414 = vrot.lane.b32.xlu0 %v1225, 12
    %v1415 = vpop.permute.xlu0 %1414
    %1416 = vrot.lane.b32.xlu0 %v1226, 12
    %v1417 = vpop.permute.xlu0 %1416
    %1418 = vrot.lane.b32.xlu0 %v1227, 12
    %v1419 = vpop.permute.xlu0 %1418
    %vm1484 = vcmask 130144
    %1485 = vst.msk [vmem:[#allocation4] sm:$0xff] %vm1484, %v1293
    %1486 = vst.msk [vmem:[#allocation4 + $0x8] sm:$0xff] %vm1484, %v1295
    %1487 = vst.msk [vmem:[#allocation4 + $0x10] sm:$0xff] %vm1484, %v1297
    %1488 = vst.msk [vmem:[#allocation4 + $0x18] sm:$0xff] %vm1484, %v1299
    %1489 = vst.msk [vmem:[#allocation4 + $0x20] sm:$0xff] %vm1484, %v1301
    %1490 = vst.msk [vmem:[#allocation4 + $0x28] sm:$0xff] %vm1484, %v1303
    %1491 = vst.msk [vmem:[#allocation4 + $0x30] sm:$0xff] %vm1484, %v1305
    %1492 = vst.msk [vmem:[#allocation4 + $0x38] sm:$0xff] %vm1484, %v1307
    %1493 = vst.msk [vmem:[#allocation4 + $0x40] sm:$0xff] %vm1484, %v1309
    %1494 = vst.msk [vmem:[#allocation4 + $0x48] sm:$0xff] %vm1484, %v1311
    %1495 = vst.msk [vmem:[#allocation4 + $0x50] sm:$0xff] %vm1484, %v1313
    %1496 = vst.msk [vmem:[#allocation4 + $0x58] sm:$0xff] %vm1484, %v1315
    %1497 = vst.msk [vmem:[#allocation4 + $0x60] sm:$0xff] %vm1484, %v1317
    %1498 = vst.msk [vmem:[#allocation4 + $0x68] sm:$0xff] %vm1484, %v1319
    %1499 = vst.msk [vmem:[#allocation4 + $0x70] sm:$0xff] %vm1484, %v1321
    %1500 = vst.msk [vmem:[#allocation4 + $0x78] sm:$0xff] %vm1484, %v1323
    %1501 = vst.msk [vmem:[#allocation4 + $0x80] sm:$0xff] %vm1484, %v1325
    %1502 = vst.msk [vmem:[#allocation4 + $0x88] sm:$0xff] %vm1484, %v1327
    %1503 = vst.msk [vmem:[#allocation4 + $0x90] sm:$0xff] %vm1484, %v1329
    %1504 = vst.msk [vmem:[#allocation4 + $0x98] sm:$0xff] %vm1484, %v1331
    %1505 = vst.msk [vmem:[#allocation4 + $0xa0] sm:$0xff] %vm1484, %v1333
    %1506 = vst.msk [vmem:[#allocation4 + $0xa8] sm:$0xff] %vm1484, %v1335
    %1507 = vst.msk [vmem:[#allocation4 + $0xb0] sm:$0xff] %vm1484, %v1337
    %1508 = vst.msk [vmem:[#allocation4 + $0xb8] sm:$0xff] %vm1484, %v1339
    %1509 = vst.msk [vmem:[#allocation4 + $0xc0] sm:$0xff] %vm1484, %v1341
    %1510 = vst.msk [vmem:[#allocation4 + $0xc8] sm:$0xff] %vm1484, %v1343
    %1511 = vst.msk [vmem:[#allocation4 + $0xd0] sm:$0xff] %vm1484, %v1345
    %1512 = vst.msk [vmem:[#allocation4 + $0xd8] sm:$0xff] %vm1484, %v1347
    %1513 = vst.msk [vmem:[#allocation4 + $0xe0] sm:$0xff] %vm1484, %v1349
    %1514 = vst.msk [vmem:[#allocation4 + $0xe8] sm:$0xff] %vm1484, %v1351
    %1515 = vst.msk [vmem:[#allocation4 + $0xf0] sm:$0xff] %vm1484, %v1353
    %1516 = vst.msk [vmem:[#allocation4 + $0xf8] sm:$0xff] %vm1484, %v1355
    %1517 = vst.msk [vmem:[#allocation4 + $0x100] sm:$0xff] %vm1484, %v1357
    %1518 = vst.msk [vmem:[#allocation4 + $0x108] sm:$0xff] %vm1484, %v1359
    %1519 = vst.msk [vmem:[#allocation4 + $0x110] sm:$0xff] %vm1484, %v1361
    %1520 = vst.msk [vmem:[#allocation4 + $0x118] sm:$0xff] %vm1484, %v1363
    %1521 = vst.msk [vmem:[#allocation4 + $0x120] sm:$0xff] %vm1484, %v1365
    %1522 = vst.msk [vmem:[#allocation4 + $0x128] sm:$0xff] %vm1484, %v1367
    %1523 = vst.msk [vmem:[#allocation4 + $0x130] sm:$0xff] %vm1484, %v1369
    %1524 = vst.msk [vmem:[#allocation4 + $0x138] sm:$0xff] %vm1484, %v1371
    %1525 = vst.msk [vmem:[#allocation4 + $0x140] sm:$0xff] %vm1484, %v1373
    %1526 = vst.msk [vmem:[#allocation4 + $0x148] sm:$0xff] %vm1484, %v1375
    %1527 = vst.msk [vmem:[#allocation4 + $0x150] sm:$0xff] %vm1484, %v1377
    %1528 = vst.msk [vmem:[#allocation4 + $0x158] sm:$0xff] %vm1484, %v1379
    %1529 = vst.msk [vmem:[#allocation4 + $0x160] sm:$0xff] %vm1484, %v1381
    %1530 = vst.msk [vmem:[#allocation4 + $0x168] sm:$0xff] %vm1484, %v1383
    %1531 = vst.msk [vmem:[#allocation4 + $0x170] sm:$0xff] %vm1484, %v1385
    %1532 = vst.msk [vmem:[#allocation4 + $0x178] sm:$0xff] %vm1484, %v1387
    %1533 = vst.msk [vmem:[#allocation4 + $0x180] sm:$0xff] %vm1484, %v1389
    %1534 = vst.msk [vmem:[#allocation4 + $0x188] sm:$0xff] %vm1484, %v1391
    %1535 = vst.msk [vmem:[#allocation4 + $0x190] sm:$0xff] %vm1484, %v1393
    %1536 = vst.msk [vmem:[#allocation4 + $0x198] sm:$0xff] %vm1484, %v1395
    %1537 = vst.msk [vmem:[#allocation4 + $0x1a0] sm:$0xff] %vm1484, %v1397
    %1538 = vst.msk [vmem:[#allocation4 + $0x1a8] sm:$0xff] %vm1484, %v1399
    %1539 = vst.msk [vmem:[#allocation4 + $0x1b0] sm:$0xff] %vm1484, %v1401
    %1540 = vst.msk [vmem:[#allocation4 + $0x1b8] sm:$0xff] %vm1484, %v1403
    %1541 = vst.msk [vmem:[#allocation4 + $0x1c0] sm:$0xff] %vm1484, %v1405
    %1542 = vst.msk [vmem:[#allocation4 + $0x1c8] sm:$0xff] %vm1484, %v1407
    %1543 = vst.msk [vmem:[#allocation4 + $0x1d0] sm:$0xff] %vm1484, %v1409
    %1544 = vst.msk [vmem:[#allocation4 + $0x1d8] sm:$0xff] %vm1484, %v1411
    %1545 = vst.msk [vmem:[#allocation4 + $0x1e0] sm:$0xff] %vm1484, %v1413
    %1546 = vst.msk [vmem:[#allocation4 + $0x1e8] sm:$0xff] %vm1484, %v1415
    %1547 = vst.msk [vmem:[#allocation4 + $0x1f0] sm:$0xff] %vm1484, %v1417
    %1548 = vst.msk [vmem:[#allocation4 + $0x1f8] sm:$0xff] %vm1484, %v1419
    %v1549 = vld [vmem:[%s201 + $0x1] sm:$0xff]
    %v1550 = vld [vmem:[%s201 + $0x9] sm:$0xff]
    %v1551 = vld [vmem:[%s201 + $0x19] sm:$0xff]
    %v1552 = vld [vmem:[%s201 + $0x21] sm:$0xff]
    %v1553 = vld [vmem:[%s201 + $0x31] sm:$0xff]
    %v1554 = vld [vmem:[%s201 + $0x39] sm:$0xff]
    %v1555 = vld [vmem:[%s201 + $0x49] sm:$0xff]
    %v1556 = vld [vmem:[%s201 + $0x51] sm:$0xff]
    %v1557 = vld [vmem:[%s201 + $0x61] sm:$0xff]
    %v1558 = vld [vmem:[%s201 + $0x69] sm:$0xff]
    %v1559 = vld [vmem:[%s201 + $0x79] sm:$0xff]
    %v1560 = vld [vmem:[%s201 + $0x81] sm:$0xff]
    %v1561 = vld [vmem:[%s201 + $0x91] sm:$0xff]
    %v1562 = vld [vmem:[%s201 + $0x99] sm:$0xff]
    %v1563 = vld [vmem:[%s201 + $0xa9] sm:$0xff]
    %v1564 = vld [vmem:[%s201 + $0xb1] sm:$0xff]
    %v1565 = vld [vmem:[%s201 + $0xc1] sm:$0xff]
    %v1566 = vld [vmem:[%s201 + $0xc9] sm:$0xff]
    %v1567 = vld [vmem:[%s201 + $0xd9] sm:$0xff]
    %v1568 = vld [vmem:[%s201 + $0xe1] sm:$0xff]
    %v1569 = vld [vmem:[%s201 + $0xf1] sm:$0xff]
    %v1570 = vld [vmem:[%s201 + $0xf9] sm:$0xff]
    %v1571 = vld [vmem:[%s201 + $0x109] sm:$0xff]
    %v1572 = vld [vmem:[%s201 + $0x111] sm:$0xff]
    %v1573 = vld [vmem:[%s201 + $0x121] sm:$0xff]
    %v1574 = vld [vmem:[%s201 + $0x129] sm:$0xff]
    %v1575 = vld [vmem:[%s201 + $0x139] sm:$0xff]
    %v1576 = vld [vmem:[%s201 + $0x141] sm:$0xff]
    %v1577 = vld [vmem:[%s201 + $0x151] sm:$0xff]
    %v1578 = vld [vmem:[%s201 + $0x159] sm:$0xff]
    %v1579 = vld [vmem:[%s201 + $0x169] sm:$0xff]
    %v1580 = vld [vmem:[%s201 + $0x171] sm:$0xff]
    %v1581 = vld [vmem:[%s201 + $0x1b1] sm:$0xff]
    %v1582 = vld [vmem:[%s201 + $0x1b9] sm:$0xff]
    %v1583 = vld [vmem:[%s201 + $0x1c9] sm:$0xff]
    %v1584 = vld [vmem:[%s201 + $0x1d1] sm:$0xff]
    %v1585 = vld [vmem:[%s201 + $0x1e1] sm:$0xff]
    %v1586 = vld [vmem:[%s201 + $0x1e9] sm:$0xff]
    %v1587 = vld [vmem:[%s201 + $0x1f9] sm:$0xff]
    %v1588 = vld [vmem:[%s201 + $0x201] sm:$0xff]
    %v1589 = vld [vmem:[%s201 + $0x211] sm:$0xff]
    %v1590 = vld [vmem:[%s201 + $0x219] sm:$0xff]
    %v1591 = vld [vmem:[%s201 + $0x229] sm:$0xff]
    %v1592 = vld [vmem:[%s201 + $0x231] sm:$0xff]
    %v1593 = vld [vmem:[%s201 + $0x241] sm:$0xff]
    %v1594 = vld [vmem:[%s201 + $0x249] sm:$0xff]
    %v1595 = vld [vmem:[%s201 + $0x259] sm:$0xff]
    %v1596 = vld [vmem:[%s201 + $0x261] sm:$0xff]
    %v1597 = vld [vmem:[%s201 + $0x271] sm:$0xff]
    %v1598 = vld [vmem:[%s201 + $0x279] sm:$0xff]
    %v1599 = vld [vmem:[%s201 + $0x289] sm:$0xff]
    %v1600 = vld [vmem:[%s201 + $0x291] sm:$0xff]
    %v1601 = vld [vmem:[%s201 + $0x2a1] sm:$0xff]
    %v1602 = vld [vmem:[%s201 + $0x2a9] sm:$0xff]
    %v1603 = vld [vmem:[%s201 + $0x2b9] sm:$0xff]
    %v1604 = vld [vmem:[%s201 + $0x2c1] sm:$0xff]
    %v1605 = vld [vmem:[%s201 + $0x2d1] sm:$0xff]
    %v1606 = vld [vmem:[%s201 + $0x2d9] sm:$0xff]
    %v1607 = vld [vmem:[%s201 + $0x2e9] sm:$0xff]
    %v1608 = vld [vmem:[%s201 + $0x2f1] sm:$0xff]
    %v1609 = vld [vmem:[%s201 + $0x301] sm:$0xff]
    %v1610 = vld [vmem:[%s201 + $0x309] sm:$0xff]
    %v1611 = vld [vmem:[%s201 + $0x319] sm:$0xff]
    %v1612 = vld [vmem:[%s201 + $0x321] sm:$0xff]
    %1677 = vrot.lane.b32.xlu0 %v1549, 16
    %v1678 = vpop.permute.xlu0 %1677
    %1679 = vrot.lane.b32.xlu0 %v1550, 16
    %v1680 = vpop.permute.xlu0 %1679
    %1681 = vrot.lane.b32.xlu0 %v1551, 16
    %v1682 = vpop.permute.xlu0 %1681
    %1683 = vrot.lane.b32.xlu0 %v1552, 16
    %v1684 = vpop.permute.xlu0 %1683
    %1685 = vrot.lane.b32.xlu0 %v1553, 16
    %v1686 = vpop.permute.xlu0 %1685
    %1687 = vrot.lane.b32.xlu0 %v1554, 16
    %v1688 = vpop.permute.xlu0 %1687
    %1689 = vrot.lane.b32.xlu0 %v1555, 16
    %v1690 = vpop.permute.xlu0 %1689
    %1691 = vrot.lane.b32.xlu0 %v1556, 16
    %v1692 = vpop.permute.xlu0 %1691
    %1693 = vrot.lane.b32.xlu0 %v1557, 16
    %v1694 = vpop.permute.xlu0 %1693
    %1695 = vrot.lane.b32.xlu0 %v1558, 16
    %v1696 = vpop.permute.xlu0 %1695
    %1697 = vrot.lane.b32.xlu0 %v1559, 16
    %v1698 = vpop.permute.xlu0 %1697
    %1699 = vrot.lane.b32.xlu0 %v1560, 16
    %v1700 = vpop.permute.xlu0 %1699
    %1701 = vrot.lane.b32.xlu0 %v1561, 16
    %v1702 = vpop.permute.xlu0 %1701
    %1703 = vrot.lane.b32.xlu0 %v1562, 16
    %v1704 = vpop.permute.xlu0 %1703
    %1705 = vrot.lane.b32.xlu0 %v1563, 16
    %v1706 = vpop.permute.xlu0 %1705
    %1707 = vrot.lane.b32.xlu0 %v1564, 16
    %v1708 = vpop.permute.xlu0 %1707
    %1709 = vrot.lane.b32.xlu0 %v1565, 16
    %v1710 = vpop.permute.xlu0 %1709
    %1711 = vrot.lane.b32.xlu0 %v1566, 16
    %v1712 = vpop.permute.xlu0 %1711
    %1713 = vrot.lane.b32.xlu0 %v1567, 16
    %v1714 = vpop.permute.xlu0 %1713
    %1715 = vrot.lane.b32.xlu0 %v1568, 16
    %v1716 = vpop.permute.xlu0 %1715
    %1717 = vrot.lane.b32.xlu0 %v1569, 16
    %v1718 = vpop.permute.xlu0 %1717
    %1719 = vrot.lane.b32.xlu0 %v1570, 16
    %v1720 = vpop.permute.xlu0 %1719
    %1721 = vrot.lane.b32.xlu0 %v1571, 16
    %v1722 = vpop.permute.xlu0 %1721
    %1723 = vrot.lane.b32.xlu0 %v1572, 16
    %v1724 = vpop.permute.xlu0 %1723
    %1725 = vrot.lane.b32.xlu0 %v1573, 16
    %v1726 = vpop.permute.xlu0 %1725
    %1727 = vrot.lane.b32.xlu0 %v1574, 16
    %v1728 = vpop.permute.xlu0 %1727
    %1729 = vrot.lane.b32.xlu0 %v1575, 16
    %v1730 = vpop.permute.xlu0 %1729
    %1731 = vrot.lane.b32.xlu0 %v1576, 16
    %v1732 = vpop.permute.xlu0 %1731
    %1733 = vrot.lane.b32.xlu0 %v1577, 16
    %v1734 = vpop.permute.xlu0 %1733
    %1735 = vrot.lane.b32.xlu0 %v1578, 16
    %v1736 = vpop.permute.xlu0 %1735
    %1737 = vrot.lane.b32.xlu0 %v1579, 16
    %v1738 = vpop.permute.xlu0 %1737
    %1739 = vrot.lane.b32.xlu0 %v1580, 16
    %v1740 = vpop.permute.xlu0 %1739
    %1741 = vrot.lane.b32.xlu0 %v1581, 16
    %v1742 = vpop.permute.xlu0 %1741
    %1743 = vrot.lane.b32.xlu0 %v1582, 16
    %v1744 = vpop.permute.xlu0 %1743
    %1745 = vrot.lane.b32.xlu0 %v1583, 16
    %v1746 = vpop.permute.xlu0 %1745
    %1747 = vrot.lane.b32.xlu0 %v1584, 16
    %v1748 = vpop.permute.xlu0 %1747
    %1749 = vrot.lane.b32.xlu0 %v1585, 16
    %v1750 = vpop.permute.xlu0 %1749
    %1751 = vrot.lane.b32.xlu0 %v1586, 16
    %v1752 = vpop.permute.xlu0 %1751
    %1753 = vrot.lane.b32.xlu0 %v1587, 16
    %v1754 = vpop.permute.xlu0 %1753
    %1755 = vrot.lane.b32.xlu0 %v1588, 16
    %v1756 = vpop.permute.xlu0 %1755
    %1757 = vrot.lane.b32.xlu0 %v1589, 16
    %v1758 = vpop.permute.xlu0 %1757
    %1759 = vrot.lane.b32.xlu0 %v1590, 16
    %v1760 = vpop.permute.xlu0 %1759
    %1761 = vrot.lane.b32.xlu0 %v1591, 16
    %v1762 = vpop.permute.xlu0 %1761
    %1763 = vrot.lane.b32.xlu0 %v1592, 16
    %v1764 = vpop.permute.xlu0 %1763
    %1765 = vrot.lane.b32.xlu0 %v1593, 16
    %v1766 = vpop.permute.xlu0 %1765
    %1767 = vrot.lane.b32.xlu0 %v1594, 16
    %v1768 = vpop.permute.xlu0 %1767
    %1769 = vrot.lane.b32.xlu0 %v1595, 16
    %v1770 = vpop.permute.xlu0 %1769
    %1771 = vrot.lane.b32.xlu0 %v1596, 16
    %v1772 = vpop.permute.xlu0 %1771
    %1773 = vrot.lane.b32.xlu0 %v1597, 16
    %v1774 = vpop.permute.xlu0 %1773
    %1775 = vrot.lane.b32.xlu0 %v1598, 16
    %v1776 = vpop.permute.xlu0 %1775
    %1777 = vrot.lane.b32.xlu0 %v1599, 16
    %v1778 = vpop.permute.xlu0 %1777
    %1779 = vrot.lane.b32.xlu0 %v1600, 16
    %v1780 = vpop.permute.xlu0 %1779
    %1781 = vrot.lane.b32.xlu0 %v1601, 16
    %v1782 = vpop.permute.xlu0 %1781
    %1783 = vrot.lane.b32.xlu0 %v1602, 16
    %v1784 = vpop.permute.xlu0 %1783
    %1785 = vrot.lane.b32.xlu0 %v1603, 16
    %v1786 = vpop.permute.xlu0 %1785
    %1787 = vrot.lane.b32.xlu0 %v1604, 16
    %v1788 = vpop.permute.xlu0 %1787
    %1789 = vrot.lane.b32.xlu0 %v1605, 16
    %v1790 = vpop.permute.xlu0 %1789
    %1791 = vrot.lane.b32.xlu0 %v1606, 16
    %v1792 = vpop.permute.xlu0 %1791
    %1793 = vrot.lane.b32.xlu0 %v1607, 16
    %v1794 = vpop.permute.xlu0 %1793
    %1795 = vrot.lane.b32.xlu0 %v1608, 16
    %v1796 = vpop.permute.xlu0 %1795
    %1797 = vrot.lane.b32.xlu0 %v1609, 16
    %v1798 = vpop.permute.xlu0 %1797
    %1799 = vrot.lane.b32.xlu0 %v1610, 16
    %v1800 = vpop.permute.xlu0 %1799
    %1801 = vrot.lane.b32.xlu0 %v1611, 16
    %v1802 = vpop.permute.xlu0 %1801
    %1803 = vrot.lane.b32.xlu0 %v1612, 16
    %v1804 = vpop.permute.xlu0 %1803
    %vm1869 = vcmask 162944
    %1870 = vst.msk [vmem:[#allocation4] sm:$0xff] %vm1869, %v1678
    %1871 = vst.msk [vmem:[#allocation4 + $0x8] sm:$0xff] %vm1869, %v1680
    %1872 = vst.msk [vmem:[#allocation4 + $0x10] sm:$0xff] %vm1869, %v1682
    %1873 = vst.msk [vmem:[#allocation4 + $0x18] sm:$0xff] %vm1869, %v1684
    %1874 = vst.msk [vmem:[#allocation4 + $0x20] sm:$0xff] %vm1869, %v1686
    %1875 = vst.msk [vmem:[#allocation4 + $0x28] sm:$0xff] %vm1869, %v1688
    %1876 = vst.msk [vmem:[#allocation4 + $0x30] sm:$0xff] %vm1869, %v1690
    %1877 = vst.msk [vmem:[#allocation4 + $0x38] sm:$0xff] %vm1869, %v1692
    %1878 = vst.msk [vmem:[#allocation4 + $0x40] sm:$0xff] %vm1869, %v1694
    %1879 = vst.msk [vmem:[#allocation4 + $0x48] sm:$0xff] %vm1869, %v1696
    %1880 = vst.msk [vmem:[#allocation4 + $0x50] sm:$0xff] %vm1869, %v1698
    %1881 = vst.msk [vmem:[#allocation4 + $0x58] sm:$0xff] %vm1869, %v1700
    %1882 = vst.msk [vmem:[#allocation4 + $0x60] sm:$0xff] %vm1869, %v1702
    %1883 = vst.msk [vmem:[#allocation4 + $0x68] sm:$0xff] %vm1869, %v1704
    %1884 = vst.msk [vmem:[#allocation4 + $0x70] sm:$0xff] %vm1869, %v1706
    %1885 = vst.msk [vmem:[#allocation4 + $0x78] sm:$0xff] %vm1869, %v1708
    %1886 = vst.msk [vmem:[#allocation4 + $0x80] sm:$0xff] %vm1869, %v1710
    %1887 = vst.msk [vmem:[#allocation4 + $0x88] sm:$0xff] %vm1869, %v1712
    %1888 = vst.msk [vmem:[#allocation4 + $0x90] sm:$0xff] %vm1869, %v1714
    %1889 = vst.msk [vmem:[#allocation4 + $0x98] sm:$0xff] %vm1869, %v1716
    %1890 = vst.msk [vmem:[#allocation4 + $0xa0] sm:$0xff] %vm1869, %v1718
    %1891 = vst.msk [vmem:[#allocation4 + $0xa8] sm:$0xff] %vm1869, %v1720
    %1892 = vst.msk [vmem:[#allocation4 + $0xb0] sm:$0xff] %vm1869, %v1722
    %1893 = vst.msk [vmem:[#allocation4 + $0xb8] sm:$0xff] %vm1869, %v1724
    %1894 = vst.msk [vmem:[#allocation4 + $0xc0] sm:$0xff] %vm1869, %v1726
    %1895 = vst.msk [vmem:[#allocation4 + $0xc8] sm:$0xff] %vm1869, %v1728
    %1896 = vst.msk [vmem:[#allocation4 + $0xd0] sm:$0xff] %vm1869, %v1730
    %1897 = vst.msk [vmem:[#allocation4 + $0xd8] sm:$0xff] %vm1869, %v1732
    %1898 = vst.msk [vmem:[#allocation4 + $0xe0] sm:$0xff] %vm1869, %v1734
    %1899 = vst.msk [vmem:[#allocation4 + $0xe8] sm:$0xff] %vm1869, %v1736
    %1900 = vst.msk [vmem:[#allocation4 + $0xf0] sm:$0xff] %vm1869, %v1738
    %1901 = vst.msk [vmem:[#allocation4 + $0xf8] sm:$0xff] %vm1869, %v1740
    %1902 = vst.msk [vmem:[#allocation4 + $0x100] sm:$0xff] %vm1869, %v1742
    %1903 = vst.msk [vmem:[#allocation4 + $0x108] sm:$0xff] %vm1869, %v1744
    %1904 = vst.msk [vmem:[#allocation4 + $0x110] sm:$0xff] %vm1869, %v1746
    %1905 = vst.msk [vmem:[#allocation4 + $0x118] sm:$0xff] %vm1869, %v1748
    %1906 = vst.msk [vmem:[#allocation4 + $0x120] sm:$0xff] %vm1869, %v1750
    %1907 = vst.msk [vmem:[#allocation4 + $0x128] sm:$0xff] %vm1869, %v1752
    %1908 = vst.msk [vmem:[#allocation4 + $0x130] sm:$0xff] %vm1869, %v1754
    %1909 = vst.msk [vmem:[#allocation4 + $0x138] sm:$0xff] %vm1869, %v1756
    %1910 = vst.msk [vmem:[#allocation4 + $0x140] sm:$0xff] %vm1869, %v1758
    %1911 = vst.msk [vmem:[#allocation4 + $0x148] sm:$0xff] %vm1869, %v1760
    %1912 = vst.msk [vmem:[#allocation4 + $0x150] sm:$0xff] %vm1869, %v1762
    %1913 = vst.msk [vmem:[#allocation4 + $0x158] sm:$0xff] %vm1869, %v1764
    %1914 = vst.msk [vmem:[#allocation4 + $0x160] sm:$0xff] %vm1869, %v1766
    %1915 = vst.msk [vmem:[#allocation4 + $0x168] sm:$0xff] %vm1869, %v1768
    %1916 = vst.msk [vmem:[#allocation4 + $0x170] sm:$0xff] %vm1869, %v1770
    %1917 = vst.msk [vmem:[#allocation4 + $0x178] sm:$0xff] %vm1869, %v1772
    %1918 = vst.msk [vmem:[#allocation4 + $0x180] sm:$0xff] %vm1869, %v1774
    %1919 = vst.msk [vmem:[#allocation4 + $0x188] sm:$0xff] %vm1869, %v1776
    %1920 = vst.msk [vmem:[#allocation4 + $0x190] sm:$0xff] %vm1869, %v1778
    %1921 = vst.msk [vmem:[#allocation4 + $0x198] sm:$0xff] %vm1869, %v1780
    %1922 = vst.msk [vmem:[#allocation4 + $0x1a0] sm:$0xff] %vm1869, %v1782
    %1923 = vst.msk [vmem:[#allocation4 + $0x1a8] sm:$0xff] %vm1869, %v1784
    %1924 = vst.msk [vmem:[#allocation4 + $0x1b0] sm:$0xff] %vm1869, %v1786
    %1925 = vst.msk [vmem:[#allocation4 + $0x1b8] sm:$0xff] %vm1869, %v1788
    %1926 = vst.msk [vmem:[#allocation4 + $0x1c0] sm:$0xff] %vm1869, %v1790
    %1927 = vst.msk [vmem:[#allocation4 + $0x1c8] sm:$0xff] %vm1869, %v1792
    %1928 = vst.msk [vmem:[#allocation4 + $0x1d0] sm:$0xff] %vm1869, %v1794
    %1929 = vst.msk [vmem:[#allocation4 + $0x1d8] sm:$0xff] %vm1869, %v1796
    %1930 = vst.msk [vmem:[#allocation4 + $0x1e0] sm:$0xff] %vm1869, %v1798
    %1931 = vst.msk [vmem:[#allocation4 + $0x1e8] sm:$0xff] %vm1869, %v1800
    %1932 = vst.msk [vmem:[#allocation4 + $0x1f0] sm:$0xff] %vm1869, %v1802
    %1933 = vst.msk [vmem:[#allocation4 + $0x1f8] sm:$0xff] %vm1869, %v1804
    %v1934 = vld [vmem:[%s201 + $0x2] sm:$0xff]
    %v1935 = vld [vmem:[%s201 + $0xa] sm:$0xff]
    %v1936 = vld [vmem:[%s201 + $0x1a] sm:$0xff]
    %v1937 = vld [vmem:[%s201 + $0x22] sm:$0xff]
    %v1938 = vld [vmem:[%s201 + $0x32] sm:$0xff]
    %v1939 = vld [vmem:[%s201 + $0x3a] sm:$0xff]
    %v1940 = vld [vmem:[%s201 + $0x4a] sm:$0xff]
    %v1941 = vld [vmem:[%s201 + $0x52] sm:$0xff]
    %v1942 = vld [vmem:[%s201 + $0x62] sm:$0xff]
    %v1943 = vld [vmem:[%s201 + $0x6a] sm:$0xff]
    %v1944 = vld [vmem:[%s201 + $0x7a] sm:$0xff]
    %v1945 = vld [vmem:[%s201 + $0x82] sm:$0xff]
    %v1946 = vld [vmem:[%s201 + $0x92] sm:$0xff]
    %v1947 = vld [vmem:[%s201 + $0x9a] sm:$0xff]
    %v1948 = vld [vmem:[%s201 + $0xaa] sm:$0xff]
    %v1949 = vld [vmem:[%s201 + $0xb2] sm:$0xff]
    %v1950 = vld [vmem:[%s201 + $0xc2] sm:$0xff]
    %v1951 = vld [vmem:[%s201 + $0xca] sm:$0xff]
    %v1952 = vld [vmem:[%s201 + $0xda] sm:$0xff]
    %v1953 = vld [vmem:[%s201 + $0xe2] sm:$0xff]
    %v1954 = vld [vmem:[%s201 + $0xf2] sm:$0xff]
    %v1955 = vld [vmem:[%s201 + $0xfa] sm:$0xff]
    %v1956 = vld [vmem:[%s201 + $0x10a] sm:$0xff]
    %v1957 = vld [vmem:[%s201 + $0x112] sm:$0xff]
    %v1958 = vld [vmem:[%s201 + $0x122] sm:$0xff]
    %v1959 = vld [vmem:[%s201 + $0x12a] sm:$0xff]
    %v1960 = vld [vmem:[%s201 + $0x13a] sm:$0xff]
    %v1961 = vld [vmem:[%s201 + $0x142] sm:$0xff]
    %v1962 = vld [vmem:[%s201 + $0x152] sm:$0xff]
    %v1963 = vld [vmem:[%s201 + $0x15a] sm:$0xff]
    %v1964 = vld [vmem:[%s201 + $0x16a] sm:$0xff]
    %v1965 = vld [vmem:[%s201 + $0x172] sm:$0xff]
    %v1966 = vld [vmem:[%s201 + $0x1b2] sm:$0xff]
    %v1967 = vld [vmem:[%s201 + $0x1ba] sm:$0xff]
    %v1968 = vld [vmem:[%s201 + $0x1ca] sm:$0xff]
    %v1969 = vld [vmem:[%s201 + $0x1d2] sm:$0xff]
    %v1970 = vld [vmem:[%s201 + $0x1e2] sm:$0xff]
    %v1971 = vld [vmem:[%s201 + $0x1ea] sm:$0xff]
    %v1972 = vld [vmem:[%s201 + $0x1fa] sm:$0xff]
    %v1973 = vld [vmem:[%s201 + $0x202] sm:$0xff]
    %v1974 = vld [vmem:[%s201 + $0x212] sm:$0xff]
    %v1975 = vld [vmem:[%s201 + $0x21a] sm:$0xff]
    %v1976 = vld [vmem:[%s201 + $0x22a] sm:$0xff]
    %v1977 = vld [vmem:[%s201 + $0x232] sm:$0xff]
    %v1978 = vld [vmem:[%s201 + $0x242] sm:$0xff]
    %v1979 = vld [vmem:[%s201 + $0x24a] sm:$0xff]
    %v1980 = vld [vmem:[%s201 + $0x25a] sm:$0xff]
    %v1981 = vld [vmem:[%s201 + $0x262] sm:$0xff]
    %v1982 = vld [vmem:[%s201 + $0x272] sm:$0xff]
    %v1983 = vld [vmem:[%s201 + $0x27a] sm:$0xff]
    %v1984 = vld [vmem:[%s201 + $0x28a] sm:$0xff]
    %v1985 = vld [vmem:[%s201 + $0x292] sm:$0xff]
    %v1986 = vld [vmem:[%s201 + $0x2a2] sm:$0xff]
    %v1987 = vld [vmem:[%s201 + $0x2aa] sm:$0xff]
    %v1988 = vld [vmem:[%s201 + $0x2ba] sm:$0xff]
    %v1989 = vld [vmem:[%s201 + $0x2c2] sm:$0xff]
    %v1990 = vld [vmem:[%s201 + $0x2d2] sm:$0xff]
    %v1991 = vld [vmem:[%s201 + $0x2da] sm:$0xff]
    %v1992 = vld [vmem:[%s201 + $0x2ea] sm:$0xff]
    %v1993 = vld [vmem:[%s201 + $0x2f2] sm:$0xff]
    %v1994 = vld [vmem:[%s201 + $0x302] sm:$0xff]
    %v1995 = vld [vmem:[%s201 + $0x30a] sm:$0xff]
    %v1996 = vld [vmem:[%s201 + $0x31a] sm:$0xff]
    %v1997 = vld [vmem:[%s201 + $0x322] sm:$0xff]
    %2062 = vrot.lane.b32.xlu0 %v1934, 20
    %v2063 = vpop.permute.xlu0 %2062
    %2064 = vrot.lane.b32.xlu0 %v1935, 20
    %v2065 = vpop.permute.xlu0 %2064
    %2066 = vrot.lane.b32.xlu0 %v1936, 20
    %v2067 = vpop.permute.xlu0 %2066
    %2068 = vrot.lane.b32.xlu0 %v1937, 20
    %v2069 = vpop.permute.xlu0 %2068
    %2070 = vrot.lane.b32.xlu0 %v1938, 20
    %v2071 = vpop.permute.xlu0 %2070
    %2072 = vrot.lane.b32.xlu0 %v1939, 20
    %v2073 = vpop.permute.xlu0 %2072
    %2074 = vrot.lane.b32.xlu0 %v1940, 20
    %v2075 = vpop.permute.xlu0 %2074
    %2076 = vrot.lane.b32.xlu0 %v1941, 20
    %v2077 = vpop.permute.xlu0 %2076
    %2078 = vrot.lane.b32.xlu0 %v1942, 20
    %v2079 = vpop.permute.xlu0 %2078
    %2080 = vrot.lane.b32.xlu0 %v1943, 20
    %v2081 = vpop.permute.xlu0 %2080
    %2082 = vrot.lane.b32.xlu0 %v1944, 20
    %v2083 = vpop.permute.xlu0 %2082
    %2084 = vrot.lane.b32.xlu0 %v1945, 20
    %v2085 = vpop.permute.xlu0 %2084
    %2086 = vrot.lane.b32.xlu0 %v1946, 20
    %v2087 = vpop.permute.xlu0 %2086
    %2088 = vrot.lane.b32.xlu0 %v1947, 20
    %v2089 = vpop.permute.xlu0 %2088
    %2090 = vrot.lane.b32.xlu0 %v1948, 20
    %v2091 = vpop.permute.xlu0 %2090
    %2092 = vrot.lane.b32.xlu0 %v1949, 20
    %v2093 = vpop.permute.xlu0 %2092
    %2094 = vrot.lane.b32.xlu0 %v1950, 20
    %v2095 = vpop.permute.xlu0 %2094
    %2096 = vrot.lane.b32.xlu0 %v1951, 20
    %v2097 = vpop.permute.xlu0 %2096
    %2098 = vrot.lane.b32.xlu0 %v1952, 20
    %v2099 = vpop.permute.xlu0 %2098
    %2100 = vrot.lane.b32.xlu0 %v1953, 20
    %v2101 = vpop.permute.xlu0 %2100
    %2102 = vrot.lane.b32.xlu0 %v1954, 20
    %v2103 = vpop.permute.xlu0 %2102
    %2104 = vrot.lane.b32.xlu0 %v1955, 20
    %v2105 = vpop.permute.xlu0 %2104
    %2106 = vrot.lane.b32.xlu0 %v1956, 20
    %v2107 = vpop.permute.xlu0 %2106
    %2108 = vrot.lane.b32.xlu0 %v1957, 20
    %v2109 = vpop.permute.xlu0 %2108
    %2110 = vrot.lane.b32.xlu0 %v1958, 20
    %v2111 = vpop.permute.xlu0 %2110
    %2112 = vrot.lane.b32.xlu0 %v1959, 20
    %v2113 = vpop.permute.xlu0 %2112
    %2114 = vrot.lane.b32.xlu0 %v1960, 20
    %v2115 = vpop.permute.xlu0 %2114
    %2116 = vrot.lane.b32.xlu0 %v1961, 20
    %v2117 = vpop.permute.xlu0 %2116
    %2118 = vrot.lane.b32.xlu0 %v1962, 20
    %v2119 = vpop.permute.xlu0 %2118
    %2120 = vrot.lane.b32.xlu0 %v1963, 20
    %v2121 = vpop.permute.xlu0 %2120
    %2122 = vrot.lane.b32.xlu0 %v1964, 20
    %v2123 = vpop.permute.xlu0 %2122
    %2124 = vrot.lane.b32.xlu0 %v1965, 20
    %v2125 = vpop.permute.xlu0 %2124
    %2126 = vrot.lane.b32.xlu0 %v1966, 20
    %v2127 = vpop.permute.xlu0 %2126
    %2128 = vrot.lane.b32.xlu0 %v1967, 20
    %v2129 = vpop.permute.xlu0 %2128
    %2130 = vrot.lane.b32.xlu0 %v1968, 20
    %v2131 = vpop.permute.xlu0 %2130
    %2132 = vrot.lane.b32.xlu0 %v1969, 20
    %v2133 = vpop.permute.xlu0 %2132
    %2134 = vrot.lane.b32.xlu0 %v1970, 20
    %v2135 = vpop.permute.xlu0 %2134
    %2136 = vrot.lane.b32.xlu0 %v1971, 20
    %v2137 = vpop.permute.xlu0 %2136
    %2138 = vrot.lane.b32.xlu0 %v1972, 20
    %v2139 = vpop.permute.xlu0 %2138
    %2140 = vrot.lane.b32.xlu0 %v1973, 20
    %v2141 = vpop.permute.xlu0 %2140
    %2142 = vrot.lane.b32.xlu0 %v1974, 20
    %v2143 = vpop.permute.xlu0 %2142
    %2144 = vrot.lane.b32.xlu0 %v1975, 20
    %v2145 = vpop.permute.xlu0 %2144
    %2146 = vrot.lane.b32.xlu0 %v1976, 20
    %v2147 = vpop.permute.xlu0 %2146
    %2148 = vrot.lane.b32.xlu0 %v1977, 20
    %v2149 = vpop.permute.xlu0 %2148
    %2150 = vrot.lane.b32.xlu0 %v1978, 20
    %v2151 = vpop.permute.xlu0 %2150
    %2152 = vrot.lane.b32.xlu0 %v1979, 20
    %v2153 = vpop.permute.xlu0 %2152
    %2154 = vrot.lane.b32.xlu0 %v1980, 20
    %v2155 = vpop.permute.xlu0 %2154
    %2156 = vrot.lane.b32.xlu0 %v1981, 20
    %v2157 = vpop.permute.xlu0 %2156
    %2158 = vrot.lane.b32.xlu0 %v1982, 20
    %v2159 = vpop.permute.xlu0 %2158
    %2160 = vrot.lane.b32.xlu0 %v1983, 20
    %v2161 = vpop.permute.xlu0 %2160
    %2162 = vrot.lane.b32.xlu0 %v1984, 20
    %v2163 = vpop.permute.xlu0 %2162
    %2164 = vrot.lane.b32.xlu0 %v1985, 20
    %v2165 = vpop.permute.xlu0 %2164
    %2166 = vrot.lane.b32.xlu0 %v1986, 20
    %v2167 = vpop.permute.xlu0 %2166
    %2168 = vrot.lane.b32.xlu0 %v1987, 20
    %v2169 = vpop.permute.xlu0 %2168
    %2170 = vrot.lane.b32.xlu0 %v1988, 20
    %v2171 = vpop.permute.xlu0 %2170
    %2172 = vrot.lane.b32.xlu0 %v1989, 20
    %v2173 = vpop.permute.xlu0 %2172
    %2174 = vrot.lane.b32.xlu0 %v1990, 20
    %v2175 = vpop.permute.xlu0 %2174
    %2176 = vrot.lane.b32.xlu0 %v1991, 20
    %v2177 = vpop.permute.xlu0 %2176
    %2178 = vrot.lane.b32.xlu0 %v1992, 20
    %v2179 = vpop.permute.xlu0 %2178
    %2180 = vrot.lane.b32.xlu0 %v1993, 20
    %v2181 = vpop.permute.xlu0 %2180
    %2182 = vrot.lane.b32.xlu0 %v1994, 20
    %v2183 = vpop.permute.xlu0 %2182
    %2184 = vrot.lane.b32.xlu0 %v1995, 20
    %v2185 = vpop.permute.xlu0 %2184
    %2186 = vrot.lane.b32.xlu0 %v1996, 20
    %v2187 = vpop.permute.xlu0 %2186
    %2188 = vrot.lane.b32.xlu0 %v1997, 20
    %v2189 = vpop.permute.xlu0 %2188
    %vm2254 = vcmask 195744
    %2255 = vst.msk [vmem:[#allocation4] sm:$0xff] %vm2254, %v2063
    %2256 = vst.msk [vmem:[#allocation4 + $0x8] sm:$0xff] %vm2254, %v2065
    %2257 = vst.msk [vmem:[#allocation4 + $0x10] sm:$0xff] %vm2254, %v2067
    %2258 = vst.msk [vmem:[#allocation4 + $0x18] sm:$0xff] %vm2254, %v2069
    %2259 = vst.msk [vmem:[#allocation4 + $0x20] sm:$0xff] %vm2254, %v2071
    %2260 = vst.msk [vmem:[#allocation4 + $0x28] sm:$0xff] %vm2254, %v2073
    %2261 = vst.msk [vmem:[#allocation4 + $0x30] sm:$0xff] %vm2254, %v2075
    %2262 = vst.msk [vmem:[#allocation4 + $0x38] sm:$0xff] %vm2254, %v2077
    %2263 = vst.msk [vmem:[#allocation4 + $0x40] sm:$0xff] %vm2254, %v2079
    %2264 = vst.msk [vmem:[#allocation4 + $0x48] sm:$0xff] %vm2254, %v2081
    %2265 = vst.msk [vmem:[#allocation4 + $0x50] sm:$0xff] %vm2254, %v2083
    %2266 = vst.msk [vmem:[#allocation4 + $0x58] sm:$0xff] %vm2254, %v2085
    %2267 = vst.msk [vmem:[#allocation4 + $0x60] sm:$0xff] %vm2254, %v2087
    %2268 = vst.msk [vmem:[#allocation4 + $0x68] sm:$0xff] %vm2254, %v2089
    %2269 = vst.msk [vmem:[#allocation4 + $0x70] sm:$0xff] %vm2254, %v2091
    %2270 = vst.msk [vmem:[#allocation4 + $0x78] sm:$0xff] %vm2254, %v2093
    %2271 = vst.msk [vmem:[#allocation4 + $0x80] sm:$0xff] %vm2254, %v2095
    %2272 = vst.msk [vmem:[#allocation4 + $0x88] sm:$0xff] %vm2254, %v2097
    %2273 = vst.msk [vmem:[#allocation4 + $0x90] sm:$0xff] %vm2254, %v2099
    %2274 = vst.msk [vmem:[#allocation4 + $0x98] sm:$0xff] %vm2254, %v2101
    %2275 = vst.msk [vmem:[#allocation4 + $0xa0] sm:$0xff] %vm2254, %v2103
    %2276 = vst.msk [vmem:[#allocation4 + $0xa8] sm:$0xff] %vm2254, %v2105
    %2277 = vst.msk [vmem:[#allocation4 + $0xb0] sm:$0xff] %vm2254, %v2107
    %2278 = vst.msk [vmem:[#allocation4 + $0xb8] sm:$0xff] %vm2254, %v2109
    %2279 = vst.msk [vmem:[#allocation4 + $0xc0] sm:$0xff] %vm2254, %v2111
    %2280 = vst.msk [vmem:[#allocation4 + $0xc8] sm:$0xff] %vm2254, %v2113
    %2281 = vst.msk [vmem:[#allocation4 + $0xd0] sm:$0xff] %vm2254, %v2115
    %2282 = vst.msk [vmem:[#allocation4 + $0xd8] sm:$0xff] %vm2254, %v2117
    %2283 = vst.msk [vmem:[#allocation4 + $0xe0] sm:$0xff] %vm2254, %v2119
    %2284 = vst.msk [vmem:[#allocation4 + $0xe8] sm:$0xff] %vm2254, %v2121
    %2285 = vst.msk [vmem:[#allocation4 + $0xf0] sm:$0xff] %vm2254, %v2123
    %2286 = vst.msk [vmem:[#allocation4 + $0xf8] sm:$0xff] %vm2254, %v2125
    %2287 = vst.msk [vmem:[#allocation4 + $0x100] sm:$0xff] %vm2254, %v2127
    %2288 = vst.msk [vmem:[#allocation4 + $0x108] sm:$0xff] %vm2254, %v2129
    %2289 = vst.msk [vmem:[#allocation4 + $0x110] sm:$0xff] %vm2254, %v2131
    %2290 = vst.msk [vmem:[#allocation4 + $0x118] sm:$0xff] %vm2254, %v2133
    %2291 = vst.msk [vmem:[#allocation4 + $0x120] sm:$0xff] %vm2254, %v2135
    %2292 = vst.msk [vmem:[#allocation4 + $0x128] sm:$0xff] %vm2254, %v2137
    %2293 = vst.msk [vmem:[#allocation4 + $0x130] sm:$0xff] %vm2254, %v2139
    %2294 = vst.msk [vmem:[#allocation4 + $0x138] sm:$0xff] %vm2254, %v2141
    %2295 = vst.msk [vmem:[#allocation4 + $0x140] sm:$0xff] %vm2254, %v2143
    %2296 = vst.msk [vmem:[#allocation4 + $0x148] sm:$0xff] %vm2254, %v2145
    %2297 = vst.msk [vmem:[#allocation4 + $0x150] sm:$0xff] %vm2254, %v2147
    %2298 = vst.msk [vmem:[#allocation4 + $0x158] sm:$0xff] %vm2254, %v2149
    %2299 = vst.msk [vmem:[#allocation4 + $0x160] sm:$0xff] %vm2254, %v2151
    %2300 = vst.msk [vmem:[#allocation4 + $0x168] sm:$0xff] %vm2254, %v2153
    %2301 = vst.msk [vmem:[#allocation4 + $0x170] sm:$0xff] %vm2254, %v2155
    %2302 = vst.msk [vmem:[#allocation4 + $0x178] sm:$0xff] %vm2254, %v2157
    %2303 = vst.msk [vmem:[#allocation4 + $0x180] sm:$0xff] %vm2254, %v2159
    %2304 = vst.msk [vmem:[#allocation4 + $0x188] sm:$0xff] %vm2254, %v2161
    %2305 = vst.msk [vmem:[#allocation4 + $0x190] sm:$0xff] %vm2254, %v2163
    %2306 = vst.msk [vmem:[#allocation4 + $0x198] sm:$0xff] %vm2254, %v2165
    %2307 = vst.msk [vmem:[#allocation4 + $0x1a0] sm:$0xff] %vm2254, %v2167
    %2308 = vst.msk [vmem:[#allocation4 + $0x1a8] sm:$0xff] %vm2254, %v2169
    %2309 = vst.msk [vmem:[#allocation4 + $0x1b0] sm:$0xff] %vm2254, %v2171
    %2310 = vst.msk [vmem:[#allocation4 + $0x1b8] sm:$0xff] %vm2254, %v2173
    %2311 = vst.msk [vmem:[#allocation4 + $0x1c0] sm:$0xff] %vm2254, %v2175
    %2312 = vst.msk [vmem:[#allocation4 + $0x1c8] sm:$0xff] %vm2254, %v2177
    %2313 = vst.msk [vmem:[#allocation4 + $0x1d0] sm:$0xff] %vm2254, %v2179
    %2314 = vst.msk [vmem:[#allocation4 + $0x1d8] sm:$0xff] %vm2254, %v2181
    %2315 = vst.msk [vmem:[#allocation4 + $0x1e0] sm:$0xff] %vm2254, %v2183
    %2316 = vst.msk [vmem:[#allocation4 + $0x1e8] sm:$0xff] %vm2254, %v2185
    %2317 = vst.msk [vmem:[#allocation4 + $0x1f0] sm:$0xff] %vm2254, %v2187
    %2318 = vst.msk [vmem:[#allocation4 + $0x1f8] sm:$0xff] %vm2254, %v2189
    %s2319 = scalar_lea.vmem [#allocation2], 48
    %v2320 = vld [vmem:[%s2319] sm:$0xff]
    %v2321 = vld [vmem:[%s2319 + $0x8] sm:$0xff]
    %v2322 = vld [vmem:[%s2319 + $0x18] sm:$0xff]
    %v2323 = vld [vmem:[%s2319 + $0x20] sm:$0xff]
    %v2324 = vld [vmem:[%s2319 + $0x30] sm:$0xff]
    %v2325 = vld [vmem:[%s2319 + $0x38] sm:$0xff]
    %v2326 = vld [vmem:[%s2319 + $0x48] sm:$0xff]
    %v2327 = vld [vmem:[%s2319 + $0x50] sm:$0xff]
    %v2328 = vld [vmem:[%s2319 + $0x60] sm:$0xff]
    %v2329 = vld [vmem:[%s2319 + $0x68] sm:$0xff]
    %v2330 = vld [vmem:[%s2319 + $0x78] sm:$0xff]
    %v2331 = vld [vmem:[%s2319 + $0x80] sm:$0xff]
    %v2332 = vld [vmem:[%s2319 + $0x90] sm:$0xff]
    %v2333 = vld [vmem:[%s2319 + $0x98] sm:$0xff]
    %v2334 = vld [vmem:[%s2319 + $0xa8] sm:$0xff]
    %v2335 = vld [vmem:[%s2319 + $0xb0] sm:$0xff]
    %v2336 = vld [vmem:[%s2319 + $0xc0] sm:$0xff]
    %v2337 = vld [vmem:[%s2319 + $0xc8] sm:$0xff]
    %v2338 = vld [vmem:[%s2319 + $0xd8] sm:$0xff]
    %v2339 = vld [vmem:[%s2319 + $0xe0] sm:$0xff]
    %v2340 = vld [vmem:[%s2319 + $0xf0] sm:$0xff]
    %v2341 = vld [vmem:[%s2319 + $0xf8] sm:$0xff]
    %v2342 = vld [vmem:[%s2319 + $0x108] sm:$0xff]
    %v2343 = vld [vmem:[%s2319 + $0x110] sm:$0xff]
    %v2344 = vld [vmem:[%s2319 + $0x120] sm:$0xff]
    %v2345 = vld [vmem:[%s2319 + $0x128] sm:$0xff]
    %v2346 = vld [vmem:[%s2319 + $0x138] sm:$0xff]
    %v2347 = vld [vmem:[%s2319 + $0x140] sm:$0xff]
    %v2348 = vld [vmem:[%s2319 + $0x150] sm:$0xff]
    %v2349 = vld [vmem:[%s2319 + $0x158] sm:$0xff]
    %v2350 = vld [vmem:[%s2319 + $0x168] sm:$0xff]
    %v2351 = vld [vmem:[%s2319 + $0x170] sm:$0xff]
    %v2352 = vld [vmem:[%s2319 + $0x1b0] sm:$0xff]
    %v2353 = vld [vmem:[%s2319 + $0x1b8] sm:$0xff]
    %v2354 = vld [vmem:[%s2319 + $0x1c8] sm:$0xff]
    %v2355 = vld [vmem:[%s2319 + $0x1d0] sm:$0xff]
    %v2356 = vld [vmem:[%s2319 + $0x1e0] sm:$0xff]
    %v2357 = vld [vmem:[%s2319 + $0x1e8] sm:$0xff]
    %v2358 = vld [vmem:[%s2319 + $0x1f8] sm:$0xff]
    %v2359 = vld [vmem:[%s2319 + $0x200] sm:$0xff]
    %v2360 = vld [vmem:[%s2319 + $0x210] sm:$0xff]
    %v2361 = vld [vmem:[%s2319 + $0x218] sm:$0xff]
    %v2362 = vld [vmem:[%s2319 + $0x228] sm:$0xff]
    %v2363 = vld [vmem:[%s2319 + $0x230] sm:$0xff]
    %v2364 = vld [vmem:[%s2319 + $0x240] sm:$0xff]
    %v2365 = vld [vmem:[%s2319 + $0x248] sm:$0xff]
    %v2366 = vld [vmem:[%s2319 + $0x258] sm:$0xff]
    %v2367 = vld [vmem:[%s2319 + $0x260] sm:$0xff]
    %v2368 = vld [vmem:[%s2319 + $0x270] sm:$0xff]
    %v2369 = vld [vmem:[%s2319 + $0x278] sm:$0xff]
    %v2370 = vld [vmem:[%s2319 + $0x288] sm:$0xff]
    %v2371 = vld [vmem:[%s2319 + $0x290] sm:$0xff]
    %v2372 = vld [vmem:[%s2319 + $0x2a0] sm:$0xff]
    %v2373 = vld [vmem:[%s2319 + $0x2a8] sm:$0xff]
    %v2374 = vld [vmem:[%s2319 + $0x2b8] sm:$0xff]
    %v2375 = vld [vmem:[%s2319 + $0x2c0] sm:$0xff]
    %v2376 = vld [vmem:[%s2319 + $0x2d0] sm:$0xff]
    %v2377 = vld [vmem:[%s2319 + $0x2d8] sm:$0xff]
    %v2378 = vld [vmem:[%s2319 + $0x2e8] sm:$0xff]
    %v2379 = vld [vmem:[%s2319 + $0x2f0] sm:$0xff]
    %v2380 = vld [vmem:[%s2319 + $0x300] sm:$0xff]
    %v2381 = vld [vmem:[%s2319 + $0x308] sm:$0xff]
    %v2382 = vld [vmem:[%s2319 + $0x318] sm:$0xff]
    %v2383 = vld [vmem:[%s2319 + $0x320] sm:$0xff]
    %2448 = vrot.lane.b32.xlu0 %v2320, 24
    %v2449 = vpop.permute.xlu0 %2448
    %2450 = vrot.lane.b32.xlu0 %v2321, 24
    %v2451 = vpop.permute.xlu0 %2450
    %2452 = vrot.lane.b32.xlu0 %v2322, 24
    %v2453 = vpop.permute.xlu0 %2452
    %2454 = vrot.lane.b32.xlu0 %v2323, 24
    %v2455 = vpop.permute.xlu0 %2454
    %2456 = vrot.lane.b32.xlu0 %v2324, 24
    %v2457 = vpop.permute.xlu0 %2456
    %2458 = vrot.lane.b32.xlu0 %v2325, 24
    %v2459 = vpop.permute.xlu0 %2458
    %2460 = vrot.lane.b32.xlu0 %v2326, 24
    %v2461 = vpop.permute.xlu0 %2460
    %2462 = vrot.lane.b32.xlu0 %v2327, 24
    %v2463 = vpop.permute.xlu0 %2462
    %2464 = vrot.lane.b32.xlu0 %v2328, 24
    %v2465 = vpop.permute.xlu0 %2464
    %2466 = vrot.lane.b32.xlu0 %v2329, 24
    %v2467 = vpop.permute.xlu0 %2466
    %2468 = vrot.lane.b32.xlu0 %v2330, 24
    %v2469 = vpop.permute.xlu0 %2468
    %2470 = vrot.lane.b32.xlu0 %v2331, 24
    %v2471 = vpop.permute.xlu0 %2470
    %2472 = vrot.lane.b32.xlu0 %v2332, 24
    %v2473 = vpop.permute.xlu0 %2472
    %2474 = vrot.lane.b32.xlu0 %v2333, 24
    %v2475 = vpop.permute.xlu0 %2474
    %2476 = vrot.lane.b32.xlu0 %v2334, 24
    %v2477 = vpop.permute.xlu0 %2476
    %2478 = vrot.lane.b32.xlu0 %v2335, 24
    %v2479 = vpop.permute.xlu0 %2478
    %2480 = vrot.lane.b32.xlu0 %v2336, 24
    %v2481 = vpop.permute.xlu0 %2480
    %2482 = vrot.lane.b32.xlu0 %v2337, 24
    %v2483 = vpop.permute.xlu0 %2482
    %2484 = vrot.lane.b32.xlu0 %v2338, 24
    %v2485 = vpop.permute.xlu0 %2484
    %2486 = vrot.lane.b32.xlu0 %v2339, 24
    %v2487 = vpop.permute.xlu0 %2486
    %2488 = vrot.lane.b32.xlu0 %v2340, 24
    %v2489 = vpop.permute.xlu0 %2488
    %2490 = vrot.lane.b32.xlu0 %v2341, 24
    %v2491 = vpop.permute.xlu0 %2490
    %2492 = vrot.lane.b32.xlu0 %v2342, 24
    %v2493 = vpop.permute.xlu0 %2492
    %2494 = vrot.lane.b32.xlu0 %v2343, 24
    %v2495 = vpop.permute.xlu0 %2494
    %2496 = vrot.lane.b32.xlu0 %v2344, 24
    %v2497 = vpop.permute.xlu0 %2496
    %2498 = vrot.lane.b32.xlu0 %v2345, 24
    %v2499 = vpop.permute.xlu0 %2498
    %2500 = vrot.lane.b32.xlu0 %v2346, 24
    %v2501 = vpop.permute.xlu0 %2500
    %2502 = vrot.lane.b32.xlu0 %v2347, 24
    %v2503 = vpop.permute.xlu0 %2502
    %2504 = vrot.lane.b32.xlu0 %v2348, 24
    %v2505 = vpop.permute.xlu0 %2504
    %2506 = vrot.lane.b32.xlu0 %v2349, 24
    %v2507 = vpop.permute.xlu0 %2506
    %2508 = vrot.lane.b32.xlu0 %v2350, 24
    %v2509 = vpop.permute.xlu0 %2508
    %2510 = vrot.lane.b32.xlu0 %v2351, 24
    %v2511 = vpop.permute.xlu0 %2510
    %2512 = vrot.lane.b32.xlu0 %v2352, 24
    %v2513 = vpop.permute.xlu0 %2512
    %2514 = vrot.lane.b32.xlu0 %v2353, 24
    %v2515 = vpop.permute.xlu0 %2514
    %2516 = vrot.lane.b32.xlu0 %v2354, 24
    %v2517 = vpop.permute.xlu0 %2516
    %2518 = vrot.lane.b32.xlu0 %v2355, 24
    %v2519 = vpop.permute.xlu0 %2518
    %2520 = vrot.lane.b32.xlu0 %v2356, 24
    %v2521 = vpop.permute.xlu0 %2520
    %2522 = vrot.lane.b32.xlu0 %v2357, 24
    %v2523 = vpop.permute.xlu0 %2522
    %2524 = vrot.lane.b32.xlu0 %v2358, 24
    %v2525 = vpop.permute.xlu0 %2524
    %2526 = vrot.lane.b32.xlu0 %v2359, 24
    %v2527 = vpop.permute.xlu0 %2526
    %2528 = vrot.lane.b32.xlu0 %v2360, 24
    %v2529 = vpop.permute.xlu0 %2528
    %2530 = vrot.lane.b32.xlu0 %v2361, 24
    %v2531 = vpop.permute.xlu0 %2530
    %2532 = vrot.lane.b32.xlu0 %v2362, 24
    %v2533 = vpop.permute.xlu0 %2532
    %2534 = vrot.lane.b32.xlu0 %v2363, 24
    %v2535 = vpop.permute.xlu0 %2534
    %2536 = vrot.lane.b32.xlu0 %v2364, 24
    %v2537 = vpop.permute.xlu0 %2536
    %2538 = vrot.lane.b32.xlu0 %v2365, 24
    %v2539 = vpop.permute.xlu0 %2538
    %2540 = vrot.lane.b32.xlu0 %v2366, 24
    %v2541 = vpop.permute.xlu0 %2540
    %2542 = vrot.lane.b32.xlu0 %v2367, 24
    %v2543 = vpop.permute.xlu0 %2542
    %2544 = vrot.lane.b32.xlu0 %v2368, 24
    %v2545 = vpop.permute.xlu0 %2544
    %2546 = vrot.lane.b32.xlu0 %v2369, 24
    %v2547 = vpop.permute.xlu0 %2546
    %2548 = vrot.lane.b32.xlu0 %v2370, 24
    %v2549 = vpop.permute.xlu0 %2548
    %2550 = vrot.lane.b32.xlu0 %v2371, 24
    %v2551 = vpop.permute.xlu0 %2550
    %2552 = vrot.lane.b32.xlu0 %v2372, 24
    %v2553 = vpop.permute.xlu0 %2552
    %2554 = vrot.lane.b32.xlu0 %v2373, 24
    %v2555 = vpop.permute.xlu0 %2554
    %2556 = vrot.lane.b32.xlu0 %v2374, 24
    %v2557 = vpop.permute.xlu0 %2556
    %2558 = vrot.lane.b32.xlu0 %v2375, 24
    %v2559 = vpop.permute.xlu0 %2558
    %2560 = vrot.lane.b32.xlu0 %v2376, 24
    %v2561 = vpop.permute.xlu0 %2560
    %2562 = vrot.lane.b32.xlu0 %v2377, 24
    %v2563 = vpop.permute.xlu0 %2562
    %2564 = vrot.lane.b32.xlu0 %v2378, 24
    %v2565 = vpop.permute.xlu0 %2564
    %2566 = vrot.lane.b32.xlu0 %v2379, 24
    %v2567 = vpop.permute.xlu0 %2566
    %2568 = vrot.lane.b32.xlu0 %v2380, 24
    %v2569 = vpop.permute.xlu0 %2568
    %2570 = vrot.lane.b32.xlu0 %v2381, 24
    %v2571 = vpop.permute.xlu0 %2570
    %2572 = vrot.lane.b32.xlu0 %v2382, 24
    %v2573 = vpop.permute.xlu0 %2572
    %2574 = vrot.lane.b32.xlu0 %v2383, 24
    %v2575 = vpop.permute.xlu0 %2574
    %vm2640 = vcmask 228544
    %2641 = vst.msk [vmem:[#allocation4] sm:$0xff] %vm2640, %v2449
    %2642 = vst.msk [vmem:[#allocation4 + $0x8] sm:$0xff] %vm2640, %v2451
    %2643 = vst.msk [vmem:[#allocation4 + $0x10] sm:$0xff] %vm2640, %v2453
    %2644 = vst.msk [vmem:[#allocation4 + $0x18] sm:$0xff] %vm2640, %v2455
    %2645 = vst.msk [vmem:[#allocation4 + $0x20] sm:$0xff] %vm2640, %v2457
    %2646 = vst.msk [vmem:[#allocation4 + $0x28] sm:$0xff] %vm2640, %v2459
    %2647 = vst.msk [vmem:[#allocation4 + $0x30] sm:$0xff] %vm2640, %v2461
    %2648 = vst.msk [vmem:[#allocation4 + $0x38] sm:$0xff] %vm2640, %v2463
    %2649 = vst.msk [vmem:[#allocation4 + $0x40] sm:$0xff] %vm2640, %v2465
    %2650 = vst.msk [vmem:[#allocation4 + $0x48] sm:$0xff] %vm2640, %v2467
    %2651 = vst.msk [vmem:[#allocation4 + $0x50] sm:$0xff] %vm2640, %v2469
    %2652 = vst.msk [vmem:[#allocation4 + $0x58] sm:$0xff] %vm2640, %v2471
    %2653 = vst.msk [vmem:[#allocation4 + $0x60] sm:$0xff] %vm2640, %v2473
    %2654 = vst.msk [vmem:[#allocation4 + $0x68] sm:$0xff] %vm2640, %v2475
    %2655 = vst.msk [vmem:[#allocation4 + $0x70] sm:$0xff] %vm2640, %v2477
    %2656 = vst.msk [vmem:[#allocation4 + $0x78] sm:$0xff] %vm2640, %v2479
    %2657 = vst.msk [vmem:[#allocation4 + $0x80] sm:$0xff] %vm2640, %v2481
    %2658 = vst.msk [vmem:[#allocation4 + $0x88] sm:$0xff] %vm2640, %v2483
    %2659 = vst.msk [vmem:[#allocation4 + $0x90] sm:$0xff] %vm2640, %v2485
    %2660 = vst.msk [vmem:[#allocation4 + $0x98] sm:$0xff] %vm2640, %v2487
    %2661 = vst.msk [vmem:[#allocation4 + $0xa0] sm:$0xff] %vm2640, %v2489
    %2662 = vst.msk [vmem:[#allocation4 + $0xa8] sm:$0xff] %vm2640, %v2491
    %2663 = vst.msk [vmem:[#allocation4 + $0xb0] sm:$0xff] %vm2640, %v2493
    %2664 = vst.msk [vmem:[#allocation4 + $0xb8] sm:$0xff] %vm2640, %v2495
    %2665 = vst.msk [vmem:[#allocation4 + $0xc0] sm:$0xff] %vm2640, %v2497
    %2666 = vst.msk [vmem:[#allocation4 + $0xc8] sm:$0xff] %vm2640, %v2499
    %2667 = vst.msk [vmem:[#allocation4 + $0xd0] sm:$0xff] %vm2640, %v2501
    %2668 = vst.msk [vmem:[#allocation4 + $0xd8] sm:$0xff] %vm2640, %v2503
    %2669 = vst.msk [vmem:[#allocation4 + $0xe0] sm:$0xff] %vm2640, %v2505
    %2670 = vst.msk [vmem:[#allocation4 + $0xe8] sm:$0xff] %vm2640, %v2507
    %2671 = vst.msk [vmem:[#allocation4 + $0xf0] sm:$0xff] %vm2640, %v2509
    %2672 = vst.msk [vmem:[#allocation4 + $0xf8] sm:$0xff] %vm2640, %v2511
    %2673 = vst.msk [vmem:[#allocation4 + $0x100] sm:$0xff] %vm2640, %v2513
    %2674 = vst.msk [vmem:[#allocation4 + $0x108] sm:$0xff] %vm2640, %v2515
    %2675 = vst.msk [vmem:[#allocation4 + $0x110] sm:$0xff] %vm2640, %v2517
    %2676 = vst.msk [vmem:[#allocation4 + $0x118] sm:$0xff] %vm2640, %v2519
    %2677 = vst.msk [vmem:[#allocation4 + $0x120] sm:$0xff] %vm2640, %v2521
    %2678 = vst.msk [vmem:[#allocation4 + $0x128] sm:$0xff] %vm2640, %v2523
    %2679 = vst.msk [vmem:[#allocation4 + $0x130] sm:$0xff] %vm2640, %v2525
    %2680 = vst.msk [vmem:[#allocation4 + $0x138] sm:$0xff] %vm2640, %v2527
    %2681 = vst.msk [vmem:[#allocation4 + $0x140] sm:$0xff] %vm2640, %v2529
    %2682 = vst.msk [vmem:[#allocation4 + $0x148] sm:$0xff] %vm2640, %v2531
    %2683 = vst.msk [vmem:[#allocation4 + $0x150] sm:$0xff] %vm2640, %v2533
    %2684 = vst.msk [vmem:[#allocation4 + $0x158] sm:$0xff] %vm2640, %v2535
    %2685 = vst.msk [vmem:[#allocation4 + $0x160] sm:$0xff] %vm2640, %v2537
    %2686 = vst.msk [vmem:[#allocation4 + $0x168] sm:$0xff] %vm2640, %v2539
    %2687 = vst.msk [vmem:[#allocation4 + $0x170] sm:$0xff] %vm2640, %v2541
    %2688 = vst.msk [vmem:[#allocation4 + $0x178] sm:$0xff] %vm2640, %v2543
    %2689 = vst.msk [vmem:[#allocation4 + $0x180] sm:$0xff] %vm2640, %v2545
    %2690 = vst.msk [vmem:[#allocation4 + $0x188] sm:$0xff] %vm2640, %v2547
    %2691 = vst.msk [vmem:[#allocation4 + $0x190] sm:$0xff] %vm2640, %v2549
    %2692 = vst.msk [vmem:[#allocation4 + $0x198] sm:$0xff] %vm2640, %v2551
    %2693 = vst.msk [vmem:[#allocation4 + $0x1a0] sm:$0xff] %vm2640, %v2553
    %2694 = vst.msk [vmem:[#allocation4 + $0x1a8] sm:$0xff] %vm2640, %v2555
    %2695 = vst.msk [vmem:[#allocation4 + $0x1b0] sm:$0xff] %vm2640, %v2557
    %2696 = vst.msk [vmem:[#allocation4 + $0x1b8] sm:$0xff] %vm2640, %v2559
    %2697 = vst.msk [vmem:[#allocation4 + $0x1c0] sm:$0xff] %vm2640, %v2561
    %2698 = vst.msk [vmem:[#allocation4 + $0x1c8] sm:$0xff] %vm2640, %v2563
    %2699 = vst.msk [vmem:[#allocation4 + $0x1d0] sm:$0xff] %vm2640, %v2565
    %2700 = vst.msk [vmem:[#allocation4 + $0x1d8] sm:$0xff] %vm2640, %v2567
    %2701 = vst.msk [vmem:[#allocation4 + $0x1e0] sm:$0xff] %vm2640, %v2569
    %2702 = vst.msk [vmem:[#allocation4 + $0x1e8] sm:$0xff] %vm2640, %v2571
    %2703 = vst.msk [vmem:[#allocation4 + $0x1f0] sm:$0xff] %vm2640, %v2573
    %2704 = vst.msk [vmem:[#allocation4 + $0x1f8] sm:$0xff] %vm2640, %v2575
    %v2705 = vld [vmem:[%s2319 + $0x1] sm:$0xff]
    %v2706 = vld [vmem:[%s2319 + $0x9] sm:$0xff]
    %v2707 = vld [vmem:[%s2319 + $0x19] sm:$0xff]
    %v2708 = vld [vmem:[%s2319 + $0x21] sm:$0xff]
    %v2709 = vld [vmem:[%s2319 + $0x31] sm:$0xff]
    %v2710 = vld [vmem:[%s2319 + $0x39] sm:$0xff]
    %v2711 = vld [vmem:[%s2319 + $0x49] sm:$0xff]
    %v2712 = vld [vmem:[%s2319 + $0x51] sm:$0xff]
    %v2713 = vld [vmem:[%s2319 + $0x61] sm:$0xff]
    %v2714 = vld [vmem:[%s2319 + $0x69] sm:$0xff]
    %v2715 = vld [vmem:[%s2319 + $0x79] sm:$0xff]
    %v2716 = vld [vmem:[%s2319 + $0x81] sm:$0xff]
    %v2717 = vld [vmem:[%s2319 + $0x91] sm:$0xff]
    %v2718 = vld [vmem:[%s2319 + $0x99] sm:$0xff]
    %v2719 = vld [vmem:[%s2319 + $0xa9] sm:$0xff]
    %v2720 = vld [vmem:[%s2319 + $0xb1] sm:$0xff]
    %v2721 = vld [vmem:[%s2319 + $0xc1] sm:$0xff]
    %v2722 = vld [vmem:[%s2319 + $0xc9] sm:$0xff]
    %v2723 = vld [vmem:[%s2319 + $0xd9] sm:$0xff]
    %v2724 = vld [vmem:[%s2319 + $0xe1] sm:$0xff]
    %v2725 = vld [vmem:[%s2319 + $0xf1] sm:$0xff]
    %v2726 = vld [vmem:[%s2319 + $0xf9] sm:$0xff]
    %v2727 = vld [vmem:[%s2319 + $0x109] sm:$0xff]
    %v2728 = vld [vmem:[%s2319 + $0x111] sm:$0xff]
    %v2729 = vld [vmem:[%s2319 + $0x121] sm:$0xff]
    %v2730 = vld [vmem:[%s2319 + $0x129] sm:$0xff]
    %v2731 = vld [vmem:[%s2319 + $0x139] sm:$0xff]
    %v2732 = vld [vmem:[%s2319 + $0x141] sm:$0xff]
    %v2733 = vld [vmem:[%s2319 + $0x151] sm:$0xff]
    %v2734 = vld [vmem:[%s2319 + $0x159] sm:$0xff]
    %v2735 = vld [vmem:[%s2319 + $0x169] sm:$0xff]
    %v2736 = vld [vmem:[%s2319 + $0x171] sm:$0xff]
    %v2737 = vld [vmem:[%s2319 + $0x1b1] sm:$0xff]
    %v2738 = vld [vmem:[%s2319 + $0x1b9] sm:$0xff]
    %v2739 = vld [vmem:[%s2319 + $0x1c9] sm:$0xff]
    %v2740 = vld [vmem:[%s2319 + $0x1d1] sm:$0xff]
    %v2741 = vld [vmem:[%s2319 + $0x1e1] sm:$0xff]
    %v2742 = vld [vmem:[%s2319 + $0x1e9] sm:$0xff]
    %v2743 = vld [vmem:[%s2319 + $0x1f9] sm:$0xff]
    %v2744 = vld [vmem:[%s2319 + $0x201] sm:$0xff]
    %v2745 = vld [vmem:[%s2319 + $0x211] sm:$0xff]
    %v2746 = vld [vmem:[%s2319 + $0x219] sm:$0xff]
    %v2747 = vld [vmem:[%s2319 + $0x229] sm:$0xff]
    %v2748 = vld [vmem:[%s2319 + $0x231] sm:$0xff]
    %v2749 = vld [vmem:[%s2319 + $0x241] sm:$0xff]
    %v2750 = vld [vmem:[%s2319 + $0x249] sm:$0xff]
    %v2751 = vld [vmem:[%s2319 + $0x259] sm:$0xff]
    %v2752 = vld [vmem:[%s2319 + $0x261] sm:$0xff]
    %v2753 = vld [vmem:[%s2319 + $0x271] sm:$0xff]
    %v2754 = vld [vmem:[%s2319 + $0x279] sm:$0xff]
    %v2755 = vld [vmem:[%s2319 + $0x289] sm:$0xff]
    %v2756 = vld [vmem:[%s2319 + $0x291] sm:$0xff]
    %v2757 = vld [vmem:[%s2319 + $0x2a1] sm:$0xff]
    %v2758 = vld [vmem:[%s2319 + $0x2a9] sm:$0xff]
    %v2759 = vld [vmem:[%s2319 + $0x2b9] sm:$0xff]
    %v2760 = vld [vmem:[%s2319 + $0x2c1] sm:$0xff]
    %v2761 = vld [vmem:[%s2319 + $0x2d1] sm:$0xff]
    %v2762 = vld [vmem:[%s2319 + $0x2d9] sm:$0xff]
    %v2763 = vld [vmem:[%s2319 + $0x2e9] sm:$0xff]
    %v2764 = vld [vmem:[%s2319 + $0x2f1] sm:$0xff]
    %v2765 = vld [vmem:[%s2319 + $0x301] sm:$0xff]
    %v2766 = vld [vmem:[%s2319 + $0x309] sm:$0xff]
    %v2767 = vld [vmem:[%s2319 + $0x319] sm:$0xff]
    %v2768 = vld [vmem:[%s2319 + $0x321] sm:$0xff]
    %2833 = vrot.lane.b32.xlu0 %v2705, 28
    %v2834 = vpop.permute.xlu0 %2833
    %2835 = vrot.lane.b32.xlu0 %v2706, 28
    %v2836 = vpop.permute.xlu0 %2835
    %2837 = vrot.lane.b32.xlu0 %v2707, 28
    %v2838 = vpop.permute.xlu0 %2837
    %2839 = vrot.lane.b32.xlu0 %v2708, 28
    %v2840 = vpop.permute.xlu0 %2839
    %2841 = vrot.lane.b32.xlu0 %v2709, 28
    %v2842 = vpop.permute.xlu0 %2841
    %2843 = vrot.lane.b32.xlu0 %v2710, 28
    %v2844 = vpop.permute.xlu0 %2843
    %2845 = vrot.lane.b32.xlu0 %v2711, 28
    %v2846 = vpop.permute.xlu0 %2845
    %2847 = vrot.lane.b32.xlu0 %v2712, 28
    %v2848 = vpop.permute.xlu0 %2847
    %2849 = vrot.lane.b32.xlu0 %v2713, 28
    %v2850 = vpop.permute.xlu0 %2849
    %2851 = vrot.lane.b32.xlu0 %v2714, 28
    %v2852 = vpop.permute.xlu0 %2851
    %2853 = vrot.lane.b32.xlu0 %v2715, 28
    %v2854 = vpop.permute.xlu0 %2853
    %2855 = vrot.lane.b32.xlu0 %v2716, 28
    %v2856 = vpop.permute.xlu0 %2855
    %2857 = vrot.lane.b32.xlu0 %v2717, 28
    %v2858 = vpop.permute.xlu0 %2857
    %2859 = vrot.lane.b32.xlu0 %v2718, 28
    %v2860 = vpop.permute.xlu0 %2859
    %2861 = vrot.lane.b32.xlu0 %v2719, 28
    %v2862 = vpop.permute.xlu0 %2861
    %2863 = vrot.lane.b32.xlu0 %v2720, 28
    %v2864 = vpop.permute.xlu0 %2863
    %2865 = vrot.lane.b32.xlu0 %v2721, 28
    %v2866 = vpop.permute.xlu0 %2865
    %2867 = vrot.lane.b32.xlu0 %v2722, 28
    %v2868 = vpop.permute.xlu0 %2867
    %2869 = vrot.lane.b32.xlu0 %v2723, 28
    %v2870 = vpop.permute.xlu0 %2869
    %2871 = vrot.lane.b32.xlu0 %v2724, 28
    %v2872 = vpop.permute.xlu0 %2871
    %2873 = vrot.lane.b32.xlu0 %v2725, 28
    %v2874 = vpop.permute.xlu0 %2873
    %2875 = vrot.lane.b32.xlu0 %v2726, 28
    %v2876 = vpop.permute.xlu0 %2875
    %2877 = vrot.lane.b32.xlu0 %v2727, 28
    %v2878 = vpop.permute.xlu0 %2877
    %2879 = vrot.lane.b32.xlu0 %v2728, 28
    %v2880 = vpop.permute.xlu0 %2879
    %2881 = vrot.lane.b32.xlu0 %v2729, 28
    %v2882 = vpop.permute.xlu0 %2881
    %2883 = vrot.lane.b32.xlu0 %v2730, 28
    %v2884 = vpop.permute.xlu0 %2883
    %2885 = vrot.lane.b32.xlu0 %v2731, 28
    %v2886 = vpop.permute.xlu0 %2885
    %2887 = vrot.lane.b32.xlu0 %v2732, 28
    %v2888 = vpop.permute.xlu0 %2887
    %2889 = vrot.lane.b32.xlu0 %v2733, 28
    %v2890 = vpop.permute.xlu0 %2889
    %2891 = vrot.lane.b32.xlu0 %v2734, 28
    %v2892 = vpop.permute.xlu0 %2891
    %2893 = vrot.lane.b32.xlu0 %v2735, 28
    %v2894 = vpop.permute.xlu0 %2893
    %2895 = vrot.lane.b32.xlu0 %v2736, 28
    %v2896 = vpop.permute.xlu0 %2895
    %2897 = vrot.lane.b32.xlu0 %v2737, 28
    %v2898 = vpop.permute.xlu0 %2897
    %2899 = vrot.lane.b32.xlu0 %v2738, 28
    %v2900 = vpop.permute.xlu0 %2899
    %2901 = vrot.lane.b32.xlu0 %v2739, 28
    %v2902 = vpop.permute.xlu0 %2901
    %2903 = vrot.lane.b32.xlu0 %v2740, 28
    %v2904 = vpop.permute.xlu0 %2903
    %2905 = vrot.lane.b32.xlu0 %v2741, 28
    %v2906 = vpop.permute.xlu0 %2905
    %2907 = vrot.lane.b32.xlu0 %v2742, 28
    %v2908 = vpop.permute.xlu0 %2907
    %2909 = vrot.lane.b32.xlu0 %v2743, 28
    %v2910 = vpop.permute.xlu0 %2909
    %2911 = vrot.lane.b32.xlu0 %v2744, 28
    %v2912 = vpop.permute.xlu0 %2911
    %2913 = vrot.lane.b32.xlu0 %v2745, 28
    %v2914 = vpop.permute.xlu0 %2913
    %2915 = vrot.lane.b32.xlu0 %v2746, 28
    %v2916 = vpop.permute.xlu0 %2915
    %2917 = vrot.lane.b32.xlu0 %v2747, 28
    %v2918 = vpop.permute.xlu0 %2917
    %2919 = vrot.lane.b32.xlu0 %v2748, 28
    %v2920 = vpop.permute.xlu0 %2919
    %2921 = vrot.lane.b32.xlu0 %v2749, 28
    %v2922 = vpop.permute.xlu0 %2921
    %2923 = vrot.lane.b32.xlu0 %v2750, 28
    %v2924 = vpop.permute.xlu0 %2923
    %2925 = vrot.lane.b32.xlu0 %v2751, 28
    %v2926 = vpop.permute.xlu0 %2925
    %2927 = vrot.lane.b32.xlu0 %v2752, 28
    %v2928 = vpop.permute.xlu0 %2927
    %2929 = vrot.lane.b32.xlu0 %v2753, 28
    %v2930 = vpop.permute.xlu0 %2929
    %2931 = vrot.lane.b32.xlu0 %v2754, 28
    %v2932 = vpop.permute.xlu0 %2931
    %2933 = vrot.lane.b32.xlu0 %v2755, 28
    %v2934 = vpop.permute.xlu0 %2933
    %2935 = vrot.lane.b32.xlu0 %v2756, 28
    %v2936 = vpop.permute.xlu0 %2935
    %2937 = vrot.lane.b32.xlu0 %v2757, 28
    %v2938 = vpop.permute.xlu0 %2937
    %2939 = vrot.lane.b32.xlu0 %v2758, 28
    %v2940 = vpop.permute.xlu0 %2939
    %2941 = vrot.lane.b32.xlu0 %v2759, 28
    %v2942 = vpop.permute.xlu0 %2941
    %2943 = vrot.lane.b32.xlu0 %v2760, 28
    %v2944 = vpop.permute.xlu0 %2943
    %2945 = vrot.lane.b32.xlu0 %v2761, 28
    %v2946 = vpop.permute.xlu0 %2945
    %2947 = vrot.lane.b32.xlu0 %v2762, 28
    %v2948 = vpop.permute.xlu0 %2947
    %2949 = vrot.lane.b32.xlu0 %v2763, 28
    %v2950 = vpop.permute.xlu0 %2949
    %2951 = vrot.lane.b32.xlu0 %v2764, 28
    %v2952 = vpop.permute.xlu0 %2951
    %2953 = vrot.lane.b32.xlu0 %v2765, 28
    %v2954 = vpop.permute.xlu0 %2953
    %2955 = vrot.lane.b32.xlu0 %v2766, 28
    %v2956 = vpop.permute.xlu0 %2955
    %2957 = vrot.lane.b32.xlu0 %v2767, 28
    %v2958 = vpop.permute.xlu0 %2957
    %2959 = vrot.lane.b32.xlu0 %v2768, 28
    %v2960 = vpop.permute.xlu0 %2959
    %vm3025 = vcmask 261344
    %3026 = vst.msk [vmem:[#allocation4] sm:$0xff] %vm3025, %v2834
    %3027 = vst.msk [vmem:[#allocation4 + $0x8] sm:$0xff] %vm3025, %v2836
    %3028 = vst.msk [vmem:[#allocation4 + $0x10] sm:$0xff] %vm3025, %v2838
    %3029 = vst.msk [vmem:[#allocation4 + $0x18] sm:$0xff] %vm3025, %v2840
    %3030 = vst.msk [vmem:[#allocation4 + $0x20] sm:$0xff] %vm3025, %v2842
    %3031 = vst.msk [vmem:[#allocation4 + $0x28] sm:$0xff] %vm3025, %v2844
    %3032 = vst.msk [vmem:[#allocation4 + $0x30] sm:$0xff] %vm3025, %v2846
    %3033 = vst.msk [vmem:[#allocation4 + $0x38] sm:$0xff] %vm3025, %v2848
    %3034 = vst.msk [vmem:[#allocation4 + $0x40] sm:$0xff] %vm3025, %v2850
    %3035 = vst.msk [vmem:[#allocation4 + $0x48] sm:$0xff] %vm3025, %v2852
    %3036 = vst.msk [vmem:[#allocation4 + $0x50] sm:$0xff] %vm3025, %v2854
    %3037 = vst.msk [vmem:[#allocation4 + $0x58] sm:$0xff] %vm3025, %v2856
    %3038 = vst.msk [vmem:[#allocation4 + $0x60] sm:$0xff] %vm3025, %v2858
    %3039 = vst.msk [vmem:[#allocation4 + $0x68] sm:$0xff] %vm3025, %v2860
    %3040 = vst.msk [vmem:[#allocation4 + $0x70] sm:$0xff] %vm3025, %v2862
    %3041 = vst.msk [vmem:[#allocation4 + $0x78] sm:$0xff] %vm3025, %v2864
    %3042 = vst.msk [vmem:[#allocation4 + $0x80] sm:$0xff] %vm3025, %v2866
    %3043 = vst.msk [vmem:[#allocation4 + $0x88] sm:$0xff] %vm3025, %v2868
    %3044 = vst.msk [vmem:[#allocation4 + $0x90] sm:$0xff] %vm3025, %v2870
    %3045 = vst.msk [vmem:[#allocation4 + $0x98] sm:$0xff] %vm3025, %v2872
    %3046 = vst.msk [vmem:[#allocation4 + $0xa0] sm:$0xff] %vm3025, %v2874
    %3047 = vst.msk [vmem:[#allocation4 + $0xa8] sm:$0xff] %vm3025, %v2876
    %3048 = vst.msk [vmem:[#allocation4 + $0xb0] sm:$0xff] %vm3025, %v2878
    %3049 = vst.msk [vmem:[#allocation4 + $0xb8] sm:$0xff] %vm3025, %v2880
    %3050 = vst.msk [vmem:[#allocation4 + $0xc0] sm:$0xff] %vm3025, %v2882
    %3051 = vst.msk [vmem:[#allocation4 + $0xc8] sm:$0xff] %vm3025, %v2884
    %3052 = vst.msk [vmem:[#allocation4 + $0xd0] sm:$0xff] %vm3025, %v2886
    %3053 = vst.msk [vmem:[#allocation4 + $0xd8] sm:$0xff] %vm3025, %v2888
    %3054 = vst.msk [vmem:[#allocation4 + $0xe0] sm:$0xff] %vm3025, %v2890
    %3055 = vst.msk [vmem:[#allocation4 + $0xe8] sm:$0xff] %vm3025, %v2892
    %3056 = vst.msk [vmem:[#allocation4 + $0xf0] sm:$0xff] %vm3025, %v2894
    %3057 = vst.msk [vmem:[#allocation4 + $0xf8] sm:$0xff] %vm3025, %v2896
    %3058 = vst.msk [vmem:[#allocation4 + $0x100] sm:$0xff] %vm3025, %v2898
    %3059 = vst.msk [vmem:[#allocation4 + $0x108] sm:$0xff] %vm3025, %v2900
    %3060 = vst.msk [vmem:[#allocation4 + $0x110] sm:$0xff] %vm3025, %v2902
    %3061 = vst.msk [vmem:[#allocation4 + $0x118] sm:$0xff] %vm3025, %v2904
    %3062 = vst.msk [vmem:[#allocation4 + $0x120] sm:$0xff] %vm3025, %v2906
    %3063 = vst.msk [vmem:[#allocation4 + $0x128] sm:$0xff] %vm3025, %v2908
    %3064 = vst.msk [vmem:[#allocation4 + $0x130] sm:$0xff] %vm3025, %v2910
    %3065 = vst.msk [vmem:[#allocation4 + $0x138] sm:$0xff] %vm3025, %v2912
    %3066 = vst.msk [vmem:[#allocation4 + $0x140] sm:$0xff] %vm3025, %v2914
    %3067 = vst.msk [vmem:[#allocation4 + $0x148] sm:$0xff] %vm3025, %v2916
    %3068 = vst.msk [vmem:[#allocation4 + $0x150] sm:$0xff] %vm3025, %v2918
    %3069 = vst.msk [vmem:[#allocation4 + $0x158] sm:$0xff] %vm3025, %v2920
    %3070 = vst.msk [vmem:[#allocation4 + $0x160] sm:$0xff] %vm3025, %v2922
    %3071 = vst.msk [vmem:[#allocation4 + $0x168] sm:$0xff] %vm3025, %v2924
    %3072 = vst.msk [vmem:[#allocation4 + $0x170] sm:$0xff] %vm3025, %v2926
    %3073 = vst.msk [vmem:[#allocation4 + $0x178] sm:$0xff] %vm3025, %v2928
    %3074 = vst.msk [vmem:[#allocation4 + $0x180] sm:$0xff] %vm3025, %v2930
    %3075 = vst.msk [vmem:[#allocation4 + $0x188] sm:$0xff] %vm3025, %v2932
    %3076 = vst.msk [vmem:[#allocation4 + $0x190] sm:$0xff] %vm3025, %v2934
    %3077 = vst.msk [vmem:[#allocation4 + $0x198] sm:$0xff] %vm3025, %v2936
    %3078 = vst.msk [vmem:[#allocation4 + $0x1a0] sm:$0xff] %vm3025, %v2938
    %3079 = vst.msk [vmem:[#allocation4 + $0x1a8] sm:$0xff] %vm3025, %v2940
    %3080 = vst.msk [vmem:[#allocation4 + $0x1b0] sm:$0xff] %vm3025, %v2942
    %3081 = vst.msk [vmem:[#allocation4 + $0x1b8] sm:$0xff] %vm3025, %v2944
    %3082 = vst.msk [vmem:[#allocation4 + $0x1c0] sm:$0xff] %vm3025, %v2946
    %3083 = vst.msk [vmem:[#allocation4 + $0x1c8] sm:$0xff] %vm3025, %v2948
    %3084 = vst.msk [vmem:[#allocation4 + $0x1d0] sm:$0xff] %vm3025, %v2950
    %3085 = vst.msk [vmem:[#allocation4 + $0x1d8] sm:$0xff] %vm3025, %v2952
    %3086 = vst.msk [vmem:[#allocation4 + $0x1e0] sm:$0xff] %vm3025, %v2954
    %3087 = vst.msk [vmem:[#allocation4 + $0x1e8] sm:$0xff] %vm3025, %v2956
    %3088 = vst.msk [vmem:[#allocation4 + $0x1f0] sm:$0xff] %vm3025, %v2958
    %3089 = vst.msk [vmem:[#allocation4 + $0x1f8] sm:$0xff] %vm3025, %v2960
    %v3090 = vld [vmem:[%s2319 + $0x2] sm:$0xff]
    %v3091 = vld [vmem:[%s2319 + $0xa] sm:$0xff]
    %v3092 = vld [vmem:[%s2319 + $0x1a] sm:$0xff]
    %v3093 = vld [vmem:[%s2319 + $0x22] sm:$0xff]
    %v3094 = vld [vmem:[%s2319 + $0x32] sm:$0xff]
    %v3095 = vld [vmem:[%s2319 + $0x3a] sm:$0xff]
    %v3096 = vld [vmem:[%s2319 + $0x4a] sm:$0xff]
    %v3097 = vld [vmem:[%s2319 + $0x52] sm:$0xff]
    %v3098 = vld [vmem:[%s2319 + $0x62] sm:$0xff]
    %v3099 = vld [vmem:[%s2319 + $0x6a] sm:$0xff]
    %v3100 = vld [vmem:[%s2319 + $0x7a] sm:$0xff]
    %v3101 = vld [vmem:[%s2319 + $0x82] sm:$0xff]
    %v3102 = vld [vmem:[%s2319 + $0x92] sm:$0xff]
    %v3103 = vld [vmem:[%s2319 + $0x9a] sm:$0xff]
    %v3104 = vld [vmem:[%s2319 + $0xaa] sm:$0xff]
    %v3105 = vld [vmem:[%s2319 + $0xb2] sm:$0xff]
    %v3106 = vld [vmem:[%s2319 + $0xc2] sm:$0xff]
    %v3107 = vld [vmem:[%s2319 + $0xca] sm:$0xff]
    %v3108 = vld [vmem:[%s2319 + $0xda] sm:$0xff]
    %v3109 = vld [vmem:[%s2319 + $0xe2] sm:$0xff]
    %v3110 = vld [vmem:[%s2319 + $0xf2] sm:$0xff]
    %v3111 = vld [vmem:[%s2319 + $0xfa] sm:$0xff]
    %v3112 = vld [vmem:[%s2319 + $0x10a] sm:$0xff]
    %v3113 = vld [vmem:[%s2319 + $0x112] sm:$0xff]
    %v3114 = vld [vmem:[%s2319 + $0x122] sm:$0xff]
    %v3115 = vld [vmem:[%s2319 + $0x12a] sm:$0xff]
    %v3116 = vld [vmem:[%s2319 + $0x13a] sm:$0xff]
    %v3117 = vld [vmem:[%s2319 + $0x142] sm:$0xff]
    %v3118 = vld [vmem:[%s2319 + $0x152] sm:$0xff]
    %v3119 = vld [vmem:[%s2319 + $0x15a] sm:$0xff]
    %v3120 = vld [vmem:[%s2319 + $0x16a] sm:$0xff]
    %v3121 = vld [vmem:[%s2319 + $0x172] sm:$0xff]
    %v3122 = vld [vmem:[%s2319 + $0x1b2] sm:$0xff]
    %v3123 = vld [vmem:[%s2319 + $0x1ba] sm:$0xff]
    %v3124 = vld [vmem:[%s2319 + $0x1ca] sm:$0xff]
    %v3125 = vld [vmem:[%s2319 + $0x1d2] sm:$0xff]
    %v3126 = vld [vmem:[%s2319 + $0x1e2] sm:$0xff]
    %v3127 = vld [vmem:[%s2319 + $0x1ea] sm:$0xff]
    %v3128 = vld [vmem:[%s2319 + $0x1fa] sm:$0xff]
    %v3129 = vld [vmem:[%s2319 + $0x202] sm:$0xff]
    %v3130 = vld [vmem:[%s2319 + $0x212] sm:$0xff]
    %v3131 = vld [vmem:[%s2319 + $0x21a] sm:$0xff]
    %v3132 = vld [vmem:[%s2319 + $0x22a] sm:$0xff]
    %v3133 = vld [vmem:[%s2319 + $0x232] sm:$0xff]
    %v3134 = vld [vmem:[%s2319 + $0x242] sm:$0xff]
    %v3135 = vld [vmem:[%s2319 + $0x24a] sm:$0xff]
    %v3136 = vld [vmem:[%s2319 + $0x25a] sm:$0xff]
    %v3137 = vld [vmem:[%s2319 + $0x262] sm:$0xff]
    %v3138 = vld [vmem:[%s2319 + $0x272] sm:$0xff]
    %v3139 = vld [vmem:[%s2319 + $0x27a] sm:$0xff]
    %v3140 = vld [vmem:[%s2319 + $0x28a] sm:$0xff]
    %v3141 = vld [vmem:[%s2319 + $0x292] sm:$0xff]
    %v3142 = vld [vmem:[%s2319 + $0x2a2] sm:$0xff]
    %v3143 = vld [vmem:[%s2319 + $0x2aa] sm:$0xff]
    %v3144 = vld [vmem:[%s2319 + $0x2ba] sm:$0xff]
    %v3145 = vld [vmem:[%s2319 + $0x2c2] sm:$0xff]
    %v3146 = vld [vmem:[%s2319 + $0x2d2] sm:$0xff]
    %v3147 = vld [vmem:[%s2319 + $0x2da] sm:$0xff]
    %v3148 = vld [vmem:[%s2319 + $0x2ea] sm:$0xff]
    %v3149 = vld [vmem:[%s2319 + $0x2f2] sm:$0xff]
    %v3150 = vld [vmem:[%s2319 + $0x302] sm:$0xff]
    %v3151 = vld [vmem:[%s2319 + $0x30a] sm:$0xff]
    %v3152 = vld [vmem:[%s2319 + $0x31a] sm:$0xff]
    %v3153 = vld [vmem:[%s2319 + $0x322] sm:$0xff]
    %3218 = vrot.lane.b32.xlu0 %v3090, 32
    %v3219 = vpop.permute.xlu0 %3218
    %3220 = vrot.lane.b32.xlu0 %v3091, 32
    %v3221 = vpop.permute.xlu0 %3220
    %3222 = vrot.lane.b32.xlu0 %v3092, 32
    %v3223 = vpop.permute.xlu0 %3222
    %3224 = vrot.lane.b32.xlu0 %v3093, 32
    %v3225 = vpop.permute.xlu0 %3224
    %3226 = vrot.lane.b32.xlu0 %v3094, 32
    %v3227 = vpop.permute.xlu0 %3226
    %3228 = vrot.lane.b32.xlu0 %v3095, 32
    %v3229 = vpop.permute.xlu0 %3228
    %3230 = vrot.lane.b32.xlu0 %v3096, 32
    %v3231 = vpop.permute.xlu0 %3230
    %3232 = vrot.lane.b32.xlu0 %v3097, 32
    %v3233 = vpop.permute.xlu0 %3232
    %3234 = vrot.lane.b32.xlu0 %v3098, 32
    %v3235 = vpop.permute.xlu0 %3234
    %3236 = vrot.lane.b32.xlu0 %v3099, 32
    %v3237 = vpop.permute.xlu0 %3236
    %3238 = vrot.lane.b32.xlu0 %v3100, 32
    %v3239 = vpop.permute.xlu0 %3238
    %3240 = vrot.lane.b32.xlu0 %v3101, 32
    %v3241 = vpop.permute.xlu0 %3240
    %3242 = vrot.lane.b32.xlu0 %v3102, 32
    %v3243 = vpop.permute.xlu0 %3242
    %3244 = vrot.lane.b32.xlu0 %v3103, 32
    %v3245 = vpop.permute.xlu0 %3244
    %3246 = vrot.lane.b32.xlu0 %v3104, 32
    %v3247 = vpop.permute.xlu0 %3246
    %3248 = vrot.lane.b32.xlu0 %v3105, 32
    %v3249 = vpop.permute.xlu0 %3248
    %3250 = vrot.lane.b32.xlu0 %v3106, 32
    %v3251 = vpop.permute.xlu0 %3250
    %3252 = vrot.lane.b32.xlu0 %v3107, 32
    %v3253 = vpop.permute.xlu0 %3252
    %3254 = vrot.lane.b32.xlu0 %v3108, 32
    %v3255 = vpop.permute.xlu0 %3254
    %3256 = vrot.lane.b32.xlu0 %v3109, 32
    %v3257 = vpop.permute.xlu0 %3256
    %3258 = vrot.lane.b32.xlu0 %v3110, 32
    %v3259 = vpop.permute.xlu0 %3258
    %3260 = vrot.lane.b32.xlu0 %v3111, 32
    %v3261 = vpop.permute.xlu0 %3260
    %3262 = vrot.lane.b32.xlu0 %v3112, 32
    %v3263 = vpop.permute.xlu0 %3262
    %3264 = vrot.lane.b32.xlu0 %v3113, 32
    %v3265 = vpop.permute.xlu0 %3264
    %3266 = vrot.lane.b32.xlu0 %v3114, 32
    %v3267 = vpop.permute.xlu0 %3266
    %3268 = vrot.lane.b32.xlu0 %v3115, 32
    %v3269 = vpop.permute.xlu0 %3268
    %3270 = vrot.lane.b32.xlu0 %v3116, 32
    %v3271 = vpop.permute.xlu0 %3270
    %3272 = vrot.lane.b32.xlu0 %v3117, 32
    %v3273 = vpop.permute.xlu0 %3272
    %3274 = vrot.lane.b32.xlu0 %v3118, 32
    %v3275 = vpop.permute.xlu0 %3274
    %3276 = vrot.lane.b32.xlu0 %v3119, 32
    %v3277 = vpop.permute.xlu0 %3276
    %3278 = vrot.lane.b32.xlu0 %v3120, 32
    %v3279 = vpop.permute.xlu0 %3278
    %3280 = vrot.lane.b32.xlu0 %v3121, 32
    %v3281 = vpop.permute.xlu0 %3280
    %3282 = vrot.lane.b32.xlu0 %v3122, 32
    %v3283 = vpop.permute.xlu0 %3282
    %3284 = vrot.lane.b32.xlu0 %v3123, 32
    %v3285 = vpop.permute.xlu0 %3284
    %3286 = vrot.lane.b32.xlu0 %v3124, 32
    %v3287 = vpop.permute.xlu0 %3286
    %3288 = vrot.lane.b32.xlu0 %v3125, 32
    %v3289 = vpop.permute.xlu0 %3288
    %3290 = vrot.lane.b32.xlu0 %v3126, 32
    %v3291 = vpop.permute.xlu0 %3290
    %3292 = vrot.lane.b32.xlu0 %v3127, 32
    %v3293 = vpop.permute.xlu0 %3292
    %3294 = vrot.lane.b32.xlu0 %v3128, 32
    %v3295 = vpop.permute.xlu0 %3294
    %3296 = vrot.lane.b32.xlu0 %v3129, 32
    %v3297 = vpop.permute.xlu0 %3296
    %3298 = vrot.lane.b32.xlu0 %v3130, 32
    %v3299 = vpop.permute.xlu0 %3298
    %3300 = vrot.lane.b32.xlu0 %v3131, 32
    %v3301 = vpop.permute.xlu0 %3300
    %3302 = vrot.lane.b32.xlu0 %v3132, 32
    %v3303 = vpop.permute.xlu0 %3302
    %3304 = vrot.lane.b32.xlu0 %v3133, 32
    %v3305 = vpop.permute.xlu0 %3304
    %3306 = vrot.lane.b32.xlu0 %v3134, 32
    %v3307 = vpop.permute.xlu0 %3306
    %3308 = vrot.lane.b32.xlu0 %v3135, 32
    %v3309 = vpop.permute.xlu0 %3308
    %3310 = vrot.lane.b32.xlu0 %v3136, 32
    %v3311 = vpop.permute.xlu0 %3310
    %3312 = vrot.lane.b32.xlu0 %v3137, 32
    %v3313 = vpop.permute.xlu0 %3312
    %3314 = vrot.lane.b32.xlu0 %v3138, 32
    %v3315 = vpop.permute.xlu0 %3314
    %3316 = vrot.lane.b32.xlu0 %v3139, 32
    %v3317 = vpop.permute.xlu0 %3316
    %3318 = vrot.lane.b32.xlu0 %v3140, 32
    %v3319 = vpop.permute.xlu0 %3318
    %3320 = vrot.lane.b32.xlu0 %v3141, 32
    %v3321 = vpop.permute.xlu0 %3320
    %3322 = vrot.lane.b32.xlu0 %v3142, 32
    %v3323 = vpop.permute.xlu0 %3322
    %3324 = vrot.lane.b32.xlu0 %v3143, 32
    %v3325 = vpop.permute.xlu0 %3324
    %3326 = vrot.lane.b32.xlu0 %v3144, 32
    %v3327 = vpop.permute.xlu0 %3326
    %3328 = vrot.lane.b32.xlu0 %v3145, 32
    %v3329 = vpop.permute.xlu0 %3328
    %3330 = vrot.lane.b32.xlu0 %v3146, 32
    %v3331 = vpop.permute.xlu0 %3330
    %3332 = vrot.lane.b32.xlu0 %v3147, 32
    %v3333 = vpop.permute.xlu0 %3332
    %3334 = vrot.lane.b32.xlu0 %v3148, 32
    %v3335 = vpop.permute.xlu0 %3334
    %3336 = vrot.lane.b32.xlu0 %v3149, 32
    %v3337 = vpop.permute.xlu0 %3336
    %3338 = vrot.lane.b32.xlu0 %v3150, 32
    %v3339 = vpop.permute.xlu0 %3338
    %3340 = vrot.lane.b32.xlu0 %v3151, 32
    %v3341 = vpop.permute.xlu0 %3340
    %3342 = vrot.lane.b32.xlu0 %v3152, 32
    %v3343 = vpop.permute.xlu0 %3342
    %3344 = vrot.lane.b32.xlu0 %v3153, 32
    %v3345 = vpop.permute.xlu0 %3344
    %vm3410 = vcmask 294144
    %3411 = vst.msk [vmem:[#allocation4] sm:$0xff] %vm3410, %v3219
    %3412 = vst.msk [vmem:[#allocation4 + $0x8] sm:$0xff] %vm3410, %v3221
    %3413 = vst.msk [vmem:[#allocation4 + $0x10] sm:$0xff] %vm3410, %v3223
    %3414 = vst.msk [vmem:[#allocation4 + $0x18] sm:$0xff] %vm3410, %v3225
    %3415 = vst.msk [vmem:[#allocation4 + $0x20] sm:$0xff] %vm3410, %v3227
    %3416 = vst.msk [vmem:[#allocation4 + $0x28] sm:$0xff] %vm3410, %v3229
    %3417 = vst.msk [vmem:[#allocation4 + $0x30] sm:$0xff] %vm3410, %v3231
    %3418 = vst.msk [vmem:[#allocation4 + $0x38] sm:$0xff] %vm3410, %v3233
    %3419 = vst.msk [vmem:[#allocation4 + $0x40] sm:$0xff] %vm3410, %v3235
    %3420 = vst.msk [vmem:[#allocation4 + $0x48] sm:$0xff] %vm3410, %v3237
    %3421 = vst.msk [vmem:[#allocation4 + $0x50] sm:$0xff] %vm3410, %v3239
    %3422 = vst.msk [vmem:[#allocation4 + $0x58] sm:$0xff] %vm3410, %v3241
    %3423 = vst.msk [vmem:[#allocation4 + $0x60] sm:$0xff] %vm3410, %v3243
    %3424 = vst.msk [vmem:[#allocation4 + $0x68] sm:$0xff] %vm3410, %v3245
    %3425 = vst.msk [vmem:[#allocation4 + $0x70] sm:$0xff] %vm3410, %v3247
    %3426 = vst.msk [vmem:[#allocation4 + $0x78] sm:$0xff] %vm3410, %v3249
    %3427 = vst.msk [vmem:[#allocation4 + $0x80] sm:$0xff] %vm3410, %v3251
    %3428 = vst.msk [vmem:[#allocation4 + $0x88] sm:$0xff] %vm3410, %v3253
    %3429 = vst.msk [vmem:[#allocation4 + $0x90] sm:$0xff] %vm3410, %v3255
    %3430 = vst.msk [vmem:[#allocation4 + $0x98] sm:$0xff] %vm3410, %v3257
    %3431 = vst.msk [vmem:[#allocation4 + $0xa0] sm:$0xff] %vm3410, %v3259
    %3432 = vst.msk [vmem:[#allocation4 + $0xa8] sm:$0xff] %vm3410, %v3261
    %3433 = vst.msk [vmem:[#allocation4 + $0xb0] sm:$0xff] %vm3410, %v3263
    %3434 = vst.msk [vmem:[#allocation4 + $0xb8] sm:$0xff] %vm3410, %v3265
    %3435 = vst.msk [vmem:[#allocation4 + $0xc0] sm:$0xff] %vm3410, %v3267
    %3436 = vst.msk [vmem:[#allocation4 + $0xc8] sm:$0xff] %vm3410, %v3269
    %3437 = vst.msk [vmem:[#allocation4 + $0xd0] sm:$0xff] %vm3410, %v3271
    %3438 = vst.msk [vmem:[#allocation4 + $0xd8] sm:$0xff] %vm3410, %v3273
    %3439 = vst.msk [vmem:[#allocation4 + $0xe0] sm:$0xff] %vm3410, %v3275
    %3440 = vst.msk [vmem:[#allocation4 + $0xe8] sm:$0xff] %vm3410, %v3277
    %3441 = vst.msk [vmem:[#allocation4 + $0xf0] sm:$0xff] %vm3410, %v3279
    %3442 = vst.msk [vmem:[#allocation4 + $0xf8] sm:$0xff] %vm3410, %v3281
    %3443 = vst.msk [vmem:[#allocation4 + $0x100] sm:$0xff] %vm3410, %v3283
    %3444 = vst.msk [vmem:[#allocation4 + $0x108] sm:$0xff] %vm3410, %v3285
    %3445 = vst.msk [vmem:[#allocation4 + $0x110] sm:$0xff] %vm3410, %v3287
    %3446 = vst.msk [vmem:[#allocation4 + $0x118] sm:$0xff] %vm3410, %v3289
    %3447 = vst.msk [vmem:[#allocation4 + $0x120] sm:$0xff] %vm3410, %v3291
    %3448 = vst.msk [vmem:[#allocation4 + $0x128] sm:$0xff] %vm3410, %v3293
    %3449 = vst.msk [vmem:[#allocation4 + $0x130] sm:$0xff] %vm3410, %v3295
    %3450 = vst.msk [vmem:[#allocation4 + $0x138] sm:$0xff] %vm3410, %v3297
    %3451 = vst.msk [vmem:[#allocation4 + $0x140] sm:$0xff] %vm3410, %v3299
    %3452 = vst.msk [vmem:[#allocation4 + $0x148] sm:$0xff] %vm3410, %v3301
    %3453 = vst.msk [vmem:[#allocation4 + $0x150] sm:$0xff] %vm3410, %v3303
    %3454 = vst.msk [vmem:[#allocation4 + $0x158] sm:$0xff] %vm3410, %v3305
    %3455 = vst.msk [vmem:[#allocation4 + $0x160] sm:$0xff] %vm3410, %v3307
    %3456 = vst.msk [vmem:[#allocation4 + $0x168] sm:$0xff] %vm3410, %v3309
    %3457 = vst.msk [vmem:[#allocation4 + $0x170] sm:$0xff] %vm3410, %v3311
    %3458 = vst.msk [vmem:[#allocation4 + $0x178] sm:$0xff] %vm3410, %v3313
    %3459 = vst.msk [vmem:[#allocation4 + $0x180] sm:$0xff] %vm3410, %v3315
    %3460 = vst.msk [vmem:[#allocation4 + $0x188] sm:$0xff] %vm3410, %v3317
    %3461 = vst.msk [vmem:[#allocation4 + $0x190] sm:$0xff] %vm3410, %v3319
    %3462 = vst.msk [vmem:[#allocation4 + $0x198] sm:$0xff] %vm3410, %v3321
    %3463 = vst.msk [vmem:[#allocation4 + $0x1a0] sm:$0xff] %vm3410, %v3323
    %3464 = vst.msk [vmem:[#allocation4 + $0x1a8] sm:$0xff] %vm3410, %v3325
    %3465 = vst.msk [vmem:[#allocation4 + $0x1b0] sm:$0xff] %vm3410, %v3327
    %3466 = vst.msk [vmem:[#allocation4 + $0x1b8] sm:$0xff] %vm3410, %v3329
    %3467 = vst.msk [vmem:[#allocation4 + $0x1c0] sm:$0xff] %vm3410, %v3331
    %3468 = vst.msk [vmem:[#allocation4 + $0x1c8] sm:$0xff] %vm3410, %v3333
    %3469 = vst.msk [vmem:[#allocation4 + $0x1d0] sm:$0xff] %vm3410, %v3335
    %3470 = vst.msk [vmem:[#allocation4 + $0x1d8] sm:$0xff] %vm3410, %v3337
    %3471 = vst.msk [vmem:[#allocation4 + $0x1e0] sm:$0xff] %vm3410, %v3339
    %3472 = vst.msk [vmem:[#allocation4 + $0x1e8] sm:$0xff] %vm3410, %v3341
    %3473 = vst.msk [vmem:[#allocation4 + $0x1f0] sm:$0xff] %vm3410, %v3343
    %3474 = vst.msk [vmem:[#allocation4 + $0x1f8] sm:$0xff] %vm3410, %v3345
    %v3475 = vld [vmem:[#allocation4] sm:$0xff]
    %v3476 = vld [vmem:[#allocation4 + $0x8] sm:$0xff]
    %v3477 = vld [vmem:[#allocation4 + $0x10] sm:$0xff]
    %v3478 = vld [vmem:[#allocation4 + $0x18] sm:$0xff]
    %v3479 = vld [vmem:[#allocation4 + $0x20] sm:$0xff]
    %v3480 = vld [vmem:[#allocation4 + $0x28] sm:$0xff]
    %v3481 = vld [vmem:[#allocation4 + $0x30] sm:$0xff]
    %v3482 = vld [vmem:[#allocation4 + $0x38] sm:$0xff]
    %v3483 = vld [vmem:[#allocation4 + $0x40] sm:$0xff]
    %v3484 = vld [vmem:[#allocation4 + $0x48] sm:$0xff]
    %v3485 = vld [vmem:[#allocation4 + $0x50] sm:$0xff]
    %v3486 = vld [vmem:[#allocation4 + $0x58] sm:$0xff]
    %v3487 = vld [vmem:[#allocation4 + $0x60] sm:$0xff]
    %v3488 = vld [vmem:[#allocation4 + $0x68] sm:$0xff]
    %v3489 = vld [vmem:[#allocation4 + $0x70] sm:$0xff]
    %v3490 = vld [vmem:[#allocation4 + $0x78] sm:$0xff]
    %v3491 = vld [vmem:[#allocation4 + $0x80] sm:$0xff]
    %v3492 = vld [vmem:[#allocation4 + $0x88] sm:$0xff]
    %v3493 = vld [vmem:[#allocation4 + $0x90] sm:$0xff]
    %v3494 = vld [vmem:[#allocation4 + $0x98] sm:$0xff]
    %v3495 = vld [vmem:[#allocation4 + $0xa0] sm:$0xff]
    %v3496 = vld [vmem:[#allocation4 + $0xa8] sm:$0xff]
    %v3497 = vld [vmem:[#allocation4 + $0xb0] sm:$0xff]
    %v3498 = vld [vmem:[#allocation4 + $0xb8] sm:$0xff]
    %v3499 = vld [vmem:[#allocation4 + $0xc0] sm:$0xff]
    %v3500 = vld [vmem:[#allocation4 + $0xc8] sm:$0xff]
    %v3501 = vld [vmem:[#allocation4 + $0xd0] sm:$0xff]
    %v3502 = vld [vmem:[#allocation4 + $0xd8] sm:$0xff]
    %v3503 = vld [vmem:[#allocation4 + $0xe0] sm:$0xff]
    %v3504 = vld [vmem:[#allocation4 + $0xe8] sm:$0xff]
    %v3505 = vld [vmem:[#allocation4 + $0xf0] sm:$0xff]
    %v3506 = vld [vmem:[#allocation4 + $0xf8] sm:$0xff]
    %v3507 = vld [vmem:[#allocation4 + $0x100] sm:$0xff]
    %v3508 = vld [vmem:[#allocation4 + $0x108] sm:$0xff]
    %v3509 = vld [vmem:[#allocation4 + $0x110] sm:$0xff]
    %v3510 = vld [vmem:[#allocation4 + $0x118] sm:$0xff]
    %v3511 = vld [vmem:[#allocation4 + $0x120] sm:$0xff]
    %v3512 = vld [vmem:[#allocation4 + $0x128] sm:$0xff]
    %v3513 = vld [vmem:[#allocation4 + $0x130] sm:$0xff]
    %v3514 = vld [vmem:[#allocation4 + $0x138] sm:$0xff]
    %v3515 = vld [vmem:[#allocation4 + $0x140] sm:$0xff]
    %v3516 = vld [vmem:[#allocation4 + $0x148] sm:$0xff]
    %v3517 = vld [vmem:[#allocation4 + $0x150] sm:$0xff]
    %v3518 = vld [vmem:[#allocation4 + $0x158] sm:$0xff]
    %v3519 = vld [vmem:[#allocation4 + $0x160] sm:$0xff]
    %v3520 = vld [vmem:[#allocation4 + $0x168] sm:$0xff]
    %v3521 = vld [vmem:[#allocation4 + $0x170] sm:$0xff]
    %v3522 = vld [vmem:[#allocation4 + $0x178] sm:$0xff]
    %v3523 = vld [vmem:[#allocation4 + $0x180] sm:$0xff]
    %v3524 = vld [vmem:[#allocation4 + $0x188] sm:$0xff]
    %v3525 = vld [vmem:[#allocation4 + $0x190] sm:$0xff]
    %v3526 = vld [vmem:[#allocation4 + $0x198] sm:$0xff]
    %v3527 = vld [vmem:[#allocation4 + $0x1a0] sm:$0xff]
    %v3528 = vld [vmem:[#allocation4 + $0x1a8] sm:$0xff]
    %v3529 = vld [vmem:[#allocation4 + $0x1b0] sm:$0xff]
    %v3530 = vld [vmem:[#allocation4 + $0x1b8] sm:$0xff]
    %v3531 = vld [vmem:[#allocation4 + $0x1c0] sm:$0xff]
    %v3532 = vld [vmem:[#allocation4 + $0x1c8] sm:$0xff]
    %v3533 = vld [vmem:[#allocation4 + $0x1d0] sm:$0xff]
    %v3534 = vld [vmem:[#allocation4 + $0x1d8] sm:$0xff]
    %v3535 = vld [vmem:[#allocation4 + $0x1e0] sm:$0xff]
    %v3536 = vld [vmem:[#allocation4 + $0x1e8] sm:$0xff]
    %v3537 = vld [vmem:[#allocation4 + $0x1f0] sm:$0xff]
    %v3538 = vld [vmem:[#allocation4 + $0x1f8] sm:$0xff]
    %v3539 = vld [vmem:[%s1] sm:$0xff]
    %v3540 = vld [vmem:[%s1 + $0x8] sm:$0xff]
    %v3541 = vld [vmem:[%s1 + $0x10] sm:$0xff]
    %v3542 = vld [vmem:[%s1 + $0x18] sm:$0xff]
    %v3543 = vld [vmem:[%s1 + $0x20] sm:$0xf]
    %vm3544 = vcmask 293888
    %v3546 = vsel %vm3544, %v3475, 0
    %v3549 = vsel %vm3544, %v3476, 0
    %v3552 = vsel %vm3544, %v3477, 0
    %v3555 = vsel %vm3544, %v3478, 0
    %v3558 = vsel %vm3544, %v3479, 0
    %v3561 = vsel %vm3544, %v3480, 0
    %v3564 = vsel %vm3544, %v3481, 0
    %v3567 = vsel %vm3544, %v3482, 0
    %v3570 = vsel %vm3544, %v3483, 0
    %v3573 = vsel %vm3544, %v3484, 0
    %v3576 = vsel %vm3544, %v3485, 0
    %v3579 = vsel %vm3544, %v3486, 0
    %v3582 = vsel %vm3544, %v3487, 0
    %v3585 = vsel %vm3544, %v3488, 0
    %v3588 = vsel %vm3544, %v3489, 0
    %v3591 = vsel %vm3544, %v3490, 0
    %v3594 = vsel %vm3544, %v3491, 0
    %v3597 = vsel %vm3544, %v3492, 0
    %v3600 = vsel %vm3544, %v3493, 0
    %v3603 = vsel %vm3544, %v3494, 0
    %v3606 = vsel %vm3544, %v3495, 0
    %v3609 = vsel %vm3544, %v3496, 0
    %v3612 = vsel %vm3544, %v3497, 0
    %v3615 = vsel %vm3544, %v3498, 0
    %v3618 = vsel %vm3544, %v3499, 0
    %v3621 = vsel %vm3544, %v3500, 0
    %v3624 = vsel %vm3544, %v3501, 0
    %v3627 = vsel %vm3544, %v3502, 0
    %v3630 = vsel %vm3544, %v3503, 0
    %v3633 = vsel %vm3544, %v3504, 0
    %v3636 = vsel %vm3544, %v3505, 0
    %v3639 = vsel %vm3544, %v3506, 0
    %v3642 = vsel %vm3544, %v3507, 0
    %v3645 = vsel %vm3544, %v3508, 0
    %v3648 = vsel %vm3544, %v3509, 0
    %v3651 = vsel %vm3544, %v3510, 0
    %v3654 = vsel %vm3544, %v3511, 0
    %v3657 = vsel %vm3544, %v3512, 0
    %v3660 = vsel %vm3544, %v3513, 0
    %v3663 = vsel %vm3544, %v3514, 0
    %v3666 = vsel %vm3544, %v3515, 0
    %v3669 = vsel %vm3544, %v3516, 0
    %v3672 = vsel %vm3544, %v3517, 0
    %v3675 = vsel %vm3544, %v3518, 0
    %v3678 = vsel %vm3544, %v3519, 0
    %v3681 = vsel %vm3544, %v3520, 0
    %v3684 = vsel %vm3544, %v3521, 0
    %v3687 = vsel %vm3544, %v3522, 0
    %v3690 = vsel %vm3544, %v3523, 0
    %v3693 = vsel %vm3544, %v3524, 0
    %v3696 = vsel %vm3544, %v3525, 0
    %v3699 = vsel %vm3544, %v3526, 0
    %v3702 = vsel %vm3544, %v3527, 0
    %v3705 = vsel %vm3544, %v3528, 0
    %v3708 = vsel %vm3544, %v3529, 0
    %v3711 = vsel %vm3544, %v3530, 0
    %v3714 = vsel %vm3544, %v3531, 0
    %v3717 = vsel %vm3544, %v3532, 0
    %v3720 = vsel %vm3544, %v3533, 0
    %v3723 = vsel %vm3544, %v3534, 0
    %v3726 = vsel %vm3544, %v3535, 0
    %v3729 = vsel %vm3544, %v3536, 0
    %v3732 = vsel %vm3544, %v3537, 0
    %v3735 = vsel %vm3544, %v3538, 0
    %vm3737 = vcmask 1043456
    %v3739 = vsel %vm3737, %v3543, 0
    %3741 = vmatprep.subr.mxu0 0.0
    %3742 = vmatpush1.msra.mxu0 %v3539
    %3743 = vmatprep.subr.mxu0 0.0
    %3744 = vmatpush1.msra.mxu0 %v3540
    %3745 = vmatprep.subr.mxu0 0.0
    %3746 = vmatpush1.msra.mxu0 %v3541
    %3747 = vmatprep.subr.mxu0 0.0
    %3748 = vmatpush1.msra.mxu0 %v3542
    %3749 = vmatprep.subr.mxu0 0.0
    %3750 = vmatpush1.msra.mxu0 %v3739
    %3751 = vmatprep.subr.mxu0 0.0
    %3752 = vmatpush1.msra.mxu0 0.0
    %3753 = vmatprep.subr.mxu0 0.0
    %3754 = vmatpush1.msra.mxu0 0.0
    %3755 = vmatprep.subr.mxu0 0.0
    %3756 = vmatpush1.msra.mxu0 0.0
    %3757 = vmatprep.subr.mxu0 0.0
    %3758 = vmatpush1.msra.mxu0 0.0
    %3759 = vmatprep.subr.mxu0 0.0
    %3760 = vmatpush1.msra.mxu0 0.0
    %3761 = vmatprep.subr.mxu0 0.0
    %3762 = vmatpush1.msra.mxu0 0.0
    %3763 = vmatprep.subr.mxu0 0.0
    %3764 = vmatpush1.msra.mxu0 0.0
    %3765 = vmatprep.subr.mxu0 0.0
    %3766 = vmatpush1.msra.mxu0 0.0
    %3767 = vmatprep.subr.mxu0 0.0
    %3768 = vmatpush1.msra.mxu0 0.0
    %3769 = vmatprep.subr.mxu0 0.0
    %3770 = vmatpush1.msra.mxu0 0.0
    %3771 = vmatprep.subr.mxu0 0.0
    %3772 = vmatpush1.msra.mxu0 0.0
    %3773 = vmatprep.subr.mxu0 0.0
    %3774 = vmatpush1.msra.mxu0 0.0
    %3775 = vmatprep.subr.mxu0 0.0
    %3776 = vmatpush1.msra.mxu0 0.0
    %3777 = vmatprep.subr.mxu0 0.0
    %3778 = vmatpush1.msra.mxu0 0.0
    %3779 = vmatprep.subr.mxu0 0.0
    %3780 = vmatpush1.msra.mxu0 0.0
    %3781 = vmatprep.subr.mxu0 0.0
    %3782 = vmatpush1.msra.mxu0 0.0
    %3783 = vmatprep.subr.mxu0 0.0
    %3784 = vmatpush1.msra.mxu0 0.0
    %3785 = vmatprep.subr.mxu0 0.0
    %3786 = vmatpush1.msra.mxu0 0.0
    %3787 = vmatprep.subr.mxu0 0.0
    %3788 = vmatpush1.msra.mxu0 0.0
    %3789 = vmatprep.subr.mxu0 0.0
    %3790 = vmatpush1.msra.mxu0 0.0
    %3791 = vmatprep.subr.mxu0 0.0
    %3792 = vmatpush1.msra.mxu0 0.0
    %3793 = vmatprep.subr.mxu0 0.0
    %3794 = vmatpush1.msra.mxu0 0.0
    %3795 = vmatprep.subr.mxu0 0.0
    %3796 = vmatpush1.msra.mxu0 0.0
    %3797 = vmatprep.subr.mxu0 0.0
    %3798 = vmatpush1.msra.mxu0 0.0
    %3799 = vmatprep.subr.mxu0 0.0
    %3800 = vmatpush1.msra.mxu0 0.0
    %3801 = vmatprep.subr.mxu0 0.0
    %3802 = vmatpush1.msra.mxu0 0.0
    %3803 = vmatprep.subr.mxu0 0.0
    %3804 = vmatpush1.msra.mxu0 0.0
    %3805 = vmatprep.mubr.f32.mxu0 0.0
    %3806 = vmatmul.mubr.f32.gmra.mrb[0].mxu0 %v3546
    %v3807 = vpop.f32.mrb[0].mxu0
    %v3808 = vadd.f32 0.0, %v3807
    %v3809 = vpop.f32.mrb[0].mxu0
    %3810 = vmatprep.mubr.f32.mxu0 0.0
    %3811 = vmatmul.mubr.f32.gmra.mrb[0].mxu0 %v3549
    %v3812 = vpop.f32.mrb[0].mxu0
    %v3813 = vadd.f32 0.0, %v3812
    %v3814 = vpop.f32.mrb[0].mxu0
    %3815 = vmatprep.mubr.f32.mxu0 0.0
    %3816 = vmatmul.mubr.f32.gmra.mrb[0].mxu0 %v3552
    %v3817 = vpop.f32.mrb[0].mxu0
    %v3818 = vadd.f32 0.0, %v3817
    %v3819 = vpop.f32.mrb[0].mxu0
    %3820 = vmatprep.mubr.f32.mxu0 0.0
    %3821 = vmatmul.mubr.f32.gmra.mrb[0].mxu0 %v3555
    %v3822 = vpop.f32.mrb[0].mxu0
    %v3823 = vadd.f32 0.0, %v3822
    %v3824 = vpop.f32.mrb[0].mxu0
    %3825 = vmatprep.mubr.f32.mxu0 0.0
    %3826 = vmatmul.mubr.f32.gmra.mrb[0].mxu0 %v3558
    %v3827 = vpop.f32.mrb[0].mxu0
    %v3828 = vadd.f32 0.0, %v3827
    %v3829 = vpop.f32.mrb[0].mxu0
    %3830 = vmatprep.mubr.f32.mxu0 0.0
    %3831 = vmatmul.mubr.f32.gmra.mrb[0].mxu0 %v3561
    %v3832 = vpop.f32.mrb[0].mxu0
    %v3833 = vadd.f32 0.0, %v3832
    %v3834 = vpop.f32.mrb[0].mxu0
    %3835 = vmatprep.mubr.f32.mxu0 0.0
    %3836 = vmatmul.mubr.f32.gmra.mrb[0].mxu0 %v3564
    %v3837 = vpop.f32.mrb[0].mxu0
    %v3838 = vadd.f32 0.0, %v3837
    %v3839 = vpop.f32.mrb[0].mxu0
    %3840 = vmatprep.mubr.f32.mxu0 0.0
    %3841 = vmatmul.mubr.f32.gmra.mrb[0].mxu0 %v3567
    %v3842 = vpop.f32.mrb[0].mxu0
    %v3843 = vadd.f32 0.0, %v3842
    %v3844 = vpop.f32.mrb[0].mxu0
    %3845 = vmatprep.mubr.f32.mxu0 0.0
    %3846 = vmatmul.mubr.f32.gmra.mrb[0].mxu0 %v3570
    %v3847 = vpop.f32.mrb[0].mxu0
    %v3848 = vadd.f32 0.0, %v3847
    %v3849 = vpop.f32.mrb[0].mxu0
    %3850 = vmatprep.mubr.f32.mxu0 0.0
    %3851 = vmatmul.mubr.f32.gmra.mrb[0].mxu0 %v3573
    %v3852 = vpop.f32.mrb[0].mxu0
    %v3853 = vadd.f32 0.0, %v3852
    %v3854 = vpop.f32.mrb[0].mxu0
    %3855 = vmatprep.mubr.f32.mxu0 0.0
    %3856 = vmatmul.mubr.f32.gmra.mrb[0].mxu0 %v3576
    %v3857 = vpop.f32.mrb[0].mxu0
    %v3858 = vadd.f32 0.0, %v3857
    %v3859 = vpop.f32.mrb[0].mxu0
    %3860 = vmatprep.mubr.f32.mxu0 0.0
    %3861 = vmatmul.mubr.f32.gmra.mrb[0].mxu0 %v3579
    %v3862 = vpop.f32.mrb[0].mxu0
    %v3863 = vadd.f32 0.0, %v3862
    %v3864 = vpop.f32.mrb[0].mxu0
    %3865 = vmatprep.mubr.f32.mxu0 0.0
    %3866 = vmatmul.mubr.f32.gmra.mrb[0].mxu0 %v3582
    %v3867 = vpop.f32.mrb[0].mxu0
    %v3868 = vadd.f32 0.0, %v3867
    %v3869 = vpop.f32.mrb[0].mxu0
    %3870 = vmatprep.mubr.f32.mxu0 0.0
    %3871 = vmatmul.mubr.f32.gmra.mrb[0].mxu0 %v3585
    %v3872 = vpop.f32.mrb[0].mxu0
    %v3873 = vadd.f32 0.0, %v3872
    %v3874 = vpop.f32.mrb[0].mxu0
    %3875 = vmatprep.mubr.f32.mxu0 0.0
    %3876 = vmatmul.mubr.f32.gmra.mrb[0].mxu0 %v3588
    %v3877 = vpop.f32.mrb[0].mxu0
    %v3878 = vadd.f32 0.0, %v3877
    %v3879 = vpop.f32.mrb[0].mxu0
    %3880 = vmatprep.mubr.f32.mxu0 0.0
    %3881 = vmatmul.mubr.f32.gmra.mrb[0].mxu0 %v3591
    %v3882 = vpop.f32.mrb[0].mxu0
    %v3883 = vadd.f32 0.0, %v3882
    %v3884 = vpop.f32.mrb[0].mxu0
    %3885 = vmatprep.mubr.f32.mxu0 0.0
    %3886 = vmatmul.mubr.f32.gmra.mrb[0].mxu0 %v3594
    %v3887 = vpop.f32.mrb[0].mxu0
    %v3888 = vadd.f32 0.0, %v3887
    %v3889 = vpop.f32.mrb[0].mxu0
    %3890 = vmatprep.mubr.f32.mxu0 0.0
    %3891 = vmatmul.mubr.f32.gmra.mrb[0].mxu0 %v3597
    %v3892 = vpop.f32.mrb[0].mxu0
    %v3893 = vadd.f32 0.0, %v3892
    %v3894 = vpop.f32.mrb[0].mxu0
    %3895 = vmatprep.mubr.f32.mxu0 0.0
    %3896 = vmatmul.mubr.f32.gmra.mrb[0].mxu0 %v3600
    %v3897 = vpop.f32.mrb[0].mxu0
    %v3898 = vadd.f32 0.0, %v3897
    %v3899 = vpop.f32.mrb[0].mxu0
    %3900 = vmatprep.mubr.f32.mxu0 0.0
    %3901 = vmatmul.mubr.f32.gmra.mrb[0].mxu0 %v3603
    %v3902 = vpop.f32.mrb[0].mxu0
    %v3903 = vadd.f32 0.0, %v3902
    %v3904 = vpop.f32.mrb[0].mxu0
    %3905 = vmatprep.mubr.f32.mxu0 0.0
    %3906 = vmatmul.mubr.f32.gmra.mrb[0].mxu0 %v3606
    %v3907 = vpop.f32.mrb[0].mxu0
    %v3908 = vadd.f32 0.0, %v3907
    %v3909 = vpop.f32.mrb[0].mxu0
    %3910 = vmatprep.mubr.f32.mxu0 0.0
    %3911 = vmatmul.mubr.f32.gmra.mrb[0].mxu0 %v3609
    %v3912 = vpop.f32.mrb[0].mxu0
    %v3913 = vadd.f32 0.0, %v3912
    %v3914 = vpop.f32.mrb[0].mxu0
    %3915 = vmatprep.mubr.f32.mxu0 0.0
    %3916 = vmatmul.mubr.f32.gmra.mrb[0].mxu0 %v3612
    %v3917 = vpop.f32.mrb[0].mxu0
    %v3918 = vadd.f32 0.0, %v3917
    %v3919 = vpop.f32.mrb[0].mxu0
    %3920 = vmatprep.mubr.f32.mxu0 0.0
    %3921 = vmatmul.mubr.f32.gmra.mrb[0].mxu0 %v3615
    %v3922 = vpop.f32.mrb[0].mxu0
    %v3923 = vadd.f32 0.0, %v3922
    %v3924 = vpop.f32.mrb[0].mxu0
    %3925 = vmatprep.mubr.f32.mxu0 0.0
    %3926 = vmatmul.mubr.f32.gmra.mrb[0].mxu0 %v3618
    %v3927 = vpop.f32.mrb[0].mxu0
    %v3928 = vadd.f32 0.0, %v3927
    %v3929 = vpop.f32.mrb[0].mxu0
    %3930 = vmatprep.mubr.f32.mxu0 0.0
    %3931 = vmatmul.mubr.f32.gmra.mrb[0].mxu0 %v3621
    %v3932 = vpop.f32.mrb[0].mxu0
    %v3933 = vadd.f32 0.0, %v3932
    %v3934 = vpop.f32.mrb[0].mxu0
    %3935 = vmatprep.mubr.f32.mxu0 0.0
    %3936 = vmatmul.mubr.f32.gmra.mrb[0].mxu0 %v3624
    %v3937 = vpop.f32.mrb[0].mxu0
    %v3938 = vadd.f32 0.0, %v3937
    %v3939 = vpop.f32.mrb[0].mxu0
    %3940 = vmatprep.mubr.f32.mxu0 0.0
    %3941 = vmatmul.mubr.f32.gmra.mrb[0].mxu0 %v3627
    %v3942 = vpop.f32.mrb[0].mxu0
    %v3943 = vadd.f32 0.0, %v3942
    %v3944 = vpop.f32.mrb[0].mxu0
    %3945 = vmatprep.mubr.f32.mxu0 0.0
    %3946 = vmatmul.mubr.f32.gmra.mrb[0].mxu0 %v3630
    %v3947 = vpop.f32.mrb[0].mxu0
    %v3948 = vadd.f32 0.0, %v3947
    %v3949 = vpop.f32.mrb[0].mxu0
    %3950 = vmatprep.mubr.f32.mxu0 0.0
    %3951 = vmatmul.mubr.f32.gmra.mrb[0].mxu0 %v3633
    %v3952 = vpop.f32.mrb[0].mxu0
    %v3953 = vadd.f32 0.0, %v3952
    %v3954 = vpop.f32.mrb[0].mxu0
    %3955 = vmatprep.mubr.f32.mxu0 0.0
    %3956 = vmatmul.mubr.f32.gmra.mrb[0].mxu0 %v3636
    %v3957 = vpop.f32.mrb[0].mxu0
    %v3958 = vadd.f32 0.0, %v3957
    %v3959 = vpop.f32.mrb[0].mxu0
    %3960 = vmatprep.mubr.f32.mxu0 0.0
    %3961 = vmatmul.mubr.f32.gmra.mrb[0].mxu0 %v3639
    %v3962 = vpop.f32.mrb[0].mxu0
    %v3963 = vadd.f32 0.0, %v3962
    %v3964 = vpop.f32.mrb[0].mxu0
    %3965 = vmatprep.mubr.f32.mxu0 0.0
    %3966 = vmatmul.mubr.f32.gmra.mrb[0].mxu0 %v3642
    %v3967 = vpop.f32.mrb[0].mxu0
    %v3968 = vadd.f32 0.0, %v3967
    %v3969 = vpop.f32.mrb[0].mxu0
    %3970 = vmatprep.mubr.f32.mxu0 0.0
    %3971 = vmatmul.mubr.f32.gmra.mrb[0].mxu0 %v3645
    %v3972 = vpop.f32.mrb[0].mxu0
    %v3973 = vadd.f32 0.0, %v3972
    %v3974 = vpop.f32.mrb[0].mxu0
    %3975 = vmatprep.mubr.f32.mxu0 0.0
    %3976 = vmatmul.mubr.f32.gmra.mrb[0].mxu0 %v3648
    %v3977 = vpop.f32.mrb[0].mxu0
    %v3978 = vadd.f32 0.0, %v3977
    %v3979 = vpop.f32.mrb[0].mxu0
    %3980 = vmatprep.mubr.f32.mxu0 0.0
    %3981 = vmatmul.mubr.f32.gmra.mrb[0].mxu0 %v3651
    %v3982 = vpop.f32.mrb[0].mxu0
    %v3983 = vadd.f32 0.0, %v3982
    %v3984 = vpop.f32.mrb[0].mxu0
    %3985 = vmatprep.mubr.f32.mxu0 0.0
    %3986 = vmatmul.mubr.f32.gmra.mrb[0].mxu0 %v3654
    %v3987 = vpop.f32.mrb[0].mxu0
    %v3988 = vadd.f32 0.0, %v3987
    %v3989 = vpop.f32.mrb[0].mxu0
    %3990 = vmatprep.mubr.f32.mxu0 0.0
    %3991 = vmatmul.mubr.f32.gmra.mrb[0].mxu0 %v3657
    %v3992 = vpop.f32.mrb[0].mxu0
    %v3993 = vadd.f32 0.0, %v3992
    %v3994 = vpop.f32.mrb[0].mxu0
    %3995 = vmatprep.mubr.f32.mxu0 0.0
    %3996 = vmatmul.mubr.f32.gmra.mrb[0].mxu0 %v3660
    %v3997 = vpop.f32.mrb[0].mxu0
    %v3998 = vadd.f32 0.0, %v3997
    %v3999 = vpop.f32.mrb[0].mxu0
    %4000 = vmatprep.mubr.f32.mxu0 0.0
    %4001 = vmatmul.mubr.f32.gmra.mrb[0].mxu0 %v3663
    %v4002 = vpop.f32.mrb[0].mxu0
    %v4003 = vadd.f32 0.0, %v4002
    %v4004 = vpop.f32.mrb[0].mxu0
    %4005 = vmatprep.mubr.f32.mxu0 0.0
    %4006 = vmatmul.mubr.f32.gmra.mrb[0].mxu0 %v3666
    %v4007 = vpop.f32.mrb[0].mxu0
    %v4008 = vadd.f32 0.0, %v4007
    %v4009 = vpop.f32.mrb[0].mxu0
    %4010 = vmatprep.mubr.f32.mxu0 0.0
    %4011 = vmatmul.mubr.f32.gmra.mrb[0].mxu0 %v3669
    %v4012 = vpop.f32.mrb[0].mxu0
    %v4013 = vadd.f32 0.0, %v4012
    %v4014 = vpop.f32.mrb[0].mxu0
    %4015 = vmatprep.mubr.f32.mxu0 0.0
    %4016 = vmatmul.mubr.f32.gmra.mrb[0].mxu0 %v3672
    %v4017 = vpop.f32.mrb[0].mxu0
    %v4018 = vadd.f32 0.0, %v4017
    %v4019 = vpop.f32.mrb[0].mxu0
    %4020 = vmatprep.mubr.f32.mxu0 0.0
    %4021 = vmatmul.mubr.f32.gmra.mrb[0].mxu0 %v3675
    %v4022 = vpop.f32.mrb[0].mxu0
    %v4023 = vadd.f32 0.0, %v4022
    %v4024 = vpop.f32.mrb[0].mxu0
    %4025 = vmatprep.mubr.f32.mxu0 0.0
    %4026 = vmatmul.mubr.f32.gmra.mrb[0].mxu0 %v3678
    %v4027 = vpop.f32.mrb[0].mxu0
    %v4028 = vadd.f32 0.0, %v4027
    %v4029 = vpop.f32.mrb[0].mxu0
    %4030 = vmatprep.mubr.f32.mxu0 0.0
    %4031 = vmatmul.mubr.f32.gmra.mrb[0].mxu0 %v3681
    %v4032 = vpop.f32.mrb[0].mxu0
    %v4033 = vadd.f32 0.0, %v4032
    %v4034 = vpop.f32.mrb[0].mxu0
    %4035 = vmatprep.mubr.f32.mxu0 0.0
    %4036 = vmatmul.mubr.f32.gmra.mrb[0].mxu0 %v3684
    %v4037 = vpop.f32.mrb[0].mxu0
    %v4038 = vadd.f32 0.0, %v4037
    %v4039 = vpop.f32.mrb[0].mxu0
    %4040 = vmatprep.mubr.f32.mxu0 0.0
    %4041 = vmatmul.mubr.f32.gmra.mrb[0].mxu0 %v3687
    %v4042 = vpop.f32.mrb[0].mxu0
    %v4043 = vadd.f32 0.0, %v4042
    %v4044 = vpop.f32.mrb[0].mxu0
    %4045 = vmatprep.mubr.f32.mxu0 0.0
    %4046 = vmatmul.mubr.f32.gmra.mrb[0].mxu0 %v3690
    %v4047 = vpop.f32.mrb[0].mxu0
    %v4048 = vadd.f32 0.0, %v4047
    %v4049 = vpop.f32.mrb[0].mxu0
    %4050 = vmatprep.mubr.f32.mxu0 0.0
    %4051 = vmatmul.mubr.f32.gmra.mrb[0].mxu0 %v3693
    %v4052 = vpop.f32.mrb[0].mxu0
    %v4053 = vadd.f32 0.0, %v4052
    %v4054 = vpop.f32.mrb[0].mxu0
    %4055 = vmatprep.mubr.f32.mxu0 0.0
    %4056 = vmatmul.mubr.f32.gmra.mrb[0].mxu0 %v3696
    %v4057 = vpop.f32.mrb[0].mxu0
    %v4058 = vadd.f32 0.0, %v4057
    %v4059 = vpop.f32.mrb[0].mxu0
    %4060 = vmatprep.mubr.f32.mxu0 0.0
    %4061 = vmatmul.mubr.f32.gmra.mrb[0].mxu0 %v3699
    %v4062 = vpop.f32.mrb[0].mxu0
    %v4063 = vadd.f32 0.0, %v4062
    %v4064 = vpop.f32.mrb[0].mxu0
    %4065 = vmatprep.mubr.f32.mxu0 0.0
    %4066 = vmatmul.mubr.f32.gmra.mrb[0].mxu0 %v3702
    %v4067 = vpop.f32.mrb[0].mxu0
    %v4068 = vadd.f32 0.0, %v4067
    %v4069 = vpop.f32.mrb[0].mxu0
    %4070 = vmatprep.mubr.f32.mxu0 0.0
    %4071 = vmatmul.mubr.f32.gmra.mrb[0].mxu0 %v3705
    %v4072 = vpop.f32.mrb[0].mxu0
    %v4073 = vadd.f32 0.0, %v4072
    %v4074 = vpop.f32.mrb[0].mxu0
    %4075 = vmatprep.mubr.f32.mxu0 0.0
    %4076 = vmatmul.mubr.f32.gmra.mrb[0].mxu0 %v3708
    %v4077 = vpop.f32.mrb[0].mxu0
    %v4078 = vadd.f32 0.0, %v4077
    %v4079 = vpop.f32.mrb[0].mxu0
    %4080 = vmatprep.mubr.f32.mxu0 0.0
    %4081 = vmatmul.mubr.f32.gmra.mrb[0].mxu0 %v3711
    %v4082 = vpop.f32.mrb[0].mxu0
    %v4083 = vadd.f32 0.0, %v4082
    %v4084 = vpop.f32.mrb[0].mxu0
    %4085 = vmatprep.mubr.f32.mxu0 0.0
    %4086 = vmatmul.mubr.f32.gmra.mrb[0].mxu0 %v3714
    %v4087 = vpop.f32.mrb[0].mxu0
    %v4088 = vadd.f32 0.0, %v4087
    %v4089 = vpop.f32.mrb[0].mxu0
    %4090 = vmatprep.mubr.f32.mxu0 0.0
    %4091 = vmatmul.mubr.f32.gmra.mrb[0].mxu0 %v3717
    %v4092 = vpop.f32.mrb[0].mxu0
    %v4093 = vadd.f32 0.0, %v4092
    %v4094 = vpop.f32.mrb[0].mxu0
    %4095 = vmatprep.mubr.f32.mxu0 0.0
    %4096 = vmatmul.mubr.f32.gmra.mrb[0].mxu0 %v3720
    %v4097 = vpop.f32.mrb[0].mxu0
    %v4098 = vadd.f32 0.0, %v4097
    %v4099 = vpop.f32.mrb[0].mxu0
    %4100 = vmatprep.mubr.f32.mxu0 0.0
    %4101 = vmatmul.mubr.f32.gmra.mrb[0].mxu0 %v3723
    %v4102 = vpop.f32.mrb[0].mxu0
    %v4103 = vadd.f32 0.0, %v4102
    %v4104 = vpop.f32.mrb[0].mxu0
    %4105 = vmatprep.mubr.f32.mxu0 0.0
    %4106 = vmatmul.mubr.f32.gmra.mrb[0].mxu0 %v3726
    %v4107 = vpop.f32.mrb[0].mxu0
    %v4108 = vadd.f32 0.0, %v4107
    %v4109 = vpop.f32.mrb[0].mxu0
    %4110 = vmatprep.mubr.f32.mxu0 0.0
    %4111 = vmatmul.mubr.f32.gmra.mrb[0].mxu0 %v3729
    %v4112 = vpop.f32.mrb[0].mxu0
    %v4113 = vadd.f32 0.0, %v4112
    %v4114 = vpop.f32.mrb[0].mxu0
    %4115 = vmatprep.mubr.f32.mxu0 0.0
    %4116 = vmatmul.mubr.f32.gmra.mrb[0].mxu0 %v3732
    %v4117 = vpop.f32.mrb[0].mxu0
    %v4118 = vadd.f32 0.0, %v4117
    %v4119 = vpop.f32.mrb[0].mxu0
    %4120 = vmatprep.mubr.f32.mxu0 0.0
    %4121 = vmatmul.mubr.f32.gmra.mrb[0].mxu0 %v3735
    %v4122 = vpop.f32.mrb[0].mxu0
    %v4123 = vadd.f32 0.0, %v4122
    %v4124 = vpop.f32.mrb[0].mxu0
    %4125 = vdwg.mxu0
    %v4126 = vld [vmem:[%s3] sm:$0x1]
    %v4127 = vld [vmem:[%s4] sm:$0x1]
    %vm4128 = vcmask 64512
    %v4129 = vsel %vm4128, %v3808, 0.0
    %v4130 = vsel %vm4128, %v3813, 0.0
    %v4131 = vadd.f32 %v4129, %v4130
    %v4132 = vsel %vm4128, %v3818, 0.0
    %v4133 = vadd.f32 %v4131, %v4132
    %v4134 = vsel %vm4128, %v3823, 0.0
    %v4135 = vadd.f32 %v4133, %v4134
    %v4136 = vsel %vm4128, %v3828, 0.0
    %v4137 = vadd.f32 %v4135, %v4136
    %v4138 = vsel %vm4128, %v3833, 0.0
    %v4139 = vadd.f32 %v4137, %v4138
    %v4140 = vsel %vm4128, %v3838, 0.0
    %v4141 = vadd.f32 %v4139, %v4140
    %v4142 = vsel %vm4128, %v3843, 0.0
    %v4143 = vadd.f32 %v4141, %v4142
    %v4144 = vsel %vm4128, %v3848, 0.0
    %v4145 = vadd.f32 %v4143, %v4144
    %v4146 = vsel %vm4128, %v3853, 0.0
    %v4147 = vadd.f32 %v4145, %v4146
    %v4148 = vsel %vm4128, %v3858, 0.0
    %v4149 = vadd.f32 %v4147, %v4148
    %v4150 = vsel %vm4128, %v3863, 0.0
    %v4151 = vadd.f32 %v4149, %v4150
    %v4152 = vsel %vm4128, %v3868, 0.0
    %v4153 = vadd.f32 %v4151, %v4152
    %v4154 = vsel %vm4128, %v3873, 0.0
    %v4155 = vadd.f32 %v4153, %v4154
    %v4156 = vsel %vm4128, %v3878, 0.0
    %v4157 = vadd.f32 %v4155, %v4156
    %v4158 = vsel %vm4128, %v3883, 0.0
    %v4159 = vadd.f32 %v4157, %v4158
    %v4160 = vsel %vm4128, %v3888, 0.0
    %v4161 = vadd.f32 %v4159, %v4160
    %v4162 = vsel %vm4128, %v3893, 0.0
    %v4163 = vadd.f32 %v4161, %v4162
    %v4164 = vsel %vm4128, %v3898, 0.0
    %v4165 = vadd.f32 %v4163, %v4164
    %v4166 = vsel %vm4128, %v3903, 0.0
    %v4167 = vadd.f32 %v4165, %v4166
    %v4168 = vsel %vm4128, %v3908, 0.0
    %v4169 = vadd.f32 %v4167, %v4168
    %v4170 = vsel %vm4128, %v3913, 0.0
    %v4171 = vadd.f32 %v4169, %v4170
    %v4172 = vsel %vm4128, %v3918, 0.0
    %v4173 = vadd.f32 %v4171, %v4172
    %v4174 = vsel %vm4128, %v3923, 0.0
    %v4175 = vadd.f32 %v4173, %v4174
    %v4176 = vsel %vm4128, %v3928, 0.0
    %v4177 = vadd.f32 %v4175, %v4176
    %v4178 = vsel %vm4128, %v3933, 0.0
    %v4179 = vadd.f32 %v4177, %v4178
    %v4180 = vsel %vm4128, %v3938, 0.0
    %v4181 = vadd.f32 %v4179, %v4180
    %v4182 = vsel %vm4128, %v3943, 0.0
    %v4183 = vadd.f32 %v4181, %v4182
    %v4184 = vsel %vm4128, %v3948, 0.0
    %v4185 = vadd.f32 %v4183, %v4184
    %v4186 = vsel %vm4128, %v3953, 0.0
    %v4187 = vadd.f32 %v4185, %v4186
    %v4188 = vsel %vm4128, %v3958, 0.0
    %v4189 = vadd.f32 %v4187, %v4188
    %v4190 = vsel %vm4128, %v3963, 0.0
    %v4191 = vadd.f32 %v4189, %v4190
    %v4192 = vsel %vm4128, %v3968, 0.0
    %v4193 = vadd.f32 %v4191, %v4192
    %v4194 = vsel %vm4128, %v3973, 0.0
    %v4195 = vadd.f32 %v4193, %v4194
    %v4196 = vsel %vm4128, %v3978, 0.0
    %v4197 = vadd.f32 %v4195, %v4196
    %v4198 = vsel %vm4128, %v3983, 0.0
    %v4199 = vadd.f32 %v4197, %v4198
    %v4200 = vsel %vm4128, %v3988, 0.0
    %v4201 = vadd.f32 %v4199, %v4200
    %v4202 = vsel %vm4128, %v3993, 0.0
    %v4203 = vadd.f32 %v4201, %v4202
    %v4204 = vsel %vm4128, %v3998, 0.0
    %v4205 = vadd.f32 %v4203, %v4204
    %v4206 = vsel %vm4128, %v4003, 0.0
    %v4207 = vadd.f32 %v4205, %v4206
    %v4208 = vsel %vm4128, %v4008, 0.0
    %v4209 = vadd.f32 %v4207, %v4208
    %v4210 = vsel %vm4128, %v4013, 0.0
    %v4211 = vadd.f32 %v4209, %v4210
    %v4212 = vsel %vm4128, %v4018, 0.0
    %v4213 = vadd.f32 %v4211, %v4212
    %v4214 = vsel %vm4128, %v4023, 0.0
    %v4215 = vadd.f32 %v4213, %v4214
    %v4216 = vsel %vm4128, %v4028, 0.0
    %v4217 = vadd.f32 %v4215, %v4216
    %v4218 = vsel %vm4128, %v4033, 0.0
    %v4219 = vadd.f32 %v4217, %v4218
    %v4220 = vsel %vm4128, %v4038, 0.0
    %v4221 = vadd.f32 %v4219, %v4220
    %v4222 = vsel %vm4128, %v4043, 0.0
    %v4223 = vadd.f32 %v4221, %v4222
    %v4224 = vsel %vm4128, %v4048, 0.0
    %v4225 = vadd.f32 %v4223, %v4224
    %v4226 = vsel %vm4128, %v4053, 0.0
    %v4227 = vadd.f32 %v4225, %v4226
    %v4228 = vsel %vm4128, %v4058, 0.0
    %v4229 = vadd.f32 %v4227, %v4228
    %v4230 = vsel %vm4128, %v4063, 0.0
    %v4231 = vadd.f32 %v4229, %v4230
    %v4232 = vsel %vm4128, %v4068, 0.0
    %v4233 = vadd.f32 %v4231, %v4232
    %v4234 = vsel %vm4128, %v4073, 0.0
    %v4235 = vadd.f32 %v4233, %v4234
    %v4236 = vsel %vm4128, %v4078, 0.0
    %v4237 = vadd.f32 %v4235, %v4236
    %v4238 = vsel %vm4128, %v4083, 0.0
    %v4239 = vadd.f32 %v4237, %v4238
    %v4240 = vsel %vm4128, %v4088, 0.0
    %v4241 = vadd.f32 %v4239, %v4240
    %v4242 = vsel %vm4128, %v4093, 0.0
    %v4243 = vadd.f32 %v4241, %v4242
    %v4244 = vsel %vm4128, %v4098, 0.0
    %v4245 = vadd.f32 %v4243, %v4244
    %v4246 = vsel %vm4128, %v4103, 0.0
    %v4247 = vadd.f32 %v4245, %v4246
    %v4248 = vsel %vm4128, %v4108, 0.0
    %v4249 = vadd.f32 %v4247, %v4248
    %v4250 = vsel %vm4128, %v4113, 0.0
    %v4251 = vadd.f32 %v4249, %v4250
    %v4252 = vsel %vm4128, %v4118, 0.0
    %v4253 = vadd.f32 %v4251, %v4252
    %v4254 = vsel %vm4128, %v4123, 0.0
    %v4255 = vadd.f32 %v4253, %v4254
    %v4256 = vrot.slane %v4255, 4
    %v4257 = vadd.f32 %v4255, %v4256
    %v4258 = vrot.slane %v4257, 2
    %v4259 = vadd.f32 %v4257, %v4258
    %v4260 = vrot.slane %v4259, 1
    %v4261 = vadd.f32 %v4259, %v4260
    %v4262 = vmul.f32 %v3808, %v3808
    %v4263 = vmul.f32 %v3813, %v3813
    %v4264 = vmul.f32 %v3818, %v3818
    %v4265 = vmul.f32 %v3823, %v3823
    %v4266 = vmul.f32 %v3828, %v3828
    %v4267 = vmul.f32 %v3833, %v3833
    %v4268 = vmul.f32 %v3838, %v3838
    %v4269 = vmul.f32 %v3843, %v3843
    %v4270 = vmul.f32 %v3848, %v3848
    %v4271 = vmul.f32 %v3853, %v3853
    %v4272 = vmul.f32 %v3858, %v3858
    %v4273 = vmul.f32 %v3863, %v3863
    %v4274 = vmul.f32 %v3868, %v3868
    %v4275 = vmul.f32 %v3873, %v3873
    %v4276 = vmul.f32 %v3878, %v3878
    %v4277 = vmul.f32 %v3883, %v3883
    %v4278 = vmul.f32 %v3888, %v3888
    %v4279 = vmul.f32 %v3893, %v3893
    %v4280 = vmul.f32 %v3898, %v3898
    %v4281 = vmul.f32 %v3903, %v3903
    %v4282 = vmul.f32 %v3908, %v3908
    %v4283 = vmul.f32 %v3913, %v3913
    %v4284 = vmul.f32 %v3918, %v3918
    %v4285 = vmul.f32 %v3923, %v3923
    %v4286 = vmul.f32 %v3928, %v3928
    %v4287 = vmul.f32 %v3933, %v3933
    %v4288 = vmul.f32 %v3938, %v3938
    %v4289 = vmul.f32 %v3943, %v3943
    %v4290 = vmul.f32 %v3948, %v3948
    %v4291 = vmul.f32 %v3953, %v3953
    %v4292 = vmul.f32 %v3958, %v3958
    %v4293 = vmul.f32 %v3963, %v3963
    %v4294 = vmul.f32 %v3968, %v3968
    %v4295 = vmul.f32 %v3973, %v3973
    %v4296 = vmul.f32 %v3978, %v3978
    %v4297 = vmul.f32 %v3983, %v3983
    %v4298 = vmul.f32 %v3988, %v3988
    %v4299 = vmul.f32 %v3993, %v3993
    %v4300 = vmul.f32 %v3998, %v3998
    %v4301 = vmul.f32 %v4003, %v4003
    %v4302 = vmul.f32 %v4008, %v4008
    %v4303 = vmul.f32 %v4013, %v4013
    %v4304 = vmul.f32 %v4018, %v4018
    %v4305 = vmul.f32 %v4023, %v4023
    %v4306 = vmul.f32 %v4028, %v4028
    %v4307 = vmul.f32 %v4033, %v4033
    %v4308 = vmul.f32 %v4038, %v4038
    %v4309 = vmul.f32 %v4043, %v4043
    %v4310 = vmul.f32 %v4048, %v4048
    %v4311 = vmul.f32 %v4053, %v4053
    %v4312 = vmul.f32 %v4058, %v4058
    %v4313 = vmul.f32 %v4063, %v4063
    %v4314 = vmul.f32 %v4068, %v4068
    %v4315 = vmul.f32 %v4073, %v4073
    %v4316 = vmul.f32 %v4078, %v4078
    %v4317 = vmul.f32 %v4083, %v4083
    %v4318 = vmul.f32 %v4088, %v4088
    %v4319 = vmul.f32 %v4093, %v4093
    %v4320 = vmul.f32 %v4098, %v4098
    %v4321 = vmul.f32 %v4103, %v4103
    %v4322 = vmul.f32 %v4108, %v4108
    %v4323 = vmul.f32 %v4113, %v4113
    %v4324 = vmul.f32 %v4118, %v4118
    %v4325 = vmul.f32 %v4123, %v4123
    %v4326 = vsel %vm4128, %v4262, 0.0
    %v4327 = vsel %vm4128, %v4263, 0.0
    %v4328 = vadd.f32 %v4326, %v4327
    %v4329 = vsel %vm4128, %v4264, 0.0
    %v4330 = vadd.f32 %v4328, %v4329
    %v4331 = vsel %vm4128, %v4265, 0.0
    %v4332 = vadd.f32 %v4330, %v4331
    %v4333 = vsel %vm4128, %v4266, 0.0
    %v4334 = vadd.f32 %v4332, %v4333
    %v4335 = vsel %vm4128, %v4267, 0.0
    %v4336 = vadd.f32 %v4334, %v4335
    %v4337 = vsel %vm4128, %v4268, 0.0
    %v4338 = vadd.f32 %v4336, %v4337
    %v4339 = vsel %vm4128, %v4269, 0.0
    %v4340 = vadd.f32 %v4338, %v4339
    %v4341 = vsel %vm4128, %v4270, 0.0
    %v4342 = vadd.f32 %v4340, %v4341
    %v4343 = vsel %vm4128, %v4271, 0.0
    %v4344 = vadd.f32 %v4342, %v4343
    %v4345 = vsel %vm4128, %v4272, 0.0
    %v4346 = vadd.f32 %v4344, %v4345
    %v4347 = vsel %vm4128, %v4273, 0.0
    %v4348 = vadd.f32 %v4346, %v4347
    %v4349 = vsel %vm4128, %v4274, 0.0
    %v4350 = vadd.f32 %v4348, %v4349
    %v4351 = vsel %vm4128, %v4275, 0.0
    %v4352 = vadd.f32 %v4350, %v4351
    %v4353 = vsel %vm4128, %v4276, 0.0
    %v4354 = vadd.f32 %v4352, %v4353
    %v4355 = vsel %vm4128, %v4277, 0.0
    %v4356 = vadd.f32 %v4354, %v4355
    %v4357 = vsel %vm4128, %v4278, 0.0
    %v4358 = vadd.f32 %v4356, %v4357
    %v4359 = vsel %vm4128, %v4279, 0.0
    %v4360 = vadd.f32 %v4358, %v4359
    %v4361 = vsel %vm4128, %v4280, 0.0
    %v4362 = vadd.f32 %v4360, %v4361
    %v4363 = vsel %vm4128, %v4281, 0.0
    %v4364 = vadd.f32 %v4362, %v4363
    %v4365 = vsel %vm4128, %v4282, 0.0
    %v4366 = vadd.f32 %v4364, %v4365
    %v4367 = vsel %vm4128, %v4283, 0.0
    %v4368 = vadd.f32 %v4366, %v4367
    %v4369 = vsel %vm4128, %v4284, 0.0
    %v4370 = vadd.f32 %v4368, %v4369
    %v4371 = vsel %vm4128, %v4285, 0.0
    %v4372 = vadd.f32 %v4370, %v4371
    %v4373 = vsel %vm4128, %v4286, 0.0
    %v4374 = vadd.f32 %v4372, %v4373
    %v4375 = vsel %vm4128, %v4287, 0.0
    %v4376 = vadd.f32 %v4374, %v4375
    %v4377 = vsel %vm4128, %v4288, 0.0
    %v4378 = vadd.f32 %v4376, %v4377
    %v4379 = vsel %vm4128, %v4289, 0.0
    %v4380 = vadd.f32 %v4378, %v4379
    %v4381 = vsel %vm4128, %v4290, 0.0
    %v4382 = vadd.f32 %v4380, %v4381
    %v4383 = vsel %vm4128, %v4291, 0.0
    %v4384 = vadd.f32 %v4382, %v4383
    %v4385 = vsel %vm4128, %v4292, 0.0
    %v4386 = vadd.f32 %v4384, %v4385
    %v4387 = vsel %vm4128, %v4293, 0.0
    %v4388 = vadd.f32 %v4386, %v4387
    %v4389 = vsel %vm4128, %v4294, 0.0
    %v4390 = vadd.f32 %v4388, %v4389
    %v4391 = vsel %vm4128, %v4295, 0.0
    %v4392 = vadd.f32 %v4390, %v4391
    %v4393 = vsel %vm4128, %v4296, 0.0
    %v4394 = vadd.f32 %v4392, %v4393
    %v4395 = vsel %vm4128, %v4297, 0.0
    %v4396 = vadd.f32 %v4394, %v4395
    %v4397 = vsel %vm4128, %v4298, 0.0
    %v4398 = vadd.f32 %v4396, %v4397
    %v4399 = vsel %vm4128, %v4299, 0.0
    %v4400 = vadd.f32 %v4398, %v4399
    %v4401 = vsel %vm4128, %v4300, 0.0
    %v4402 = vadd.f32 %v4400, %v4401
    %v4403 = vsel %vm4128, %v4301, 0.0
    %v4404 = vadd.f32 %v4402, %v4403
    %v4405 = vsel %vm4128, %v4302, 0.0
    %v4406 = vadd.f32 %v4404, %v4405
    %v4407 = vsel %vm4128, %v4303, 0.0
    %v4408 = vadd.f32 %v4406, %v4407
    %v4409 = vsel %vm4128, %v4304, 0.0
    %v4410 = vadd.f32 %v4408, %v4409
    %v4411 = vsel %vm4128, %v4305, 0.0
    %v4412 = vadd.f32 %v4410, %v4411
    %v4413 = vsel %vm4128, %v4306, 0.0
    %v4414 = vadd.f32 %v4412, %v4413
    %v4415 = vsel %vm4128, %v4307, 0.0
    %v4416 = vadd.f32 %v4414, %v4415
    %v4417 = vsel %vm4128, %v4308, 0.0
    %v4418 = vadd.f32 %v4416, %v4417
    %v4419 = vsel %vm4128, %v4309, 0.0
    %v4420 = vadd.f32 %v4418, %v4419
    %v4421 = vsel %vm4128, %v4310, 0.0
    %v4422 = vadd.f32 %v4420, %v4421
    %v4423 = vsel %vm4128, %v4311, 0.0
    %v4424 = vadd.f32 %v4422, %v4423
    %v4425 = vsel %vm4128, %v4312, 0.0
    %v4426 = vadd.f32 %v4424, %v4425
    %v4427 = vsel %vm4128, %v4313, 0.0
    %v4428 = vadd.f32 %v4426, %v4427
    %v4429 = vsel %vm4128, %v4314, 0.0
    %v4430 = vadd.f32 %v4428, %v4429
    %v4431 = vsel %vm4128, %v4315, 0.0
    %v4432 = vadd.f32 %v4430, %v4431
    %v4433 = vsel %vm4128, %v4316, 0.0
    %v4434 = vadd.f32 %v4432, %v4433
    %v4435 = vsel %vm4128, %v4317, 0.0
    %v4436 = vadd.f32 %v4434, %v4435
    %v4437 = vsel %vm4128, %v4318, 0.0
    %v4438 = vadd.f32 %v4436, %v4437
    %v4439 = vsel %vm4128, %v4319, 0.0
    %v4440 = vadd.f32 %v4438, %v4439
    %v4441 = vsel %vm4128, %v4320, 0.0
    %v4442 = vadd.f32 %v4440, %v4441
    %v4443 = vsel %vm4128, %v4321, 0.0
    %v4444 = vadd.f32 %v4442, %v4443
    %v4445 = vsel %vm4128, %v4322, 0.0
    %v4446 = vadd.f32 %v4444, %v4445
    %v4447 = vsel %vm4128, %v4323, 0.0
    %v4448 = vadd.f32 %v4446, %v4447
    %v4449 = vsel %vm4128, %v4324, 0.0
    %v4450 = vadd.f32 %v4448, %v4449
    %v4451 = vsel %vm4128, %v4325, 0.0
    %v4452 = vadd.f32 %v4450, %v4451
    %v4453 = vrot.slane %v4452, 4
    %v4454 = vadd.f32 %v4452, %v4453
    %v4455 = vrot.slane %v4454, 2
    %v4456 = vadd.f32 %v4454, %v4455
    %v4457 = vrot.slane %v4456, 1
    %v4458 = vadd.f32 %v4456, %v4457
    %v4459 = vmul.f32 %v4261, 0.001953125
    %v4460 = vmul.f32 %v4458, 0.001953125
    %v4461 = vmul.f32 %v4459, %v4459
    %v4462 = vsub.f32 %v4460, %v4461
    %v4463 = vadd.f32 %v4462, 1e-05
    %v4464 = vrsqrt.pop %v4463
    %v4465 = vmul.f32 %v4464, %v4126
    %v4466 = vsub.f32 %v3808, %v4459
    %v4467 = vsub.f32 %v3813, %v4459
    %v4468 = vsub.f32 %v3818, %v4459
    %v4469 = vsub.f32 %v3823, %v4459
    %v4470 = vsub.f32 %v3828, %v4459
    %v4471 = vsub.f32 %v3833, %v4459
    %v4472 = vsub.f32 %v3838, %v4459
    %v4473 = vsub.f32 %v3843, %v4459
    %v4474 = vsub.f32 %v3848, %v4459
    %v4475 = vsub.f32 %v3853, %v4459
    %v4476 = vsub.f32 %v3858, %v4459
    %v4477 = vsub.f32 %v3863, %v4459
    %v4478 = vsub.f32 %v3868, %v4459
    %v4479 = vsub.f32 %v3873, %v4459
    %v4480 = vsub.f32 %v3878, %v4459
    %v4481 = vsub.f32 %v3883, %v4459
    %v4482 = vsub.f32 %v3888, %v4459
    %v4483 = vsub.f32 %v3893, %v4459
    %v4484 = vsub.f32 %v3898, %v4459
    %v4485 = vsub.f32 %v3903, %v4459
    %v4486 = vsub.f32 %v3908, %v4459
    %v4487 = vsub.f32 %v3913, %v4459
    %v4488 = vsub.f32 %v3918, %v4459
    %v4489 = vsub.f32 %v3923, %v4459
    %v4490 = vsub.f32 %v3928, %v4459
    %v4491 = vsub.f32 %v3933, %v4459
    %v4492 = vsub.f32 %v3938, %v4459
    %v4493 = vsub.f32 %v3943, %v4459
    %v4494 = vsub.f32 %v3948, %v4459
    %v4495 = vsub.f32 %v3953, %v4459
    %v4496 = vsub.f32 %v3958, %v4459
    %v4497 = vsub.f32 %v3963, %v4459
    %v4498 = vsub.f32 %v3968, %v4459
    %v4499 = vsub.f32 %v3973, %v4459
    %v4500 = vsub.f32 %v3978, %v4459
    %v4501 = vsub.f32 %v3983, %v4459
    %v4502 = vsub.f32 %v3988, %v4459
    %v4503 = vsub.f32 %v3993, %v4459
    %v4504 = vsub.f32 %v3998, %v4459
    %v4505 = vsub.f32 %v4003, %v4459
    %v4506 = vsub.f32 %v4008, %v4459
    %v4507 = vsub.f32 %v4013, %v4459
    %v4508 = vsub.f32 %v4018, %v4459
    %v4509 = vsub.f32 %v4023, %v4459
    %v4510 = vsub.f32 %v4028, %v4459
    %v4511 = vsub.f32 %v4033, %v4459
    %v4512 = vsub.f32 %v4038, %v4459
    %v4513 = vsub.f32 %v4043, %v4459
    %v4514 = vsub.f32 %v4048, %v4459
    %v4515 = vsub.f32 %v4053, %v4459
    %v4516 = vsub.f32 %v4058, %v4459
    %v4517 = vsub.f32 %v4063, %v4459
    %v4518 = vsub.f32 %v4068, %v4459
    %v4519 = vsub.f32 %v4073, %v4459
    %v4520 = vsub.f32 %v4078, %v4459
    %v4521 = vsub.f32 %v4083, %v4459
    %v4522 = vsub.f32 %v4088, %v4459
    %v4523 = vsub.f32 %v4093, %v4459
    %v4524 = vsub.f32 %v4098, %v4459
    %v4525 = vsub.f32 %v4103, %v4459
    %v4526 = vsub.f32 %v4108, %v4459
    %v4527 = vsub.f32 %v4113, %v4459
    %v4528 = vsub.f32 %v4118, %v4459
    %v4529 = vsub.f32 %v4123, %v4459
    %v4530 = vlaneseq
    %v4531 = vshrl.u32 %v4530, 7
    %v4532 = vsub.s32 0, %v4531
    %v4533 = vrot.slane %v4465, %v4532
    %v4534 = vmul.f32 %v4466, %v4533
    %v4535 = vmul.f32 %v4467, %v4533
    %v4536 = vmul.f32 %v4468, %v4533
    %v4537 = vmul.f32 %v4469, %v4533
    %v4538 = vmul.f32 %v4470, %v4533
    %v4539 = vmul.f32 %v4471, %v4533
    %v4540 = vmul.f32 %v4472, %v4533
    %v4541 = vmul.f32 %v4473, %v4533
    %v4542 = vmul.f32 %v4474, %v4533
    %v4543 = vmul.f32 %v4475, %v4533
    %v4544 = vmul.f32 %v4476, %v4533
    %v4545 = vmul.f32 %v4477, %v4533
    %v4546 = vmul.f32 %v4478, %v4533
    %v4547 = vmul.f32 %v4479, %v4533
    %v4548 = vmul.f32 %v4480, %v4533
    %v4549 = vmul.f32 %v4481, %v4533
    %v4550 = vmul.f32 %v4482, %v4533
    %v4551 = vmul.f32 %v4483, %v4533
    %v4552 = vmul.f32 %v4484, %v4533
    %v4553 = vmul.f32 %v4485, %v4533
    %v4554 = vmul.f32 %v4486, %v4533
    %v4555 = vmul.f32 %v4487, %v4533
    %v4556 = vmul.f32 %v4488, %v4533
    %v4557 = vmul.f32 %v4489, %v4533
    %v4558 = vmul.f32 %v4490, %v4533
    %v4559 = vmul.f32 %v4491, %v4533
    %v4560 = vmul.f32 %v4492, %v4533
    %v4561 = vmul.f32 %v4493, %v4533
    %v4562 = vmul.f32 %v4494, %v4533
    %v4563 = vmul.f32 %v4495, %v4533
    %v4564 = vmul.f32 %v4496, %v4533
    %v4565 = vmul.f32 %v4497, %v4533
    %v4566 = vmul.f32 %v4498, %v4533
    %v4567 = vmul.f32 %v4499, %v4533
    %v4568 = vmul.f32 %v4500, %v4533
    %v4569 = vmul.f32 %v4501, %v4533
    %v4570 = vmul.f32 %v4502, %v4533
    %v4571 = vmul.f32 %v4503, %v4533
    %v4572 = vmul.f32 %v4504, %v4533
    %v4573 = vmul.f32 %v4505, %v4533
    %v4574 = vmul.f32 %v4506, %v4533
    %v4575 = vmul.f32 %v4507, %v4533
    %v4576 = vmul.f32 %v4508, %v4533
    %v4577 = vmul.f32 %v4509, %v4533
    %v4578 = vmul.f32 %v4510, %v4533
    %v4579 = vmul.f32 %v4511, %v4533
    %v4580 = vmul.f32 %v4512, %v4533
    %v4581 = vmul.f32 %v4513, %v4533
    %v4582 = vmul.f32 %v4514, %v4533
    %v4583 = vmul.f32 %v4515, %v4533
    %v4584 = vmul.f32 %v4516, %v4533
    %v4585 = vmul.f32 %v4517, %v4533
    %v4586 = vmul.f32 %v4518, %v4533
    %v4587 = vmul.f32 %v4519, %v4533
    %v4588 = vmul.f32 %v4520, %v4533
    %v4589 = vmul.f32 %v4521, %v4533
    %v4590 = vmul.f32 %v4522, %v4533
    %v4591 = vmul.f32 %v4523, %v4533
    %v4592 = vmul.f32 %v4524, %v4533
    %v4593 = vmul.f32 %v4525, %v4533
    %v4594 = vmul.f32 %v4526, %v4533
    %v4595 = vmul.f32 %v4527, %v4533
    %v4596 = vmul.f32 %v4528, %v4533
    %v4597 = vmul.f32 %v4529, %v4533
    %v4599 = vlaneseq
    %v4600 = vshrl.u32 %v4599, 7
    %v4601 = vsub.s32 0, %v4600
    %v4602 = vrot.slane %v4127, %v4601
    %v4604 = vadd.f32 %v4534, %v4602
    %v4605 = vadd.f32 %v4535, %v4602
    %v4606 = vadd.f32 %v4536, %v4602
    %v4607 = vadd.f32 %v4537, %v4602
    %v4608 = vadd.f32 %v4538, %v4602
    %v4609 = vadd.f32 %v4539, %v4602
    %v4610 = vadd.f32 %v4540, %v4602
    %v4611 = vadd.f32 %v4541, %v4602
    %v4612 = vadd.f32 %v4542, %v4602
    %v4613 = vadd.f32 %v4543, %v4602
    %v4614 = vadd.f32 %v4544, %v4602
    %v4615 = vadd.f32 %v4545, %v4602
    %v4616 = vadd.f32 %v4546, %v4602
    %v4617 = vadd.f32 %v4547, %v4602
    %v4618 = vadd.f32 %v4548, %v4602
    %v4619 = vadd.f32 %v4549, %v4602
    %v4620 = vadd.f32 %v4550, %v4602
    %v4621 = vadd.f32 %v4551, %v4602
    %v4622 = vadd.f32 %v4552, %v4602
    %v4623 = vadd.f32 %v4553, %v4602
    %v4624 = vadd.f32 %v4554, %v4602
    %v4625 = vadd.f32 %v4555, %v4602
    %v4626 = vadd.f32 %v4556, %v4602
    %v4627 = vadd.f32 %v4557, %v4602
    %v4628 = vadd.f32 %v4558, %v4602
    %v4629 = vadd.f32 %v4559, %v4602
    %v4630 = vadd.f32 %v4560, %v4602
    %v4631 = vadd.f32 %v4561, %v4602
    %v4632 = vadd.f32 %v4562, %v4602
    %v4633 = vadd.f32 %v4563, %v4602
    %v4634 = vadd.f32 %v4564, %v4602
    %v4635 = vadd.f32 %v4565, %v4602
    %v4636 = vadd.f32 %v4566, %v4602
    %v4637 = vadd.f32 %v4567, %v4602
    %v4638 = vadd.f32 %v4568, %v4602
    %v4639 = vadd.f32 %v4569, %v4602
    %v4640 = vadd.f32 %v4570, %v4602
    %v4641 = vadd.f32 %v4571, %v4602
    %v4642 = vadd.f32 %v4572, %v4602
    %v4643 = vadd.f32 %v4573, %v4602
    %v4644 = vadd.f32 %v4574, %v4602
    %v4645 = vadd.f32 %v4575, %v4602
    %v4646 = vadd.f32 %v4576, %v4602
    %v4647 = vadd.f32 %v4577, %v4602
    %v4648 = vadd.f32 %v4578, %v4602
    %v4649 = vadd.f32 %v4579, %v4602
    %v4650 = vadd.f32 %v4580, %v4602
    %v4651 = vadd.f32 %v4581, %v4602
    %v4652 = vadd.f32 %v4582, %v4602
    %v4653 = vadd.f32 %v4583, %v4602
    %v4654 = vadd.f32 %v4584, %v4602
    %v4655 = vadd.f32 %v4585, %v4602
    %v4656 = vadd.f32 %v4586, %v4602
    %v4657 = vadd.f32 %v4587, %v4602
    %v4658 = vadd.f32 %v4588, %v4602
    %v4659 = vadd.f32 %v4589, %v4602
    %v4660 = vadd.f32 %v4590, %v4602
    %v4661 = vadd.f32 %v4591, %v4602
    %v4662 = vadd.f32 %v4592, %v4602
    %v4663 = vadd.f32 %v4593, %v4602
    %v4664 = vadd.f32 %v4594, %v4602
    %v4665 = vadd.f32 %v4595, %v4602
    %v4666 = vadd.f32 %v4596, %v4602
    %v4667 = vadd.f32 %v4597, %v4602
    %v4668 = vmax.f32 %v4604, 0.0
    %v4669 = vmax.f32 %v4605, 0.0
    %v4670 = vmax.f32 %v4606, 0.0
    %v4671 = vmax.f32 %v4607, 0.0
    %v4672 = vmax.f32 %v4608, 0.0
    %v4673 = vmax.f32 %v4609, 0.0
    %v4674 = vmax.f32 %v4610, 0.0
    %v4675 = vmax.f32 %v4611, 0.0
    %v4676 = vmax.f32 %v4612, 0.0
    %v4677 = vmax.f32 %v4613, 0.0
    %v4678 = vmax.f32 %v4614, 0.0
    %v4679 = vmax.f32 %v4615, 0.0
    %v4680 = vmax.f32 %v4616, 0.0
    %v4681 = vmax.f32 %v4617, 0.0
    %v4682 = vmax.f32 %v4618, 0.0
    %v4683 = vmax.f32 %v4619, 0.0
    %v4684 = vmax.f32 %v4620, 0.0
    %v4685 = vmax.f32 %v4621, 0.0
    %v4686 = vmax.f32 %v4622, 0.0
    %v4687 = vmax.f32 %v4623, 0.0
    %v4688 = vmax.f32 %v4624, 0.0
    %v4689 = vmax.f32 %v4625, 0.0
    %v4690 = vmax.f32 %v4626, 0.0
    %v4691 = vmax.f32 %v4627, 0.0
    %v4692 = vmax.f32 %v4628, 0.0
    %v4693 = vmax.f32 %v4629, 0.0
    %v4694 = vmax.f32 %v4630, 0.0
    %v4695 = vmax.f32 %v4631, 0.0
    %v4696 = vmax.f32 %v4632, 0.0
    %v4697 = vmax.f32 %v4633, 0.0
    %v4698 = vmax.f32 %v4634, 0.0
    %v4699 = vmax.f32 %v4635, 0.0
    %v4700 = vmax.f32 %v4636, 0.0
    %v4701 = vmax.f32 %v4637, 0.0
    %v4702 = vmax.f32 %v4638, 0.0
    %v4703 = vmax.f32 %v4639, 0.0
    %v4704 = vmax.f32 %v4640, 0.0
    %v4705 = vmax.f32 %v4641, 0.0
    %v4706 = vmax.f32 %v4642, 0.0
    %v4707 = vmax.f32 %v4643, 0.0
    %v4708 = vmax.f32 %v4644, 0.0
    %v4709 = vmax.f32 %v4645, 0.0
    %v4710 = vmax.f32 %v4646, 0.0
    %v4711 = vmax.f32 %v4647, 0.0
    %v4712 = vmax.f32 %v4648, 0.0
    %v4713 = vmax.f32 %v4649, 0.0
    %v4714 = vmax.f32 %v4650, 0.0
    %v4715 = vmax.f32 %v4651, 0.0
    %v4716 = vmax.f32 %v4652, 0.0
    %v4717 = vmax.f32 %v4653, 0.0
    %v4718 = vmax.f32 %v4654, 0.0
    %v4719 = vmax.f32 %v4655, 0.0
    %v4720 = vmax.f32 %v4656, 0.0
    %v4721 = vmax.f32 %v4657, 0.0
    %v4722 = vmax.f32 %v4658, 0.0
    %v4723 = vmax.f32 %v4659, 0.0
    %v4724 = vmax.f32 %v4660, 0.0
    %v4725 = vmax.f32 %v4661, 0.0
    %v4726 = vmax.f32 %v4662, 0.0
    %v4727 = vmax.f32 %v4663, 0.0
    %v4728 = vmax.f32 %v4664, 0.0
    %v4729 = vmax.f32 %v4665, 0.0
    %v4730 = vmax.f32 %v4666, 0.0
    %v4731 = vmax.f32 %v4667, 0.0
    %4732 = vst.msk [vmem:[#allocation3] sm:$0xff] %vm4128, 0.0
    %4733 = vst.msk [vmem:[#allocation3 + $0x8] sm:$0xff] %vm4128, 0.0
    %vm4734 = vcmask 58368
    %4735 = vst.msk [vmem:[#allocation3 + $0x10] sm:$0x3] %vm4734, 0.0
    %4736 = vst.msk [vmem:[#allocation3 + $0x18] sm:$0xff] %vm4128, 0.0
    %4737 = vst.msk [vmem:[#allocation3 + $0x20] sm:$0xff] %vm4128, 0.0
    %4738 = vst.msk [vmem:[#allocation3 + $0x28] sm:$0x3] %vm4734, 0.0
    %4739 = vst.msk [vmem:[#allocation3 + $0x30] sm:$0xff] %vm4128, 0.0
    %4740 = vst.msk [vmem:[#allocation3 + $0x38] sm:$0xff] %vm4128, 0.0
    %4741 = vst.msk [vmem:[#allocation3 + $0x40] sm:$0x3] %vm4734, 0.0
    %4742 = vst.msk [vmem:[#allocation3 + $0x48] sm:$0xff] %vm4128, 0.0
    %4743 = vst.msk [vmem:[#allocation3 + $0x50] sm:$0xff] %vm4128, 0.0
    %4744 = vst.msk [vmem:[#allocation3 + $0x58] sm:$0x3] %vm4734, 0.0
    %4745 = vst.msk [vmem:[#allocation3 + $0x60] sm:$0xff] %vm4128, 0.0
    %4746 = vst.msk [vmem:[#allocation3 + $0x68] sm:$0xff] %vm4128, 0.0
    %4747 = vst.msk [vmem:[#allocation3 + $0x70] sm:$0x3] %vm4734, 0.0
    %4748 = vst.msk [vmem:[#allocation3 + $0x78] sm:$0xff] %vm4128, 0.0
    %4749 = vst.msk [vmem:[#allocation3 + $0x80] sm:$0xff] %vm4128, 0.0
    %4750 = vst.msk [vmem:[#allocation3 + $0x88] sm:$0x3] %vm4734, 0.0
    %4751 = vst.msk [vmem:[#allocation3 + $0x90] sm:$0xff] %vm4128, 0.0
    %4752 = vst.msk [vmem:[#allocation3 + $0x98] sm:$0xff] %vm4128, 0.0
    %4753 = vst.msk [vmem:[#allocation3 + $0xa0] sm:$0x3] %vm4734, 0.0
    %4754 = vst.msk [vmem:[#allocation3 + $0xa8] sm:$0xff] %vm4128, 0.0
    %4755 = vst.msk [vmem:[#allocation3 + $0xb0] sm:$0xff] %vm4128, 0.0
    %4756 = vst.msk [vmem:[#allocation3 + $0xb8] sm:$0x3] %vm4734, 0.0
    %4757 = vst.msk [vmem:[#allocation3 + $0xc0] sm:$0xff] %vm4128, 0.0
    %4758 = vst.msk [vmem:[#allocation3 + $0xc8] sm:$0xff] %vm4128, 0.0
    %4759 = vst.msk [vmem:[#allocation3 + $0xd0] sm:$0x3] %vm4734, 0.0
    %4760 = vst.msk [vmem:[#allocation3 + $0xd8] sm:$0xff] %vm4128, 0.0
    %4761 = vst.msk [vmem:[#allocation3 + $0xe0] sm:$0xff] %vm4128, 0.0
    %4762 = vst.msk [vmem:[#allocation3 + $0xe8] sm:$0x3] %vm4734, 0.0
    %4763 = vst.msk [vmem:[#allocation3 + $0xf0] sm:$0xff] %vm4128, 0.0
    %4764 = vst.msk [vmem:[#allocation3 + $0xf8] sm:$0xff] %vm4128, 0.0
    %4765 = vst.msk [vmem:[#allocation3 + $0x100] sm:$0x3] %vm4734, 0.0
    %4766 = vst.msk [vmem:[#allocation3 + $0x108] sm:$0xff] %vm4128, 0.0
    %4767 = vst.msk [vmem:[#allocation3 + $0x110] sm:$0xff] %vm4128, 0.0
    %4768 = vst.msk [vmem:[#allocation3 + $0x118] sm:$0x3] %vm4734, 0.0
    %4769 = vst.msk [vmem:[#allocation3 + $0x120] sm:$0xff] %vm4128, 0.0
    %4770 = vst.msk [vmem:[#allocation3 + $0x128] sm:$0xff] %vm4128, 0.0
    %4771 = vst.msk [vmem:[#allocation3 + $0x130] sm:$0x3] %vm4734, 0.0
    %4772 = vst.msk [vmem:[#allocation3 + $0x138] sm:$0xff] %vm4128, 0.0
    %4773 = vst.msk [vmem:[#allocation3 + $0x140] sm:$0xff] %vm4128, 0.0
    %4774 = vst.msk [vmem:[#allocation3 + $0x148] sm:$0x3] %vm4734, 0.0
    %4775 = vst.msk [vmem:[#allocation3 + $0x150] sm:$0xff] %vm4128, 0.0
    %4776 = vst.msk [vmem:[#allocation3 + $0x158] sm:$0xff] %vm4128, 0.0
    %4777 = vst.msk [vmem:[#allocation3 + $0x160] sm:$0x3] %vm4734, 0.0
    %4778 = vst.msk [vmem:[#allocation3 + $0x168] sm:$0xff] %vm4128, 0.0
    %4779 = vst.msk [vmem:[#allocation3 + $0x170] sm:$0xff] %vm4128, 0.0
    %4780 = vst.msk [vmem:[#allocation3 + $0x178] sm:$0x3] %vm4734, 0.0
    %4781 = vst.msk [vmem:[#allocation3 + $0x180] sm:$0xff] %vm4128, 0.0
    %4782 = vst.msk [vmem:[#allocation3 + $0x188] sm:$0xff] %vm4128, 0.0
    %4783 = vst.msk [vmem:[#allocation3 + $0x190] sm:$0x3] %vm4734, 0.0
    %4784 = vst.msk [vmem:[#allocation3 + $0x198] sm:$0xff] %vm4128, 0.0
    %4785 = vst.msk [vmem:[#allocation3 + $0x1a0] sm:$0xff] %vm4128, 0.0
    %4786 = vst.msk [vmem:[#allocation3 + $0x1a8] sm:$0x3] %vm4734, 0.0
    %4787 = vst.msk [vmem:[#allocation3 + $0x1b0] sm:$0xff] %vm4128, 0.0
    %4788 = vst.msk [vmem:[#allocation3 + $0x1b8] sm:$0xff] %vm4128, 0.0
    %4789 = vst.msk [vmem:[#allocation3 + $0x1c0] sm:$0x3] %vm4734, 0.0
    %4790 = vst.msk [vmem:[#allocation3 + $0x1c8] sm:$0xff] %vm4128, 0.0
    %4791 = vst.msk [vmem:[#allocation3 + $0x1d0] sm:$0xff] %vm4128, 0.0
    %4792 = vst.msk [vmem:[#allocation3 + $0x1d8] sm:$0x3] %vm4734, 0.0
    %4793 = vst.msk [vmem:[#allocation3 + $0x1e0] sm:$0xff] %vm4128, 0.0
    %4794 = vst.msk [vmem:[#allocation3 + $0x1e8] sm:$0xff] %vm4128, 0.0
    %4795 = vst.msk [vmem:[#allocation3 + $0x1f0] sm:$0x3] %vm4734, 0.0
    %4796 = vst.msk [vmem:[#allocation3 + $0x1f8] sm:$0xff] %vm4128, 0.0
    %4797 = vst.msk [vmem:[#allocation3 + $0x200] sm:$0xff] %vm4128, 0.0
    %4798 = vst.msk [vmem:[#allocation3 + $0x208] sm:$0x3] %vm4734, 0.0
    %4799 = vst.msk [vmem:[#allocation3 + $0x210] sm:$0xff] %vm4128, 0.0
    %4800 = vst.msk [vmem:[#allocation3 + $0x218] sm:$0xff] %vm4128, 0.0
    %4801 = vst.msk [vmem:[#allocation3 + $0x220] sm:$0x3] %vm4734, 0.0
    %4802 = vst.msk [vmem:[#allocation3 + $0x228] sm:$0xff] %vm4128, 0.0
    %4803 = vst.msk [vmem:[#allocation3 + $0x230] sm:$0xff] %vm4128, 0.0
    %4804 = vst.msk [vmem:[#allocation3 + $0x238] sm:$0x3] %vm4734, 0.0
    %4805 = vst.msk [vmem:[#allocation3 + $0x240] sm:$0xff] %vm4128, 0.0
    %4806 = vst.msk [vmem:[#allocation3 + $0x248] sm:$0xff] %vm4128, 0.0
    %4807 = vst.msk [vmem:[#allocation3 + $0x250] sm:$0x3] %vm4734, 0.0
    %4808 = vst.msk [vmem:[#allocation3 + $0x258] sm:$0xff] %vm4128, 0.0
    %4809 = vst.msk [vmem:[#allocation3 + $0x260] sm:$0xff] %vm4128, 0.0
    %4810 = vst.msk [vmem:[#allocation3 + $0x268] sm:$0x3] %vm4734, 0.0
    %4811 = vst.msk [vmem:[#allocation3 + $0x270] sm:$0xff] %vm4128, 0.0
    %4812 = vst.msk [vmem:[#allocation3 + $0x278] sm:$0xff] %vm4128, 0.0
    %4813 = vst.msk [vmem:[#allocation3 + $0x280] sm:$0x3] %vm4734, 0.0
    %4814 = vst.msk [vmem:[#allocation3 + $0x288] sm:$0xff] %vm4128, 0.0
    %4815 = vst.msk [vmem:[#allocation3 + $0x290] sm:$0xff] %vm4128, 0.0
    %4816 = vst.msk [vmem:[#allocation3 + $0x298] sm:$0x3] %vm4734, 0.0
    %4817 = vst.msk [vmem:[#allocation3 + $0x2a0] sm:$0xff] %vm4128, 0.0
    %4818 = vst.msk [vmem:[#allocation3 + $0x2a8] sm:$0xff] %vm4128, 0.0
    %4819 = vst.msk [vmem:[#allocation3 + $0x2b0] sm:$0x3] %vm4734, 0.0
    %4820 = vst.msk [vmem:[#allocation3 + $0x2b8] sm:$0xff] %vm4128, 0.0
    %4821 = vst.msk [vmem:[#allocation3 + $0x2c0] sm:$0xff] %vm4128, 0.0
    %4822 = vst.msk [vmem:[#allocation3 + $0x2c8] sm:$0x3] %vm4734, 0.0
    %4823 = vst.msk [vmem:[#allocation3 + $0x2d0] sm:$0xff] %vm4128, 0.0
    %4824 = vst.msk [vmem:[#allocation3 + $0x2d8] sm:$0xff] %vm4128, 0.0
    %4825 = vst.msk [vmem:[#allocation3 + $0x2e0] sm:$0x3] %vm4734, 0.0
    %4826 = vst.msk [vmem:[#allocation3 + $0x2e8] sm:$0xff] %vm4128, 0.0
    %4827 = vst.msk [vmem:[#allocation3 + $0x2f0] sm:$0xff] %vm4128, 0.0
    %4828 = vst.msk [vmem:[#allocation3 + $0x2f8] sm:$0x3] %vm4734, 0.0
    %4829 = vst.msk [vmem:[#allocation3 + $0x300] sm:$0xff] %vm4128, 0.0
    %4830 = vst.msk [vmem:[#allocation3 + $0x308] sm:$0xff] %vm4128, 0.0
    %4831 = vst.msk [vmem:[#allocation3 + $0x310] sm:$0x3] %vm4734, 0.0
    %4832 = vst.msk [vmem:[#allocation3 + $0x318] sm:$0xff] %vm4128, 0.0
    %4833 = vst.msk [vmem:[#allocation3 + $0x320] sm:$0xff] %vm4128, 0.0
    %4834 = vst.msk [vmem:[#allocation3 + $0x328] sm:$0x3] %vm4734, 0.0
    %4835 = vst.msk [vmem:[#allocation3 + $0x330] sm:$0xff] %vm4128, 0.0
    %4836 = vst.msk [vmem:[#allocation3 + $0x338] sm:$0xff] %vm4128, 0.0
    %4837 = vst.msk [vmem:[#allocation3 + $0x340] sm:$0x3] %vm4734, 0.0
    %4838 = vst.msk [vmem:[#allocation3 + $0x348] sm:$0xff] %vm4128, 0.0
    %4839 = vst.msk [vmem:[#allocation3 + $0x350] sm:$0xff] %vm4128, 0.0
    %4840 = vst.msk [vmem:[#allocation3 + $0x358] sm:$0x3] %vm4734, 0.0
    %s4841 = scalar_lea.vmem [#allocation3], 24
    %4842 = vst.msk [vmem:[%s4841 + $0x1] sm:$0xff] %vm4128, %v4668
    %4843 = vst.msk [vmem:[%s4841 + $0x9] sm:$0xff] %vm4128, %v4669
    %4844 = vst.msk [vmem:[%s4841 + $0x19] sm:$0xff] %vm4128, %v4670
    %4845 = vst.msk [vmem:[%s4841 + $0x21] sm:$0xff] %vm4128, %v4671
    %4846 = vst.msk [vmem:[%s4841 + $0x31] sm:$0xff] %vm4128, %v4672
    %4847 = vst.msk [vmem:[%s4841 + $0x39] sm:$0xff] %vm4128, %v4673
    %4848 = vst.msk [vmem:[%s4841 + $0x49] sm:$0xff] %vm4128, %v4674
    %4849 = vst.msk [vmem:[%s4841 + $0x51] sm:$0xff] %vm4128, %v4675
    %4850 = vst.msk [vmem:[%s4841 + $0x61] sm:$0xff] %vm4128, %v4676
    %4851 = vst.msk [vmem:[%s4841 + $0x69] sm:$0xff] %vm4128, %v4677
    %4852 = vst.msk [vmem:[%s4841 + $0x79] sm:$0xff] %vm4128, %v4678
    %4853 = vst.msk [vmem:[%s4841 + $0x81] sm:$0xff] %vm4128, %v4679
    %4854 = vst.msk [vmem:[%s4841 + $0x91] sm:$0xff] %vm4128, %v4680
    %4855 = vst.msk [vmem:[%s4841 + $0x99] sm:$0xff] %vm4128, %v4681
    %4856 = vst.msk [vmem:[%s4841 + $0xa9] sm:$0xff] %vm4128, %v4682
    %4857 = vst.msk [vmem:[%s4841 + $0xb1] sm:$0xff] %vm4128, %v4683
    %4858 = vst.msk [vmem:[%s4841 + $0xc1] sm:$0xff] %vm4128, %v4684
    %4859 = vst.msk [vmem:[%s4841 + $0xc9] sm:$0xff] %vm4128, %v4685
    %4860 = vst.msk [vmem:[%s4841 + $0xd9] sm:$0xff] %vm4128, %v4686
    %4861 = vst.msk [vmem:[%s4841 + $0xe1] sm:$0xff] %vm4128, %v4687
    %4862 = vst.msk [vmem:[%s4841 + $0xf1] sm:$0xff] %vm4128, %v4688
    %4863 = vst.msk [vmem:[%s4841 + $0xf9] sm:$0xff] %vm4128, %v4689
    %4864 = vst.msk [vmem:[%s4841 + $0x109] sm:$0xff] %vm4128, %v4690
    %4865 = vst.msk [vmem:[%s4841 + $0x111] sm:$0xff] %vm4128, %v4691
    %4866 = vst.msk [vmem:[%s4841 + $0x121] sm:$0xff] %vm4128, %v4692
    %4867 = vst.msk [vmem:[%s4841 + $0x129] sm:$0xff] %vm4128, %v4693
    %4868 = vst.msk [vmem:[%s4841 + $0x139] sm:$0xff] %vm4128, %v4694
    %4869 = vst.msk [vmem:[%s4841 + $0x141] sm:$0xff] %vm4128, %v4695
    %4870 = vst.msk [vmem:[%s4841 + $0x151] sm:$0xff] %vm4128, %v4696
    %4871 = vst.msk [vmem:[%s4841 + $0x159] sm:$0xff] %vm4128, %v4697
    %4872 = vst.msk [vmem:[%s4841 + $0x169] sm:$0xff] %vm4128, %v4698
    %4873 = vst.msk [vmem:[%s4841 + $0x171] sm:$0xff] %vm4128, %v4699
    %4874 = vst.msk [vmem:[%s4841 + $0x1b1] sm:$0xff] %vm4128, %v4700
    %4875 = vst.msk [vmem:[%s4841 + $0x1b9] sm:$0xff] %vm4128, %v4701
    %4876 = vst.msk [vmem:[%s4841 + $0x1c9] sm:$0xff] %vm4128, %v4702
    %4877 = vst.msk [vmem:[%s4841 + $0x1d1] sm:$0xff] %vm4128, %v4703
    %4878 = vst.msk [vmem:[%s4841 + $0x1e1] sm:$0xff] %vm4128, %v4704
    %4879 = vst.msk [vmem:[%s4841 + $0x1e9] sm:$0xff] %vm4128, %v4705
    %4880 = vst.msk [vmem:[%s4841 + $0x1f9] sm:$0xff] %vm4128, %v4706
    %4881 = vst.msk [vmem:[%s4841 + $0x201] sm:$0xff] %vm4128, %v4707
    %4882 = vst.msk [vmem:[%s4841 + $0x211] sm:$0xff] %vm4128, %v4708
    %4883 = vst.msk [vmem:[%s4841 + $0x219] sm:$0xff] %vm4128, %v4709
    %4884 = vst.msk [vmem:[%s4841 + $0x229] sm:$0xff] %vm4128, %v4710
    %4885 = vst.msk [vmem:[%s4841 + $0x231] sm:$0xff] %vm4128, %v4711
    %4886 = vst.msk [vmem:[%s4841 + $0x241] sm:$0xff] %vm4128, %v4712
    %4887 = vst.msk [vmem:[%s4841 + $0x249] sm:$0xff] %vm4128, %v4713
    %4888 = vst.msk [vmem:[%s4841 + $0x259] sm:$0xff] %vm4128, %v4714
    %4889 = vst.msk [vmem:[%s4841 + $0x261] sm:$0xff] %vm4128, %v4715
    %4890 = vst.msk [vmem:[%s4841 + $0x271] sm:$0xff] %vm4128, %v4716
    %4891 = vst.msk [vmem:[%s4841 + $0x279] sm:$0xff] %vm4128, %v4717
    %4892 = vst.msk [vmem:[%s4841 + $0x289] sm:$0xff] %vm4128, %v4718
    %4893 = vst.msk [vmem:[%s4841 + $0x291] sm:$0xff] %vm4128, %v4719
    %4894 = vst.msk [vmem:[%s4841 + $0x2a1] sm:$0xff] %vm4128, %v4720
    %4895 = vst.msk [vmem:[%s4841 + $0x2a9] sm:$0xff] %vm4128, %v4721
    %4896 = vst.msk [vmem:[%s4841 + $0x2b9] sm:$0xff] %vm4128, %v4722
    %4897 = vst.msk [vmem:[%s4841 + $0x2c1] sm:$0xff] %vm4128, %v4723
    %4898 = vst.msk [vmem:[%s4841 + $0x2d1] sm:$0xff] %vm4128, %v4724
    %4899 = vst.msk [vmem:[%s4841 + $0x2d9] sm:$0xff] %vm4128, %v4725
    %4900 = vst.msk [vmem:[%s4841 + $0x2e9] sm:$0xff] %vm4128, %v4726
    %4901 = vst.msk [vmem:[%s4841 + $0x2f1] sm:$0xff] %vm4128, %v4727
    %4902 = vst.msk [vmem:[%s4841 + $0x301] sm:$0xff] %vm4128, %v4728
    %4903 = vst.msk [vmem:[%s4841 + $0x309] sm:$0xff] %vm4128, %v4729
    %4904 = vst.msk [vmem:[%s4841 + $0x319] sm:$0xff] %vm4128, %v4730
    %4905 = vst.msk [vmem:[%s4841 + $0x321] sm:$0xff] %vm4128, %v4731
    %v4906 = vld [vmem:[#allocation3] sm:$0xff]
    %v4907 = vld [vmem:[#allocation3 + $0x8] sm:$0xff]
    %v4908 = vld [vmem:[#allocation3 + $0x18] sm:$0xff]
    %v4909 = vld [vmem:[#allocation3 + $0x20] sm:$0xff]
    %v4910 = vld [vmem:[#allocation3 + $0x30] sm:$0xff]
    %v4911 = vld [vmem:[#allocation3 + $0x38] sm:$0xff]
    %v4912 = vld [vmem:[#allocation3 + $0x48] sm:$0xff]
    %v4913 = vld [vmem:[#allocation3 + $0x50] sm:$0xff]
    %v4914 = vld [vmem:[#allocation3 + $0x60] sm:$0xff]
    %v4915 = vld [vmem:[#allocation3 + $0x68] sm:$0xff]
    %v4916 = vld [vmem:[#allocation3 + $0x78] sm:$0xff]
    %v4917 = vld [vmem:[#allocation3 + $0x80] sm:$0xff]
    %v4918 = vld [vmem:[#allocation3 + $0x90] sm:$0xff]
    %v4919 = vld [vmem:[#allocation3 + $0x98] sm:$0xff]
    %v4920 = vld [vmem:[#allocation3 + $0xa8] sm:$0xff]
    %v4921 = vld [vmem:[#allocation3 + $0xb0] sm:$0xff]
    %v4922 = vld [vmem:[#allocation3 + $0xc0] sm:$0xff]
    %v4923 = vld [vmem:[#allocation3 + $0xc8] sm:$0xff]
    %v4924 = vld [vmem:[#allocation3 + $0xd8] sm:$0xff]
    %v4925 = vld [vmem:[#allocation3 + $0xe0] sm:$0xff]
    %v4926 = vld [vmem:[#allocation3 + $0xf0] sm:$0xff]
    %v4927 = vld [vmem:[#allocation3 + $0xf8] sm:$0xff]
    %v4928 = vld [vmem:[#allocation3 + $0x108] sm:$0xff]
    %v4929 = vld [vmem:[#allocation3 + $0x110] sm:$0xff]
    %v4930 = vld [vmem:[#allocation3 + $0x120] sm:$0xff]
    %v4931 = vld [vmem:[#allocation3 + $0x128] sm:$0xff]
    %v4932 = vld [vmem:[#allocation3 + $0x138] sm:$0xff]
    %v4933 = vld [vmem:[#allocation3 + $0x140] sm:$0xff]
    %v4934 = vld [vmem:[#allocation3 + $0x150] sm:$0xff]
    %v4935 = vld [vmem:[#allocation3 + $0x158] sm:$0xff]
    %v4936 = vld [vmem:[#allocation3 + $0x168] sm:$0xff]
    %v4937 = vld [vmem:[#allocation3 + $0x170] sm:$0xff]
    %v4938 = vld [vmem:[#allocation3 + $0x1b0] sm:$0xff]
    %v4939 = vld [vmem:[#allocation3 + $0x1b8] sm:$0xff]
    %v4940 = vld [vmem:[#allocation3 + $0x1c8] sm:$0xff]
    %v4941 = vld [vmem:[#allocation3 + $0x1d0] sm:$0xff]
    %v4942 = vld [vmem:[#allocation3 + $0x1e0] sm:$0xff]
    %v4943 = vld [vmem:[#allocation3 + $0x1e8] sm:$0xff]
    %v4944 = vld [vmem:[#allocation3 + $0x1f8] sm:$0xff]
    %v4945 = vld [vmem:[#allocation3 + $0x200] sm:$0xff]
    %v4946 = vld [vmem:[#allocation3 + $0x210] sm:$0xff]
    %v4947 = vld [vmem:[#allocation3 + $0x218] sm:$0xff]
    %v4948 = vld [vmem:[#allocation3 + $0x228] sm:$0xff]
    %v4949 = vld [vmem:[#allocation3 + $0x230] sm:$0xff]
    %v4950 = vld [vmem:[#allocation3 + $0x240] sm:$0xff]
    %v4951 = vld [vmem:[#allocation3 + $0x248] sm:$0xff]
    %v4952 = vld [vmem:[#allocation3 + $0x258] sm:$0xff]
    %v4953 = vld [vmem:[#allocation3 + $0x260] sm:$0xff]
    %v4954 = vld [vmem:[#allocation3 + $0x270] sm:$0xff]
    %v4955 = vld [vmem:[#allocation3 + $0x278] sm:$0xff]
    %v4956 = vld [vmem:[#allocation3 + $0x288] sm:$0xff]
    %v4957 = vld [vmem:[#allocation3 + $0x290] sm:$0xff]
    %v4958 = vld [vmem:[#allocation3 + $0x2a0] sm:$0xff]
    %v4959 = vld [vmem:[#allocation3 + $0x2a8] sm:$0xff]
    %v4960 = vld [vmem:[#allocation3 + $0x2b8] sm:$0xff]
    %v4961 = vld [vmem:[#allocation3 + $0x2c0] sm:$0xff]
    %v4962 = vld [vmem:[#allocation3 + $0x2d0] sm:$0xff]
    %v4963 = vld [vmem:[#allocation3 + $0x2d8] sm:$0xff]
    %v4964 = vld [vmem:[#allocation3 + $0x2e8] sm:$0xff]
    %v4965 = vld [vmem:[#allocation3 + $0x2f0] sm:$0xff]
    %v4966 = vld [vmem:[#allocation3 + $0x300] sm:$0xff]
    %v4967 = vld [vmem:[#allocation3 + $0x308] sm:$0xff]
    %v4968 = vld [vmem:[#allocation3 + $0x318] sm:$0xff]
    %v4969 = vld [vmem:[#allocation3 + $0x320] sm:$0xff]
    %4970 = vst.msk [vmem:[#allocation5] sm:$0xff] %vm4128, %v4906
    %4971 = vst.msk [vmem:[#allocation5 + $0x8] sm:$0xff] %vm4128, %v4907
    %4972 = vst.msk [vmem:[#allocation5 + $0x10] sm:$0xff] %vm4128, %v4908
    %4973 = vst.msk [vmem:[#allocation5 + $0x18] sm:$0xff] %vm4128, %v4909
    %4974 = vst.msk [vmem:[#allocation5 + $0x20] sm:$0xff] %vm4128, %v4910
    %4975 = vst.msk [vmem:[#allocation5 + $0x28] sm:$0xff] %vm4128, %v4911
    %4976 = vst.msk [vmem:[#allocation5 + $0x30] sm:$0xff] %vm4128, %v4912
    %4977 = vst.msk [vmem:[#allocation5 + $0x38] sm:$0xff] %vm4128, %v4913
    %4978 = vst.msk [vmem:[#allocation5 + $0x40] sm:$0xff] %vm4128, %v4914
    %4979 = vst.msk [vmem:[#allocation5 + $0x48] sm:$0xff] %vm4128, %v4915
    %4980 = vst.msk [vmem:[#allocation5 + $0x50] sm:$0xff] %vm4128, %v4916
    %4981 = vst.msk [vmem:[#allocation5 + $0x58] sm:$0xff] %vm4128, %v4917
    %4982 = vst.msk [vmem:[#allocation5 + $0x60] sm:$0xff] %vm4128, %v4918
    %4983 = vst.msk [vmem:[#allocation5 + $0x68] sm:$0xff] %vm4128, %v4919
    %4984 = vst.msk [vmem:[#allocation5 + $0x70] sm:$0xff] %vm4128, %v4920
    %4985 = vst.msk [vmem:[#allocation5 + $0x78] sm:$0xff] %vm4128, %v4921
    %4986 = vst.msk [vmem:[#allocation5 + $0x80] sm:$0xff] %vm4128, %v4922
    %4987 = vst.msk [vmem:[#allocation5 + $0x88] sm:$0xff] %vm4128, %v4923
    %4988 = vst.msk [vmem:[#allocation5 + $0x90] sm:$0xff] %vm4128, %v4924
    %4989 = vst.msk [vmem:[#allocation5 + $0x98] sm:$0xff] %vm4128, %v4925
    %4990 = vst.msk [vmem:[#allocation5 + $0xa0] sm:$0xff] %vm4128, %v4926
    %4991 = vst.msk [vmem:[#allocation5 + $0xa8] sm:$0xff] %vm4128, %v4927
    %4992 = vst.msk [vmem:[#allocation5 + $0xb0] sm:$0xff] %vm4128, %v4928
    %4993 = vst.msk [vmem:[#allocation5 + $0xb8] sm:$0xff] %vm4128, %v4929
    %4994 = vst.msk [vmem:[#allocation5 + $0xc0] sm:$0xff] %vm4128, %v4930
    %4995 = vst.msk [vmem:[#allocation5 + $0xc8] sm:$0xff] %vm4128, %v4931
    %4996 = vst.msk [vmem:[#allocation5 + $0xd0] sm:$0xff] %vm4128, %v4932
    %4997 = vst.msk [vmem:[#allocation5 + $0xd8] sm:$0xff] %vm4128, %v4933
    %4998 = vst.msk [vmem:[#allocation5 + $0xe0] sm:$0xff] %vm4128, %v4934
    %4999 = vst.msk [vmem:[#allocation5 + $0xe8] sm:$0xff] %vm4128, %v4935
    %5000 = vst.msk [vmem:[#allocation5 + $0xf0] sm:$0xff] %vm4128, %v4936
    %5001 = vst.msk [vmem:[#allocation5 + $0xf8] sm:$0xff] %vm4128, %v4937
    %5002 = vst.msk [vmem:[#allocation5 + $0x100] sm:$0xff] %vm4128, %v4938
    %5003 = vst.msk [vmem:[#allocation5 + $0x108] sm:$0xff] %vm4128, %v4939
    %5004 = vst.msk [vmem:[#allocation5 + $0x110] sm:$0xff] %vm4128, %v4940
    %5005 = vst.msk [vmem:[#allocation5 + $0x118] sm:$0xff] %vm4128, %v4941
    %5006 = vst.msk [vmem:[#allocation5 + $0x120] sm:$0xff] %vm4128, %v4942
    %5007 = vst.msk [vmem:[#allocation5 + $0x128] sm:$0xff] %vm4128, %v4943
    %5008 = vst.msk [vmem:[#allocation5 + $0x130] sm:$0xff] %vm4128, %v4944
    %5009 = vst.msk [vmem:[#allocation5 + $0x138] sm:$0xff] %vm4128, %v4945
    %5010 = vst.msk [vmem:[#allocation5 + $0x140] sm:$0xff] %vm4128, %v4946
    %5011 = vst.msk [vmem:[#allocation5 + $0x148] sm:$0xff] %vm4128, %v4947
    %5012 = vst.msk [vmem:[#allocation5 + $0x150] sm:$0xff] %vm4128, %v4948
    %5013 = vst.msk [vmem:[#allocation5 + $0x158] sm:$0xff] %vm4128, %v4949
    %5014 = vst.msk [vmem:[#allocation5 + $0x160] sm:$0xff] %vm4128, %v4950
    %5015 = vst.msk [vmem:[#allocation5 + $0x168] sm:$0xff] %vm4128, %v4951
    %5016 = vst.msk [vmem:[#allocation5 + $0x170] sm:$0xff] %vm4128, %v4952
    %5017 = vst.msk [vmem:[#allocation5 + $0x178] sm:$0xff] %vm4128, %v4953
    %5018 = vst.msk [vmem:[#allocation5 + $0x180] sm:$0xff] %vm4128, %v4954
    %5019 = vst.msk [vmem:[#allocation5 + $0x188] sm:$0xff] %vm4128, %v4955
    %5020 = vst.msk [vmem:[#allocation5 + $0x190] sm:$0xff] %vm4128, %v4956
    %5021 = vst.msk [vmem:[#allocation5 + $0x198] sm:$0xff] %vm4128, %v4957
    %5022 = vst.msk [vmem:[#allocation5 + $0x1a0] sm:$0xff] %vm4128, %v4958
    %5023 = vst.msk [vmem:[#allocation5 + $0x1a8] sm:$0xff] %vm4128, %v4959
    %5024 = vst.msk [vmem:[#allocation5 + $0x1b0] sm:$0xff] %vm4128, %v4960
    %5025 = vst.msk [vmem:[#allocation5 + $0x1b8] sm:$0xff] %vm4128, %v4961
    %5026 = vst.msk [vmem:[#allocation5 + $0x1c0] sm:$0xff] %vm4128, %v4962
    %5027 = vst.msk [vmem:[#allocation5 + $0x1c8] sm:$0xff] %vm4128, %v4963
    %5028 = vst.msk [vmem:[#allocation5 + $0x1d0] sm:$0xff] %vm4128, %v4964
    %5029 = vst.msk [vmem:[#allocation5 + $0x1d8] sm:$0xff] %vm4128, %v4965
    %5030 = vst.msk [vmem:[#allocation5 + $0x1e0] sm:$0xff] %vm4128, %v4966
    %5031 = vst.msk [vmem:[#allocation5 + $0x1e8] sm:$0xff] %vm4128, %v4967
    %5032 = vst.msk [vmem:[#allocation5 + $0x1f0] sm:$0xff] %vm4128, %v4968
    %5033 = vst.msk [vmem:[#allocation5 + $0x1f8] sm:$0xff] %vm4128, %v4969
    %v5034 = vld [vmem:[#allocation3 + $0x1] sm:$0xff]
    %v5035 = vld [vmem:[#allocation3 + $0x9] sm:$0xff]
    %v5036 = vld [vmem:[#allocation3 + $0x19] sm:$0xff]
    %v5037 = vld [vmem:[#allocation3 + $0x21] sm:$0xff]
    %v5038 = vld [vmem:[#allocation3 + $0x31] sm:$0xff]
    %v5039 = vld [vmem:[#allocation3 + $0x39] sm:$0xff]
    %v5040 = vld [vmem:[#allocation3 + $0x49] sm:$0xff]
    %v5041 = vld [vmem:[#allocation3 + $0x51] sm:$0xff]
    %v5042 = vld [vmem:[#allocation3 + $0x61] sm:$0xff]
    %v5043 = vld [vmem:[#allocation3 + $0x69] sm:$0xff]
    %v5044 = vld [vmem:[#allocation3 + $0x79] sm:$0xff]
    %v5045 = vld [vmem:[#allocation3 + $0x81] sm:$0xff]
    %v5046 = vld [vmem:[#allocation3 + $0x91] sm:$0xff]
    %v5047 = vld [vmem:[#allocation3 + $0x99] sm:$0xff]
    %v5048 = vld [vmem:[#allocation3 + $0xa9] sm:$0xff]
    %v5049 = vld [vmem:[#allocation3 + $0xb1] sm:$0xff]
    %v5050 = vld [vmem:[#allocation3 + $0xc1] sm:$0xff]
    %v5051 = vld [vmem:[#allocation3 + $0xc9] sm:$0xff]
    %v5052 = vld [vmem:[#allocation3 + $0xd9] sm:$0xff]
    %v5053 = vld [vmem:[#allocation3 + $0xe1] sm:$0xff]
    %v5054 = vld [vmem:[#allocation3 + $0xf1] sm:$0xff]
    %v5055 = vld [vmem:[#allocation3 + $0xf9] sm:$0xff]
    %v5056 = vld [vmem:[#allocation3 + $0x109] sm:$0xff]
    %v5057 = vld [vmem:[#allocation3 + $0x111] sm:$0xff]
    %v5058 = vld [vmem:[#allocation3 + $0x121] sm:$0xff]
    %v5059 = vld [vmem:[#allocation3 + $0x129] sm:$0xff]
    %v5060 = vld [vmem:[#allocation3 + $0x139] sm:$0xff]
    %v5061 = vld [vmem:[#allocation3 + $0x141] sm:$0xff]
    %v5062 = vld [vmem:[#allocation3 + $0x151] sm:$0xff]
    %v5063 = vld [vmem:[#allocation3 + $0x159] sm:$0xff]
    %v5064 = vld [vmem:[#allocation3 + $0x169] sm:$0xff]
    %v5065 = vld [vmem:[#allocation3 + $0x171] sm:$0xff]
    %v5066 = vld [vmem:[#allocation3 + $0x1b1] sm:$0xff]
    %v5067 = vld [vmem:[#allocation3 + $0x1b9] sm:$0xff]
    %v5068 = vld [vmem:[#allocation3 + $0x1c9] sm:$0xff]
    %v5069 = vld [vmem:[#allocation3 + $0x1d1] sm:$0xff]
    %v5070 = vld [vmem:[#allocation3 + $0x1e1] sm:$0xff]
    %v5071 = vld [vmem:[#allocation3 + $0x1e9] sm:$0xff]
    %v5072 = vld [vmem:[#allocation3 + $0x1f9] sm:$0xff]
    %v5073 = vld [vmem:[#allocation3 + $0x201] sm:$0xff]
    %v5074 = vld [vmem:[#allocation3 + $0x211] sm:$0xff]
    %v5075 = vld [vmem:[#allocation3 + $0x219] sm:$0xff]
    %v5076 = vld [vmem:[#allocation3 + $0x229] sm:$0xff]
    %v5077 = vld [vmem:[#allocation3 + $0x231] sm:$0xff]
    %v5078 = vld [vmem:[#allocation3 + $0x241] sm:$0xff]
    %v5079 = vld [vmem:[#allocation3 + $0x249] sm:$0xff]
    %v5080 = vld [vmem:[#allocation3 + $0x259] sm:$0xff]
    %v5081 = vld [vmem:[#allocation3 + $0x261] sm:$0xff]
    %v5082 = vld [vmem:[#allocation3 + $0x271] sm:$0xff]
    %v5083 = vld [vmem:[#allocation3 + $0x279] sm:$0xff]
    %v5084 = vld [vmem:[#allocation3 + $0x289] sm:$0xff]
    %v5085 = vld [vmem:[#allocation3 + $0x291] sm:$0xff]
    %v5086 = vld [vmem:[#allocation3 + $0x2a1] sm:$0xff]
    %v5087 = vld [vmem:[#allocation3 + $0x2a9] sm:$0xff]
    %v5088 = vld [vmem:[#allocation3 + $0x2b9] sm:$0xff]
    %v5089 = vld [vmem:[#allocation3 + $0x2c1] sm:$0xff]
    %v5090 = vld [vmem:[#allocation3 + $0x2d1] sm:$0xff]
    %v5091 = vld [vmem:[#allocation3 + $0x2d9] sm:$0xff]
    %v5092 = vld [vmem:[#allocation3 + $0x2e9] sm:$0xff]
    %v5093 = vld [vmem:[#allocation3 + $0x2f1] sm:$0xff]
    %v5094 = vld [vmem:[#allocation3 + $0x301] sm:$0xff]
    %v5095 = vld [vmem:[#allocation3 + $0x309] sm:$0xff]
    %v5096 = vld [vmem:[#allocation3 + $0x319] sm:$0xff]
    %v5097 = vld [vmem:[#allocation3 + $0x321] sm:$0xff]
    %5162 = vrot.lane.b32.xlu0 %v5034, 8
    %v5163 = vpop.permute.xlu0 %5162
    %5164 = vrot.lane.b32.xlu0 %v5035, 8
    %v5165 = vpop.permute.xlu0 %5164
    %5166 = vrot.lane.b32.xlu0 %v5036, 8
    %v5167 = vpop.permute.xlu0 %5166
    %5168 = vrot.lane.b32.xlu0 %v5037, 8
    %v5169 = vpop.permute.xlu0 %5168
    %5170 = vrot.lane.b32.xlu0 %v5038, 8
    %v5171 = vpop.permute.xlu0 %5170
    %5172 = vrot.lane.b32.xlu0 %v5039, 8
    %v5173 = vpop.permute.xlu0 %5172
    %5174 = vrot.lane.b32.xlu0 %v5040, 8
    %v5175 = vpop.permute.xlu0 %5174
    %5176 = vrot.lane.b32.xlu0 %v5041, 8
    %v5177 = vpop.permute.xlu0 %5176
    %5178 = vrot.lane.b32.xlu0 %v5042, 8
    %v5179 = vpop.permute.xlu0 %5178
    %5180 = vrot.lane.b32.xlu0 %v5043, 8
    %v5181 = vpop.permute.xlu0 %5180
    %5182 = vrot.lane.b32.xlu0 %v5044, 8
    %v5183 = vpop.permute.xlu0 %5182
    %5184 = vrot.lane.b32.xlu0 %v5045, 8
    %v5185 = vpop.permute.xlu0 %5184
    %5186 = vrot.lane.b32.xlu0 %v5046, 8
    %v5187 = vpop.permute.xlu0 %5186
    %5188 = vrot.lane.b32.xlu0 %v5047, 8
    %v5189 = vpop.permute.xlu0 %5188
    %5190 = vrot.lane.b32.xlu0 %v5048, 8
    %v5191 = vpop.permute.xlu0 %5190
    %5192 = vrot.lane.b32.xlu0 %v5049, 8
    %v5193 = vpop.permute.xlu0 %5192
    %5194 = vrot.lane.b32.xlu0 %v5050, 8
    %v5195 = vpop.permute.xlu0 %5194
    %5196 = vrot.lane.b32.xlu0 %v5051, 8
    %v5197 = vpop.permute.xlu0 %5196
    %5198 = vrot.lane.b32.xlu0 %v5052, 8
    %v5199 = vpop.permute.xlu0 %5198
    %5200 = vrot.lane.b32.xlu0 %v5053, 8
    %v5201 = vpop.permute.xlu0 %5200
    %5202 = vrot.lane.b32.xlu0 %v5054, 8
    %v5203 = vpop.permute.xlu0 %5202
    %5204 = vrot.lane.b32.xlu0 %v5055, 8
    %v5205 = vpop.permute.xlu0 %5204
    %5206 = vrot.lane.b32.xlu0 %v5056, 8
    %v5207 = vpop.permute.xlu0 %5206
    %5208 = vrot.lane.b32.xlu0 %v5057, 8
    %v5209 = vpop.permute.xlu0 %5208
    %5210 = vrot.lane.b32.xlu0 %v5058, 8
    %v5211 = vpop.permute.xlu0 %5210
    %5212 = vrot.lane.b32.xlu0 %v5059, 8
    %v5213 = vpop.permute.xlu0 %5212
    %5214 = vrot.lane.b32.xlu0 %v5060, 8
    %v5215 = vpop.permute.xlu0 %5214
    %5216 = vrot.lane.b32.xlu0 %v5061, 8
    %v5217 = vpop.permute.xlu0 %5216
    %5218 = vrot.lane.b32.xlu0 %v5062, 8
    %v5219 = vpop.permute.xlu0 %5218
    %5220 = vrot.lane.b32.xlu0 %v5063, 8
    %v5221 = vpop.permute.xlu0 %5220
    %5222 = vrot.lane.b32.xlu0 %v5064, 8
    %v5223 = vpop.permute.xlu0 %5222
    %5224 = vrot.lane.b32.xlu0 %v5065, 8
    %v5225 = vpop.permute.xlu0 %5224
    %5226 = vrot.lane.b32.xlu0 %v5066, 8
    %v5227 = vpop.permute.xlu0 %5226
    %5228 = vrot.lane.b32.xlu0 %v5067, 8
    %v5229 = vpop.permute.xlu0 %5228
    %5230 = vrot.lane.b32.xlu0 %v5068, 8
    %v5231 = vpop.permute.xlu0 %5230
    %5232 = vrot.lane.b32.xlu0 %v5069, 8
    %v5233 = vpop.permute.xlu0 %5232
    %5234 = vrot.lane.b32.xlu0 %v5070, 8
    %v5235 = vpop.permute.xlu0 %5234
    %5236 = vrot.lane.b32.xlu0 %v5071, 8
    %v5237 = vpop.permute.xlu0 %5236
    %5238 = vrot.lane.b32.xlu0 %v5072, 8
    %v5239 = vpop.permute.xlu0 %5238
    %5240 = vrot.lane.b32.xlu0 %v5073, 8
    %v5241 = vpop.permute.xlu0 %5240
    %5242 = vrot.lane.b32.xlu0 %v5074, 8
    %v5243 = vpop.permute.xlu0 %5242
    %5244 = vrot.lane.b32.xlu0 %v5075, 8
    %v5245 = vpop.permute.xlu0 %5244
    %5246 = vrot.lane.b32.xlu0 %v5076, 8
    %v5247 = vpop.permute.xlu0 %5246
    %5248 = vrot.lane.b32.xlu0 %v5077, 8
    %v5249 = vpop.permute.xlu0 %5248
    %5250 = vrot.lane.b32.xlu0 %v5078, 8
    %v5251 = vpop.permute.xlu0 %5250
    %5252 = vrot.lane.b32.xlu0 %v5079, 8
    %v5253 = vpop.permute.xlu0 %5252
    %5254 = vrot.lane.b32.xlu0 %v5080, 8
    %v5255 = vpop.permute.xlu0 %5254
    %5256 = vrot.lane.b32.xlu0 %v5081, 8
    %v5257 = vpop.permute.xlu0 %5256
    %5258 = vrot.lane.b32.xlu0 %v5082, 8
    %v5259 = vpop.permute.xlu0 %5258
    %5260 = vrot.lane.b32.xlu0 %v5083, 8
    %v5261 = vpop.permute.xlu0 %5260
    %5262 = vrot.lane.b32.xlu0 %v5084, 8
    %v5263 = vpop.permute.xlu0 %5262
    %5264 = vrot.lane.b32.xlu0 %v5085, 8
    %v5265 = vpop.permute.xlu0 %5264
    %5266 = vrot.lane.b32.xlu0 %v5086, 8
    %v5267 = vpop.permute.xlu0 %5266
    %5268 = vrot.lane.b32.xlu0 %v5087, 8
    %v5269 = vpop.permute.xlu0 %5268
    %5270 = vrot.lane.b32.xlu0 %v5088, 8
    %v5271 = vpop.permute.xlu0 %5270
    %5272 = vrot.lane.b32.xlu0 %v5089, 8
    %v5273 = vpop.permute.xlu0 %5272
    %5274 = vrot.lane.b32.xlu0 %v5090, 8
    %v5275 = vpop.permute.xlu0 %5274
    %5276 = vrot.lane.b32.xlu0 %v5091, 8
    %v5277 = vpop.permute.xlu0 %5276
    %5278 = vrot.lane.b32.xlu0 %v5092, 8
    %v5279 = vpop.permute.xlu0 %5278
    %5280 = vrot.lane.b32.xlu0 %v5093, 8
    %v5281 = vpop.permute.xlu0 %5280
    %5282 = vrot.lane.b32.xlu0 %v5094, 8
    %v5283 = vpop.permute.xlu0 %5282
    %5284 = vrot.lane.b32.xlu0 %v5095, 8
    %v5285 = vpop.permute.xlu0 %5284
    %5286 = vrot.lane.b32.xlu0 %v5096, 8
    %v5287 = vpop.permute.xlu0 %5286
    %5288 = vrot.lane.b32.xlu0 %v5097, 8
    %v5289 = vpop.permute.xlu0 %5288
    %vm5354 = vcmask 130112
    %5355 = vst.msk [vmem:[#allocation5] sm:$0xff] %vm5354, %v5163
    %5356 = vst.msk [vmem:[#allocation5 + $0x8] sm:$0xff] %vm5354, %v5165
    %5357 = vst.msk [vmem:[#allocation5 + $0x10] sm:$0xff] %vm5354, %v5167
    %5358 = vst.msk [vmem:[#allocation5 + $0x18] sm:$0xff] %vm5354, %v5169
    %5359 = vst.msk [vmem:[#allocation5 + $0x20] sm:$0xff] %vm5354, %v5171
    %5360 = vst.msk [vmem:[#allocation5 + $0x28] sm:$0xff] %vm5354, %v5173
    %5361 = vst.msk [vmem:[#allocation5 + $0x30] sm:$0xff] %vm5354, %v5175
    %5362 = vst.msk [vmem:[#allocation5 + $0x38] sm:$0xff] %vm5354, %v5177
    %5363 = vst.msk [vmem:[#allocation5 + $0x40] sm:$0xff] %vm5354, %v5179
    %5364 = vst.msk [vmem:[#allocation5 + $0x48] sm:$0xff] %vm5354, %v5181
    %5365 = vst.msk [vmem:[#allocation5 + $0x50] sm:$0xff] %vm5354, %v5183
    %5366 = vst.msk [vmem:[#allocation5 + $0x58] sm:$0xff] %vm5354, %v5185
    %5367 = vst.msk [vmem:[#allocation5 + $0x60] sm:$0xff] %vm5354, %v5187
    %5368 = vst.msk [vmem:[#allocation5 + $0x68] sm:$0xff] %vm5354, %v5189
    %5369 = vst.msk [vmem:[#allocation5 + $0x70] sm:$0xff] %vm5354, %v5191
    %5370 = vst.msk [vmem:[#allocation5 + $0x78] sm:$0xff] %vm5354, %v5193
    %5371 = vst.msk [vmem:[#allocation5 + $0x80] sm:$0xff] %vm5354, %v5195
    %5372 = vst.msk [vmem:[#allocation5 + $0x88] sm:$0xff] %vm5354, %v5197
    %5373 = vst.msk [vmem:[#allocation5 + $0x90] sm:$0xff] %vm5354, %v5199
    %5374 = vst.msk [vmem:[#allocation5 + $0x98] sm:$0xff] %vm5354, %v5201
    %5375 = vst.msk [vmem:[#allocation5 + $0xa0] sm:$0xff] %vm5354, %v5203
    %5376 = vst.msk [vmem:[#allocation5 + $0xa8] sm:$0xff] %vm5354, %v5205
    %5377 = vst.msk [vmem:[#allocation5 + $0xb0] sm:$0xff] %vm5354, %v5207
    %5378 = vst.msk [vmem:[#allocation5 + $0xb8] sm:$0xff] %vm5354, %v5209
    %5379 = vst.msk [vmem:[#allocation5 + $0xc0] sm:$0xff] %vm5354, %v5211
    %5380 = vst.msk [vmem:[#allocation5 + $0xc8] sm:$0xff] %vm5354, %v5213
    %5381 = vst.msk [vmem:[#allocation5 + $0xd0] sm:$0xff] %vm5354, %v5215
    %5382 = vst.msk [vmem:[#allocation5 + $0xd8] sm:$0xff] %vm5354, %v5217
    %5383 = vst.msk [vmem:[#allocation5 + $0xe0] sm:$0xff] %vm5354, %v5219
    %5384 = vst.msk [vmem:[#allocation5 + $0xe8] sm:$0xff] %vm5354, %v5221
    %5385 = vst.msk [vmem:[#allocation5 + $0xf0] sm:$0xff] %vm5354, %v5223
    %5386 = vst.msk [vmem:[#allocation5 + $0xf8] sm:$0xff] %vm5354, %v5225
    %5387 = vst.msk [vmem:[#allocation5 + $0x100] sm:$0xff] %vm5354, %v5227
    %5388 = vst.msk [vmem:[#allocation5 + $0x108] sm:$0xff] %vm5354, %v5229
    %5389 = vst.msk [vmem:[#allocation5 + $0x110] sm:$0xff] %vm5354, %v5231
    %5390 = vst.msk [vmem:[#allocation5 + $0x118] sm:$0xff] %vm5354, %v5233
    %5391 = vst.msk [vmem:[#allocation5 + $0x120] sm:$0xff] %vm5354, %v5235
    %5392 = vst.msk [vmem:[#allocation5 + $0x128] sm:$0xff] %vm5354, %v5237
    %5393 = vst.msk [vmem:[#allocation5 + $0x130] sm:$0xff] %vm5354, %v5239
    %5394 = vst.msk [vmem:[#allocation5 + $0x138] sm:$0xff] %vm5354, %v5241
    %5395 = vst.msk [vmem:[#allocation5 + $0x140] sm:$0xff] %vm5354, %v5243
    %5396 = vst.msk [vmem:[#allocation5 + $0x148] sm:$0xff] %vm5354, %v5245
    %5397 = vst.msk [vmem:[#allocation5 + $0x150] sm:$0xff] %vm5354, %v5247
    %5398 = vst.msk [vmem:[#allocation5 + $0x158] sm:$0xff] %vm5354, %v5249
    %5399 = vst.msk [vmem:[#allocation5 + $0x160] sm:$0xff] %vm5354, %v5251
    %5400 = vst.msk [vmem:[#allocation5 + $0x168] sm:$0xff] %vm5354, %v5253
    %5401 = vst.msk [vmem:[#allocation5 + $0x170] sm:$0xff] %vm5354, %v5255
    %5402 = vst.msk [vmem:[#allocation5 + $0x178] sm:$0xff] %vm5354, %v5257
    %5403 = vst.msk [vmem:[#allocation5 + $0x180] sm:$0xff] %vm5354, %v5259
    %5404 = vst.msk [vmem:[#allocation5 + $0x188] sm:$0xff] %vm5354, %v5261
    %5405 = vst.msk [vmem:[#allocation5 + $0x190] sm:$0xff] %vm5354, %v5263
    %5406 = vst.msk [vmem:[#allocation5 + $0x198] sm:$0xff] %vm5354, %v5265
    %5407 = vst.msk [vmem:[#allocation5 + $0x1a0] sm:$0xff] %vm5354, %v5267
    %5408 = vst.msk [vmem:[#allocation5 + $0x1a8] sm:$0xff] %vm5354, %v5269
    %5409 = vst.msk [vmem:[#allocation5 + $0x1b0] sm:$0xff] %vm5354, %v5271
    %5410 = vst.msk [vmem:[#allocation5 + $0x1b8] sm:$0xff] %vm5354, %v5273
    %5411 = vst.msk [vmem:[#allocation5 + $0x1c0] sm:$0xff] %vm5354, %v5275
    %5412 = vst.msk [vmem:[#allocation5 + $0x1c8] sm:$0xff] %vm5354, %v5277
    %5413 = vst.msk [vmem:[#allocation5 + $0x1d0] sm:$0xff] %vm5354, %v5279
    %5414 = vst.msk [vmem:[#allocation5 + $0x1d8] sm:$0xff] %vm5354, %v5281
    %5415 = vst.msk [vmem:[#allocation5 + $0x1e0] sm:$0xff] %vm5354, %v5283
    %5416 = vst.msk [vmem:[#allocation5 + $0x1e8] sm:$0xff] %vm5354, %v5285
    %5417 = vst.msk [vmem:[#allocation5 + $0x1f0] sm:$0xff] %vm5354, %v5287
    %5418 = vst.msk [vmem:[#allocation5 + $0x1f8] sm:$0xff] %vm5354, %v5289
    %v5419 = vld [vmem:[#allocation3 + $0x2] sm:$0xff]
    %v5420 = vld [vmem:[#allocation3 + $0xa] sm:$0xff]
    %v5421 = vld [vmem:[#allocation3 + $0x1a] sm:$0xff]
    %v5422 = vld [vmem:[#allocation3 + $0x22] sm:$0xff]
    %v5423 = vld [vmem:[#allocation3 + $0x32] sm:$0xff]
    %v5424 = vld [vmem:[#allocation3 + $0x3a] sm:$0xff]
    %v5425 = vld [vmem:[#allocation3 + $0x4a] sm:$0xff]
    %v5426 = vld [vmem:[#allocation3 + $0x52] sm:$0xff]
    %v5427 = vld [vmem:[#allocation3 + $0x62] sm:$0xff]
    %v5428 = vld [vmem:[#allocation3 + $0x6a] sm:$0xff]
    %v5429 = vld [vmem:[#allocation3 + $0x7a] sm:$0xff]
    %v5430 = vld [vmem:[#allocation3 + $0x82] sm:$0xff]
    %v5431 = vld [vmem:[#allocation3 + $0x92] sm:$0xff]
    %v5432 = vld [vmem:[#allocation3 + $0x9a] sm:$0xff]
    %v5433 = vld [vmem:[#allocation3 + $0xaa] sm:$0xff]
    %v5434 = vld [vmem:[#allocation3 + $0xb2] sm:$0xff]
    %v5435 = vld [vmem:[#allocation3 + $0xc2] sm:$0xff]
    %v5436 = vld [vmem:[#allocation3 + $0xca] sm:$0xff]
    %v5437 = vld [vmem:[#allocation3 + $0xda] sm:$0xff]
    %v5438 = vld [vmem:[#allocation3 + $0xe2] sm:$0xff]
    %v5439 = vld [vmem:[#allocation3 + $0xf2] sm:$0xff]
    %v5440 = vld [vmem:[#allocation3 + $0xfa] sm:$0xff]
    %v5441 = vld [vmem:[#allocation3 + $0x10a] sm:$0xff]
    %v5442 = vld [vmem:[#allocation3 + $0x112] sm:$0xff]
    %v5443 = vld [vmem:[#allocation3 + $0x122] sm:$0xff]
    %v5444 = vld [vmem:[#allocation3 + $0x12a] sm:$0xff]
    %v5445 = vld [vmem:[#allocation3 + $0x13a] sm:$0xff]
    %v5446 = vld [vmem:[#allocation3 + $0x142] sm:$0xff]
    %v5447 = vld [vmem:[#allocation3 + $0x152] sm:$0xff]
    %v5448 = vld [vmem:[#allocation3 + $0x15a] sm:$0xff]
    %v5449 = vld [vmem:[#allocation3 + $0x16a] sm:$0xff]
    %v5450 = vld [vmem:[#allocation3 + $0x172] sm:$0xff]
    %v5451 = vld [vmem:[#allocation3 + $0x1b2] sm:$0xff]
    %v5452 = vld [vmem:[#allocation3 + $0x1ba] sm:$0xff]
    %v5453 = vld [vmem:[#allocation3 + $0x1ca] sm:$0xff]
    %v5454 = vld [vmem:[#allocation3 + $0x1d2] sm:$0xff]
    %v5455 = vld [vmem:[#allocation3 + $0x1e2] sm:$0xff]
    %v5456 = vld [vmem:[#allocation3 + $0x1ea] sm:$0xff]
    %v5457 = vld [vmem:[#allocation3 + $0x1fa] sm:$0xff]
    %v5458 = vld [vmem:[#allocation3 + $0x202] sm:$0xff]
    %v5459 = vld [vmem:[#allocation3 + $0x212] sm:$0xff]
    %v5460 = vld [vmem:[#allocation3 + $0x21a] sm:$0xff]
    %v5461 = vld [vmem:[#allocation3 + $0x22a] sm:$0xff]
    %v5462 = vld [vmem:[#allocation3 + $0x232] sm:$0xff]
    %v5463 = vld [vmem:[#allocation3 + $0x242] sm:$0xff]
    %v5464 = vld [vmem:[#allocation3 + $0x24a] sm:$0xff]
    %v5465 = vld [vmem:[#allocation3 + $0x25a] sm:$0xff]
    %v5466 = vld [vmem:[#allocation3 + $0x262] sm:$0xff]
    %v5467 = vld [vmem:[#allocation3 + $0x272] sm:$0xff]
    %v5468 = vld [vmem:[#allocation3 + $0x27a] sm:$0xff]
    %v5469 = vld [vmem:[#allocation3 + $0x28a] sm:$0xff]
    %v5470 = vld [vmem:[#allocation3 + $0x292] sm:$0xff]
    %v5471 = vld [vmem:[#allocation3 + $0x2a2] sm:$0xff]
    %v5472 = vld [vmem:[#allocation3 + $0x2aa] sm:$0xff]
    %v5473 = vld [vmem:[#allocation3 + $0x2ba] sm:$0xff]
    %v5474 = vld [vmem:[#allocation3 + $0x2c2] sm:$0xff]
    %v5475 = vld [vmem:[#allocation3 + $0x2d2] sm:$0xff]
    %v5476 = vld [vmem:[#allocation3 + $0x2da] sm:$0xff]
    %v5477 = vld [vmem:[#allocation3 + $0x2ea] sm:$0xff]
    %v5478 = vld [vmem:[#allocation3 + $0x2f2] sm:$0xff]
    %v5479 = vld [vmem:[#allocation3 + $0x302] sm:$0xff]
    %v5480 = vld [vmem:[#allocation3 + $0x30a] sm:$0xff]
    %v5481 = vld [vmem:[#allocation3 + $0x31a] sm:$0xff]
    %v5482 = vld [vmem:[#allocation3 + $0x322] sm:$0xff]
    %5547 = vrot.lane.b32.xlu0 %v5419, 16
    %v5548 = vpop.permute.xlu0 %5547
    %5549 = vrot.lane.b32.xlu0 %v5420, 16
    %v5550 = vpop.permute.xlu0 %5549
    %5551 = vrot.lane.b32.xlu0 %v5421, 16
    %v5552 = vpop.permute.xlu0 %5551
    %5553 = vrot.lane.b32.xlu0 %v5422, 16
    %v5554 = vpop.permute.xlu0 %5553
    %5555 = vrot.lane.b32.xlu0 %v5423, 16
    %v5556 = vpop.permute.xlu0 %5555
    %5557 = vrot.lane.b32.xlu0 %v5424, 16
    %v5558 = vpop.permute.xlu0 %5557
    %5559 = vrot.lane.b32.xlu0 %v5425, 16
    %v5560 = vpop.permute.xlu0 %5559
    %5561 = vrot.lane.b32.xlu0 %v5426, 16
    %v5562 = vpop.permute.xlu0 %5561
    %5563 = vrot.lane.b32.xlu0 %v5427, 16
    %v5564 = vpop.permute.xlu0 %5563
    %5565 = vrot.lane.b32.xlu0 %v5428, 16
    %v5566 = vpop.permute.xlu0 %5565
    %5567 = vrot.lane.b32.xlu0 %v5429, 16
    %v5568 = vpop.permute.xlu0 %5567
    %5569 = vrot.lane.b32.xlu0 %v5430, 16
    %v5570 = vpop.permute.xlu0 %5569
    %5571 = vrot.lane.b32.xlu0 %v5431, 16
    %v5572 = vpop.permute.xlu0 %5571
    %5573 = vrot.lane.b32.xlu0 %v5432, 16
    %v5574 = vpop.permute.xlu0 %5573
    %5575 = vrot.lane.b32.xlu0 %v5433, 16
    %v5576 = vpop.permute.xlu0 %5575
    %5577 = vrot.lane.b32.xlu0 %v5434, 16
    %v5578 = vpop.permute.xlu0 %5577
    %5579 = vrot.lane.b32.xlu0 %v5435, 16
    %v5580 = vpop.permute.xlu0 %5579
    %5581 = vrot.lane.b32.xlu0 %v5436, 16
    %v5582 = vpop.permute.xlu0 %5581
    %5583 = vrot.lane.b32.xlu0 %v5437, 16
    %v5584 = vpop.permute.xlu0 %5583
    %5585 = vrot.lane.b32.xlu0 %v5438, 16
    %v5586 = vpop.permute.xlu0 %5585
    %5587 = vrot.lane.b32.xlu0 %v5439, 16
    %v5588 = vpop.permute.xlu0 %5587
    %5589 = vrot.lane.b32.xlu0 %v5440, 16
    %v5590 = vpop.permute.xlu0 %5589
    %5591 = vrot.lane.b32.xlu0 %v5441, 16
    %v5592 = vpop.permute.xlu0 %5591
    %5593 = vrot.lane.b32.xlu0 %v5442, 16
    %v5594 = vpop.permute.xlu0 %5593
    %5595 = vrot.lane.b32.xlu0 %v5443, 16
    %v5596 = vpop.permute.xlu0 %5595
    %5597 = vrot.lane.b32.xlu0 %v5444, 16
    %v5598 = vpop.permute.xlu0 %5597
    %5599 = vrot.lane.b32.xlu0 %v5445, 16
    %v5600 = vpop.permute.xlu0 %5599
    %5601 = vrot.lane.b32.xlu0 %v5446, 16
    %v5602 = vpop.permute.xlu0 %5601
    %5603 = vrot.lane.b32.xlu0 %v5447, 16
    %v5604 = vpop.permute.xlu0 %5603
    %5605 = vrot.lane.b32.xlu0 %v5448, 16
    %v5606 = vpop.permute.xlu0 %5605
    %5607 = vrot.lane.b32.xlu0 %v5449, 16
    %v5608 = vpop.permute.xlu0 %5607
    %5609 = vrot.lane.b32.xlu0 %v5450, 16
    %v5610 = vpop.permute.xlu0 %5609
    %5611 = vrot.lane.b32.xlu0 %v5451, 16
    %v5612 = vpop.permute.xlu0 %5611
    %5613 = vrot.lane.b32.xlu0 %v5452, 16
    %v5614 = vpop.permute.xlu0 %5613
    %5615 = vrot.lane.b32.xlu0 %v5453, 16
    %v5616 = vpop.permute.xlu0 %5615
    %5617 = vrot.lane.b32.xlu0 %v5454, 16
    %v5618 = vpop.permute.xlu0 %5617
    %5619 = vrot.lane.b32.xlu0 %v5455, 16
    %v5620 = vpop.permute.xlu0 %5619
    %5621 = vrot.lane.b32.xlu0 %v5456, 16
    %v5622 = vpop.permute.xlu0 %5621
    %5623 = vrot.lane.b32.xlu0 %v5457, 16
    %v5624 = vpop.permute.xlu0 %5623
    %5625 = vrot.lane.b32.xlu0 %v5458, 16
    %v5626 = vpop.permute.xlu0 %5625
    %5627 = vrot.lane.b32.xlu0 %v5459, 16
    %v5628 = vpop.permute.xlu0 %5627
    %5629 = vrot.lane.b32.xlu0 %v5460, 16
    %v5630 = vpop.permute.xlu0 %5629
    %5631 = vrot.lane.b32.xlu0 %v5461, 16
    %v5632 = vpop.permute.xlu0 %5631
    %5633 = vrot.lane.b32.xlu0 %v5462, 16
    %v5634 = vpop.permute.xlu0 %5633
    %5635 = vrot.lane.b32.xlu0 %v5463, 16
    %v5636 = vpop.permute.xlu0 %5635
    %5637 = vrot.lane.b32.xlu0 %v5464, 16
    %v5638 = vpop.permute.xlu0 %5637
    %5639 = vrot.lane.b32.xlu0 %v5465, 16
    %v5640 = vpop.permute.xlu0 %5639
    %5641 = vrot.lane.b32.xlu0 %v5466, 16
    %v5642 = vpop.permute.xlu0 %5641
    %5643 = vrot.lane.b32.xlu0 %v5467, 16
    %v5644 = vpop.permute.xlu0 %5643
    %5645 = vrot.lane.b32.xlu0 %v5468, 16
    %v5646 = vpop.permute.xlu0 %5645
    %5647 = vrot.lane.b32.xlu0 %v5469, 16
    %v5648 = vpop.permute.xlu0 %5647
    %5649 = vrot.lane.b32.xlu0 %v5470, 16
    %v5650 = vpop.permute.xlu0 %5649
    %5651 = vrot.lane.b32.xlu0 %v5471, 16
    %v5652 = vpop.permute.xlu0 %5651
    %5653 = vrot.lane.b32.xlu0 %v5472, 16
    %v5654 = vpop.permute.xlu0 %5653
    %5655 = vrot.lane.b32.xlu0 %v5473, 16
    %v5656 = vpop.permute.xlu0 %5655
    %5657 = vrot.lane.b32.xlu0 %v5474, 16
    %v5658 = vpop.permute.xlu0 %5657
    %5659 = vrot.lane.b32.xlu0 %v5475, 16
    %v5660 = vpop.permute.xlu0 %5659
    %5661 = vrot.lane.b32.xlu0 %v5476, 16
    %v5662 = vpop.permute.xlu0 %5661
    %5663 = vrot.lane.b32.xlu0 %v5477, 16
    %v5664 = vpop.permute.xlu0 %5663
    %5665 = vrot.lane.b32.xlu0 %v5478, 16
    %v5666 = vpop.permute.xlu0 %5665
    %5667 = vrot.lane.b32.xlu0 %v5479, 16
    %v5668 = vpop.permute.xlu0 %5667
    %5669 = vrot.lane.b32.xlu0 %v5480, 16
    %v5670 = vpop.permute.xlu0 %5669
    %5671 = vrot.lane.b32.xlu0 %v5481, 16
    %v5672 = vpop.permute.xlu0 %5671
    %5673 = vrot.lane.b32.xlu0 %v5482, 16
    %v5674 = vpop.permute.xlu0 %5673
    %vm5739 = vcmask 195712
    %5740 = vst.msk [vmem:[#allocation5] sm:$0xff] %vm5739, %v5548
    %5741 = vst.msk [vmem:[#allocation5 + $0x8] sm:$0xff] %vm5739, %v5550
    %5742 = vst.msk [vmem:[#allocation5 + $0x10] sm:$0xff] %vm5739, %v5552
    %5743 = vst.msk [vmem:[#allocation5 + $0x18] sm:$0xff] %vm5739, %v5554
    %5744 = vst.msk [vmem:[#allocation5 + $0x20] sm:$0xff] %vm5739, %v5556
    %5745 = vst.msk [vmem:[#allocation5 + $0x28] sm:$0xff] %vm5739, %v5558
    %5746 = vst.msk [vmem:[#allocation5 + $0x30] sm:$0xff] %vm5739, %v5560
    %5747 = vst.msk [vmem:[#allocation5 + $0x38] sm:$0xff] %vm5739, %v5562
    %5748 = vst.msk [vmem:[#allocation5 + $0x40] sm:$0xff] %vm5739, %v5564
    %5749 = vst.msk [vmem:[#allocation5 + $0x48] sm:$0xff] %vm5739, %v5566
    %5750 = vst.msk [vmem:[#allocation5 + $0x50] sm:$0xff] %vm5739, %v5568
    %5751 = vst.msk [vmem:[#allocation5 + $0x58] sm:$0xff] %vm5739, %v5570
    %5752 = vst.msk [vmem:[#allocation5 + $0x60] sm:$0xff] %vm5739, %v5572
    %5753 = vst.msk [vmem:[#allocation5 + $0x68] sm:$0xff] %vm5739, %v5574
    %5754 = vst.msk [vmem:[#allocation5 + $0x70] sm:$0xff] %vm5739, %v5576
    %5755 = vst.msk [vmem:[#allocation5 + $0x78] sm:$0xff] %vm5739, %v5578
    %5756 = vst.msk [vmem:[#allocation5 + $0x80] sm:$0xff] %vm5739, %v5580
    %5757 = vst.msk [vmem:[#allocation5 + $0x88] sm:$0xff] %vm5739, %v5582
    %5758 = vst.msk [vmem:[#allocation5 + $0x90] sm:$0xff] %vm5739, %v5584
    %5759 = vst.msk [vmem:[#allocation5 + $0x98] sm:$0xff] %vm5739, %v5586
    %5760 = vst.msk [vmem:[#allocation5 + $0xa0] sm:$0xff] %vm5739, %v5588
    %5761 = vst.msk [vmem:[#allocation5 + $0xa8] sm:$0xff] %vm5739, %v5590
    %5762 = vst.msk [vmem:[#allocation5 + $0xb0] sm:$0xff] %vm5739, %v5592
    %5763 = vst.msk [vmem:[#allocation5 + $0xb8] sm:$0xff] %vm5739, %v5594
    %5764 = vst.msk [vmem:[#allocation5 + $0xc0] sm:$0xff] %vm5739, %v5596
    %5765 = vst.msk [vmem:[#allocation5 + $0xc8] sm:$0xff] %vm5739, %v5598
    %5766 = vst.msk [vmem:[#allocation5 + $0xd0] sm:$0xff] %vm5739, %v5600
    %5767 = vst.msk [vmem:[#allocation5 + $0xd8] sm:$0xff] %vm5739, %v5602
    %5768 = vst.msk [vmem:[#allocation5 + $0xe0] sm:$0xff] %vm5739, %v5604
    %5769 = vst.msk [vmem:[#allocation5 + $0xe8] sm:$0xff] %vm5739, %v5606
    %5770 = vst.msk [vmem:[#allocation5 + $0xf0] sm:$0xff] %vm5739, %v5608
    %5771 = vst.msk [vmem:[#allocation5 + $0xf8] sm:$0xff] %vm5739, %v5610
    %5772 = vst.msk [vmem:[#allocation5 + $0x100] sm:$0xff] %vm5739, %v5612
    %5773 = vst.msk [vmem:[#allocation5 + $0x108] sm:$0xff] %vm5739, %v5614
    %5774 = vst.msk [vmem:[#allocation5 + $0x110] sm:$0xff] %vm5739, %v5616
    %5775 = vst.msk [vmem:[#allocation5 + $0x118] sm:$0xff] %vm5739, %v5618
    %5776 = vst.msk [vmem:[#allocation5 + $0x120] sm:$0xff] %vm5739, %v5620
    %5777 = vst.msk [vmem:[#allocation5 + $0x128] sm:$0xff] %vm5739, %v5622
    %5778 = vst.msk [vmem:[#allocation5 + $0x130] sm:$0xff] %vm5739, %v5624
    %5779 = vst.msk [vmem:[#allocation5 + $0x138] sm:$0xff] %vm5739, %v5626
    %5780 = vst.msk [vmem:[#allocation5 + $0x140] sm:$0xff] %vm5739, %v5628
    %5781 = vst.msk [vmem:[#allocation5 + $0x148] sm:$0xff] %vm5739, %v5630
    %5782 = vst.msk [vmem:[#allocation5 + $0x150] sm:$0xff] %vm5739, %v5632
    %5783 = vst.msk [vmem:[#allocation5 + $0x158] sm:$0xff] %vm5739, %v5634
    %5784 = vst.msk [vmem:[#allocation5 + $0x160] sm:$0xff] %vm5739, %v5636
    %5785 = vst.msk [vmem:[#allocation5 + $0x168] sm:$0xff] %vm5739, %v5638
    %5786 = vst.msk [vmem:[#allocation5 + $0x170] sm:$0xff] %vm5739, %v5640
    %5787 = vst.msk [vmem:[#allocation5 + $0x178] sm:$0xff] %vm5739, %v5642
    %5788 = vst.msk [vmem:[#allocation5 + $0x180] sm:$0xff] %vm5739, %v5644
    %5789 = vst.msk [vmem:[#allocation5 + $0x188] sm:$0xff] %vm5739, %v5646
    %5790 = vst.msk [vmem:[#allocation5 + $0x190] sm:$0xff] %vm5739, %v5648
    %5791 = vst.msk [vmem:[#allocation5 + $0x198] sm:$0xff] %vm5739, %v5650
    %5792 = vst.msk [vmem:[#allocation5 + $0x1a0] sm:$0xff] %vm5739, %v5652
    %5793 = vst.msk [vmem:[#allocation5 + $0x1a8] sm:$0xff] %vm5739, %v5654
    %5794 = vst.msk [vmem:[#allocation5 + $0x1b0] sm:$0xff] %vm5739, %v5656
    %5795 = vst.msk [vmem:[#allocation5 + $0x1b8] sm:$0xff] %vm5739, %v5658
    %5796 = vst.msk [vmem:[#allocation5 + $0x1c0] sm:$0xff] %vm5739, %v5660
    %5797 = vst.msk [vmem:[#allocation5 + $0x1c8] sm:$0xff] %vm5739, %v5662
    %5798 = vst.msk [vmem:[#allocation5 + $0x1d0] sm:$0xff] %vm5739, %v5664
    %5799 = vst.msk [vmem:[#allocation5 + $0x1d8] sm:$0xff] %vm5739, %v5666
    %5800 = vst.msk [vmem:[#allocation5 + $0x1e0] sm:$0xff] %vm5739, %v5668
    %5801 = vst.msk [vmem:[#allocation5 + $0x1e8] sm:$0xff] %vm5739, %v5670
    %5802 = vst.msk [vmem:[#allocation5 + $0x1f0] sm:$0xff] %vm5739, %v5672
    %5803 = vst.msk [vmem:[#allocation5 + $0x1f8] sm:$0xff] %vm5739, %v5674
    %v5804 = vld [vmem:[%s4841] sm:$0xff]
    %v5805 = vld [vmem:[%s4841 + $0x8] sm:$0xff]
    %v5806 = vld [vmem:[%s4841 + $0x18] sm:$0xff]
    %v5807 = vld [vmem:[%s4841 + $0x20] sm:$0xff]
    %v5808 = vld [vmem:[%s4841 + $0x30] sm:$0xff]
    %v5809 = vld [vmem:[%s4841 + $0x38] sm:$0xff]
    %v5810 = vld [vmem:[%s4841 + $0x48] sm:$0xff]
    %v5811 = vld [vmem:[%s4841 + $0x50] sm:$0xff]
    %v5812 = vld [vmem:[%s4841 + $0x60] sm:$0xff]
    %v5813 = vld [vmem:[%s4841 + $0x68] sm:$0xff]
    %v5814 = vld [vmem:[%s4841 + $0x78] sm:$0xff]
    %v5815 = vld [vmem:[%s4841 + $0x80] sm:$0xff]
    %v5816 = vld [vmem:[%s4841 + $0x90] sm:$0xff]
    %v5817 = vld [vmem:[%s4841 + $0x98] sm:$0xff]
    %v5818 = vld [vmem:[%s4841 + $0xa8] sm:$0xff]
    %v5819 = vld [vmem:[%s4841 + $0xb0] sm:$0xff]
    %v5820 = vld [vmem:[%s4841 + $0xc0] sm:$0xff]
    %v5821 = vld [vmem:[%s4841 + $0xc8] sm:$0xff]
    %v5822 = vld [vmem:[%s4841 + $0xd8] sm:$0xff]
    %v5823 = vld [vmem:[%s4841 + $0xe0] sm:$0xff]
    %v5824 = vld [vmem:[%s4841 + $0xf0] sm:$0xff]
    %v5825 = vld [vmem:[%s4841 + $0xf8] sm:$0xff]
    %v5826 = vld [vmem:[%s4841 + $0x108] sm:$0xff]
    %v5827 = vld [vmem:[%s4841 + $0x110] sm:$0xff]
    %v5828 = vld [vmem:[%s4841 + $0x120] sm:$0xff]
    %v5829 = vld [vmem:[%s4841 + $0x128] sm:$0xff]
    %v5830 = vld [vmem:[%s4841 + $0x138] sm:$0xff]
    %v5831 = vld [vmem:[%s4841 + $0x140] sm:$0xff]
    %v5832 = vld [vmem:[%s4841 + $0x150] sm:$0xff]
    %v5833 = vld [vmem:[%s4841 + $0x158] sm:$0xff]
    %v5834 = vld [vmem:[%s4841 + $0x168] sm:$0xff]
    %v5835 = vld [vmem:[%s4841 + $0x170] sm:$0xff]
    %v5836 = vld [vmem:[%s4841 + $0x1b0] sm:$0xff]
    %v5837 = vld [vmem:[%s4841 + $0x1b8] sm:$0xff]
    %v5838 = vld [vmem:[%s4841 + $0x1c8] sm:$0xff]
    %v5839 = vld [vmem:[%s4841 + $0x1d0] sm:$0xff]
    %v5840 = vld [vmem:[%s4841 + $0x1e0] sm:$0xff]
    %v5841 = vld [vmem:[%s4841 + $0x1e8] sm:$0xff]
    %v5842 = vld [vmem:[%s4841 + $0x1f8] sm:$0xff]
    %v5843 = vld [vmem:[%s4841 + $0x200] sm:$0xff]
    %v5844 = vld [vmem:[%s4841 + $0x210] sm:$0xff]
    %v5845 = vld [vmem:[%s4841 + $0x218] sm:$0xff]
    %v5846 = vld [vmem:[%s4841 + $0x228] sm:$0xff]
    %v5847 = vld [vmem:[%s4841 + $0x230] sm:$0xff]
    %v5848 = vld [vmem:[%s4841 + $0x240] sm:$0xff]
    %v5849 = vld [vmem:[%s4841 + $0x248] sm:$0xff]
    %v5850 = vld [vmem:[%s4841 + $0x258] sm:$0xff]
    %v5851 = vld [vmem:[%s4841 + $0x260] sm:$0xff]
    %v5852 = vld [vmem:[%s4841 + $0x270] sm:$0xff]
    %v5853 = vld [vmem:[%s4841 + $0x278] sm:$0xff]
    %v5854 = vld [vmem:[%s4841 + $0x288] sm:$0xff]
    %v5855 = vld [vmem:[%s4841 + $0x290] sm:$0xff]
    %v5856 = vld [vmem:[%s4841 + $0x2a0] sm:$0xff]
    %v5857 = vld [vmem:[%s4841 + $0x2a8] sm:$0xff]
    %v5858 = vld [vmem:[%s4841 + $0x2b8] sm:$0xff]
    %v5859 = vld [vmem:[%s4841 + $0x2c0] sm:$0xff]
    %v5860 = vld [vmem:[%s4841 + $0x2d0] sm:$0xff]
    %v5861 = vld [vmem:[%s4841 + $0x2d8] sm:$0xff]
    %v5862 = vld [vmem:[%s4841 + $0x2e8] sm:$0xff]
    %v5863 = vld [vmem:[%s4841 + $0x2f0] sm:$0xff]
    %v5864 = vld [vmem:[%s4841 + $0x300] sm:$0xff]
    %v5865 = vld [vmem:[%s4841 + $0x308] sm:$0xff]
    %v5866 = vld [vmem:[%s4841 + $0x318] sm:$0xff]
    %v5867 = vld [vmem:[%s4841 + $0x320] sm:$0xff]
    %5932 = vrot.lane.b32.xlu0 %v5804, 24
    %v5933 = vpop.permute.xlu0 %5932
    %5934 = vrot.lane.b32.xlu0 %v5805, 24
    %v5935 = vpop.permute.xlu0 %5934
    %5936 = vrot.lane.b32.xlu0 %v5806, 24
    %v5937 = vpop.permute.xlu0 %5936
    %5938 = vrot.lane.b32.xlu0 %v5807, 24
    %v5939 = vpop.permute.xlu0 %5938
    %5940 = vrot.lane.b32.xlu0 %v5808, 24
    %v5941 = vpop.permute.xlu0 %5940
    %5942 = vrot.lane.b32.xlu0 %v5809, 24
    %v5943 = vpop.permute.xlu0 %5942
    %5944 = vrot.lane.b32.xlu0 %v5810, 24
    %v5945 = vpop.permute.xlu0 %5944
    %5946 = vrot.lane.b32.xlu0 %v5811, 24
    %v5947 = vpop.permute.xlu0 %5946
    %5948 = vrot.lane.b32.xlu0 %v5812, 24
    %v5949 = vpop.permute.xlu0 %5948
    %5950 = vrot.lane.b32.xlu0 %v5813, 24
    %v5951 = vpop.permute.xlu0 %5950
    %5952 = vrot.lane.b32.xlu0 %v5814, 24
    %v5953 = vpop.permute.xlu0 %5952
    %5954 = vrot.lane.b32.xlu0 %v5815, 24
    %v5955 = vpop.permute.xlu0 %5954
    %5956 = vrot.lane.b32.xlu0 %v5816, 24
    %v5957 = vpop.permute.xlu0 %5956
    %5958 = vrot.lane.b32.xlu0 %v5817, 24
    %v5959 = vpop.permute.xlu0 %5958
    %5960 = vrot.lane.b32.xlu0 %v5818, 24
    %v5961 = vpop.permute.xlu0 %5960
    %5962 = vrot.lane.b32.xlu0 %v5819, 24
    %v5963 = vpop.permute.xlu0 %5962
    %5964 = vrot.lane.b32.xlu0 %v5820, 24
    %v5965 = vpop.permute.xlu0 %5964
    %5966 = vrot.lane.b32.xlu0 %v5821, 24
    %v5967 = vpop.permute.xlu0 %5966
    %5968 = vrot.lane.b32.xlu0 %v5822, 24
    %v5969 = vpop.permute.xlu0 %5968
    %5970 = vrot.lane.b32.xlu0 %v5823, 24
    %v5971 = vpop.permute.xlu0 %5970
    %5972 = vrot.lane.b32.xlu0 %v5824, 24
    %v5973 = vpop.permute.xlu0 %5972
    %5974 = vrot.lane.b32.xlu0 %v5825, 24
    %v5975 = vpop.permute.xlu0 %5974
    %5976 = vrot.lane.b32.xlu0 %v5826, 24
    %v5977 = vpop.permute.xlu0 %5976
    %5978 = vrot.lane.b32.xlu0 %v5827, 24
    %v5979 = vpop.permute.xlu0 %5978
    %5980 = vrot.lane.b32.xlu0 %v5828, 24
    %v5981 = vpop.permute.xlu0 %5980
    %5982 = vrot.lane.b32.xlu0 %v5829, 24
    %v5983 = vpop.permute.xlu0 %5982
    %5984 = vrot.lane.b32.xlu0 %v5830, 24
    %v5985 = vpop.permute.xlu0 %5984
    %5986 = vrot.lane.b32.xlu0 %v5831, 24
    %v5987 = vpop.permute.xlu0 %5986
    %5988 = vrot.lane.b32.xlu0 %v5832, 24
    %v5989 = vpop.permute.xlu0 %5988
    %5990 = vrot.lane.b32.xlu0 %v5833, 24
    %v5991 = vpop.permute.xlu0 %5990
    %5992 = vrot.lane.b32.xlu0 %v5834, 24
    %v5993 = vpop.permute.xlu0 %5992
    %5994 = vrot.lane.b32.xlu0 %v5835, 24
    %v5995 = vpop.permute.xlu0 %5994
    %5996 = vrot.lane.b32.xlu0 %v5836, 24
    %v5997 = vpop.permute.xlu0 %5996
    %5998 = vrot.lane.b32.xlu0 %v5837, 24
    %v5999 = vpop.permute.xlu0 %5998
    %6000 = vrot.lane.b32.xlu0 %v5838, 24
    %v6001 = vpop.permute.xlu0 %6000
    %6002 = vrot.lane.b32.xlu0 %v5839, 24
    %v6003 = vpop.permute.xlu0 %6002
    %6004 = vrot.lane.b32.xlu0 %v5840, 24
    %v6005 = vpop.permute.xlu0 %6004
    %6006 = vrot.lane.b32.xlu0 %v5841, 24
    %v6007 = vpop.permute.xlu0 %6006
    %6008 = vrot.lane.b32.xlu0 %v5842, 24
    %v6009 = vpop.permute.xlu0 %6008
    %6010 = vrot.lane.b32.xlu0 %v5843, 24
    %v6011 = vpop.permute.xlu0 %6010
    %6012 = vrot.lane.b32.xlu0 %v5844, 24
    %v6013 = vpop.permute.xlu0 %6012
    %6014 = vrot.lane.b32.xlu0 %v5845, 24
    %v6015 = vpop.permute.xlu0 %6014
    %6016 = vrot.lane.b32.xlu0 %v5846, 24
    %v6017 = vpop.permute.xlu0 %6016
    %6018 = vrot.lane.b32.xlu0 %v5847, 24
    %v6019 = vpop.permute.xlu0 %6018
    %6020 = vrot.lane.b32.xlu0 %v5848, 24
    %v6021 = vpop.permute.xlu0 %6020
    %6022 = vrot.lane.b32.xlu0 %v5849, 24
    %v6023 = vpop.permute.xlu0 %6022
    %6024 = vrot.lane.b32.xlu0 %v5850, 24
    %v6025 = vpop.permute.xlu0 %6024
    %6026 = vrot.lane.b32.xlu0 %v5851, 24
    %v6027 = vpop.permute.xlu0 %6026
    %6028 = vrot.lane.b32.xlu0 %v5852, 24
    %v6029 = vpop.permute.xlu0 %6028
    %6030 = vrot.lane.b32.xlu0 %v5853, 24
    %v6031 = vpop.permute.xlu0 %6030
    %6032 = vrot.lane.b32.xlu0 %v5854, 24
    %v6033 = vpop.permute.xlu0 %6032
    %6034 = vrot.lane.b32.xlu0 %v5855, 24
    %v6035 = vpop.permute.xlu0 %6034
    %6036 = vrot.lane.b32.xlu0 %v5856, 24
    %v6037 = vpop.permute.xlu0 %6036
    %6038 = vrot.lane.b32.xlu0 %v5857, 24
    %v6039 = vpop.permute.xlu0 %6038
    %6040 = vrot.lane.b32.xlu0 %v5858, 24
    %v6041 = vpop.permute.xlu0 %6040
    %6042 = vrot.lane.b32.xlu0 %v5859, 24
    %v6043 = vpop.permute.xlu0 %6042
    %6044 = vrot.lane.b32.xlu0 %v5860, 24
    %v6045 = vpop.permute.xlu0 %6044
    %6046 = vrot.lane.b32.xlu0 %v5861, 24
    %v6047 = vpop.permute.xlu0 %6046
    %6048 = vrot.lane.b32.xlu0 %v5862, 24
    %v6049 = vpop.permute.xlu0 %6048
    %6050 = vrot.lane.b32.xlu0 %v5863, 24
    %v6051 = vpop.permute.xlu0 %6050
    %6052 = vrot.lane.b32.xlu0 %v5864, 24
    %v6053 = vpop.permute.xlu0 %6052
    %6054 = vrot.lane.b32.xlu0 %v5865, 24
    %v6055 = vpop.permute.xlu0 %6054
    %6056 = vrot.lane.b32.xlu0 %v5866, 24
    %v6057 = vpop.permute.xlu0 %6056
    %6058 = vrot.lane.b32.xlu0 %v5867, 24
    %v6059 = vpop.permute.xlu0 %6058
    %vm6124 = vcmask 261312
    %6125 = vst.msk [vmem:[#allocation5] sm:$0xff] %vm6124, %v5933
    %6126 = vst.msk [vmem:[#allocation5 + $0x8] sm:$0xff] %vm6124, %v5935
    %6127 = vst.msk [vmem:[#allocation5 + $0x10] sm:$0xff] %vm6124, %v5937
    %6128 = vst.msk [vmem:[#allocation5 + $0x18] sm:$0xff] %vm6124, %v5939
    %6129 = vst.msk [vmem:[#allocation5 + $0x20] sm:$0xff] %vm6124, %v5941
    %6130 = vst.msk [vmem:[#allocation5 + $0x28] sm:$0xff] %vm6124, %v5943
    %6131 = vst.msk [vmem:[#allocation5 + $0x30] sm:$0xff] %vm6124, %v5945
    %6132 = vst.msk [vmem:[#allocation5 + $0x38] sm:$0xff] %vm6124, %v5947
    %6133 = vst.msk [vmem:[#allocation5 + $0x40] sm:$0xff] %vm6124, %v5949
    %6134 = vst.msk [vmem:[#allocation5 + $0x48] sm:$0xff] %vm6124, %v5951
    %6135 = vst.msk [vmem:[#allocation5 + $0x50] sm:$0xff] %vm6124, %v5953
    %6136 = vst.msk [vmem:[#allocation5 + $0x58] sm:$0xff] %vm6124, %v5955
    %6137 = vst.msk [vmem:[#allocation5 + $0x60] sm:$0xff] %vm6124, %v5957
    %6138 = vst.msk [vmem:[#allocation5 + $0x68] sm:$0xff] %vm6124, %v5959
    %6139 = vst.msk [vmem:[#allocation5 + $0x70] sm:$0xff] %vm6124, %v5961
    %6140 = vst.msk [vmem:[#allocation5 + $0x78] sm:$0xff] %vm6124, %v5963
    %6141 = vst.msk [vmem:[#allocation5 + $0x80] sm:$0xff] %vm6124, %v5965
    %6142 = vst.msk [vmem:[#allocation5 + $0x88] sm:$0xff] %vm6124, %v5967
    %6143 = vst.msk [vmem:[#allocation5 + $0x90] sm:$0xff] %vm6124, %v5969
    %6144 = vst.msk [vmem:[#allocation5 + $0x98] sm:$0xff] %vm6124, %v5971
    %6145 = vst.msk [vmem:[#allocation5 + $0xa0] sm:$0xff] %vm6124, %v5973
    %6146 = vst.msk [vmem:[#allocation5 + $0xa8] sm:$0xff] %vm6124, %v5975
    %6147 = vst.msk [vmem:[#allocation5 + $0xb0] sm:$0xff] %vm6124, %v5977
    %6148 = vst.msk [vmem:[#allocation5 + $0xb8] sm:$0xff] %vm6124, %v5979
    %6149 = vst.msk [vmem:[#allocation5 + $0xc0] sm:$0xff] %vm6124, %v5981
    %6150 = vst.msk [vmem:[#allocation5 + $0xc8] sm:$0xff] %vm6124, %v5983
    %6151 = vst.msk [vmem:[#allocation5 + $0xd0] sm:$0xff] %vm6124, %v5985
    %6152 = vst.msk [vmem:[#allocation5 + $0xd8] sm:$0xff] %vm6124, %v5987
    %6153 = vst.msk [vmem:[#allocation5 + $0xe0] sm:$0xff] %vm6124, %v5989
    %6154 = vst.msk [vmem:[#allocation5 + $0xe8] sm:$0xff] %vm6124, %v5991
    %6155 = vst.msk [vmem:[#allocation5 + $0xf0] sm:$0xff] %vm6124, %v5993
    %6156 = vst.msk [vmem:[#allocation5 + $0xf8] sm:$0xff] %vm6124, %v5995
    %6157 = vst.msk [vmem:[#allocation5 + $0x100] sm:$0xff] %vm6124, %v5997
    %6158 = vst.msk [vmem:[#allocation5 + $0x108] sm:$0xff] %vm6124, %v5999
    %6159 = vst.msk [vmem:[#allocation5 + $0x110] sm:$0xff] %vm6124, %v6001
    %6160 = vst.msk [vmem:[#allocation5 + $0x118] sm:$0xff] %vm6124, %v6003
    %6161 = vst.msk [vmem:[#allocation5 + $0x120] sm:$0xff] %vm6124, %v6005
    %6162 = vst.msk [vmem:[#allocation5 + $0x128] sm:$0xff] %vm6124, %v6007
    %6163 = vst.msk [vmem:[#allocation5 + $0x130] sm:$0xff] %vm6124, %v6009
    %6164 = vst.msk [vmem:[#allocation5 + $0x138] sm:$0xff] %vm6124, %v6011
    %6165 = vst.msk [vmem:[#allocation5 + $0x140] sm:$0xff] %vm6124, %v6013
    %6166 = vst.msk [vmem:[#allocation5 + $0x148] sm:$0xff] %vm6124, %v6015
    %6167 = vst.msk [vmem:[#allocation5 + $0x150] sm:$0xff] %vm6124, %v6017
    %6168 = vst.msk [vmem:[#allocation5 + $0x158] sm:$0xff] %vm6124, %v6019
    %6169 = vst.msk [vmem:[#allocation5 + $0x160] sm:$0xff] %vm6124, %v6021
    %6170 = vst.msk [vmem:[#allocation5 + $0x168] sm:$0xff] %vm6124, %v6023
    %6171 = vst.msk [vmem:[#allocation5 + $0x170] sm:$0xff] %vm6124, %v6025
    %6172 = vst.msk [vmem:[#allocation5 + $0x178] sm:$0xff] %vm6124, %v6027
    %6173 = vst.msk [vmem:[#allocation5 + $0x180] sm:$0xff] %vm6124, %v6029
    %6174 = vst.msk [vmem:[#allocation5 + $0x188] sm:$0xff] %vm6124, %v6031
    %6175 = vst.msk [vmem:[#allocation5 + $0x190] sm:$0xff] %vm6124, %v6033
    %6176 = vst.msk [vmem:[#allocation5 + $0x198] sm:$0xff] %vm6124, %v6035
    %6177 = vst.msk [vmem:[#allocation5 + $0x1a0] sm:$0xff] %vm6124, %v6037
    %6178 = vst.msk [vmem:[#allocation5 + $0x1a8] sm:$0xff] %vm6124, %v6039
    %6179 = vst.msk [vmem:[#allocation5 + $0x1b0] sm:$0xff] %vm6124, %v6041
    %6180 = vst.msk [vmem:[#allocation5 + $0x1b8] sm:$0xff] %vm6124, %v6043
    %6181 = vst.msk [vmem:[#allocation5 + $0x1c0] sm:$0xff] %vm6124, %v6045
    %6182 = vst.msk [vmem:[#allocation5 + $0x1c8] sm:$0xff] %vm6124, %v6047
    %6183 = vst.msk [vmem:[#allocation5 + $0x1d0] sm:$0xff] %vm6124, %v6049
    %6184 = vst.msk [vmem:[#allocation5 + $0x1d8] sm:$0xff] %vm6124, %v6051
    %6185 = vst.msk [vmem:[#allocation5 + $0x1e0] sm:$0xff] %vm6124, %v6053
    %6186 = vst.msk [vmem:[#allocation5 + $0x1e8] sm:$0xff] %vm6124, %v6055
    %6187 = vst.msk [vmem:[#allocation5 + $0x1f0] sm:$0xff] %vm6124, %v6057
    %6188 = vst.msk [vmem:[#allocation5 + $0x1f8] sm:$0xff] %vm6124, %v6059
    %v6189 = vld [vmem:[%s4841 + $0x1] sm:$0xff]
    %v6190 = vld [vmem:[%s4841 + $0x9] sm:$0xff]
    %v6191 = vld [vmem:[%s4841 + $0x19] sm:$0xff]
    %v6192 = vld [vmem:[%s4841 + $0x21] sm:$0xff]
    %v6193 = vld [vmem:[%s4841 + $0x31] sm:$0xff]
    %v6194 = vld [vmem:[%s4841 + $0x39] sm:$0xff]
    %v6195 = vld [vmem:[%s4841 + $0x49] sm:$0xff]
    %v6196 = vld [vmem:[%s4841 + $0x51] sm:$0xff]
    %v6197 = vld [vmem:[%s4841 + $0x61] sm:$0xff]
    %v6198 = vld [vmem:[%s4841 + $0x69] sm:$0xff]
    %v6199 = vld [vmem:[%s4841 + $0x79] sm:$0xff]
    %v6200 = vld [vmem:[%s4841 + $0x81] sm:$0xff]
    %v6201 = vld [vmem:[%s4841 + $0x91] sm:$0xff]
    %v6202 = vld [vmem:[%s4841 + $0x99] sm:$0xff]
    %v6203 = vld [vmem:[%s4841 + $0xa9] sm:$0xff]
    %v6204 = vld [vmem:[%s4841 + $0xb1] sm:$0xff]
    %v6205 = vld [vmem:[%s4841 + $0xc1] sm:$0xff]
    %v6206 = vld [vmem:[%s4841 + $0xc9] sm:$0xff]
    %v6207 = vld [vmem:[%s4841 + $0xd9] sm:$0xff]
    %v6208 = vld [vmem:[%s4841 + $0xe1] sm:$0xff]
    %v6209 = vld [vmem:[%s4841 + $0xf1] sm:$0xff]
    %v6210 = vld [vmem:[%s4841 + $0xf9] sm:$0xff]
    %v6211 = vld [vmem:[%s4841 + $0x109] sm:$0xff]
    %v6212 = vld [vmem:[%s4841 + $0x111] sm:$0xff]
    %v6213 = vld [vmem:[%s4841 + $0x121] sm:$0xff]
    %v6214 = vld [vmem:[%s4841 + $0x129] sm:$0xff]
    %v6215 = vld [vmem:[%s4841 + $0x139] sm:$0xff]
    %v6216 = vld [vmem:[%s4841 + $0x141] sm:$0xff]
    %v6217 = vld [vmem:[%s4841 + $0x151] sm:$0xff]
    %v6218 = vld [vmem:[%s4841 + $0x159] sm:$0xff]
    %v6219 = vld [vmem:[%s4841 + $0x169] sm:$0xff]
    %v6220 = vld [vmem:[%s4841 + $0x171] sm:$0xff]
    %v6221 = vld [vmem:[%s4841 + $0x1b1] sm:$0xff]
    %v6222 = vld [vmem:[%s4841 + $0x1b9] sm:$0xff]
    %v6223 = vld [vmem:[%s4841 + $0x1c9] sm:$0xff]
    %v6224 = vld [vmem:[%s4841 + $0x1d1] sm:$0xff]
    %v6225 = vld [vmem:[%s4841 + $0x1e1] sm:$0xff]
    %v6226 = vld [vmem:[%s4841 + $0x1e9] sm:$0xff]
    %v6227 = vld [vmem:[%s4841 + $0x1f9] sm:$0xff]
    %v6228 = vld [vmem:[%s4841 + $0x201] sm:$0xff]
    %v6229 = vld [vmem:[%s4841 + $0x211] sm:$0xff]
    %v6230 = vld [vmem:[%s4841 + $0x219] sm:$0xff]
    %v6231 = vld [vmem:[%s4841 + $0x229] sm:$0xff]
    %v6232 = vld [vmem:[%s4841 + $0x231] sm:$0xff]
    %v6233 = vld [vmem:[%s4841 + $0x241] sm:$0xff]
    %v6234 = vld [vmem:[%s4841 + $0x249] sm:$0xff]
    %v6235 = vld [vmem:[%s4841 + $0x259] sm:$0xff]
    %v6236 = vld [vmem:[%s4841 + $0x261] sm:$0xff]
    %v6237 = vld [vmem:[%s4841 + $0x271] sm:$0xff]
    %v6238 = vld [vmem:[%s4841 + $0x279] sm:$0xff]
    %v6239 = vld [vmem:[%s4841 + $0x289] sm:$0xff]
    %v6240 = vld [vmem:[%s4841 + $0x291] sm:$0xff]
    %v6241 = vld [vmem:[%s4841 + $0x2a1] sm:$0xff]
    %v6242 = vld [vmem:[%s4841 + $0x2a9] sm:$0xff]
    %v6243 = vld [vmem:[%s4841 + $0x2b9] sm:$0xff]
    %v6244 = vld [vmem:[%s4841 + $0x2c1] sm:$0xff]
    %v6245 = vld [vmem:[%s4841 + $0x2d1] sm:$0xff]
    %v6246 = vld [vmem:[%s4841 + $0x2d9] sm:$0xff]
    %v6247 = vld [vmem:[%s4841 + $0x2e9] sm:$0xff]
    %v6248 = vld [vmem:[%s4841 + $0x2f1] sm:$0xff]
    %v6249 = vld [vmem:[%s4841 + $0x301] sm:$0xff]
    %v6250 = vld [vmem:[%s4841 + $0x309] sm:$0xff]
    %v6251 = vld [vmem:[%s4841 + $0x319] sm:$0xff]
    %v6252 = vld [vmem:[%s4841 + $0x321] sm:$0xff]
    %6317 = vrot.lane.b32.xlu0 %v6189, 32
    %v6318 = vpop.permute.xlu0 %6317
    %6319 = vrot.lane.b32.xlu0 %v6190, 32
    %v6320 = vpop.permute.xlu0 %6319
    %6321 = vrot.lane.b32.xlu0 %v6191, 32
    %v6322 = vpop.permute.xlu0 %6321
    %6323 = vrot.lane.b32.xlu0 %v6192, 32
    %v6324 = vpop.permute.xlu0 %6323
    %6325 = vrot.lane.b32.xlu0 %v6193, 32
    %v6326 = vpop.permute.xlu0 %6325
    %6327 = vrot.lane.b32.xlu0 %v6194, 32
    %v6328 = vpop.permute.xlu0 %6327
    %6329 = vrot.lane.b32.xlu0 %v6195, 32
    %v6330 = vpop.permute.xlu0 %6329
    %6331 = vrot.lane.b32.xlu0 %v6196, 32
    %v6332 = vpop.permute.xlu0 %6331
    %6333 = vrot.lane.b32.xlu0 %v6197, 32
    %v6334 = vpop.permute.xlu0 %6333
    %6335 = vrot.lane.b32.xlu0 %v6198, 32
    %v6336 = vpop.permute.xlu0 %6335
    %6337 = vrot.lane.b32.xlu0 %v6199, 32
    %v6338 = vpop.permute.xlu0 %6337
    %6339 = vrot.lane.b32.xlu0 %v6200, 32
    %v6340 = vpop.permute.xlu0 %6339
    %6341 = vrot.lane.b32.xlu0 %v6201, 32
    %v6342 = vpop.permute.xlu0 %6341
    %6343 = vrot.lane.b32.xlu0 %v6202, 32
    %v6344 = vpop.permute.xlu0 %6343
    %6345 = vrot.lane.b32.xlu0 %v6203, 32
    %v6346 = vpop.permute.xlu0 %6345
    %6347 = vrot.lane.b32.xlu0 %v6204, 32
    %v6348 = vpop.permute.xlu0 %6347
    %6349 = vrot.lane.b32.xlu0 %v6205, 32
    %v6350 = vpop.permute.xlu0 %6349
    %6351 = vrot.lane.b32.xlu0 %v6206, 32
    %v6352 = vpop.permute.xlu0 %6351
    %6353 = vrot.lane.b32.xlu0 %v6207, 32
    %v6354 = vpop.permute.xlu0 %6353
    %6355 = vrot.lane.b32.xlu0 %v6208, 32
    %v6356 = vpop.permute.xlu0 %6355
    %6357 = vrot.lane.b32.xlu0 %v6209, 32
    %v6358 = vpop.permute.xlu0 %6357
    %6359 = vrot.lane.b32.xlu0 %v6210, 32
    %v6360 = vpop.permute.xlu0 %6359
    %6361 = vrot.lane.b32.xlu0 %v6211, 32
    %v6362 = vpop.permute.xlu0 %6361
    %6363 = vrot.lane.b32.xlu0 %v6212, 32
    %v6364 = vpop.permute.xlu0 %6363
    %6365 = vrot.lane.b32.xlu0 %v6213, 32
    %v6366 = vpop.permute.xlu0 %6365
    %6367 = vrot.lane.b32.xlu0 %v6214, 32
    %v6368 = vpop.permute.xlu0 %6367
    %6369 = vrot.lane.b32.xlu0 %v6215, 32
    %v6370 = vpop.permute.xlu0 %6369
    %6371 = vrot.lane.b32.xlu0 %v6216, 32
    %v6372 = vpop.permute.xlu0 %6371
    %6373 = vrot.lane.b32.xlu0 %v6217, 32
    %v6374 = vpop.permute.xlu0 %6373
    %6375 = vrot.lane.b32.xlu0 %v6218, 32
    %v6376 = vpop.permute.xlu0 %6375
    %6377 = vrot.lane.b32.xlu0 %v6219, 32
    %v6378 = vpop.permute.xlu0 %6377
    %6379 = vrot.lane.b32.xlu0 %v6220, 32
    %v6380 = vpop.permute.xlu0 %6379
    %6381 = vrot.lane.b32.xlu0 %v6221, 32
    %v6382 = vpop.permute.xlu0 %6381
    %6383 = vrot.lane.b32.xlu0 %v6222, 32
    %v6384 = vpop.permute.xlu0 %6383
    %6385 = vrot.lane.b32.xlu0 %v6223, 32
    %v6386 = vpop.permute.xlu0 %6385
    %6387 = vrot.lane.b32.xlu0 %v6224, 32
    %v6388 = vpop.permute.xlu0 %6387
    %6389 = vrot.lane.b32.xlu0 %v6225, 32
    %v6390 = vpop.permute.xlu0 %6389
    %6391 = vrot.lane.b32.xlu0 %v6226, 32
    %v6392 = vpop.permute.xlu0 %6391
    %6393 = vrot.lane.b32.xlu0 %v6227, 32
    %v6394 = vpop.permute.xlu0 %6393
    %6395 = vrot.lane.b32.xlu0 %v6228, 32
    %v6396 = vpop.permute.xlu0 %6395
    %6397 = vrot.lane.b32.xlu0 %v6229, 32
    %v6398 = vpop.permute.xlu0 %6397
    %6399 = vrot.lane.b32.xlu0 %v6230, 32
    %v6400 = vpop.permute.xlu0 %6399
    %6401 = vrot.lane.b32.xlu0 %v6231, 32
    %v6402 = vpop.permute.xlu0 %6401
    %6403 = vrot.lane.b32.xlu0 %v6232, 32
    %v6404 = vpop.permute.xlu0 %6403
    %6405 = vrot.lane.b32.xlu0 %v6233, 32
    %v6406 = vpop.permute.xlu0 %6405
    %6407 = vrot.lane.b32.xlu0 %v6234, 32
    %v6408 = vpop.permute.xlu0 %6407
    %6409 = vrot.lane.b32.xlu0 %v6235, 32
    %v6410 = vpop.permute.xlu0 %6409
    %6411 = vrot.lane.b32.xlu0 %v6236, 32
    %v6412 = vpop.permute.xlu0 %6411
    %6413 = vrot.lane.b32.xlu0 %v6237, 32
    %v6414 = vpop.permute.xlu0 %6413
    %6415 = vrot.lane.b32.xlu0 %v6238, 32
    %v6416 = vpop.permute.xlu0 %6415
    %6417 = vrot.lane.b32.xlu0 %v6239, 32
    %v6418 = vpop.permute.xlu0 %6417
    %6419 = vrot.lane.b32.xlu0 %v6240, 32
    %v6420 = vpop.permute.xlu0 %6419
    %6421 = vrot.lane.b32.xlu0 %v6241, 32
    %v6422 = vpop.permute.xlu0 %6421
    %6423 = vrot.lane.b32.xlu0 %v6242, 32
    %v6424 = vpop.permute.xlu0 %6423
    %6425 = vrot.lane.b32.xlu0 %v6243, 32
    %v6426 = vpop.permute.xlu0 %6425
    %6427 = vrot.lane.b32.xlu0 %v6244, 32
    %v6428 = vpop.permute.xlu0 %6427
    %6429 = vrot.lane.b32.xlu0 %v6245, 32
    %v6430 = vpop.permute.xlu0 %6429
    %6431 = vrot.lane.b32.xlu0 %v6246, 32
    %v6432 = vpop.permute.xlu0 %6431
    %6433 = vrot.lane.b32.xlu0 %v6247, 32
    %v6434 = vpop.permute.xlu0 %6433
    %6435 = vrot.lane.b32.xlu0 %v6248, 32
    %v6436 = vpop.permute.xlu0 %6435
    %6437 = vrot.lane.b32.xlu0 %v6249, 32
    %v6438 = vpop.permute.xlu0 %6437
    %6439 = vrot.lane.b32.xlu0 %v6250, 32
    %v6440 = vpop.permute.xlu0 %6439
    %6441 = vrot.lane.b32.xlu0 %v6251, 32
    %v6442 = vpop.permute.xlu0 %6441
    %6443 = vrot.lane.b32.xlu0 %v6252, 32
    %v6444 = vpop.permute.xlu0 %6443
    %vm6509 = vcmask 326912
    %6510 = vst.msk [vmem:[#allocation5] sm:$0xff] %vm6509, %v6318
    %6511 = vst.msk [vmem:[#allocation5 + $0x8] sm:$0xff] %vm6509, %v6320
    %6512 = vst.msk [vmem:[#allocation5 + $0x10] sm:$0xff] %vm6509, %v6322
    %6513 = vst.msk [vmem:[#allocation5 + $0x18] sm:$0xff] %vm6509, %v6324
    %6514 = vst.msk [vmem:[#allocation5 + $0x20] sm:$0xff] %vm6509, %v6326
    %6515 = vst.msk [vmem:[#allocation5 + $0x28] sm:$0xff] %vm6509, %v6328
    %6516 = vst.msk [vmem:[#allocation5 + $0x30] sm:$0xff] %vm6509, %v6330
    %6517 = vst.msk [vmem:[#allocation5 + $0x38] sm:$0xff] %vm6509, %v6332
    %6518 = vst.msk [vmem:[#allocation5 + $0x40] sm:$0xff] %vm6509, %v6334
    %6519 = vst.msk [vmem:[#allocation5 + $0x48] sm:$0xff] %vm6509, %v6336
    %6520 = vst.msk [vmem:[#allocation5 + $0x50] sm:$0xff] %vm6509, %v6338
    %6521 = vst.msk [vmem:[#allocation5 + $0x58] sm:$0xff] %vm6509, %v6340
    %6522 = vst.msk [vmem:[#allocation5 + $0x60] sm:$0xff] %vm6509, %v6342
    %6523 = vst.msk [vmem:[#allocation5 + $0x68] sm:$0xff] %vm6509, %v6344
    %6524 = vst.msk [vmem:[#allocation5 + $0x70] sm:$0xff] %vm6509, %v6346
    %6525 = vst.msk [vmem:[#allocation5 + $0x78] sm:$0xff] %vm6509, %v6348
    %6526 = vst.msk [vmem:[#allocation5 + $0x80] sm:$0xff] %vm6509, %v6350
    %6527 = vst.msk [vmem:[#allocation5 + $0x88] sm:$0xff] %vm6509, %v6352
    %6528 = vst.msk [vmem:[#allocation5 + $0x90] sm:$0xff] %vm6509, %v6354
    %6529 = vst.msk [vmem:[#allocation5 + $0x98] sm:$0xff] %vm6509, %v6356
    %6530 = vst.msk [vmem:[#allocation5 + $0xa0] sm:$0xff] %vm6509, %v6358
    %6531 = vst.msk [vmem:[#allocation5 + $0xa8] sm:$0xff] %vm6509, %v6360
    %6532 = vst.msk [vmem:[#allocation5 + $0xb0] sm:$0xff] %vm6509, %v6362
    %6533 = vst.msk [vmem:[#allocation5 + $0xb8] sm:$0xff] %vm6509, %v6364
    %6534 = vst.msk [vmem:[#allocation5 + $0xc0] sm:$0xff] %vm6509, %v6366
    %6535 = vst.msk [vmem:[#allocation5 + $0xc8] sm:$0xff] %vm6509, %v6368
    %6536 = vst.msk [vmem:[#allocation5 + $0xd0] sm:$0xff] %vm6509, %v6370
    %6537 = vst.msk [vmem:[#allocation5 + $0xd8] sm:$0xff] %vm6509, %v6372
    %6538 = vst.msk [vmem:[#allocation5 + $0xe0] sm:$0xff] %vm6509, %v6374
    %6539 = vst.msk [vmem:[#allocation5 + $0xe8] sm:$0xff] %vm6509, %v6376
    %6540 = vst.msk [vmem:[#allocation5 + $0xf0] sm:$0xff] %vm6509, %v6378
    %6541 = vst.msk [vmem:[#allocation5 + $0xf8] sm:$0xff] %vm6509, %v6380
    %6542 = vst.msk [vmem:[#allocation5 + $0x100] sm:$0xff] %vm6509, %v6382
    %6543 = vst.msk [vmem:[#allocation5 + $0x108] sm:$0xff] %vm6509, %v6384
    %6544 = vst.msk [vmem:[#allocation5 + $0x110] sm:$0xff] %vm6509, %v6386
    %6545 = vst.msk [vmem:[#allocation5 + $0x118] sm:$0xff] %vm6509, %v6388
    %6546 = vst.msk [vmem:[#allocation5 + $0x120] sm:$0xff] %vm6509, %v6390
    %6547 = vst.msk [vmem:[#allocation5 + $0x128] sm:$0xff] %vm6509, %v6392
    %6548 = vst.msk [vmem:[#allocation5 + $0x130] sm:$0xff] %vm6509, %v6394
    %6549 = vst.msk [vmem:[#allocation5 + $0x138] sm:$0xff] %vm6509, %v6396
    %6550 = vst.msk [vmem:[#allocation5 + $0x140] sm:$0xff] %vm6509, %v6398
    %6551 = vst.msk [vmem:[#allocation5 + $0x148] sm:$0xff] %vm6509, %v6400
    %6552 = vst.msk [vmem:[#allocation5 + $0x150] sm:$0xff] %vm6509, %v6402
    %6553 = vst.msk [vmem:[#allocation5 + $0x158] sm:$0xff] %vm6509, %v6404
    %6554 = vst.msk [vmem:[#allocation5 + $0x160] sm:$0xff] %vm6509, %v6406
    %6555 = vst.msk [vmem:[#allocation5 + $0x168] sm:$0xff] %vm6509, %v6408
    %6556 = vst.msk [vmem:[#allocation5 + $0x170] sm:$0xff] %vm6509, %v6410
    %6557 = vst.msk [vmem:[#allocation5 + $0x178] sm:$0xff] %vm6509, %v6412
    %6558 = vst.msk [vmem:[#allocation5 + $0x180] sm:$0xff] %vm6509, %v6414
    %6559 = vst.msk [vmem:[#allocation5 + $0x188] sm:$0xff] %vm6509, %v6416
    %6560 = vst.msk [vmem:[#allocation5 + $0x190] sm:$0xff] %vm6509, %v6418
    %6561 = vst.msk [vmem:[#allocation5 + $0x198] sm:$0xff] %vm6509, %v6420
    %6562 = vst.msk [vmem:[#allocation5 + $0x1a0] sm:$0xff] %vm6509, %v6422
    %6563 = vst.msk [vmem:[#allocation5 + $0x1a8] sm:$0xff] %vm6509, %v6424
    %6564 = vst.msk [vmem:[#allocation5 + $0x1b0] sm:$0xff] %vm6509, %v6426
    %6565 = vst.msk [vmem:[#allocation5 + $0x1b8] sm:$0xff] %vm6509, %v6428
    %6566 = vst.msk [vmem:[#allocation5 + $0x1c0] sm:$0xff] %vm6509, %v6430
    %6567 = vst.msk [vmem:[#allocation5 + $0x1c8] sm:$0xff] %vm6509, %v6432
    %6568 = vst.msk [vmem:[#allocation5 + $0x1d0] sm:$0xff] %vm6509, %v6434
    %6569 = vst.msk [vmem:[#allocation5 + $0x1d8] sm:$0xff] %vm6509, %v6436
    %6570 = vst.msk [vmem:[#allocation5 + $0x1e0] sm:$0xff] %vm6509, %v6438
    %6571 = vst.msk [vmem:[#allocation5 + $0x1e8] sm:$0xff] %vm6509, %v6440
    %6572 = vst.msk [vmem:[#allocation5 + $0x1f0] sm:$0xff] %vm6509, %v6442
    %6573 = vst.msk [vmem:[#allocation5 + $0x1f8] sm:$0xff] %vm6509, %v6444
    %v6574 = vld [vmem:[%s4841 + $0x2] sm:$0xff]
    %v6575 = vld [vmem:[%s4841 + $0xa] sm:$0xff]
    %v6576 = vld [vmem:[%s4841 + $0x1a] sm:$0xff]
    %v6577 = vld [vmem:[%s4841 + $0x22] sm:$0xff]
    %v6578 = vld [vmem:[%s4841 + $0x32] sm:$0xff]
    %v6579 = vld [vmem:[%s4841 + $0x3a] sm:$0xff]
    %v6580 = vld [vmem:[%s4841 + $0x4a] sm:$0xff]
    %v6581 = vld [vmem:[%s4841 + $0x52] sm:$0xff]
    %v6582 = vld [vmem:[%s4841 + $0x62] sm:$0xff]
    %v6583 = vld [vmem:[%s4841 + $0x6a] sm:$0xff]
    %v6584 = vld [vmem:[%s4841 + $0x7a] sm:$0xff]
    %v6585 = vld [vmem:[%s4841 + $0x82] sm:$0xff]
    %v6586 = vld [vmem:[%s4841 + $0x92] sm:$0xff]
    %v6587 = vld [vmem:[%s4841 + $0x9a] sm:$0xff]
    %v6588 = vld [vmem:[%s4841 + $0xaa] sm:$0xff]
    %v6589 = vld [vmem:[%s4841 + $0xb2] sm:$0xff]
    %v6590 = vld [vmem:[%s4841 + $0xc2] sm:$0xff]
    %v6591 = vld [vmem:[%s4841 + $0xca] sm:$0xff]
    %v6592 = vld [vmem:[%s4841 + $0xda] sm:$0xff]
    %v6593 = vld [vmem:[%s4841 + $0xe2] sm:$0xff]
    %v6594 = vld [vmem:[%s4841 + $0xf2] sm:$0xff]
    %v6595 = vld [vmem:[%s4841 + $0xfa] sm:$0xff]
    %v6596 = vld [vmem:[%s4841 + $0x10a] sm:$0xff]
    %v6597 = vld [vmem:[%s4841 + $0x112] sm:$0xff]
    %v6598 = vld [vmem:[%s4841 + $0x122] sm:$0xff]
    %v6599 = vld [vmem:[%s4841 + $0x12a] sm:$0xff]
    %v6600 = vld [vmem:[%s4841 + $0x13a] sm:$0xff]
    %v6601 = vld [vmem:[%s4841 + $0x142] sm:$0xff]
    %v6602 = vld [vmem:[%s4841 + $0x152] sm:$0xff]
    %v6603 = vld [vmem:[%s4841 + $0x15a] sm:$0xff]
    %v6604 = vld [vmem:[%s4841 + $0x16a] sm:$0xff]
    %v6605 = vld [vmem:[%s4841 + $0x172] sm:$0xff]
    %v6606 = vld [vmem:[%s4841 + $0x1b2] sm:$0xff]
    %v6607 = vld [vmem:[%s4841 + $0x1ba] sm:$0xff]
    %v6608 = vld [vmem:[%s4841 + $0x1ca] sm:$0xff]
    %v6609 = vld [vmem:[%s4841 + $0x1d2] sm:$0xff]
    %v6610 = vld [vmem:[%s4841 + $0x1e2] sm:$0xff]
    %v6611 = vld [vmem:[%s4841 + $0x1ea] sm:$0xff]
    %v6612 = vld [vmem:[%s4841 + $0x1fa] sm:$0xff]
    %v6613 = vld [vmem:[%s4841 + $0x202] sm:$0xff]
    %v6614 = vld [vmem:[%s4841 + $0x212] sm:$0xff]
    %v6615 = vld [vmem:[%s4841 + $0x21a] sm:$0xff]
    %v6616 = vld [vmem:[%s4841 + $0x22a] sm:$0xff]
    %v6617 = vld [vmem:[%s4841 + $0x232] sm:$0xff]
    %v6618 = vld [vmem:[%s4841 + $0x242] sm:$0xff]
    %v6619 = vld [vmem:[%s4841 + $0x24a] sm:$0xff]
    %v6620 = vld [vmem:[%s4841 + $0x25a] sm:$0xff]
    %v6621 = vld [vmem:[%s4841 + $0x262] sm:$0xff]
    %v6622 = vld [vmem:[%s4841 + $0x272] sm:$0xff]
    %v6623 = vld [vmem:[%s4841 + $0x27a] sm:$0xff]
    %v6624 = vld [vmem:[%s4841 + $0x28a] sm:$0xff]
    %v6625 = vld [vmem:[%s4841 + $0x292] sm:$0xff]
    %v6626 = vld [vmem:[%s4841 + $0x2a2] sm:$0xff]
    %v6627 = vld [vmem:[%s4841 + $0x2aa] sm:$0xff]
    %v6628 = vld [vmem:[%s4841 + $0x2ba] sm:$0xff]
    %v6629 = vld [vmem:[%s4841 + $0x2c2] sm:$0xff]
    %v6630 = vld [vmem:[%s4841 + $0x2d2] sm:$0xff]
    %v6631 = vld [vmem:[%s4841 + $0x2da] sm:$0xff]
    %v6632 = vld [vmem:[%s4841 + $0x2ea] sm:$0xff]
    %v6633 = vld [vmem:[%s4841 + $0x2f2] sm:$0xff]
    %v6634 = vld [vmem:[%s4841 + $0x302] sm:$0xff]
    %v6635 = vld [vmem:[%s4841 + $0x30a] sm:$0xff]
    %v6636 = vld [vmem:[%s4841 + $0x31a] sm:$0xff]
    %v6637 = vld [vmem:[%s4841 + $0x322] sm:$0xff]
    %6702 = vrot.lane.b32.xlu0 %v6574, 40
    %v6703 = vpop.permute.xlu0 %6702
    %6704 = vrot.lane.b32.xlu0 %v6575, 40
    %v6705 = vpop.permute.xlu0 %6704
    %6706 = vrot.lane.b32.xlu0 %v6576, 40
    %v6707 = vpop.permute.xlu0 %6706
    %6708 = vrot.lane.b32.xlu0 %v6577, 40
    %v6709 = vpop.permute.xlu0 %6708
    %6710 = vrot.lane.b32.xlu0 %v6578, 40
    %v6711 = vpop.permute.xlu0 %6710
    %6712 = vrot.lane.b32.xlu0 %v6579, 40
    %v6713 = vpop.permute.xlu0 %6712
    %6714 = vrot.lane.b32.xlu0 %v6580, 40
    %v6715 = vpop.permute.xlu0 %6714
    %6716 = vrot.lane.b32.xlu0 %v6581, 40
    %v6717 = vpop.permute.xlu0 %6716
    %6718 = vrot.lane.b32.xlu0 %v6582, 40
    %v6719 = vpop.permute.xlu0 %6718
    %6720 = vrot.lane.b32.xlu0 %v6583, 40
    %v6721 = vpop.permute.xlu0 %6720
    %6722 = vrot.lane.b32.xlu0 %v6584, 40
    %v6723 = vpop.permute.xlu0 %6722
    %6724 = vrot.lane.b32.xlu0 %v6585, 40
    %v6725 = vpop.permute.xlu0 %6724
    %6726 = vrot.lane.b32.xlu0 %v6586, 40
    %v6727 = vpop.permute.xlu0 %6726
    %6728 = vrot.lane.b32.xlu0 %v6587, 40
    %v6729 = vpop.permute.xlu0 %6728
    %6730 = vrot.lane.b32.xlu0 %v6588, 40
    %v6731 = vpop.permute.xlu0 %6730
    %6732 = vrot.lane.b32.xlu0 %v6589, 40
    %v6733 = vpop.permute.xlu0 %6732
    %6734 = vrot.lane.b32.xlu0 %v6590, 40
    %v6735 = vpop.permute.xlu0 %6734
    %6736 = vrot.lane.b32.xlu0 %v6591, 40
    %v6737 = vpop.permute.xlu0 %6736
    %6738 = vrot.lane.b32.xlu0 %v6592, 40
    %v6739 = vpop.permute.xlu0 %6738
    %6740 = vrot.lane.b32.xlu0 %v6593, 40
    %v6741 = vpop.permute.xlu0 %6740
    %6742 = vrot.lane.b32.xlu0 %v6594, 40
    %v6743 = vpop.permute.xlu0 %6742
    %6744 = vrot.lane.b32.xlu0 %v6595, 40
    %v6745 = vpop.permute.xlu0 %6744
    %6746 = vrot.lane.b32.xlu0 %v6596, 40
    %v6747 = vpop.permute.xlu0 %6746
    %6748 = vrot.lane.b32.xlu0 %v6597, 40
    %v6749 = vpop.permute.xlu0 %6748
    %6750 = vrot.lane.b32.xlu0 %v6598, 40
    %v6751 = vpop.permute.xlu0 %6750
    %6752 = vrot.lane.b32.xlu0 %v6599, 40
    %v6753 = vpop.permute.xlu0 %6752
    %6754 = vrot.lane.b32.xlu0 %v6600, 40
    %v6755 = vpop.permute.xlu0 %6754
    %6756 = vrot.lane.b32.xlu0 %v6601, 40
    %v6757 = vpop.permute.xlu0 %6756
    %6758 = vrot.lane.b32.xlu0 %v6602, 40
    %v6759 = vpop.permute.xlu0 %6758
    %6760 = vrot.lane.b32.xlu0 %v6603, 40
    %v6761 = vpop.permute.xlu0 %6760
    %6762 = vrot.lane.b32.xlu0 %v6604, 40
    %v6763 = vpop.permute.xlu0 %6762
    %6764 = vrot.lane.b32.xlu0 %v6605, 40
    %v6765 = vpop.permute.xlu0 %6764
    %6766 = vrot.lane.b32.xlu0 %v6606, 40
    %v6767 = vpop.permute.xlu0 %6766
    %6768 = vrot.lane.b32.xlu0 %v6607, 40
    %v6769 = vpop.permute.xlu0 %6768
    %6770 = vrot.lane.b32.xlu0 %v6608, 40
    %v6771 = vpop.permute.xlu0 %6770
    %6772 = vrot.lane.b32.xlu0 %v6609, 40
    %v6773 = vpop.permute.xlu0 %6772
    %6774 = vrot.lane.b32.xlu0 %v6610, 40
    %v6775 = vpop.permute.xlu0 %6774
    %6776 = vrot.lane.b32.xlu0 %v6611, 40
    %v6777 = vpop.permute.xlu0 %6776
    %6778 = vrot.lane.b32.xlu0 %v6612, 40
    %v6779 = vpop.permute.xlu0 %6778
    %6780 = vrot.lane.b32.xlu0 %v6613, 40
    %v6781 = vpop.permute.xlu0 %6780
    %6782 = vrot.lane.b32.xlu0 %v6614, 40
    %v6783 = vpop.permute.xlu0 %6782
    %6784 = vrot.lane.b32.xlu0 %v6615, 40
    %v6785 = vpop.permute.xlu0 %6784
    %6786 = vrot.lane.b32.xlu0 %v6616, 40
    %v6787 = vpop.permute.xlu0 %6786
    %6788 = vrot.lane.b32.xlu0 %v6617, 40
    %v6789 = vpop.permute.xlu0 %6788
    %6790 = vrot.lane.b32.xlu0 %v6618, 40
    %v6791 = vpop.permute.xlu0 %6790
    %6792 = vrot.lane.b32.xlu0 %v6619, 40
    %v6793 = vpop.permute.xlu0 %6792
    %6794 = vrot.lane.b32.xlu0 %v6620, 40
    %v6795 = vpop.permute.xlu0 %6794
    %6796 = vrot.lane.b32.xlu0 %v6621, 40
    %v6797 = vpop.permute.xlu0 %6796
    %6798 = vrot.lane.b32.xlu0 %v6622, 40
    %v6799 = vpop.permute.xlu0 %6798
    %6800 = vrot.lane.b32.xlu0 %v6623, 40
    %v6801 = vpop.permute.xlu0 %6800
    %6802 = vrot.lane.b32.xlu0 %v6624, 40
    %v6803 = vpop.permute.xlu0 %6802
    %6804 = vrot.lane.b32.xlu0 %v6625, 40
    %v6805 = vpop.permute.xlu0 %6804
    %6806 = vrot.lane.b32.xlu0 %v6626, 40
    %v6807 = vpop.permute.xlu0 %6806
    %6808 = vrot.lane.b32.xlu0 %v6627, 40
    %v6809 = vpop.permute.xlu0 %6808
    %6810 = vrot.lane.b32.xlu0 %v6628, 40
    %v6811 = vpop.permute.xlu0 %6810
    %6812 = vrot.lane.b32.xlu0 %v6629, 40
    %v6813 = vpop.permute.xlu0 %6812
    %6814 = vrot.lane.b32.xlu0 %v6630, 40
    %v6815 = vpop.permute.xlu0 %6814
    %6816 = vrot.lane.b32.xlu0 %v6631, 40
    %v6817 = vpop.permute.xlu0 %6816
    %6818 = vrot.lane.b32.xlu0 %v6632, 40
    %v6819 = vpop.permute.xlu0 %6818
    %6820 = vrot.lane.b32.xlu0 %v6633, 40
    %v6821 = vpop.permute.xlu0 %6820
    %6822 = vrot.lane.b32.xlu0 %v6634, 40
    %v6823 = vpop.permute.xlu0 %6822
    %6824 = vrot.lane.b32.xlu0 %v6635, 40
    %v6825 = vpop.permute.xlu0 %6824
    %6826 = vrot.lane.b32.xlu0 %v6636, 40
    %v6827 = vpop.permute.xlu0 %6826
    %6828 = vrot.lane.b32.xlu0 %v6637, 40
    %v6829 = vpop.permute.xlu0 %6828
    %vm6894 = vcmask 392512
    %6895 = vst.msk [vmem:[#allocation5] sm:$0xff] %vm6894, %v6703
    %6896 = vst.msk [vmem:[#allocation5 + $0x8] sm:$0xff] %vm6894, %v6705
    %6897 = vst.msk [vmem:[#allocation5 + $0x10] sm:$0xff] %vm6894, %v6707
    %6898 = vst.msk [vmem:[#allocation5 + $0x18] sm:$0xff] %vm6894, %v6709
    %6899 = vst.msk [vmem:[#allocation5 + $0x20] sm:$0xff] %vm6894, %v6711
    %6900 = vst.msk [vmem:[#allocation5 + $0x28] sm:$0xff] %vm6894, %v6713
    %6901 = vst.msk [vmem:[#allocation5 + $0x30] sm:$0xff] %vm6894, %v6715
    %6902 = vst.msk [vmem:[#allocation5 + $0x38] sm:$0xff] %vm6894, %v6717
    %6903 = vst.msk [vmem:[#allocation5 + $0x40] sm:$0xff] %vm6894, %v6719
    %6904 = vst.msk [vmem:[#allocation5 + $0x48] sm:$0xff] %vm6894, %v6721
    %6905 = vst.msk [vmem:[#allocation5 + $0x50] sm:$0xff] %vm6894, %v6723
    %6906 = vst.msk [vmem:[#allocation5 + $0x58] sm:$0xff] %vm6894, %v6725
    %6907 = vst.msk [vmem:[#allocation5 + $0x60] sm:$0xff] %vm6894, %v6727
    %6908 = vst.msk [vmem:[#allocation5 + $0x68] sm:$0xff] %vm6894, %v6729
    %6909 = vst.msk [vmem:[#allocation5 + $0x70] sm:$0xff] %vm6894, %v6731
    %6910 = vst.msk [vmem:[#allocation5 + $0x78] sm:$0xff] %vm6894, %v6733
    %6911 = vst.msk [vmem:[#allocation5 + $0x80] sm:$0xff] %vm6894, %v6735
    %6912 = vst.msk [vmem:[#allocation5 + $0x88] sm:$0xff] %vm6894, %v6737
    %6913 = vst.msk [vmem:[#allocation5 + $0x90] sm:$0xff] %vm6894, %v6739
    %6914 = vst.msk [vmem:[#allocation5 + $0x98] sm:$0xff] %vm6894, %v6741
    %6915 = vst.msk [vmem:[#allocation5 + $0xa0] sm:$0xff] %vm6894, %v6743
    %6916 = vst.msk [vmem:[#allocation5 + $0xa8] sm:$0xff] %vm6894, %v6745
    %6917 = vst.msk [vmem:[#allocation5 + $0xb0] sm:$0xff] %vm6894, %v6747
    %6918 = vst.msk [vmem:[#allocation5 + $0xb8] sm:$0xff] %vm6894, %v6749
    %6919 = vst.msk [vmem:[#allocation5 + $0xc0] sm:$0xff] %vm6894, %v6751
    %6920 = vst.msk [vmem:[#allocation5 + $0xc8] sm:$0xff] %vm6894, %v6753
    %6921 = vst.msk [vmem:[#allocation5 + $0xd0] sm:$0xff] %vm6894, %v6755
    %6922 = vst.msk [vmem:[#allocation5 + $0xd8] sm:$0xff] %vm6894, %v6757
    %6923 = vst.msk [vmem:[#allocation5 + $0xe0] sm:$0xff] %vm6894, %v6759
    %6924 = vst.msk [vmem:[#allocation5 + $0xe8] sm:$0xff] %vm6894, %v6761
    %6925 = vst.msk [vmem:[#allocation5 + $0xf0] sm:$0xff] %vm6894, %v6763
    %6926 = vst.msk [vmem:[#allocation5 + $0xf8] sm:$0xff] %vm6894, %v6765
    %6927 = vst.msk [vmem:[#allocation5 + $0x100] sm:$0xff] %vm6894, %v6767
    %6928 = vst.msk [vmem:[#allocation5 + $0x108] sm:$0xff] %vm6894, %v6769
    %6929 = vst.msk [vmem:[#allocation5 + $0x110] sm:$0xff] %vm6894, %v6771
    %6930 = vst.msk [vmem:[#allocation5 + $0x118] sm:$0xff] %vm6894, %v6773
    %6931 = vst.msk [vmem:[#allocation5 + $0x120] sm:$0xff] %vm6894, %v6775
    %6932 = vst.msk [vmem:[#allocation5 + $0x128] sm:$0xff] %vm6894, %v6777
    %6933 = vst.msk [vmem:[#allocation5 + $0x130] sm:$0xff] %vm6894, %v6779
    %6934 = vst.msk [vmem:[#allocation5 + $0x138] sm:$0xff] %vm6894, %v6781
    %6935 = vst.msk [vmem:[#allocation5 + $0x140] sm:$0xff] %vm6894, %v6783
    %6936 = vst.msk [vmem:[#allocation5 + $0x148] sm:$0xff] %vm6894, %v6785
    %6937 = vst.msk [vmem:[#allocation5 + $0x150] sm:$0xff] %vm6894, %v6787
    %6938 = vst.msk [vmem:[#allocation5 + $0x158] sm:$0xff] %vm6894, %v6789
    %6939 = vst.msk [vmem:[#allocation5 + $0x160] sm:$0xff] %vm6894, %v6791
    %6940 = vst.msk [vmem:[#allocation5 + $0x168] sm:$0xff] %vm6894, %v6793
    %6941 = vst.msk [vmem:[#allocation5 + $0x170] sm:$0xff] %vm6894, %v6795
    %6942 = vst.msk [vmem:[#allocation5 + $0x178] sm:$0xff] %vm6894, %v6797
    %6943 = vst.msk [vmem:[#allocation5 + $0x180] sm:$0xff] %vm6894, %v6799
    %6944 = vst.msk [vmem:[#allocation5 + $0x188] sm:$0xff] %vm6894, %v6801
    %6945 = vst.msk [vmem:[#allocation5 + $0x190] sm:$0xff] %vm6894, %v6803
    %6946 = vst.msk [vmem:[#allocation5 + $0x198] sm:$0xff] %vm6894, %v6805
    %6947 = vst.msk [vmem:[#allocation5 + $0x1a0] sm:$0xff] %vm6894, %v6807
    %6948 = vst.msk [vmem:[#allocation5 + $0x1a8] sm:$0xff] %vm6894, %v6809
    %6949 = vst.msk [vmem:[#allocation5 + $0x1b0] sm:$0xff] %vm6894, %v6811
    %6950 = vst.msk [vmem:[#allocation5 + $0x1b8] sm:$0xff] %vm6894, %v6813
    %6951 = vst.msk [vmem:[#allocation5 + $0x1c0] sm:$0xff] %vm6894, %v6815
    %6952 = vst.msk [vmem:[#allocation5 + $0x1c8] sm:$0xff] %vm6894, %v6817
    %6953 = vst.msk [vmem:[#allocation5 + $0x1d0] sm:$0xff] %vm6894, %v6819
    %6954 = vst.msk [vmem:[#allocation5 + $0x1d8] sm:$0xff] %vm6894, %v6821
    %6955 = vst.msk [vmem:[#allocation5 + $0x1e0] sm:$0xff] %vm6894, %v6823
    %6956 = vst.msk [vmem:[#allocation5 + $0x1e8] sm:$0xff] %vm6894, %v6825
    %6957 = vst.msk [vmem:[#allocation5 + $0x1f0] sm:$0xff] %vm6894, %v6827
    %6958 = vst.msk [vmem:[#allocation5 + $0x1f8] sm:$0xff] %vm6894, %v6829
    %s6959 = scalar_lea.vmem [#allocation3], 48
    %v6960 = vld [vmem:[%s6959] sm:$0xff]
    %v6961 = vld [vmem:[%s6959 + $0x8] sm:$0xff]
    %v6962 = vld [vmem:[%s6959 + $0x18] sm:$0xff]
    %v6963 = vld [vmem:[%s6959 + $0x20] sm:$0xff]
    %v6964 = vld [vmem:[%s6959 + $0x30] sm:$0xff]
    %v6965 = vld [vmem:[%s6959 + $0x38] sm:$0xff]
    %v6966 = vld [vmem:[%s6959 + $0x48] sm:$0xff]
    %v6967 = vld [vmem:[%s6959 + $0x50] sm:$0xff]
    %v6968 = vld [vmem:[%s6959 + $0x60] sm:$0xff]
    %v6969 = vld [vmem:[%s6959 + $0x68] sm:$0xff]
    %v6970 = vld [vmem:[%s6959 + $0x78] sm:$0xff]
    %v6971 = vld [vmem:[%s6959 + $0x80] sm:$0xff]
    %v6972 = vld [vmem:[%s6959 + $0x90] sm:$0xff]
    %v6973 = vld [vmem:[%s6959 + $0x98] sm:$0xff]
    %v6974 = vld [vmem:[%s6959 + $0xa8] sm:$0xff]
    %v6975 = vld [vmem:[%s6959 + $0xb0] sm:$0xff]
    %v6976 = vld [vmem:[%s6959 + $0xc0] sm:$0xff]
    %v6977 = vld [vmem:[%s6959 + $0xc8] sm:$0xff]
    %v6978 = vld [vmem:[%s6959 + $0xd8] sm:$0xff]
    %v6979 = vld [vmem:[%s6959 + $0xe0] sm:$0xff]
    %v6980 = vld [vmem:[%s6959 + $0xf0] sm:$0xff]
    %v6981 = vld [vmem:[%s6959 + $0xf8] sm:$0xff]
    %v6982 = vld [vmem:[%s6959 + $0x108] sm:$0xff]
    %v6983 = vld [vmem:[%s6959 + $0x110] sm:$0xff]
    %v6984 = vld [vmem:[%s6959 + $0x120] sm:$0xff]
    %v6985 = vld [vmem:[%s6959 + $0x128] sm:$0xff]
    %v6986 = vld [vmem:[%s6959 + $0x138] sm:$0xff]
    %v6987 = vld [vmem:[%s6959 + $0x140] sm:$0xff]
    %v6988 = vld [vmem:[%s6959 + $0x150] sm:$0xff]
    %v6989 = vld [vmem:[%s6959 + $0x158] sm:$0xff]
    %v6990 = vld [vmem:[%s6959 + $0x168] sm:$0xff]
    %v6991 = vld [vmem:[%s6959 + $0x170] sm:$0xff]
    %v6992 = vld [vmem:[%s6959 + $0x1b0] sm:$0xff]
    %v6993 = vld [vmem:[%s6959 + $0x1b8] sm:$0xff]
    %v6994 = vld [vmem:[%s6959 + $0x1c8] sm:$0xff]
    %v6995 = vld [vmem:[%s6959 + $0x1d0] sm:$0xff]
    %v6996 = vld [vmem:[%s6959 + $0x1e0] sm:$0xff]
    %v6997 = vld [vmem:[%s6959 + $0x1e8] sm:$0xff]
    %v6998 = vld [vmem:[%s6959 + $0x1f8] sm:$0xff]
    %v6999 = vld [vmem:[%s6959 + $0x200] sm:$0xff]
    %v7000 = vld [vmem:[%s6959 + $0x210] sm:$0xff]
    %v7001 = vld [vmem:[%s6959 + $0x218] sm:$0xff]
    %v7002 = vld [vmem:[%s6959 + $0x228] sm:$0xff]
    %v7003 = vld [vmem:[%s6959 + $0x230] sm:$0xff]
    %v7004 = vld [vmem:[%s6959 + $0x240] sm:$0xff]
    %v7005 = vld [vmem:[%s6959 + $0x248] sm:$0xff]
    %v7006 = vld [vmem:[%s6959 + $0x258] sm:$0xff]
    %v7007 = vld [vmem:[%s6959 + $0x260] sm:$0xff]
    %v7008 = vld [vmem:[%s6959 + $0x270] sm:$0xff]
    %v7009 = vld [vmem:[%s6959 + $0x278] sm:$0xff]
    %v7010 = vld [vmem:[%s6959 + $0x288] sm:$0xff]
    %v7011 = vld [vmem:[%s6959 + $0x290] sm:$0xff]
    %v7012 = vld [vmem:[%s6959 + $0x2a0] sm:$0xff]
    %v7013 = vld [vmem:[%s6959 + $0x2a8] sm:$0xff]
    %v7014 = vld [vmem:[%s6959 + $0x2b8] sm:$0xff]
    %v7015 = vld [vmem:[%s6959 + $0x2c0] sm:$0xff]
    %v7016 = vld [vmem:[%s6959 + $0x2d0] sm:$0xff]
    %v7017 = vld [vmem:[%s6959 + $0x2d8] sm:$0xff]
    %v7018 = vld [vmem:[%s6959 + $0x2e8] sm:$0xff]
    %v7019 = vld [vmem:[%s6959 + $0x2f0] sm:$0xff]
    %v7020 = vld [vmem:[%s6959 + $0x300] sm:$0xff]
    %v7021 = vld [vmem:[%s6959 + $0x308] sm:$0xff]
    %v7022 = vld [vmem:[%s6959 + $0x318] sm:$0xff]
    %v7023 = vld [vmem:[%s6959 + $0x320] sm:$0xff]
    %7088 = vrot.lane.b32.xlu0 %v6960, 48
    %v7089 = vpop.permute.xlu0 %7088
    %7090 = vrot.lane.b32.xlu0 %v6961, 48
    %v7091 = vpop.permute.xlu0 %7090
    %7092 = vrot.lane.b32.xlu0 %v6962, 48
    %v7093 = vpop.permute.xlu0 %7092
    %7094 = vrot.lane.b32.xlu0 %v6963, 48
    %v7095 = vpop.permute.xlu0 %7094
    %7096 = vrot.lane.b32.xlu0 %v6964, 48
    %v7097 = vpop.permute.xlu0 %7096
    %7098 = vrot.lane.b32.xlu0 %v6965, 48
    %v7099 = vpop.permute.xlu0 %7098
    %7100 = vrot.lane.b32.xlu0 %v6966, 48
    %v7101 = vpop.permute.xlu0 %7100
    %7102 = vrot.lane.b32.xlu0 %v6967, 48
    %v7103 = vpop.permute.xlu0 %7102
    %7104 = vrot.lane.b32.xlu0 %v6968, 48
    %v7105 = vpop.permute.xlu0 %7104
    %7106 = vrot.lane.b32.xlu0 %v6969, 48
    %v7107 = vpop.permute.xlu0 %7106
    %7108 = vrot.lane.b32.xlu0 %v6970, 48
    %v7109 = vpop.permute.xlu0 %7108
    %7110 = vrot.lane.b32.xlu0 %v6971, 48
    %v7111 = vpop.permute.xlu0 %7110
    %7112 = vrot.lane.b32.xlu0 %v6972, 48
    %v7113 = vpop.permute.xlu0 %7112
    %7114 = vrot.lane.b32.xlu0 %v6973, 48
    %v7115 = vpop.permute.xlu0 %7114
    %7116 = vrot.lane.b32.xlu0 %v6974, 48
    %v7117 = vpop.permute.xlu0 %7116
    %7118 = vrot.lane.b32.xlu0 %v6975, 48
    %v7119 = vpop.permute.xlu0 %7118
    %7120 = vrot.lane.b32.xlu0 %v6976, 48
    %v7121 = vpop.permute.xlu0 %7120
    %7122 = vrot.lane.b32.xlu0 %v6977, 48
    %v7123 = vpop.permute.xlu0 %7122
    %7124 = vrot.lane.b32.xlu0 %v6978, 48
    %v7125 = vpop.permute.xlu0 %7124
    %7126 = vrot.lane.b32.xlu0 %v6979, 48
    %v7127 = vpop.permute.xlu0 %7126
    %7128 = vrot.lane.b32.xlu0 %v6980, 48
    %v7129 = vpop.permute.xlu0 %7128
    %7130 = vrot.lane.b32.xlu0 %v6981, 48
    %v7131 = vpop.permute.xlu0 %7130
    %7132 = vrot.lane.b32.xlu0 %v6982, 48
    %v7133 = vpop.permute.xlu0 %7132
    %7134 = vrot.lane.b32.xlu0 %v6983, 48
    %v7135 = vpop.permute.xlu0 %7134
    %7136 = vrot.lane.b32.xlu0 %v6984, 48
    %v7137 = vpop.permute.xlu0 %7136
    %7138 = vrot.lane.b32.xlu0 %v6985, 48
    %v7139 = vpop.permute.xlu0 %7138
    %7140 = vrot.lane.b32.xlu0 %v6986, 48
    %v7141 = vpop.permute.xlu0 %7140
    %7142 = vrot.lane.b32.xlu0 %v6987, 48
    %v7143 = vpop.permute.xlu0 %7142
    %7144 = vrot.lane.b32.xlu0 %v6988, 48
    %v7145 = vpop.permute.xlu0 %7144
    %7146 = vrot.lane.b32.xlu0 %v6989, 48
    %v7147 = vpop.permute.xlu0 %7146
    %7148 = vrot.lane.b32.xlu0 %v6990, 48
    %v7149 = vpop.permute.xlu0 %7148
    %7150 = vrot.lane.b32.xlu0 %v6991, 48
    %v7151 = vpop.permute.xlu0 %7150
    %7152 = vrot.lane.b32.xlu0 %v6992, 48
    %v7153 = vpop.permute.xlu0 %7152
    %7154 = vrot.lane.b32.xlu0 %v6993, 48
    %v7155 = vpop.permute.xlu0 %7154
    %7156 = vrot.lane.b32.xlu0 %v6994, 48
    %v7157 = vpop.permute.xlu0 %7156
    %7158 = vrot.lane.b32.xlu0 %v6995, 48
    %v7159 = vpop.permute.xlu0 %7158
    %7160 = vrot.lane.b32.xlu0 %v6996, 48
    %v7161 = vpop.permute.xlu0 %7160
    %7162 = vrot.lane.b32.xlu0 %v6997, 48
    %v7163 = vpop.permute.xlu0 %7162
    %7164 = vrot.lane.b32.xlu0 %v6998, 48
    %v7165 = vpop.permute.xlu0 %7164
    %7166 = vrot.lane.b32.xlu0 %v6999, 48
    %v7167 = vpop.permute.xlu0 %7166
    %7168 = vrot.lane.b32.xlu0 %v7000, 48
    %v7169 = vpop.permute.xlu0 %7168
    %7170 = vrot.lane.b32.xlu0 %v7001, 48
    %v7171 = vpop.permute.xlu0 %7170
    %7172 = vrot.lane.b32.xlu0 %v7002, 48
    %v7173 = vpop.permute.xlu0 %7172
    %7174 = vrot.lane.b32.xlu0 %v7003, 48
    %v7175 = vpop.permute.xlu0 %7174
    %7176 = vrot.lane.b32.xlu0 %v7004, 48
    %v7177 = vpop.permute.xlu0 %7176
    %7178 = vrot.lane.b32.xlu0 %v7005, 48
    %v7179 = vpop.permute.xlu0 %7178
    %7180 = vrot.lane.b32.xlu0 %v7006, 48
    %v7181 = vpop.permute.xlu0 %7180
    %7182 = vrot.lane.b32.xlu0 %v7007, 48
    %v7183 = vpop.permute.xlu0 %7182
    %7184 = vrot.lane.b32.xlu0 %v7008, 48
    %v7185 = vpop.permute.xlu0 %7184
    %7186 = vrot.lane.b32.xlu0 %v7009, 48
    %v7187 = vpop.permute.xlu0 %7186
    %7188 = vrot.lane.b32.xlu0 %v7010, 48
    %v7189 = vpop.permute.xlu0 %7188
    %7190 = vrot.lane.b32.xlu0 %v7011, 48
    %v7191 = vpop.permute.xlu0 %7190
    %7192 = vrot.lane.b32.xlu0 %v7012, 48
    %v7193 = vpop.permute.xlu0 %7192
    %7194 = vrot.lane.b32.xlu0 %v7013, 48
    %v7195 = vpop.permute.xlu0 %7194
    %7196 = vrot.lane.b32.xlu0 %v7014, 48
    %v7197 = vpop.permute.xlu0 %7196
    %7198 = vrot.lane.b32.xlu0 %v7015, 48
    %v7199 = vpop.permute.xlu0 %7198
    %7200 = vrot.lane.b32.xlu0 %v7016, 48
    %v7201 = vpop.permute.xlu0 %7200
    %7202 = vrot.lane.b32.xlu0 %v7017, 48
    %v7203 = vpop.permute.xlu0 %7202
    %7204 = vrot.lane.b32.xlu0 %v7018, 48
    %v7205 = vpop.permute.xlu0 %7204
    %7206 = vrot.lane.b32.xlu0 %v7019, 48
    %v7207 = vpop.permute.xlu0 %7206
    %7208 = vrot.lane.b32.xlu0 %v7020, 48
    %v7209 = vpop.permute.xlu0 %7208
    %7210 = vrot.lane.b32.xlu0 %v7021, 48
    %v7211 = vpop.permute.xlu0 %7210
    %7212 = vrot.lane.b32.xlu0 %v7022, 48
    %v7213 = vpop.permute.xlu0 %7212
    %7214 = vrot.lane.b32.xlu0 %v7023, 48
    %v7215 = vpop.permute.xlu0 %7214
    %vm7280 = vcmask 458112
    %7281 = vst.msk [vmem:[#allocation5] sm:$0xff] %vm7280, %v7089
    %7282 = vst.msk [vmem:[#allocation5 + $0x8] sm:$0xff] %vm7280, %v7091
    %7283 = vst.msk [vmem:[#allocation5 + $0x10] sm:$0xff] %vm7280, %v7093
    %7284 = vst.msk [vmem:[#allocation5 + $0x18] sm:$0xff] %vm7280, %v7095
    %7285 = vst.msk [vmem:[#allocation5 + $0x20] sm:$0xff] %vm7280, %v7097
    %7286 = vst.msk [vmem:[#allocation5 + $0x28] sm:$0xff] %vm7280, %v7099
    %7287 = vst.msk [vmem:[#allocation5 + $0x30] sm:$0xff] %vm7280, %v7101
    %7288 = vst.msk [vmem:[#allocation5 + $0x38] sm:$0xff] %vm7280, %v7103
    %7289 = vst.msk [vmem:[#allocation5 + $0x40] sm:$0xff] %vm7280, %v7105
    %7290 = vst.msk [vmem:[#allocation5 + $0x48] sm:$0xff] %vm7280, %v7107
    %7291 = vst.msk [vmem:[#allocation5 + $0x50] sm:$0xff] %vm7280, %v7109
    %7292 = vst.msk [vmem:[#allocation5 + $0x58] sm:$0xff] %vm7280, %v7111
    %7293 = vst.msk [vmem:[#allocation5 + $0x60] sm:$0xff] %vm7280, %v7113
    %7294 = vst.msk [vmem:[#allocation5 + $0x68] sm:$0xff] %vm7280, %v7115
    %7295 = vst.msk [vmem:[#allocation5 + $0x70] sm:$0xff] %vm7280, %v7117
    %7296 = vst.msk [vmem:[#allocation5 + $0x78] sm:$0xff] %vm7280, %v7119
    %7297 = vst.msk [vmem:[#allocation5 + $0x80] sm:$0xff] %vm7280, %v7121
    %7298 = vst.msk [vmem:[#allocation5 + $0x88] sm:$0xff] %vm7280, %v7123
    %7299 = vst.msk [vmem:[#allocation5 + $0x90] sm:$0xff] %vm7280, %v7125
    %7300 = vst.msk [vmem:[#allocation5 + $0x98] sm:$0xff] %vm7280, %v7127
    %7301 = vst.msk [vmem:[#allocation5 + $0xa0] sm:$0xff] %vm7280, %v7129
    %7302 = vst.msk [vmem:[#allocation5 + $0xa8] sm:$0xff] %vm7280, %v7131
    %7303 = vst.msk [vmem:[#allocation5 + $0xb0] sm:$0xff] %vm7280, %v7133
    %7304 = vst.msk [vmem:[#allocation5 + $0xb8] sm:$0xff] %vm7280, %v7135
    %7305 = vst.msk [vmem:[#allocation5 + $0xc0] sm:$0xff] %vm7280, %v7137
    %7306 = vst.msk [vmem:[#allocation5 + $0xc8] sm:$0xff] %vm7280, %v7139
    %7307 = vst.msk [vmem:[#allocation5 + $0xd0] sm:$0xff] %vm7280, %v7141
    %7308 = vst.msk [vmem:[#allocation5 + $0xd8] sm:$0xff] %vm7280, %v7143
    %7309 = vst.msk [vmem:[#allocation5 + $0xe0] sm:$0xff] %vm7280, %v7145
    %7310 = vst.msk [vmem:[#allocation5 + $0xe8] sm:$0xff] %vm7280, %v7147
    %7311 = vst.msk [vmem:[#allocation5 + $0xf0] sm:$0xff] %vm7280, %v7149
    %7312 = vst.msk [vmem:[#allocation5 + $0xf8] sm:$0xff] %vm7280, %v7151
    %7313 = vst.msk [vmem:[#allocation5 + $0x100] sm:$0xff] %vm7280, %v7153
    %7314 = vst.msk [vmem:[#allocation5 + $0x108] sm:$0xff] %vm7280, %v7155
    %7315 = vst.msk [vmem:[#allocation5 + $0x110] sm:$0xff] %vm7280, %v7157
    %7316 = vst.msk [vmem:[#allocation5 + $0x118] sm:$0xff] %vm7280, %v7159
    %7317 = vst.msk [vmem:[#allocation5 + $0x120] sm:$0xff] %vm7280, %v7161
    %7318 = vst.msk [vmem:[#allocation5 + $0x128] sm:$0xff] %vm7280, %v7163
    %7319 = vst.msk [vmem:[#allocation5 + $0x130] sm:$0xff] %vm7280, %v7165
    %7320 = vst.msk [vmem:[#allocation5 + $0x138] sm:$0xff] %vm7280, %v7167
    %7321 = vst.msk [vmem:[#allocation5 + $0x140] sm:$0xff] %vm7280, %v7169
    %7322 = vst.msk [vmem:[#allocation5 + $0x148] sm:$0xff] %vm7280, %v7171
    %7323 = vst.msk [vmem:[#allocation5 + $0x150] sm:$0xff] %vm7280, %v7173
    %7324 = vst.msk [vmem:[#allocation5 + $0x158] sm:$0xff] %vm7280, %v7175
    %7325 = vst.msk [vmem:[#allocation5 + $0x160] sm:$0xff] %vm7280, %v7177
    %7326 = vst.msk [vmem:[#allocation5 + $0x168] sm:$0xff] %vm7280, %v7179
    %7327 = vst.msk [vmem:[#allocation5 + $0x170] sm:$0xff] %vm7280, %v7181
    %7328 = vst.msk [vmem:[#allocation5 + $0x178] sm:$0xff] %vm7280, %v7183
    %7329 = vst.msk [vmem:[#allocation5 + $0x180] sm:$0xff] %vm7280, %v7185
    %7330 = vst.msk [vmem:[#allocation5 + $0x188] sm:$0xff] %vm7280, %v7187
    %7331 = vst.msk [vmem:[#allocation5 + $0x190] sm:$0xff] %vm7280, %v7189
    %7332 = vst.msk [vmem:[#allocation5 + $0x198] sm:$0xff] %vm7280, %v7191
    %7333 = vst.msk [vmem:[#allocation5 + $0x1a0] sm:$0xff] %vm7280, %v7193
    %7334 = vst.msk [vmem:[#allocation5 + $0x1a8] sm:$0xff] %vm7280, %v7195
    %7335 = vst.msk [vmem:[#allocation5 + $0x1b0] sm:$0xff] %vm7280, %v7197
    %7336 = vst.msk [vmem:[#allocation5 + $0x1b8] sm:$0xff] %vm7280, %v7199
    %7337 = vst.msk [vmem:[#allocation5 + $0x1c0] sm:$0xff] %vm7280, %v7201
    %7338 = vst.msk [vmem:[#allocation5 + $0x1c8] sm:$0xff] %vm7280, %v7203
    %7339 = vst.msk [vmem:[#allocation5 + $0x1d0] sm:$0xff] %vm7280, %v7205
    %7340 = vst.msk [vmem:[#allocation5 + $0x1d8] sm:$0xff] %vm7280, %v7207
    %7341 = vst.msk [vmem:[#allocation5 + $0x1e0] sm:$0xff] %vm7280, %v7209
    %7342 = vst.msk [vmem:[#allocation5 + $0x1e8] sm:$0xff] %vm7280, %v7211
    %7343 = vst.msk [vmem:[#allocation5 + $0x1f0] sm:$0xff] %vm7280, %v7213
    %7344 = vst.msk [vmem:[#allocation5 + $0x1f8] sm:$0xff] %vm7280, %v7215
    %v7345 = vld [vmem:[%s6959 + $0x1] sm:$0xff]
    %v7346 = vld [vmem:[%s6959 + $0x9] sm:$0xff]
    %v7347 = vld [vmem:[%s6959 + $0x19] sm:$0xff]
    %v7348 = vld [vmem:[%s6959 + $0x21] sm:$0xff]
    %v7349 = vld [vmem:[%s6959 + $0x31] sm:$0xff]
    %v7350 = vld [vmem:[%s6959 + $0x39] sm:$0xff]
    %v7351 = vld [vmem:[%s6959 + $0x49] sm:$0xff]
    %v7352 = vld [vmem:[%s6959 + $0x51] sm:$0xff]
    %v7353 = vld [vmem:[%s6959 + $0x61] sm:$0xff]
    %v7354 = vld [vmem:[%s6959 + $0x69] sm:$0xff]
    %v7355 = vld [vmem:[%s6959 + $0x79] sm:$0xff]
    %v7356 = vld [vmem:[%s6959 + $0x81] sm:$0xff]
    %v7357 = vld [vmem:[%s6959 + $0x91] sm:$0xff]
    %v7358 = vld [vmem:[%s6959 + $0x99] sm:$0xff]
    %v7359 = vld [vmem:[%s6959 + $0xa9] sm:$0xff]
    %v7360 = vld [vmem:[%s6959 + $0xb1] sm:$0xff]
    %v7361 = vld [vmem:[%s6959 + $0xc1] sm:$0xff]
    %v7362 = vld [vmem:[%s6959 + $0xc9] sm:$0xff]
    %v7363 = vld [vmem:[%s6959 + $0xd9] sm:$0xff]
    %v7364 = vld [vmem:[%s6959 + $0xe1] sm:$0xff]
    %v7365 = vld [vmem:[%s6959 + $0xf1] sm:$0xff]
    %v7366 = vld [vmem:[%s6959 + $0xf9] sm:$0xff]
    %v7367 = vld [vmem:[%s6959 + $0x109] sm:$0xff]
    %v7368 = vld [vmem:[%s6959 + $0x111] sm:$0xff]
    %v7369 = vld [vmem:[%s6959 + $0x121] sm:$0xff]
    %v7370 = vld [vmem:[%s6959 + $0x129] sm:$0xff]
    %v7371 = vld [vmem:[%s6959 + $0x139] sm:$0xff]
    %v7372 = vld [vmem:[%s6959 + $0x141] sm:$0xff]
    %v7373 = vld [vmem:[%s6959 + $0x151] sm:$0xff]
    %v7374 = vld [vmem:[%s6959 + $0x159] sm:$0xff]
    %v7375 = vld [vmem:[%s6959 + $0x169] sm:$0xff]
    %v7376 = vld [vmem:[%s6959 + $0x171] sm:$0xff]
    %v7377 = vld [vmem:[%s6959 + $0x1b1] sm:$0xff]
    %v7378 = vld [vmem:[%s6959 + $0x1b9] sm:$0xff]
    %v7379 = vld [vmem:[%s6959 + $0x1c9] sm:$0xff]
    %v7380 = vld [vmem:[%s6959 + $0x1d1] sm:$0xff]
    %v7381 = vld [vmem:[%s6959 + $0x1e1] sm:$0xff]
    %v7382 = vld [vmem:[%s6959 + $0x1e9] sm:$0xff]
    %v7383 = vld [vmem:[%s6959 + $0x1f9] sm:$0xff]
    %v7384 = vld [vmem:[%s6959 + $0x201] sm:$0xff]
    %v7385 = vld [vmem:[%s6959 + $0x211] sm:$0xff]
    %v7386 = vld [vmem:[%s6959 + $0x219] sm:$0xff]
    %v7387 = vld [vmem:[%s6959 + $0x229] sm:$0xff]
    %v7388 = vld [vmem:[%s6959 + $0x231] sm:$0xff]
    %v7389 = vld [vmem:[%s6959 + $0x241] sm:$0xff]
    %v7390 = vld [vmem:[%s6959 + $0x249] sm:$0xff]
    %v7391 = vld [vmem:[%s6959 + $0x259] sm:$0xff]
    %v7392 = vld [vmem:[%s6959 + $0x261] sm:$0xff]
    %v7393 = vld [vmem:[%s6959 + $0x271] sm:$0xff]
    %v7394 = vld [vmem:[%s6959 + $0x279] sm:$0xff]
    %v7395 = vld [vmem:[%s6959 + $0x289] sm:$0xff]
    %v7396 = vld [vmem:[%s6959 + $0x291] sm:$0xff]
    %v7397 = vld [vmem:[%s6959 + $0x2a1] sm:$0xff]
    %v7398 = vld [vmem:[%s6959 + $0x2a9] sm:$0xff]
    %v7399 = vld [vmem:[%s6959 + $0x2b9] sm:$0xff]
    %v7400 = vld [vmem:[%s6959 + $0x2c1] sm:$0xff]
    %v7401 = vld [vmem:[%s6959 + $0x2d1] sm:$0xff]
    %v7402 = vld [vmem:[%s6959 + $0x2d9] sm:$0xff]
    %v7403 = vld [vmem:[%s6959 + $0x2e9] sm:$0xff]
    %v7404 = vld [vmem:[%s6959 + $0x2f1] sm:$0xff]
    %v7405 = vld [vmem:[%s6959 + $0x301] sm:$0xff]
    %v7406 = vld [vmem:[%s6959 + $0x309] sm:$0xff]
    %v7407 = vld [vmem:[%s6959 + $0x319] sm:$0xff]
    %v7408 = vld [vmem:[%s6959 + $0x321] sm:$0xff]
    %7473 = vrot.lane.b32.xlu0 %v7345, 56
    %v7474 = vpop.permute.xlu0 %7473
    %7475 = vrot.lane.b32.xlu0 %v7346, 56
    %v7476 = vpop.permute.xlu0 %7475
    %7477 = vrot.lane.b32.xlu0 %v7347, 56
    %v7478 = vpop.permute.xlu0 %7477
    %7479 = vrot.lane.b32.xlu0 %v7348, 56
    %v7480 = vpop.permute.xlu0 %7479
    %7481 = vrot.lane.b32.xlu0 %v7349, 56
    %v7482 = vpop.permute.xlu0 %7481
    %7483 = vrot.lane.b32.xlu0 %v7350, 56
    %v7484 = vpop.permute.xlu0 %7483
    %7485 = vrot.lane.b32.xlu0 %v7351, 56
    %v7486 = vpop.permute.xlu0 %7485
    %7487 = vrot.lane.b32.xlu0 %v7352, 56
    %v7488 = vpop.permute.xlu0 %7487
    %7489 = vrot.lane.b32.xlu0 %v7353, 56
    %v7490 = vpop.permute.xlu0 %7489
    %7491 = vrot.lane.b32.xlu0 %v7354, 56
    %v7492 = vpop.permute.xlu0 %7491
    %7493 = vrot.lane.b32.xlu0 %v7355, 56
    %v7494 = vpop.permute.xlu0 %7493
    %7495 = vrot.lane.b32.xlu0 %v7356, 56
    %v7496 = vpop.permute.xlu0 %7495
    %7497 = vrot.lane.b32.xlu0 %v7357, 56
    %v7498 = vpop.permute.xlu0 %7497
    %7499 = vrot.lane.b32.xlu0 %v7358, 56
    %v7500 = vpop.permute.xlu0 %7499
    %7501 = vrot.lane.b32.xlu0 %v7359, 56
    %v7502 = vpop.permute.xlu0 %7501
    %7503 = vrot.lane.b32.xlu0 %v7360, 56
    %v7504 = vpop.permute.xlu0 %7503
    %7505 = vrot.lane.b32.xlu0 %v7361, 56
    %v7506 = vpop.permute.xlu0 %7505
    %7507 = vrot.lane.b32.xlu0 %v7362, 56
    %v7508 = vpop.permute.xlu0 %7507
    %7509 = vrot.lane.b32.xlu0 %v7363, 56
    %v7510 = vpop.permute.xlu0 %7509
    %7511 = vrot.lane.b32.xlu0 %v7364, 56
    %v7512 = vpop.permute.xlu0 %7511
    %7513 = vrot.lane.b32.xlu0 %v7365, 56
    %v7514 = vpop.permute.xlu0 %7513
    %7515 = vrot.lane.b32.xlu0 %v7366, 56
    %v7516 = vpop.permute.xlu0 %7515
    %7517 = vrot.lane.b32.xlu0 %v7367, 56
    %v7518 = vpop.permute.xlu0 %7517
    %7519 = vrot.lane.b32.xlu0 %v7368, 56
    %v7520 = vpop.permute.xlu0 %7519
    %7521 = vrot.lane.b32.xlu0 %v7369, 56
    %v7522 = vpop.permute.xlu0 %7521
    %7523 = vrot.lane.b32.xlu0 %v7370, 56
    %v7524 = vpop.permute.xlu0 %7523
    %7525 = vrot.lane.b32.xlu0 %v7371, 56
    %v7526 = vpop.permute.xlu0 %7525
    %7527 = vrot.lane.b32.xlu0 %v7372, 56
    %v7528 = vpop.permute.xlu0 %7527
    %7529 = vrot.lane.b32.xlu0 %v7373, 56
    %v7530 = vpop.permute.xlu0 %7529
    %7531 = vrot.lane.b32.xlu0 %v7374, 56
    %v7532 = vpop.permute.xlu0 %7531
    %7533 = vrot.lane.b32.xlu0 %v7375, 56
    %v7534 = vpop.permute.xlu0 %7533
    %7535 = vrot.lane.b32.xlu0 %v7376, 56
    %v7536 = vpop.permute.xlu0 %7535
    %7537 = vrot.lane.b32.xlu0 %v7377, 56
    %v7538 = vpop.permute.xlu0 %7537
    %7539 = vrot.lane.b32.xlu0 %v7378, 56
    %v7540 = vpop.permute.xlu0 %7539
    %7541 = vrot.lane.b32.xlu0 %v7379, 56
    %v7542 = vpop.permute.xlu0 %7541
    %7543 = vrot.lane.b32.xlu0 %v7380, 56
    %v7544 = vpop.permute.xlu0 %7543
    %7545 = vrot.lane.b32.xlu0 %v7381, 56
    %v7546 = vpop.permute.xlu0 %7545
    %7547 = vrot.lane.b32.xlu0 %v7382, 56
    %v7548 = vpop.permute.xlu0 %7547
    %7549 = vrot.lane.b32.xlu0 %v7383, 56
    %v7550 = vpop.permute.xlu0 %7549
    %7551 = vrot.lane.b32.xlu0 %v7384, 56
    %v7552 = vpop.permute.xlu0 %7551
    %7553 = vrot.lane.b32.xlu0 %v7385, 56
    %v7554 = vpop.permute.xlu0 %7553
    %7555 = vrot.lane.b32.xlu0 %v7386, 56
    %v7556 = vpop.permute.xlu0 %7555
    %7557 = vrot.lane.b32.xlu0 %v7387, 56
    %v7558 = vpop.permute.xlu0 %7557
    %7559 = vrot.lane.b32.xlu0 %v7388, 56
    %v7560 = vpop.permute.xlu0 %7559
    %7561 = vrot.lane.b32.xlu0 %v7389, 56
    %v7562 = vpop.permute.xlu0 %7561
    %7563 = vrot.lane.b32.xlu0 %v7390, 56
    %v7564 = vpop.permute.xlu0 %7563
    %7565 = vrot.lane.b32.xlu0 %v7391, 56
    %v7566 = vpop.permute.xlu0 %7565
    %7567 = vrot.lane.b32.xlu0 %v7392, 56
    %v7568 = vpop.permute.xlu0 %7567
    %7569 = vrot.lane.b32.xlu0 %v7393, 56
    %v7570 = vpop.permute.xlu0 %7569
    %7571 = vrot.lane.b32.xlu0 %v7394, 56
    %v7572 = vpop.permute.xlu0 %7571
    %7573 = vrot.lane.b32.xlu0 %v7395, 56
    %v7574 = vpop.permute.xlu0 %7573
    %7575 = vrot.lane.b32.xlu0 %v7396, 56
    %v7576 = vpop.permute.xlu0 %7575
    %7577 = vrot.lane.b32.xlu0 %v7397, 56
    %v7578 = vpop.permute.xlu0 %7577
    %7579 = vrot.lane.b32.xlu0 %v7398, 56
    %v7580 = vpop.permute.xlu0 %7579
    %7581 = vrot.lane.b32.xlu0 %v7399, 56
    %v7582 = vpop.permute.xlu0 %7581
    %7583 = vrot.lane.b32.xlu0 %v7400, 56
    %v7584 = vpop.permute.xlu0 %7583
    %7585 = vrot.lane.b32.xlu0 %v7401, 56
    %v7586 = vpop.permute.xlu0 %7585
    %7587 = vrot.lane.b32.xlu0 %v7402, 56
    %v7588 = vpop.permute.xlu0 %7587
    %7589 = vrot.lane.b32.xlu0 %v7403, 56
    %v7590 = vpop.permute.xlu0 %7589
    %7591 = vrot.lane.b32.xlu0 %v7404, 56
    %v7592 = vpop.permute.xlu0 %7591
    %7593 = vrot.lane.b32.xlu0 %v7405, 56
    %v7594 = vpop.permute.xlu0 %7593
    %7595 = vrot.lane.b32.xlu0 %v7406, 56
    %v7596 = vpop.permute.xlu0 %7595
    %7597 = vrot.lane.b32.xlu0 %v7407, 56
    %v7598 = vpop.permute.xlu0 %7597
    %7599 = vrot.lane.b32.xlu0 %v7408, 56
    %v7600 = vpop.permute.xlu0 %7599
    %vm7665 = vcmask 523712
    %7666 = vst.msk [vmem:[#allocation5] sm:$0xff] %vm7665, %v7474
    %7667 = vst.msk [vmem:[#allocation5 + $0x8] sm:$0xff] %vm7665, %v7476
    %7668 = vst.msk [vmem:[#allocation5 + $0x10] sm:$0xff] %vm7665, %v7478
    %7669 = vst.msk [vmem:[#allocation5 + $0x18] sm:$0xff] %vm7665, %v7480
    %7670 = vst.msk [vmem:[#allocation5 + $0x20] sm:$0xff] %vm7665, %v7482
    %7671 = vst.msk [vmem:[#allocation5 + $0x28] sm:$0xff] %vm7665, %v7484
    %7672 = vst.msk [vmem:[#allocation5 + $0x30] sm:$0xff] %vm7665, %v7486
    %7673 = vst.msk [vmem:[#allocation5 + $0x38] sm:$0xff] %vm7665, %v7488
    %7674 = vst.msk [vmem:[#allocation5 + $0x40] sm:$0xff] %vm7665, %v7490
    %7675 = vst.msk [vmem:[#allocation5 + $0x48] sm:$0xff] %vm7665, %v7492
    %7676 = vst.msk [vmem:[#allocation5 + $0x50] sm:$0xff] %vm7665, %v7494
    %7677 = vst.msk [vmem:[#allocation5 + $0x58] sm:$0xff] %vm7665, %v7496
    %7678 = vst.msk [vmem:[#allocation5 + $0x60] sm:$0xff] %vm7665, %v7498
    %7679 = vst.msk [vmem:[#allocation5 + $0x68] sm:$0xff] %vm7665, %v7500
    %7680 = vst.msk [vmem:[#allocation5 + $0x70] sm:$0xff] %vm7665, %v7502
    %7681 = vst.msk [vmem:[#allocation5 + $0x78] sm:$0xff] %vm7665, %v7504
    %7682 = vst.msk [vmem:[#allocation5 + $0x80] sm:$0xff] %vm7665, %v7506
    %7683 = vst.msk [vmem:[#allocation5 + $0x88] sm:$0xff] %vm7665, %v7508
    %7684 = vst.msk [vmem:[#allocation5 + $0x90] sm:$0xff] %vm7665, %v7510
    %7685 = vst.msk [vmem:[#allocation5 + $0x98] sm:$0xff] %vm7665, %v7512
    %7686 = vst.msk [vmem:[#allocation5 + $0xa0] sm:$0xff] %vm7665, %v7514
    %7687 = vst.msk [vmem:[#allocation5 + $0xa8] sm:$0xff] %vm7665, %v7516
    %7688 = vst.msk [vmem:[#allocation5 + $0xb0] sm:$0xff] %vm7665, %v7518
    %7689 = vst.msk [vmem:[#allocation5 + $0xb8] sm:$0xff] %vm7665, %v7520
    %7690 = vst.msk [vmem:[#allocation5 + $0xc0] sm:$0xff] %vm7665, %v7522
    %7691 = vst.msk [vmem:[#allocation5 + $0xc8] sm:$0xff] %vm7665, %v7524
    %7692 = vst.msk [vmem:[#allocation5 + $0xd0] sm:$0xff] %vm7665, %v7526
    %7693 = vst.msk [vmem:[#allocation5 + $0xd8] sm:$0xff] %vm7665, %v7528
    %7694 = vst.msk [vmem:[#allocation5 + $0xe0] sm:$0xff] %vm7665, %v7530
    %7695 = vst.msk [vmem:[#allocation5 + $0xe8] sm:$0xff] %vm7665, %v7532
    %7696 = vst.msk [vmem:[#allocation5 + $0xf0] sm:$0xff] %vm7665, %v7534
    %7697 = vst.msk [vmem:[#allocation5 + $0xf8] sm:$0xff] %vm7665, %v7536
    %7698 = vst.msk [vmem:[#allocation5 + $0x100] sm:$0xff] %vm7665, %v7538
    %7699 = vst.msk [vmem:[#allocation5 + $0x108] sm:$0xff] %vm7665, %v7540
    %7700 = vst.msk [vmem:[#allocation5 + $0x110] sm:$0xff] %vm7665, %v7542
    %7701 = vst.msk [vmem:[#allocation5 + $0x118] sm:$0xff] %vm7665, %v7544
    %7702 = vst.msk [vmem:[#allocation5 + $0x120] sm:$0xff] %vm7665, %v7546
    %7703 = vst.msk [vmem:[#allocation5 + $0x128] sm:$0xff] %vm7665, %v7548
    %7704 = vst.msk [vmem:[#allocation5 + $0x130] sm:$0xff] %vm7665, %v7550
    %7705 = vst.msk [vmem:[#allocation5 + $0x138] sm:$0xff] %vm7665, %v7552
    %7706 = vst.msk [vmem:[#allocation5 + $0x140] sm:$0xff] %vm7665, %v7554
    %7707 = vst.msk [vmem:[#allocation5 + $0x148] sm:$0xff] %vm7665, %v7556
    %7708 = vst.msk [vmem:[#allocation5 + $0x150] sm:$0xff] %vm7665, %v7558
    %7709 = vst.msk [vmem:[#allocation5 + $0x158] sm:$0xff] %vm7665, %v7560
    %7710 = vst.msk [vmem:[#allocation5 + $0x160] sm:$0xff] %vm7665, %v7562
    %7711 = vst.msk [vmem:[#allocation5 + $0x168] sm:$0xff] %vm7665, %v7564
    %7712 = vst.msk [vmem:[#allocation5 + $0x170] sm:$0xff] %vm7665, %v7566
    %7713 = vst.msk [vmem:[#allocation5 + $0x178] sm:$0xff] %vm7665, %v7568
    %7714 = vst.msk [vmem:[#allocation5 + $0x180] sm:$0xff] %vm7665, %v7570
    %7715 = vst.msk [vmem:[#allocation5 + $0x188] sm:$0xff] %vm7665, %v7572
    %7716 = vst.msk [vmem:[#allocation5 + $0x190] sm:$0xff] %vm7665, %v7574
    %7717 = vst.msk [vmem:[#allocation5 + $0x198] sm:$0xff] %vm7665, %v7576
    %7718 = vst.msk [vmem:[#allocation5 + $0x1a0] sm:$0xff] %vm7665, %v7578
    %7719 = vst.msk [vmem:[#allocation5 + $0x1a8] sm:$0xff] %vm7665, %v7580
    %7720 = vst.msk [vmem:[#allocation5 + $0x1b0] sm:$0xff] %vm7665, %v7582
    %7721 = vst.msk [vmem:[#allocation5 + $0x1b8] sm:$0xff] %vm7665, %v7584
    %7722 = vst.msk [vmem:[#allocation5 + $0x1c0] sm:$0xff] %vm7665, %v7586
    %7723 = vst.msk [vmem:[#allocation5 + $0x1c8] sm:$0xff] %vm7665, %v7588
    %7724 = vst.msk [vmem:[#allocation5 + $0x1d0] sm:$0xff] %vm7665, %v7590
    %7725 = vst.msk [vmem:[#allocation5 + $0x1d8] sm:$0xff] %vm7665, %v7592
    %7726 = vst.msk [vmem:[#allocation5 + $0x1e0] sm:$0xff] %vm7665, %v7594
    %7727 = vst.msk [vmem:[#allocation5 + $0x1e8] sm:$0xff] %vm7665, %v7596
    %7728 = vst.msk [vmem:[#allocation5 + $0x1f0] sm:$0xff] %vm7665, %v7598
    %7729 = vst.msk [vmem:[#allocation5 + $0x1f8] sm:$0xff] %vm7665, %v7600
    %v7730 = vld [vmem:[%s6959 + $0x2] sm:$0xff]
    %v7731 = vld [vmem:[%s6959 + $0xa] sm:$0xff]
    %v7732 = vld [vmem:[%s6959 + $0x1a] sm:$0xff]
    %v7733 = vld [vmem:[%s6959 + $0x22] sm:$0xff]
    %v7734 = vld [vmem:[%s6959 + $0x32] sm:$0xff]
    %v7735 = vld [vmem:[%s6959 + $0x3a] sm:$0xff]
    %v7736 = vld [vmem:[%s6959 + $0x4a] sm:$0xff]
    %v7737 = vld [vmem:[%s6959 + $0x52] sm:$0xff]
    %v7738 = vld [vmem:[%s6959 + $0x62] sm:$0xff]
    %v7739 = vld [vmem:[%s6959 + $0x6a] sm:$0xff]
    %v7740 = vld [vmem:[%s6959 + $0x7a] sm:$0xff]
    %v7741 = vld [vmem:[%s6959 + $0x82] sm:$0xff]
    %v7742 = vld [vmem:[%s6959 + $0x92] sm:$0xff]
    %v7743 = vld [vmem:[%s6959 + $0x9a] sm:$0xff]
    %v7744 = vld [vmem:[%s6959 + $0xaa] sm:$0xff]
    %v7745 = vld [vmem:[%s6959 + $0xb2] sm:$0xff]
    %v7746 = vld [vmem:[%s6959 + $0xc2] sm:$0xff]
    %v7747 = vld [vmem:[%s6959 + $0xca] sm:$0xff]
    %v7748 = vld [vmem:[%s6959 + $0xda] sm:$0xff]
    %v7749 = vld [vmem:[%s6959 + $0xe2] sm:$0xff]
    %v7750 = vld [vmem:[%s6959 + $0xf2] sm:$0xff]
    %v7751 = vld [vmem:[%s6959 + $0xfa] sm:$0xff]
    %v7752 = vld [vmem:[%s6959 + $0x10a] sm:$0xff]
    %v7753 = vld [vmem:[%s6959 + $0x112] sm:$0xff]
    %v7754 = vld [vmem:[%s6959 + $0x122] sm:$0xff]
    %v7755 = vld [vmem:[%s6959 + $0x12a] sm:$0xff]
    %v7756 = vld [vmem:[%s6959 + $0x13a] sm:$0xff]
    %v7757 = vld [vmem:[%s6959 + $0x142] sm:$0xff]
    %v7758 = vld [vmem:[%s6959 + $0x152] sm:$0xff]
    %v7759 = vld [vmem:[%s6959 + $0x15a] sm:$0xff]
    %v7760 = vld [vmem:[%s6959 + $0x16a] sm:$0xff]
    %v7761 = vld [vmem:[%s6959 + $0x172] sm:$0xff]
    %v7762 = vld [vmem:[%s6959 + $0x1b2] sm:$0xff]
    %v7763 = vld [vmem:[%s6959 + $0x1ba] sm:$0xff]
    %v7764 = vld [vmem:[%s6959 + $0x1ca] sm:$0xff]
    %v7765 = vld [vmem:[%s6959 + $0x1d2] sm:$0xff]
    %v7766 = vld [vmem:[%s6959 + $0x1e2] sm:$0xff]
    %v7767 = vld [vmem:[%s6959 + $0x1ea] sm:$0xff]
    %v7768 = vld [vmem:[%s6959 + $0x1fa] sm:$0xff]
    %v7769 = vld [vmem:[%s6959 + $0x202] sm:$0xff]
    %v7770 = vld [vmem:[%s6959 + $0x212] sm:$0xff]
    %v7771 = vld [vmem:[%s6959 + $0x21a] sm:$0xff]
    %v7772 = vld [vmem:[%s6959 + $0x22a] sm:$0xff]
    %v7773 = vld [vmem:[%s6959 + $0x232] sm:$0xff]
    %v7774 = vld [vmem:[%s6959 + $0x242] sm:$0xff]
    %v7775 = vld [vmem:[%s6959 + $0x24a] sm:$0xff]
    %v7776 = vld [vmem:[%s6959 + $0x25a] sm:$0xff]
    %v7777 = vld [vmem:[%s6959 + $0x262] sm:$0xff]
    %v7778 = vld [vmem:[%s6959 + $0x272] sm:$0xff]
    %v7779 = vld [vmem:[%s6959 + $0x27a] sm:$0xff]
    %v7780 = vld [vmem:[%s6959 + $0x28a] sm:$0xff]
    %v7781 = vld [vmem:[%s6959 + $0x292] sm:$0xff]
    %v7782 = vld [vmem:[%s6959 + $0x2a2] sm:$0xff]
    %v7783 = vld [vmem:[%s6959 + $0x2aa] sm:$0xff]
    %v7784 = vld [vmem:[%s6959 + $0x2ba] sm:$0xff]
    %v7785 = vld [vmem:[%s6959 + $0x2c2] sm:$0xff]
    %v7786 = vld [vmem:[%s6959 + $0x2d2] sm:$0xff]
    %v7787 = vld [vmem:[%s6959 + $0x2da] sm:$0xff]
    %v7788 = vld [vmem:[%s6959 + $0x2ea] sm:$0xff]
    %v7789 = vld [vmem:[%s6959 + $0x2f2] sm:$0xff]
    %v7790 = vld [vmem:[%s6959 + $0x302] sm:$0xff]
    %v7791 = vld [vmem:[%s6959 + $0x30a] sm:$0xff]
    %v7792 = vld [vmem:[%s6959 + $0x31a] sm:$0xff]
    %v7793 = vld [vmem:[%s6959 + $0x322] sm:$0xff]
    %7858 = vrot.lane.b32.xlu0 %v7730, 64
    %v7859 = vpop.permute.xlu0 %7858
    %7860 = vrot.lane.b32.xlu0 %v7731, 64
    %v7861 = vpop.permute.xlu0 %7860
    %7862 = vrot.lane.b32.xlu0 %v7732, 64
    %v7863 = vpop.permute.xlu0 %7862
    %7864 = vrot.lane.b32.xlu0 %v7733, 64
    %v7865 = vpop.permute.xlu0 %7864
    %7866 = vrot.lane.b32.xlu0 %v7734, 64
    %v7867 = vpop.permute.xlu0 %7866
    %7868 = vrot.lane.b32.xlu0 %v7735, 64
    %v7869 = vpop.permute.xlu0 %7868
    %7870 = vrot.lane.b32.xlu0 %v7736, 64
    %v7871 = vpop.permute.xlu0 %7870
    %7872 = vrot.lane.b32.xlu0 %v7737, 64
    %v7873 = vpop.permute.xlu0 %7872
    %7874 = vrot.lane.b32.xlu0 %v7738, 64
    %v7875 = vpop.permute.xlu0 %7874
    %7876 = vrot.lane.b32.xlu0 %v7739, 64
    %v7877 = vpop.permute.xlu0 %7876
    %7878 = vrot.lane.b32.xlu0 %v7740, 64
    %v7879 = vpop.permute.xlu0 %7878
    %7880 = vrot.lane.b32.xlu0 %v7741, 64
    %v7881 = vpop.permute.xlu0 %7880
    %7882 = vrot.lane.b32.xlu0 %v7742, 64
    %v7883 = vpop.permute.xlu0 %7882
    %7884 = vrot.lane.b32.xlu0 %v7743, 64
    %v7885 = vpop.permute.xlu0 %7884
    %7886 = vrot.lane.b32.xlu0 %v7744, 64
    %v7887 = vpop.permute.xlu0 %7886
    %7888 = vrot.lane.b32.xlu0 %v7745, 64
    %v7889 = vpop.permute.xlu0 %7888
    %7890 = vrot.lane.b32.xlu0 %v7746, 64
    %v7891 = vpop.permute.xlu0 %7890
    %7892 = vrot.lane.b32.xlu0 %v7747, 64
    %v7893 = vpop.permute.xlu0 %7892
    %7894 = vrot.lane.b32.xlu0 %v7748, 64
    %v7895 = vpop.permute.xlu0 %7894
    %7896 = vrot.lane.b32.xlu0 %v7749, 64
    %v7897 = vpop.permute.xlu0 %7896
    %7898 = vrot.lane.b32.xlu0 %v7750, 64
    %v7899 = vpop.permute.xlu0 %7898
    %7900 = vrot.lane.b32.xlu0 %v7751, 64
    %v7901 = vpop.permute.xlu0 %7900
    %7902 = vrot.lane.b32.xlu0 %v7752, 64
    %v7903 = vpop.permute.xlu0 %7902
    %7904 = vrot.lane.b32.xlu0 %v7753, 64
    %v7905 = vpop.permute.xlu0 %7904
    %7906 = vrot.lane.b32.xlu0 %v7754, 64
    %v7907 = vpop.permute.xlu0 %7906
    %7908 = vrot.lane.b32.xlu0 %v7755, 64
    %v7909 = vpop.permute.xlu0 %7908
    %7910 = vrot.lane.b32.xlu0 %v7756, 64
    %v7911 = vpop.permute.xlu0 %7910
    %7912 = vrot.lane.b32.xlu0 %v7757, 64
    %v7913 = vpop.permute.xlu0 %7912
    %7914 = vrot.lane.b32.xlu0 %v7758, 64
    %v7915 = vpop.permute.xlu0 %7914
    %7916 = vrot.lane.b32.xlu0 %v7759, 64
    %v7917 = vpop.permute.xlu0 %7916
    %7918 = vrot.lane.b32.xlu0 %v7760, 64
    %v7919 = vpop.permute.xlu0 %7918
    %7920 = vrot.lane.b32.xlu0 %v7761, 64
    %v7921 = vpop.permute.xlu0 %7920
    %7922 = vrot.lane.b32.xlu0 %v7762, 64
    %v7923 = vpop.permute.xlu0 %7922
    %7924 = vrot.lane.b32.xlu0 %v7763, 64
    %v7925 = vpop.permute.xlu0 %7924
    %7926 = vrot.lane.b32.xlu0 %v7764, 64
    %v7927 = vpop.permute.xlu0 %7926
    %7928 = vrot.lane.b32.xlu0 %v7765, 64
    %v7929 = vpop.permute.xlu0 %7928
    %7930 = vrot.lane.b32.xlu0 %v7766, 64
    %v7931 = vpop.permute.xlu0 %7930
    %7932 = vrot.lane.b32.xlu0 %v7767, 64
    %v7933 = vpop.permute.xlu0 %7932
    %7934 = vrot.lane.b32.xlu0 %v7768, 64
    %v7935 = vpop.permute.xlu0 %7934
    %7936 = vrot.lane.b32.xlu0 %v7769, 64
    %v7937 = vpop.permute.xlu0 %7936
    %7938 = vrot.lane.b32.xlu0 %v7770, 64
    %v7939 = vpop.permute.xlu0 %7938
    %7940 = vrot.lane.b32.xlu0 %v7771, 64
    %v7941 = vpop.permute.xlu0 %7940
    %7942 = vrot.lane.b32.xlu0 %v7772, 64
    %v7943 = vpop.permute.xlu0 %7942
    %7944 = vrot.lane.b32.xlu0 %v7773, 64
    %v7945 = vpop.permute.xlu0 %7944
    %7946 = vrot.lane.b32.xlu0 %v7774, 64
    %v7947 = vpop.permute.xlu0 %7946
    %7948 = vrot.lane.b32.xlu0 %v7775, 64
    %v7949 = vpop.permute.xlu0 %7948
    %7950 = vrot.lane.b32.xlu0 %v7776, 64
    %v7951 = vpop.permute.xlu0 %7950
    %7952 = vrot.lane.b32.xlu0 %v7777, 64
    %v7953 = vpop.permute.xlu0 %7952
    %7954 = vrot.lane.b32.xlu0 %v7778, 64
    %v7955 = vpop.permute.xlu0 %7954
    %7956 = vrot.lane.b32.xlu0 %v7779, 64
    %v7957 = vpop.permute.xlu0 %7956
    %7958 = vrot.lane.b32.xlu0 %v7780, 64
    %v7959 = vpop.permute.xlu0 %7958
    %7960 = vrot.lane.b32.xlu0 %v7781, 64
    %v7961 = vpop.permute.xlu0 %7960
    %7962 = vrot.lane.b32.xlu0 %v7782, 64
    %v7963 = vpop.permute.xlu0 %7962
    %7964 = vrot.lane.b32.xlu0 %v7783, 64
    %v7965 = vpop.permute.xlu0 %7964
    %7966 = vrot.lane.b32.xlu0 %v7784, 64
    %v7967 = vpop.permute.xlu0 %7966
    %7968 = vrot.lane.b32.xlu0 %v7785, 64
    %v7969 = vpop.permute.xlu0 %7968
    %7970 = vrot.lane.b32.xlu0 %v7786, 64
    %v7971 = vpop.permute.xlu0 %7970
    %7972 = vrot.lane.b32.xlu0 %v7787, 64
    %v7973 = vpop.permute.xlu0 %7972
    %7974 = vrot.lane.b32.xlu0 %v7788, 64
    %v7975 = vpop.permute.xlu0 %7974
    %7976 = vrot.lane.b32.xlu0 %v7789, 64
    %v7977 = vpop.permute.xlu0 %7976
    %7978 = vrot.lane.b32.xlu0 %v7790, 64
    %v7979 = vpop.permute.xlu0 %7978
    %7980 = vrot.lane.b32.xlu0 %v7791, 64
    %v7981 = vpop.permute.xlu0 %7980
    %7982 = vrot.lane.b32.xlu0 %v7792, 64
    %v7983 = vpop.permute.xlu0 %7982
    %7984 = vrot.lane.b32.xlu0 %v7793, 64
    %v7985 = vpop.permute.xlu0 %7984
    %vm8050 = vcmask 589312
    %8051 = vst.msk [vmem:[#allocation5] sm:$0xff] %vm8050, %v7859
    %8052 = vst.msk [vmem:[#allocation5 + $0x8] sm:$0xff] %vm8050, %v7861
    %8053 = vst.msk [vmem:[#allocation5 + $0x10] sm:$0xff] %vm8050, %v7863
    %8054 = vst.msk [vmem:[#allocation5 + $0x18] sm:$0xff] %vm8050, %v7865
    %8055 = vst.msk [vmem:[#allocation5 + $0x20] sm:$0xff] %vm8050, %v7867
    %8056 = vst.msk [vmem:[#allocation5 + $0x28] sm:$0xff] %vm8050, %v7869
    %8057 = vst.msk [vmem:[#allocation5 + $0x30] sm:$0xff] %vm8050, %v7871
    %8058 = vst.msk [vmem:[#allocation5 + $0x38] sm:$0xff] %vm8050, %v7873
    %8059 = vst.msk [vmem:[#allocation5 + $0x40] sm:$0xff] %vm8050, %v7875
    %8060 = vst.msk [vmem:[#allocation5 + $0x48] sm:$0xff] %vm8050, %v7877
    %8061 = vst.msk [vmem:[#allocation5 + $0x50] sm:$0xff] %vm8050, %v7879
    %8062 = vst.msk [vmem:[#allocation5 + $0x58] sm:$0xff] %vm8050, %v7881
    %8063 = vst.msk [vmem:[#allocation5 + $0x60] sm:$0xff] %vm8050, %v7883
    %8064 = vst.msk [vmem:[#allocation5 + $0x68] sm:$0xff] %vm8050, %v7885
    %8065 = vst.msk [vmem:[#allocation5 + $0x70] sm:$0xff] %vm8050, %v7887
    %8066 = vst.msk [vmem:[#allocation5 + $0x78] sm:$0xff] %vm8050, %v7889
    %8067 = vst.msk [vmem:[#allocation5 + $0x80] sm:$0xff] %vm8050, %v7891
    %8068 = vst.msk [vmem:[#allocation5 + $0x88] sm:$0xff] %vm8050, %v7893
    %8069 = vst.msk [vmem:[#allocation5 + $0x90] sm:$0xff] %vm8050, %v7895
    %8070 = vst.msk [vmem:[#allocation5 + $0x98] sm:$0xff] %vm8050, %v7897
    %8071 = vst.msk [vmem:[#allocation5 + $0xa0] sm:$0xff] %vm8050, %v7899
    %8072 = vst.msk [vmem:[#allocation5 + $0xa8] sm:$0xff] %vm8050, %v7901
    %8073 = vst.msk [vmem:[#allocation5 + $0xb0] sm:$0xff] %vm8050, %v7903
    %8074 = vst.msk [vmem:[#allocation5 + $0xb8] sm:$0xff] %vm8050, %v7905
    %8075 = vst.msk [vmem:[#allocation5 + $0xc0] sm:$0xff] %vm8050, %v7907
    %8076 = vst.msk [vmem:[#allocation5 + $0xc8] sm:$0xff] %vm8050, %v7909
    %8077 = vst.msk [vmem:[#allocation5 + $0xd0] sm:$0xff] %vm8050, %v7911
    %8078 = vst.msk [vmem:[#allocation5 + $0xd8] sm:$0xff] %vm8050, %v7913
    %8079 = vst.msk [vmem:[#allocation5 + $0xe0] sm:$0xff] %vm8050, %v7915
    %8080 = vst.msk [vmem:[#allocation5 + $0xe8] sm:$0xff] %vm8050, %v7917
    %8081 = vst.msk [vmem:[#allocation5 + $0xf0] sm:$0xff] %vm8050, %v7919
    %8082 = vst.msk [vmem:[#allocation5 + $0xf8] sm:$0xff] %vm8050, %v7921
    %8083 = vst.msk [vmem:[#allocation5 + $0x100] sm:$0xff] %vm8050, %v7923
    %8084 = vst.msk [vmem:[#allocation5 + $0x108] sm:$0xff] %vm8050, %v7925
    %8085 = vst.msk [vmem:[#allocation5 + $0x110] sm:$0xff] %vm8050, %v7927
    %8086 = vst.msk [vmem:[#allocation5 + $0x118] sm:$0xff] %vm8050, %v7929
    %8087 = vst.msk [vmem:[#allocation5 + $0x120] sm:$0xff] %vm8050, %v7931
    %8088 = vst.msk [vmem:[#allocation5 + $0x128] sm:$0xff] %vm8050, %v7933
    %8089 = vst.msk [vmem:[#allocation5 + $0x130] sm:$0xff] %vm8050, %v7935
    %8090 = vst.msk [vmem:[#allocation5 + $0x138] sm:$0xff] %vm8050, %v7937
    %8091 = vst.msk [vmem:[#allocation5 + $0x140] sm:$0xff] %vm8050, %v7939
    %8092 = vst.msk [vmem:[#allocation5 + $0x148] sm:$0xff] %vm8050, %v7941
    %8093 = vst.msk [vmem:[#allocation5 + $0x150] sm:$0xff] %vm8050, %v7943
    %8094 = vst.msk [vmem:[#allocation5 + $0x158] sm:$0xff] %vm8050, %v7945
    %8095 = vst.msk [vmem:[#allocation5 + $0x160] sm:$0xff] %vm8050, %v7947
    %8096 = vst.msk [vmem:[#allocation5 + $0x168] sm:$0xff] %vm8050, %v7949
    %8097 = vst.msk [vmem:[#allocation5 + $0x170] sm:$0xff] %vm8050, %v7951
    %8098 = vst.msk [vmem:[#allocation5 + $0x178] sm:$0xff] %vm8050, %v7953
    %8099 = vst.msk [vmem:[#allocation5 + $0x180] sm:$0xff] %vm8050, %v7955
    %8100 = vst.msk [vmem:[#allocation5 + $0x188] sm:$0xff] %vm8050, %v7957
    %8101 = vst.msk [vmem:[#allocation5 + $0x190] sm:$0xff] %vm8050, %v7959
    %8102 = vst.msk [vmem:[#allocation5 + $0x198] sm:$0xff] %vm8050, %v7961
    %8103 = vst.msk [vmem:[#allocation5 + $0x1a0] sm:$0xff] %vm8050, %v7963
    %8104 = vst.msk [vmem:[#allocation5 + $0x1a8] sm:$0xff] %vm8050, %v7965
    %8105 = vst.msk [vmem:[#allocation5 + $0x1b0] sm:$0xff] %vm8050, %v7967
    %8106 = vst.msk [vmem:[#allocation5 + $0x1b8] sm:$0xff] %vm8050, %v7969
    %8107 = vst.msk [vmem:[#allocation5 + $0x1c0] sm:$0xff] %vm8050, %v7971
    %8108 = vst.msk [vmem:[#allocation5 + $0x1c8] sm:$0xff] %vm8050, %v7973
    %8109 = vst.msk [vmem:[#allocation5 + $0x1d0] sm:$0xff] %vm8050, %v7975
    %8110 = vst.msk [vmem:[#allocation5 + $0x1d8] sm:$0xff] %vm8050, %v7977
    %8111 = vst.msk [vmem:[#allocation5 + $0x1e0] sm:$0xff] %vm8050, %v7979
    %8112 = vst.msk [vmem:[#allocation5 + $0x1e8] sm:$0xff] %vm8050, %v7981
    %8113 = vst.msk [vmem:[#allocation5 + $0x1f0] sm:$0xff] %vm8050, %v7983
    %8114 = vst.msk [vmem:[#allocation5 + $0x1f8] sm:$0xff] %vm8050, %v7985
    %v8115 = vld [vmem:[#allocation5] sm:$0xff]
    %v8116 = vld [vmem:[#allocation5 + $0x8] sm:$0xff]
    %v8117 = vld [vmem:[#allocation5 + $0x10] sm:$0xff]
    %v8118 = vld [vmem:[#allocation5 + $0x18] sm:$0xff]
    %v8119 = vld [vmem:[#allocation5 + $0x20] sm:$0xff]
    %v8120 = vld [vmem:[#allocation5 + $0x28] sm:$0xff]
    %v8121 = vld [vmem:[#allocation5 + $0x30] sm:$0xff]
    %v8122 = vld [vmem:[#allocation5 + $0x38] sm:$0xff]
    %v8123 = vld [vmem:[#allocation5 + $0x40] sm:$0xff]
    %v8124 = vld [vmem:[#allocation5 + $0x48] sm:$0xff]
    %v8125 = vld [vmem:[#allocation5 + $0x50] sm:$0xff]
    %v8126 = vld [vmem:[#allocation5 + $0x58] sm:$0xff]
    %v8127 = vld [vmem:[#allocation5 + $0x60] sm:$0xff]
    %v8128 = vld [vmem:[#allocation5 + $0x68] sm:$0xff]
    %v8129 = vld [vmem:[#allocation5 + $0x70] sm:$0xff]
    %v8130 = vld [vmem:[#allocation5 + $0x78] sm:$0xff]
    %v8131 = vld [vmem:[#allocation5 + $0x80] sm:$0xff]
    %v8132 = vld [vmem:[#allocation5 + $0x88] sm:$0xff]
    %v8133 = vld [vmem:[#allocation5 + $0x90] sm:$0xff]
    %v8134 = vld [vmem:[#allocation5 + $0x98] sm:$0xff]
    %v8135 = vld [vmem:[#allocation5 + $0xa0] sm:$0xff]
    %v8136 = vld [vmem:[#allocation5 + $0xa8] sm:$0xff]
    %v8137 = vld [vmem:[#allocation5 + $0xb0] sm:$0xff]
    %v8138 = vld [vmem:[#allocation5 + $0xb8] sm:$0xff]
    %v8139 = vld [vmem:[#allocation5 + $0xc0] sm:$0xff]
    %v8140 = vld [vmem:[#allocation5 + $0xc8] sm:$0xff]
    %v8141 = vld [vmem:[#allocation5 + $0xd0] sm:$0xff]
    %v8142 = vld [vmem:[#allocation5 + $0xd8] sm:$0xff]
    %v8143 = vld [vmem:[#allocation5 + $0xe0] sm:$0xff]
    %v8144 = vld [vmem:[#allocation5 + $0xe8] sm:$0xff]
    %v8145 = vld [vmem:[#allocation5 + $0xf0] sm:$0xff]
    %v8146 = vld [vmem:[#allocation5 + $0xf8] sm:$0xff]
    %v8147 = vld [vmem:[#allocation5 + $0x100] sm:$0xff]
    %v8148 = vld [vmem:[#allocation5 + $0x108] sm:$0xff]
    %v8149 = vld [vmem:[#allocation5 + $0x110] sm:$0xff]
    %v8150 = vld [vmem:[#allocation5 + $0x118] sm:$0xff]
    %v8151 = vld [vmem:[#allocation5 + $0x120] sm:$0xff]
    %v8152 = vld [vmem:[#allocation5 + $0x128] sm:$0xff]
    %v8153 = vld [vmem:[#allocation5 + $0x130] sm:$0xff]
    %v8154 = vld [vmem:[#allocation5 + $0x138] sm:$0xff]
    %v8155 = vld [vmem:[#allocation5 + $0x140] sm:$0xff]
    %v8156 = vld [vmem:[#allocation5 + $0x148] sm:$0xff]
    %v8157 = vld [vmem:[#allocation5 + $0x150] sm:$0xff]
    %v8158 = vld [vmem:[#allocation5 + $0x158] sm:$0xff]
    %v8159 = vld [vmem:[#allocation5 + $0x160] sm:$0xff]
    %v8160 = vld [vmem:[#allocation5 + $0x168] sm:$0xff]
    %v8161 = vld [vmem:[#allocation5 + $0x170] sm:$0xff]
    %v8162 = vld [vmem:[#allocation5 + $0x178] sm:$0xff]
    %v8163 = vld [vmem:[#allocation5 + $0x180] sm:$0xff]
    %v8164 = vld [vmem:[#allocation5 + $0x188] sm:$0xff]
    %v8165 = vld [vmem:[#allocation5 + $0x190] sm:$0xff]
    %v8166 = vld [vmem:[#allocation5 + $0x198] sm:$0xff]
    %v8167 = vld [vmem:[#allocation5 + $0x1a0] sm:$0xff]
    %v8168 = vld [vmem:[#allocation5 + $0x1a8] sm:$0xff]
    %v8169 = vld [vmem:[#allocation5 + $0x1b0] sm:$0xff]
    %v8170 = vld [vmem:[#allocation5 + $0x1b8] sm:$0xff]
    %v8171 = vld [vmem:[#allocation5 + $0x1c0] sm:$0xff]
    %v8172 = vld [vmem:[#allocation5 + $0x1c8] sm:$0xff]
    %v8173 = vld [vmem:[#allocation5 + $0x1d0] sm:$0xff]
    %v8174 = vld [vmem:[#allocation5 + $0x1d8] sm:$0xff]
    %v8175 = vld [vmem:[#allocation5 + $0x1e0] sm:$0xff]
    %v8176 = vld [vmem:[#allocation5 + $0x1e8] sm:$0xff]
    %v8177 = vld [vmem:[#allocation5 + $0x1f0] sm:$0xff]
    %v8178 = vld [vmem:[#allocation5 + $0x1f8] sm:$0xff]
    %v8179 = vld [vmem:[%s2] sm:$0xff]
    %v8180 = vld [vmem:[%s2 + $0x8] sm:$0xff]
    %v8181 = vld [vmem:[%s2 + $0x10] sm:$0xff]
    %v8182 = vld [vmem:[%s2 + $0x18] sm:$0xff]
    %v8183 = vld [vmem:[%s2 + $0x20] sm:$0xff]
    %v8184 = vld [vmem:[%s2 + $0x28] sm:$0xff]
    %v8185 = vld [vmem:[%s2 + $0x30] sm:$0xff]
    %v8186 = vld [vmem:[%s2 + $0x38] sm:$0xff]
    %v8187 = vld [vmem:[%s2 + $0x40] sm:$0xff]
    %vm8188 = vcmask 588800
    %v8190 = vsel %vm8188, %v8115, 0
    %v8193 = vsel %vm8188, %v8116, 0
    %v8196 = vsel %vm8188, %v8117, 0
    %v8199 = vsel %vm8188, %v8118, 0
    %v8202 = vsel %vm8188, %v8119, 0
    %v8205 = vsel %vm8188, %v8120, 0
    %v8208 = vsel %vm8188, %v8121, 0
    %v8211 = vsel %vm8188, %v8122, 0
    %v8214 = vsel %vm8188, %v8123, 0
    %v8217 = vsel %vm8188, %v8124, 0
    %v8220 = vsel %vm8188, %v8125, 0
    %v8223 = vsel %vm8188, %v8126, 0
    %v8226 = vsel %vm8188, %v8127, 0
    %v8229 = vsel %vm8188, %v8128, 0
    %v8232 = vsel %vm8188, %v8129, 0
    %v8235 = vsel %vm8188, %v8130, 0
    %v8238 = vsel %vm8188, %v8131, 0
    %v8241 = vsel %vm8188, %v8132, 0
    %v8244 = vsel %vm8188, %v8133, 0
    %v8247 = vsel %vm8188, %v8134, 0
    %v8250 = vsel %vm8188, %v8135, 0
    %v8253 = vsel %vm8188, %v8136, 0
    %v8256 = vsel %vm8188, %v8137, 0
    %v8259 = vsel %vm8188, %v8138, 0
    %v8262 = vsel %vm8188, %v8139, 0
    %v8265 = vsel %vm8188, %v8140, 0
    %v8268 = vsel %vm8188, %v8141, 0
    %v8271 = vsel %vm8188, %v8142, 0
    %v8274 = vsel %vm8188, %v8143, 0
    %v8277 = vsel %vm8188, %v8144, 0
    %v8280 = vsel %vm8188, %v8145, 0
    %v8283 = vsel %vm8188, %v8146, 0
    %v8286 = vsel %vm8188, %v8147, 0
    %v8289 = vsel %vm8188, %v8148, 0
    %v8292 = vsel %vm8188, %v8149, 0
    %v8295 = vsel %vm8188, %v8150, 0
    %v8298 = vsel %vm8188, %v8151, 0
    %v8301 = vsel %vm8188, %v8152, 0
    %v8304 = vsel %vm8188, %v8153, 0
    %v8307 = vsel %vm8188, %v8154, 0
    %v8310 = vsel %vm8188, %v8155, 0
    %v8313 = vsel %vm8188, %v8156, 0
    %v8316 = vsel %vm8188, %v8157, 0
    %v8319 = vsel %vm8188, %v8158, 0
    %v8322 = vsel %vm8188, %v8159, 0
    %v8325 = vsel %vm8188, %v8160, 0
    %v8328 = vsel %vm8188, %v8161, 0
    %v8331 = vsel %vm8188, %v8162, 0
    %v8334 = vsel %vm8188, %v8163, 0
    %v8337 = vsel %vm8188, %v8164, 0
    %v8340 = vsel %vm8188, %v8165, 0
    %v8343 = vsel %vm8188, %v8166, 0
    %v8346 = vsel %vm8188, %v8167, 0
    %v8349 = vsel %vm8188, %v8168, 0
    %v8352 = vsel %vm8188, %v8169, 0
    %v8355 = vsel %vm8188, %v8170, 0
    %v8358 = vsel %vm8188, %v8171, 0
    %v8361 = vsel %vm8188, %v8172, 0
    %v8364 = vsel %vm8188, %v8173, 0
    %v8367 = vsel %vm8188, %v8174, 0
    %v8370 = vsel %vm8188, %v8175, 0
    %v8373 = vsel %vm8188, %v8176, 0
    %v8376 = vsel %vm8188, %v8177, 0
    %v8379 = vsel %vm8188, %v8178, 0
    %8381 = vmatprep.subr.mxu0 0.0
    %8382 = vmatpush1.msra.mxu0 %v8179
    %8383 = vmatprep.subr.mxu0 0.0
    %8384 = vmatpush1.msra.mxu0 %v8180
    %8385 = vmatprep.subr.mxu0 0.0
    %8386 = vmatpush1.msra.mxu0 %v8181
    %8387 = vmatprep.subr.mxu0 0.0
    %8388 = vmatpush1.msra.mxu0 %v8182
    %8389 = vmatprep.subr.mxu0 0.0
    %8390 = vmatpush1.msra.mxu0 %v8183
    %8391 = vmatprep.subr.mxu0 0.0
    %8392 = vmatpush1.msra.mxu0 %v8184
    %8393 = vmatprep.subr.mxu0 0.0
    %8394 = vmatpush1.msra.mxu0 %v8185
    %8395 = vmatprep.subr.mxu0 0.0
    %8396 = vmatpush1.msra.mxu0 %v8186
    %8397 = vmatprep.subr.mxu0 0.0
    %8398 = vmatpush1.msra.mxu0 %v8187
    %8399 = vmatprep.subr.mxu0 0.0
    %8400 = vmatpush1.msra.mxu0 0.0
    %8401 = vmatprep.subr.mxu0 0.0
    %8402 = vmatpush1.msra.mxu0 0.0
    %8403 = vmatprep.subr.mxu0 0.0
    %8404 = vmatpush1.msra.mxu0 0.0
    %8405 = vmatprep.subr.mxu0 0.0
    %8406 = vmatpush1.msra.mxu0 0.0
    %8407 = vmatprep.subr.mxu0 0.0
    %8408 = vmatpush1.msra.mxu0 0.0
    %8409 = vmatprep.subr.mxu0 0.0
    %8410 = vmatpush1.msra.mxu0 0.0
    %8411 = vmatprep.subr.mxu0 0.0
    %8412 = vmatpush1.msra.mxu0 0.0
    %8413 = vmatprep.subr.mxu0 0.0
    %8414 = vmatpush1.msra.mxu0 0.0
    %8415 = vmatprep.subr.mxu0 0.0
    %8416 = vmatpush1.msra.mxu0 0.0
    %8417 = vmatprep.subr.mxu0 0.0
    %8418 = vmatpush1.msra.mxu0 0.0
    %8419 = vmatprep.subr.mxu0 0.0
    %8420 = vmatpush1.msra.mxu0 0.0
    %8421 = vmatprep.subr.mxu0 0.0
    %8422 = vmatpush1.msra.mxu0 0.0
    %8423 = vmatprep.subr.mxu0 0.0
    %8424 = vmatpush1.msra.mxu0 0.0
    %8425 = vmatprep.subr.mxu0 0.0
    %8426 = vmatpush1.msra.mxu0 0.0
    %8427 = vmatprep.subr.mxu0 0.0
    %8428 = vmatpush1.msra.mxu0 0.0
    %8429 = vmatprep.subr.mxu0 0.0
    %8430 = vmatpush1.msra.mxu0 0.0
    %8431 = vmatprep.subr.mxu0 0.0
    %8432 = vmatpush1.msra.mxu0 0.0
    %8433 = vmatprep.subr.mxu0 0.0
    %8434 = vmatpush1.msra.mxu0 0.0
    %8435 = vmatprep.subr.mxu0 0.0
    %8436 = vmatpush1.msra.mxu0 0.0
    %8437 = vmatprep.subr.mxu0 0.0
    %8438 = vmatpush1.msra.mxu0 0.0
    %8439 = vmatprep.subr.mxu0 0.0
    %8440 = vmatpush1.msra.mxu0 0.0
    %8441 = vmatprep.subr.mxu0 0.0
    %8442 = vmatpush1.msra.mxu0 0.0
    %8443 = vmatprep.subr.mxu0 0.0
    %8444 = vmatpush1.msra.mxu0 0.0
    %8445 = vmatprep.mubr.f32.mxu0 0.0
    %8446 = vmatmul.mubr.f32.gmra.mrb[0].mxu0 %v8190
    %v8447 = vpop.f32.mrb[0].mxu0
    %v8448 = vadd.f32 0.0, %v8447
    %v8449 = vpop.f32.mrb[0].mxu0
    %8450 = vmatprep.mubr.f32.mxu0 0.0
    %8451 = vmatmul.mubr.f32.gmra.mrb[0].mxu0 %v8193
    %v8452 = vpop.f32.mrb[0].mxu0
    %v8453 = vadd.f32 0.0, %v8452
    %v8454 = vpop.f32.mrb[0].mxu0
    %8455 = vmatprep.mubr.f32.mxu0 0.0
    %8456 = vmatmul.mubr.f32.gmra.mrb[0].mxu0 %v8196
    %v8457 = vpop.f32.mrb[0].mxu0
    %v8458 = vadd.f32 0.0, %v8457
    %v8459 = vpop.f32.mrb[0].mxu0
    %8460 = vmatprep.mubr.f32.mxu0 0.0
    %8461 = vmatmul.mubr.f32.gmra.mrb[0].mxu0 %v8199
    %v8462 = vpop.f32.mrb[0].mxu0
    %v8463 = vadd.f32 0.0, %v8462
    %v8464 = vpop.f32.mrb[0].mxu0
    %8465 = vmatprep.mubr.f32.mxu0 0.0
    %8466 = vmatmul.mubr.f32.gmra.mrb[0].mxu0 %v8202
    %v8467 = vpop.f32.mrb[0].mxu0
    %v8468 = vadd.f32 0.0, %v8467
    %v8469 = vpop.f32.mrb[0].mxu0
    %8470 = vmatprep.mubr.f32.mxu0 0.0
    %8471 = vmatmul.mubr.f32.gmra.mrb[0].mxu0 %v8205
    %v8472 = vpop.f32.mrb[0].mxu0
    %v8473 = vadd.f32 0.0, %v8472
    %v8474 = vpop.f32.mrb[0].mxu0
    %8475 = vmatprep.mubr.f32.mxu0 0.0
    %8476 = vmatmul.mubr.f32.gmra.mrb[0].mxu0 %v8208
    %v8477 = vpop.f32.mrb[0].mxu0
    %v8478 = vadd.f32 0.0, %v8477
    %v8479 = vpop.f32.mrb[0].mxu0
    %8480 = vmatprep.mubr.f32.mxu0 0.0
    %8481 = vmatmul.mubr.f32.gmra.mrb[0].mxu0 %v8211
    %v8482 = vpop.f32.mrb[0].mxu0
    %v8483 = vadd.f32 0.0, %v8482
    %v8484 = vpop.f32.mrb[0].mxu0
    %8485 = vmatprep.mubr.f32.mxu0 0.0
    %8486 = vmatmul.mubr.f32.gmra.mrb[0].mxu0 %v8214
    %v8487 = vpop.f32.mrb[0].mxu0
    %v8488 = vadd.f32 0.0, %v8487
    %v8489 = vpop.f32.mrb[0].mxu0
    %8490 = vmatprep.mubr.f32.mxu0 0.0
    %8491 = vmatmul.mubr.f32.gmra.mrb[0].mxu0 %v8217
    %v8492 = vpop.f32.mrb[0].mxu0
    %v8493 = vadd.f32 0.0, %v8492
    %v8494 = vpop.f32.mrb[0].mxu0
    %8495 = vmatprep.mubr.f32.mxu0 0.0
    %8496 = vmatmul.mubr.f32.gmra.mrb[0].mxu0 %v8220
    %v8497 = vpop.f32.mrb[0].mxu0
    %v8498 = vadd.f32 0.0, %v8497
    %v8499 = vpop.f32.mrb[0].mxu0
    %8500 = vmatprep.mubr.f32.mxu0 0.0
    %8501 = vmatmul.mubr.f32.gmra.mrb[0].mxu0 %v8223
    %v8502 = vpop.f32.mrb[0].mxu0
    %v8503 = vadd.f32 0.0, %v8502
    %v8504 = vpop.f32.mrb[0].mxu0
    %8505 = vmatprep.mubr.f32.mxu0 0.0
    %8506 = vmatmul.mubr.f32.gmra.mrb[0].mxu0 %v8226
    %v8507 = vpop.f32.mrb[0].mxu0
    %v8508 = vadd.f32 0.0, %v8507
    %v8509 = vpop.f32.mrb[0].mxu0
    %8510 = vmatprep.mubr.f32.mxu0 0.0
    %8511 = vmatmul.mubr.f32.gmra.mrb[0].mxu0 %v8229
    %v8512 = vpop.f32.mrb[0].mxu0
    %v8513 = vadd.f32 0.0, %v8512
    %v8514 = vpop.f32.mrb[0].mxu0
    %8515 = vmatprep.mubr.f32.mxu0 0.0
    %8516 = vmatmul.mubr.f32.gmra.mrb[0].mxu0 %v8232
    %v8517 = vpop.f32.mrb[0].mxu0
    %v8518 = vadd.f32 0.0, %v8517
    %v8519 = vpop.f32.mrb[0].mxu0
    %8520 = vmatprep.mubr.f32.mxu0 0.0
    %8521 = vmatmul.mubr.f32.gmra.mrb[0].mxu0 %v8235
    %v8522 = vpop.f32.mrb[0].mxu0
    %v8523 = vadd.f32 0.0, %v8522
    %v8524 = vpop.f32.mrb[0].mxu0
    %8525 = vmatprep.mubr.f32.mxu0 0.0
    %8526 = vmatmul.mubr.f32.gmra.mrb[0].mxu0 %v8238
    %v8527 = vpop.f32.mrb[0].mxu0
    %v8528 = vadd.f32 0.0, %v8527
    %v8529 = vpop.f32.mrb[0].mxu0
    %8530 = vmatprep.mubr.f32.mxu0 0.0
    %8531 = vmatmul.mubr.f32.gmra.mrb[0].mxu0 %v8241
    %v8532 = vpop.f32.mrb[0].mxu0
    %v8533 = vadd.f32 0.0, %v8532
    %v8534 = vpop.f32.mrb[0].mxu0
    %8535 = vmatprep.mubr.f32.mxu0 0.0
    %8536 = vmatmul.mubr.f32.gmra.mrb[0].mxu0 %v8244
    %v8537 = vpop.f32.mrb[0].mxu0
    %v8538 = vadd.f32 0.0, %v8537
    %v8539 = vpop.f32.mrb[0].mxu0
    %8540 = vmatprep.mubr.f32.mxu0 0.0
    %8541 = vmatmul.mubr.f32.gmra.mrb[0].mxu0 %v8247
    %v8542 = vpop.f32.mrb[0].mxu0
    %v8543 = vadd.f32 0.0, %v8542
    %v8544 = vpop.f32.mrb[0].mxu0
    %8545 = vmatprep.mubr.f32.mxu0 0.0
    %8546 = vmatmul.mubr.f32.gmra.mrb[0].mxu0 %v8250
    %v8547 = vpop.f32.mrb[0].mxu0
    %v8548 = vadd.f32 0.0, %v8547
    %v8549 = vpop.f32.mrb[0].mxu0
    %8550 = vmatprep.mubr.f32.mxu0 0.0
    %8551 = vmatmul.mubr.f32.gmra.mrb[0].mxu0 %v8253
    %v8552 = vpop.f32.mrb[0].mxu0
    %v8553 = vadd.f32 0.0, %v8552
    %v8554 = vpop.f32.mrb[0].mxu0
    %8555 = vmatprep.mubr.f32.mxu0 0.0
    %8556 = vmatmul.mubr.f32.gmra.mrb[0].mxu0 %v8256
    %v8557 = vpop.f32.mrb[0].mxu0
    %v8558 = vadd.f32 0.0, %v8557
    %v8559 = vpop.f32.mrb[0].mxu0
    %8560 = vmatprep.mubr.f32.mxu0 0.0
    %8561 = vmatmul.mubr.f32.gmra.mrb[0].mxu0 %v8259
    %v8562 = vpop.f32.mrb[0].mxu0
    %v8563 = vadd.f32 0.0, %v8562
    %v8564 = vpop.f32.mrb[0].mxu0
    %8565 = vmatprep.mubr.f32.mxu0 0.0
    %8566 = vmatmul.mubr.f32.gmra.mrb[0].mxu0 %v8262
    %v8567 = vpop.f32.mrb[0].mxu0
    %v8568 = vadd.f32 0.0, %v8567
    %v8569 = vpop.f32.mrb[0].mxu0
    %8570 = vmatprep.mubr.f32.mxu0 0.0
    %8571 = vmatmul.mubr.f32.gmra.mrb[0].mxu0 %v8265
    %v8572 = vpop.f32.mrb[0].mxu0
    %v8573 = vadd.f32 0.0, %v8572
    %v8574 = vpop.f32.mrb[0].mxu0
    %8575 = vmatprep.mubr.f32.mxu0 0.0
    %8576 = vmatmul.mubr.f32.gmra.mrb[0].mxu0 %v8268
    %v8577 = vpop.f32.mrb[0].mxu0
    %v8578 = vadd.f32 0.0, %v8577
    %v8579 = vpop.f32.mrb[0].mxu0
    %8580 = vmatprep.mubr.f32.mxu0 0.0
    %8581 = vmatmul.mubr.f32.gmra.mrb[0].mxu0 %v8271
    %v8582 = vpop.f32.mrb[0].mxu0
    %v8583 = vadd.f32 0.0, %v8582
    %v8584 = vpop.f32.mrb[0].mxu0
    %8585 = vmatprep.mubr.f32.mxu0 0.0
    %8586 = vmatmul.mubr.f32.gmra.mrb[0].mxu0 %v8274
    %v8587 = vpop.f32.mrb[0].mxu0
    %v8588 = vadd.f32 0.0, %v8587
    %v8589 = vpop.f32.mrb[0].mxu0
    %8590 = vmatprep.mubr.f32.mxu0 0.0
    %8591 = vmatmul.mubr.f32.gmra.mrb[0].mxu0 %v8277
    %v8592 = vpop.f32.mrb[0].mxu0
    %v8593 = vadd.f32 0.0, %v8592
    %v8594 = vpop.f32.mrb[0].mxu0
    %8595 = vmatprep.mubr.f32.mxu0 0.0
    %8596 = vmatmul.mubr.f32.gmra.mrb[0].mxu0 %v8280
    %v8597 = vpop.f32.mrb[0].mxu0
    %v8598 = vadd.f32 0.0, %v8597
    %v8599 = vpop.f32.mrb[0].mxu0
    %8600 = vmatprep.mubr.f32.mxu0 0.0
    %8601 = vmatmul.mubr.f32.gmra.mrb[0].mxu0 %v8283
    %v8602 = vpop.f32.mrb[0].mxu0
    %v8603 = vadd.f32 0.0, %v8602
    %v8604 = vpop.f32.mrb[0].mxu0
    %8605 = vmatprep.mubr.f32.mxu0 0.0
    %8606 = vmatmul.mubr.f32.gmra.mrb[0].mxu0 %v8286
    %v8607 = vpop.f32.mrb[0].mxu0
    %v8608 = vadd.f32 0.0, %v8607
    %v8609 = vpop.f32.mrb[0].mxu0
    %8610 = vmatprep.mubr.f32.mxu0 0.0
    %8611 = vmatmul.mubr.f32.gmra.mrb[0].mxu0 %v8289
    %v8612 = vpop.f32.mrb[0].mxu0
    %v8613 = vadd.f32 0.0, %v8612
    %v8614 = vpop.f32.mrb[0].mxu0
    %8615 = vmatprep.mubr.f32.mxu0 0.0
    %8616 = vmatmul.mubr.f32.gmra.mrb[0].mxu0 %v8292
    %v8617 = vpop.f32.mrb[0].mxu0
    %v8618 = vadd.f32 0.0, %v8617
    %v8619 = vpop.f32.mrb[0].mxu0
    %8620 = vmatprep.mubr.f32.mxu0 0.0
    %8621 = vmatmul.mubr.f32.gmra.mrb[0].mxu0 %v8295
    %v8622 = vpop.f32.mrb[0].mxu0
    %v8623 = vadd.f32 0.0, %v8622
    %v8624 = vpop.f32.mrb[0].mxu0
    %8625 = vmatprep.mubr.f32.mxu0 0.0
    %8626 = vmatmul.mubr.f32.gmra.mrb[0].mxu0 %v8298
    %v8627 = vpop.f32.mrb[0].mxu0
    %v8628 = vadd.f32 0.0, %v8627
    %v8629 = vpop.f32.mrb[0].mxu0
    %8630 = vmatprep.mubr.f32.mxu0 0.0
    %8631 = vmatmul.mubr.f32.gmra.mrb[0].mxu0 %v8301
    %v8632 = vpop.f32.mrb[0].mxu0
    %v8633 = vadd.f32 0.0, %v8632
    %v8634 = vpop.f32.mrb[0].mxu0
    %8635 = vmatprep.mubr.f32.mxu0 0.0
    %8636 = vmatmul.mubr.f32.gmra.mrb[0].mxu0 %v8304
    %v8637 = vpop.f32.mrb[0].mxu0
    %v8638 = vadd.f32 0.0, %v8637
    %v8639 = vpop.f32.mrb[0].mxu0
    %8640 = vmatprep.mubr.f32.mxu0 0.0
    %8641 = vmatmul.mubr.f32.gmra.mrb[0].mxu0 %v8307
    %v8642 = vpop.f32.mrb[0].mxu0
    %v8643 = vadd.f32 0.0, %v8642
    %v8644 = vpop.f32.mrb[0].mxu0
    %8645 = vmatprep.mubr.f32.mxu0 0.0
    %8646 = vmatmul.mubr.f32.gmra.mrb[0].mxu0 %v8310
    %v8647 = vpop.f32.mrb[0].mxu0
    %v8648 = vadd.f32 0.0, %v8647
    %v8649 = vpop.f32.mrb[0].mxu0
    %8650 = vmatprep.mubr.f32.mxu0 0.0
    %8651 = vmatmul.mubr.f32.gmra.mrb[0].mxu0 %v8313
    %v8652 = vpop.f32.mrb[0].mxu0
    %v8653 = vadd.f32 0.0, %v8652
    %v8654 = vpop.f32.mrb[0].mxu0
    %8655 = vmatprep.mubr.f32.mxu0 0.0
    %8656 = vmatmul.mubr.f32.gmra.mrb[0].mxu0 %v8316
    %v8657 = vpop.f32.mrb[0].mxu0
    %v8658 = vadd.f32 0.0, %v8657
    %v8659 = vpop.f32.mrb[0].mxu0
    %8660 = vmatprep.mubr.f32.mxu0 0.0
    %8661 = vmatmul.mubr.f32.gmra.mrb[0].mxu0 %v8319
    %v8662 = vpop.f32.mrb[0].mxu0
    %v8663 = vadd.f32 0.0, %v8662
    %v8664 = vpop.f32.mrb[0].mxu0
    %8665 = vmatprep.mubr.f32.mxu0 0.0
    %8666 = vmatmul.mubr.f32.gmra.mrb[0].mxu0 %v8322
    %v8667 = vpop.f32.mrb[0].mxu0
    %v8668 = vadd.f32 0.0, %v8667
    %v8669 = vpop.f32.mrb[0].mxu0
    %8670 = vmatprep.mubr.f32.mxu0 0.0
    %8671 = vmatmul.mubr.f32.gmra.mrb[0].mxu0 %v8325
    %v8672 = vpop.f32.mrb[0].mxu0
    %v8673 = vadd.f32 0.0, %v8672
    %v8674 = vpop.f32.mrb[0].mxu0
    %8675 = vmatprep.mubr.f32.mxu0 0.0
    %8676 = vmatmul.mubr.f32.gmra.mrb[0].mxu0 %v8328
    %v8677 = vpop.f32.mrb[0].mxu0
    %v8678 = vadd.f32 0.0, %v8677
    %v8679 = vpop.f32.mrb[0].mxu0
    %8680 = vmatprep.mubr.f32.mxu0 0.0
    %8681 = vmatmul.mubr.f32.gmra.mrb[0].mxu0 %v8331
    %v8682 = vpop.f32.mrb[0].mxu0
    %v8683 = vadd.f32 0.0, %v8682
    %v8684 = vpop.f32.mrb[0].mxu0
    %8685 = vmatprep.mubr.f32.mxu0 0.0
    %8686 = vmatmul.mubr.f32.gmra.mrb[0].mxu0 %v8334
    %v8687 = vpop.f32.mrb[0].mxu0
    %v8688 = vadd.f32 0.0, %v8687
    %v8689 = vpop.f32.mrb[0].mxu0
    %8690 = vmatprep.mubr.f32.mxu0 0.0
    %8691 = vmatmul.mubr.f32.gmra.mrb[0].mxu0 %v8337
    %v8692 = vpop.f32.mrb[0].mxu0
    %v8693 = vadd.f32 0.0, %v8692
    %v8694 = vpop.f32.mrb[0].mxu0
    %8695 = vmatprep.mubr.f32.mxu0 0.0
    %8696 = vmatmul.mubr.f32.gmra.mrb[0].mxu0 %v8340
    %v8697 = vpop.f32.mrb[0].mxu0
    %v8698 = vadd.f32 0.0, %v8697
    %v8699 = vpop.f32.mrb[0].mxu0
    %8700 = vmatprep.mubr.f32.mxu0 0.0
    %8701 = vmatmul.mubr.f32.gmra.mrb[0].mxu0 %v8343
    %v8702 = vpop.f32.mrb[0].mxu0
    %v8703 = vadd.f32 0.0, %v8702
    %v8704 = vpop.f32.mrb[0].mxu0
    %8705 = vmatprep.mubr.f32.mxu0 0.0
    %8706 = vmatmul.mubr.f32.gmra.mrb[0].mxu0 %v8346
    %v8707 = vpop.f32.mrb[0].mxu0
    %v8708 = vadd.f32 0.0, %v8707
    %v8709 = vpop.f32.mrb[0].mxu0
    %8710 = vmatprep.mubr.f32.mxu0 0.0
    %8711 = vmatmul.mubr.f32.gmra.mrb[0].mxu0 %v8349
    %v8712 = vpop.f32.mrb[0].mxu0
    %v8713 = vadd.f32 0.0, %v8712
    %v8714 = vpop.f32.mrb[0].mxu0
    %8715 = vmatprep.mubr.f32.mxu0 0.0
    %8716 = vmatmul.mubr.f32.gmra.mrb[0].mxu0 %v8352
    %v8717 = vpop.f32.mrb[0].mxu0
    %v8718 = vadd.f32 0.0, %v8717
    %v8719 = vpop.f32.mrb[0].mxu0
    %8720 = vmatprep.mubr.f32.mxu0 0.0
    %8721 = vmatmul.mubr.f32.gmra.mrb[0].mxu0 %v8355
    %v8722 = vpop.f32.mrb[0].mxu0
    %v8723 = vadd.f32 0.0, %v8722
    %v8724 = vpop.f32.mrb[0].mxu0
    %8725 = vmatprep.mubr.f32.mxu0 0.0
    %8726 = vmatmul.mubr.f32.gmra.mrb[0].mxu0 %v8358
    %v8727 = vpop.f32.mrb[0].mxu0
    %v8728 = vadd.f32 0.0, %v8727
    %v8729 = vpop.f32.mrb[0].mxu0
    %8730 = vmatprep.mubr.f32.mxu0 0.0
    %8731 = vmatmul.mubr.f32.gmra.mrb[0].mxu0 %v8361
    %v8732 = vpop.f32.mrb[0].mxu0
    %v8733 = vadd.f32 0.0, %v8732
    %v8734 = vpop.f32.mrb[0].mxu0
    %8735 = vmatprep.mubr.f32.mxu0 0.0
    %8736 = vmatmul.mubr.f32.gmra.mrb[0].mxu0 %v8364
    %v8737 = vpop.f32.mrb[0].mxu0
    %v8738 = vadd.f32 0.0, %v8737
    %v8739 = vpop.f32.mrb[0].mxu0
    %8740 = vmatprep.mubr.f32.mxu0 0.0
    %8741 = vmatmul.mubr.f32.gmra.mrb[0].mxu0 %v8367
    %v8742 = vpop.f32.mrb[0].mxu0
    %v8743 = vadd.f32 0.0, %v8742
    %v8744 = vpop.f32.mrb[0].mxu0
    %8745 = vmatprep.mubr.f32.mxu0 0.0
    %8746 = vmatmul.mubr.f32.gmra.mrb[0].mxu0 %v8370
    %v8747 = vpop.f32.mrb[0].mxu0
    %v8748 = vadd.f32 0.0, %v8747
    %v8749 = vpop.f32.mrb[0].mxu0
    %8750 = vmatprep.mubr.f32.mxu0 0.0
    %8751 = vmatmul.mubr.f32.gmra.mrb[0].mxu0 %v8373
    %v8752 = vpop.f32.mrb[0].mxu0
    %v8753 = vadd.f32 0.0, %v8752
    %v8754 = vpop.f32.mrb[0].mxu0
    %8755 = vmatprep.mubr.f32.mxu0 0.0
    %8756 = vmatmul.mubr.f32.gmra.mrb[0].mxu0 %v8376
    %v8757 = vpop.f32.mrb[0].mxu0
    %v8758 = vadd.f32 0.0, %v8757
    %v8759 = vpop.f32.mrb[0].mxu0
    %8760 = vmatprep.mubr.f32.mxu0 0.0
    %8761 = vmatmul.mubr.f32.gmra.mrb[0].mxu0 %v8379
    %v8762 = vpop.f32.mrb[0].mxu0
    %v8763 = vadd.f32 0.0, %v8762
    %v8764 = vpop.f32.mrb[0].mxu0
    %8765 = vdwg.mxu0
    %v8766 = vld [vmem:[%s5] sm:$0x1]
    %v8767 = vld [vmem:[%s6] sm:$0x1]
    %v8768 = vadd.f32 %v8448, %v8453
    %v8769 = vadd.f32 %v8768, %v8458
    %v8770 = vadd.f32 %v8769, %v8463
    %v8771 = vadd.f32 %v8770, %v8468
    %v8772 = vadd.f32 %v8771, %v8473
    %v8773 = vadd.f32 %v8772, %v8478
    %v8774 = vadd.f32 %v8773, %v8483
    %v8775 = vadd.f32 %v8774, %v8488
    %v8776 = vadd.f32 %v8775, %v8493
    %v8777 = vadd.f32 %v8776, %v8498
    %v8778 = vadd.f32 %v8777, %v8503
    %v8779 = vadd.f32 %v8778, %v8508
    %v8780 = vadd.f32 %v8779, %v8513
    %v8781 = vadd.f32 %v8780, %v8518
    %v8782 = vadd.f32 %v8781, %v8523
    %v8783 = vadd.f32 %v8782, %v8528
    %v8784 = vadd.f32 %v8783, %v8533
    %v8785 = vadd.f32 %v8784, %v8538
    %v8786 = vadd.f32 %v8785, %v8543
    %v8787 = vadd.f32 %v8786, %v8548
    %v8788 = vadd.f32 %v8787, %v8553
    %v8789 = vadd.f32 %v8788, %v8558
    %v8790 = vadd.f32 %v8789, %v8563
    %v8791 = vadd.f32 %v8790, %v8568
    %v8792 = vadd.f32 %v8791, %v8573
    %v8793 = vadd.f32 %v8792, %v8578
    %v8794 = vadd.f32 %v8793, %v8583
    %v8795 = vadd.f32 %v8794, %v8588
    %v8796 = vadd.f32 %v8795, %v8593
    %v8797 = vadd.f32 %v8796, %v8598
    %v8798 = vadd.f32 %v8797, %v8603
    %v8799 = vadd.f32 %v8798, %v8608
    %v8800 = vadd.f32 %v8799, %v8613
    %v8801 = vadd.f32 %v8800, %v8618
    %v8802 = vadd.f32 %v8801, %v8623
    %v8803 = vadd.f32 %v8802, %v8628
    %v8804 = vadd.f32 %v8803, %v8633
    %v8805 = vadd.f32 %v8804, %v8638
    %v8806 = vadd.f32 %v8805, %v8643
    %v8807 = vadd.f32 %v8806, %v8648
    %v8808 = vadd.f32 %v8807, %v8653
    %v8809 = vadd.f32 %v8808, %v8658
    %v8810 = vadd.f32 %v8809, %v8663
    %v8811 = vadd.f32 %v8810, %v8668
    %v8812 = vadd.f32 %v8811, %v8673
    %v8813 = vadd.f32 %v8812, %v8678
    %v8814 = vadd.f32 %v8813, %v8683
    %v8815 = vadd.f32 %v8814, %v8688
    %v8816 = vadd.f32 %v8815, %v8693
    %v8817 = vadd.f32 %v8816, %v8698
    %v8818 = vadd.f32 %v8817, %v8703
    %v8819 = vadd.f32 %v8818, %v8708
    %v8820 = vadd.f32 %v8819, %v8713
    %v8821 = vadd.f32 %v8820, %v8718
    %v8822 = vadd.f32 %v8821, %v8723
    %v8823 = vadd.f32 %v8822, %v8728
    %v8824 = vadd.f32 %v8823, %v8733
    %v8825 = vadd.f32 %v8824, %v8738
    %v8826 = vadd.f32 %v8825, %v8743
    %v8827 = vadd.f32 %v8826, %v8748
    %v8828 = vadd.f32 %v8827, %v8753
    %v8829 = vadd.f32 %v8828, %v8758
    %v8830 = vadd.f32 %v8829, %v8763
    %v8831 = vrot.slane %v8830, 4
    %v8832 = vadd.f32 %v8830, %v8831
    %v8833 = vrot.slane %v8832, 2
    %v8834 = vadd.f32 %v8832, %v8833
    %v8835 = vrot.slane %v8834, 1
    %v8836 = vadd.f32 %v8834, %v8835
    %v8837 = vmul.f32 %v8448, %v8448
    %v8838 = vmul.f32 %v8453, %v8453
    %v8839 = vmul.f32 %v8458, %v8458
    %v8840 = vmul.f32 %v8463, %v8463
    %v8841 = vmul.f32 %v8468, %v8468
    %v8842 = vmul.f32 %v8473, %v8473
    %v8843 = vmul.f32 %v8478, %v8478
    %v8844 = vmul.f32 %v8483, %v8483
    %v8845 = vmul.f32 %v8488, %v8488
    %v8846 = vmul.f32 %v8493, %v8493
    %v8847 = vmul.f32 %v8498, %v8498
    %v8848 = vmul.f32 %v8503, %v8503
    %v8849 = vmul.f32 %v8508, %v8508
    %v8850 = vmul.f32 %v8513, %v8513
    %v8851 = vmul.f32 %v8518, %v8518
    %v8852 = vmul.f32 %v8523, %v8523
    %v8853 = vmul.f32 %v8528, %v8528
    %v8854 = vmul.f32 %v8533, %v8533
    %v8855 = vmul.f32 %v8538, %v8538
    %v8856 = vmul.f32 %v8543, %v8543
    %v8857 = vmul.f32 %v8548, %v8548
    %v8858 = vmul.f32 %v8553, %v8553
    %v8859 = vmul.f32 %v8558, %v8558
    %v8860 = vmul.f32 %v8563, %v8563
    %v8861 = vmul.f32 %v8568, %v8568
    %v8862 = vmul.f32 %v8573, %v8573
    %v8863 = vmul.f32 %v8578, %v8578
    %v8864 = vmul.f32 %v8583, %v8583
    %v8865 = vmul.f32 %v8588, %v8588
    %v8866 = vmul.f32 %v8593, %v8593
    %v8867 = vmul.f32 %v8598, %v8598
    %v8868 = vmul.f32 %v8603, %v8603
    %v8869 = vmul.f32 %v8608, %v8608
    %v8870 = vmul.f32 %v8613, %v8613
    %v8871 = vmul.f32 %v8618, %v8618
    %v8872 = vmul.f32 %v8623, %v8623
    %v8873 = vmul.f32 %v8628, %v8628
    %v8874 = vmul.f32 %v8633, %v8633
    %v8875 = vmul.f32 %v8638, %v8638
    %v8876 = vmul.f32 %v8643, %v8643
    %v8877 = vmul.f32 %v8648, %v8648
    %v8878 = vmul.f32 %v8653, %v8653
    %v8879 = vmul.f32 %v8658, %v8658
    %v8880 = vmul.f32 %v8663, %v8663
    %v8881 = vmul.f32 %v8668, %v8668
    %v8882 = vmul.f32 %v8673, %v8673
    %v8883 = vmul.f32 %v8678, %v8678
    %v8884 = vmul.f32 %v8683, %v8683
    %v8885 = vmul.f32 %v8688, %v8688
    %v8886 = vmul.f32 %v8693, %v8693
    %v8887 = vmul.f32 %v8698, %v8698
    %v8888 = vmul.f32 %v8703, %v8703
    %v8889 = vmul.f32 %v8708, %v8708
    %v8890 = vmul.f32 %v8713, %v8713
    %v8891 = vmul.f32 %v8718, %v8718
    %v8892 = vmul.f32 %v8723, %v8723
    %v8893 = vmul.f32 %v8728, %v8728
    %v8894 = vmul.f32 %v8733, %v8733
    %v8895 = vmul.f32 %v8738, %v8738
    %v8896 = vmul.f32 %v8743, %v8743
    %v8897 = vmul.f32 %v8748, %v8748
    %v8898 = vmul.f32 %v8753, %v8753
    %v8899 = vmul.f32 %v8758, %v8758
    %v8900 = vmul.f32 %v8763, %v8763
    %v8901 = vadd.f32 %v8837, %v8838
    %v8902 = vadd.f32 %v8901, %v8839
    %v8903 = vadd.f32 %v8902, %v8840
    %v8904 = vadd.f32 %v8903, %v8841
    %v8905 = vadd.f32 %v8904, %v8842
    %v8906 = vadd.f32 %v8905, %v8843
    %v8907 = vadd.f32 %v8906, %v8844
    %v8908 = vadd.f32 %v8907, %v8845
    %v8909 = vadd.f32 %v8908, %v8846
    %v8910 = vadd.f32 %v8909, %v8847
    %v8911 = vadd.f32 %v8910, %v8848
    %v8912 = vadd.f32 %v8911, %v8849
    %v8913 = vadd.f32 %v8912, %v8850
    %v8914 = vadd.f32 %v8913, %v8851
    %v8915 = vadd.f32 %v8914, %v8852
    %v8916 = vadd.f32 %v8915, %v8853
    %v8917 = vadd.f32 %v8916, %v8854
    %v8918 = vadd.f32 %v8917, %v8855
    %v8919 = vadd.f32 %v8918, %v8856
    %v8920 = vadd.f32 %v8919, %v8857
    %v8921 = vadd.f32 %v8920, %v8858
    %v8922 = vadd.f32 %v8921, %v8859
    %v8923 = vadd.f32 %v8922, %v8860
    %v8924 = vadd.f32 %v8923, %v8861
    %v8925 = vadd.f32 %v8924, %v8862
    %v8926 = vadd.f32 %v8925, %v8863
    %v8927 = vadd.f32 %v8926, %v8864
    %v8928 = vadd.f32 %v8927, %v8865
    %v8929 = vadd.f32 %v8928, %v8866
    %v8930 = vadd.f32 %v8929, %v8867
    %v8931 = vadd.f32 %v8930, %v8868
    %v8932 = vadd.f32 %v8931, %v8869
    %v8933 = vadd.f32 %v8932, %v8870
    %v8934 = vadd.f32 %v8933, %v8871
    %v8935 = vadd.f32 %v8934, %v8872
    %v8936 = vadd.f32 %v8935, %v8873
    %v8937 = vadd.f32 %v8936, %v8874
    %v8938 = vadd.f32 %v8937, %v8875
    %v8939 = vadd.f32 %v8938, %v8876
    %v8940 = vadd.f32 %v8939, %v8877
    %v8941 = vadd.f32 %v8940, %v8878
    %v8942 = vadd.f32 %v8941, %v8879
    %v8943 = vadd.f32 %v8942, %v8880
    %v8944 = vadd.f32 %v8943, %v8881
    %v8945 = vadd.f32 %v8944, %v8882
    %v8946 = vadd.f32 %v8945, %v8883
    %v8947 = vadd.f32 %v8946, %v8884
    %v8948 = vadd.f32 %v8947, %v8885
    %v8949 = vadd.f32 %v8948, %v8886
    %v8950 = vadd.f32 %v8949, %v8887
    %v8951 = vadd.f32 %v8950, %v8888
    %v8952 = vadd.f32 %v8951, %v8889
    %v8953 = vadd.f32 %v8952, %v8890
    %v8954 = vadd.f32 %v8953, %v8891
    %v8955 = vadd.f32 %v8954, %v8892
    %v8956 = vadd.f32 %v8955, %v8893
    %v8957 = vadd.f32 %v8956, %v8894
    %v8958 = vadd.f32 %v8957, %v8895
    %v8959 = vadd.f32 %v8958, %v8896
    %v8960 = vadd.f32 %v8959, %v8897
    %v8961 = vadd.f32 %v8960, %v8898
    %v8962 = vadd.f32 %v8961, %v8899
    %v8963 = vadd.f32 %v8962, %v8900
    %v8964 = vrot.slane %v8963, 4
    %v8965 = vadd.f32 %v8963, %v8964
    %v8966 = vrot.slane %v8965, 2
    %v8967 = vadd.f32 %v8965, %v8966
    %v8968 = vrot.slane %v8967, 1
    %v8969 = vadd.f32 %v8967, %v8968
    %v8970 = vmul.f32 %v8836, 0.001953125
    %v8971 = vmul.f32 %v8969, 0.001953125
    %v8972 = vmul.f32 %v8970, %v8970
    %v8973 = vsub.f32 %v8971, %v8972
    %v8974 = vadd.f32 %v8973, 1e-05
    %v8975 = vrsqrt.pop %v8974
    %v8976 = vmul.f32 %v8975, %v8766
    %v8977 = vsub.f32 %v8448, %v8970
    %v8978 = vsub.f32 %v8453, %v8970
    %v8979 = vsub.f32 %v8458, %v8970
    %v8980 = vsub.f32 %v8463, %v8970
    %v8981 = vsub.f32 %v8468, %v8970
    %v8982 = vsub.f32 %v8473, %v8970
    %v8983 = vsub.f32 %v8478, %v8970
    %v8984 = vsub.f32 %v8483, %v8970
    %v8985 = vsub.f32 %v8488, %v8970
    %v8986 = vsub.f32 %v8493, %v8970
    %v8987 = vsub.f32 %v8498, %v8970
    %v8988 = vsub.f32 %v8503, %v8970
    %v8989 = vsub.f32 %v8508, %v8970
    %v8990 = vsub.f32 %v8513, %v8970
    %v8991 = vsub.f32 %v8518, %v8970
    %v8992 = vsub.f32 %v8523, %v8970
    %v8993 = vsub.f32 %v8528, %v8970
    %v8994 = vsub.f32 %v8533, %v8970
    %v8995 = vsub.f32 %v8538, %v8970
    %v8996 = vsub.f32 %v8543, %v8970
    %v8997 = vsub.f32 %v8548, %v8970
    %v8998 = vsub.f32 %v8553, %v8970
    %v8999 = vsub.f32 %v8558, %v8970
    %v9000 = vsub.f32 %v8563, %v8970
    %v9001 = vsub.f32 %v8568, %v8970
    %v9002 = vsub.f32 %v8573, %v8970
    %v9003 = vsub.f32 %v8578, %v8970
    %v9004 = vsub.f32 %v8583, %v8970
    %v9005 = vsub.f32 %v8588, %v8970
    %v9006 = vsub.f32 %v8593, %v8970
    %v9007 = vsub.f32 %v8598, %v8970
    %v9008 = vsub.f32 %v8603, %v8970
    %v9009 = vsub.f32 %v8608, %v8970
    %v9010 = vsub.f32 %v8613, %v8970
    %v9011 = vsub.f32 %v8618, %v8970
    %v9012 = vsub.f32 %v8623, %v8970
    %v9013 = vsub.f32 %v8628, %v8970
    %v9014 = vsub.f32 %v8633, %v8970
    %v9015 = vsub.f32 %v8638, %v8970
    %v9016 = vsub.f32 %v8643, %v8970
    %v9017 = vsub.f32 %v8648, %v8970
    %v9018 = vsub.f32 %v8653, %v8970
    %v9019 = vsub.f32 %v8658, %v8970
    %v9020 = vsub.f32 %v8663, %v8970
    %v9021 = vsub.f32 %v8668, %v8970
    %v9022 = vsub.f32 %v8673, %v8970
    %v9023 = vsub.f32 %v8678, %v8970
    %v9024 = vsub.f32 %v8683, %v8970
    %v9025 = vsub.f32 %v8688, %v8970
    %v9026 = vsub.f32 %v8693, %v8970
    %v9027 = vsub.f32 %v8698, %v8970
    %v9028 = vsub.f32 %v8703, %v8970
    %v9029 = vsub.f32 %v8708, %v8970
    %v9030 = vsub.f32 %v8713, %v8970
    %v9031 = vsub.f32 %v8718, %v8970
    %v9032 = vsub.f32 %v8723, %v8970
    %v9033 = vsub.f32 %v8728, %v8970
    %v9034 = vsub.f32 %v8733, %v8970
    %v9035 = vsub.f32 %v8738, %v8970
    %v9036 = vsub.f32 %v8743, %v8970
    %v9037 = vsub.f32 %v8748, %v8970
    %v9038 = vsub.f32 %v8753, %v8970
    %v9039 = vsub.f32 %v8758, %v8970
    %v9040 = vsub.f32 %v8763, %v8970
    %v9041 = vlaneseq
    %v9042 = vshrl.u32 %v9041, 7
    %v9043 = vsub.s32 0, %v9042
    %v9044 = vrot.slane %v8976, %v9043
    %v9045 = vmul.f32 %v8977, %v9044
    %v9046 = vmul.f32 %v8978, %v9044
    %v9047 = vmul.f32 %v8979, %v9044
    %v9048 = vmul.f32 %v8980, %v9044
    %v9049 = vmul.f32 %v8981, %v9044
    %v9050 = vmul.f32 %v8982, %v9044
    %v9051 = vmul.f32 %v8983, %v9044
    %v9052 = vmul.f32 %v8984, %v9044
    %v9053 = vmul.f32 %v8985, %v9044
    %v9054 = vmul.f32 %v8986, %v9044
    %v9055 = vmul.f32 %v8987, %v9044
    %v9056 = vmul.f32 %v8988, %v9044
    %v9057 = vmul.f32 %v8989, %v9044
    %v9058 = vmul.f32 %v8990, %v9044
    %v9059 = vmul.f32 %v8991, %v9044
    %v9060 = vmul.f32 %v8992, %v9044
    %v9061 = vmul.f32 %v8993, %v9044
    %v9062 = vmul.f32 %v8994, %v9044
    %v9063 = vmul.f32 %v8995, %v9044
    %v9064 = vmul.f32 %v8996, %v9044
    %v9065 = vmul.f32 %v8997, %v9044
    %v9066 = vmul.f32 %v8998, %v9044
    %v9067 = vmul.f32 %v8999, %v9044
    %v9068 = vmul.f32 %v9000, %v9044
    %v9069 = vmul.f32 %v9001, %v9044
    %v9070 = vmul.f32 %v9002, %v9044
    %v9071 = vmul.f32 %v9003, %v9044
    %v9072 = vmul.f32 %v9004, %v9044
    %v9073 = vmul.f32 %v9005, %v9044
    %v9074 = vmul.f32 %v9006, %v9044
    %v9075 = vmul.f32 %v9007, %v9044
    %v9076 = vmul.f32 %v9008, %v9044
    %v9077 = vmul.f32 %v9009, %v9044
    %v9078 = vmul.f32 %v9010, %v9044
    %v9079 = vmul.f32 %v9011, %v9044
    %v9080 = vmul.f32 %v9012, %v9044
    %v9081 = vmul.f32 %v9013, %v9044
    %v9082 = vmul.f32 %v9014, %v9044
    %v9083 = vmul.f32 %v9015, %v9044
    %v9084 = vmul.f32 %v9016, %v9044
    %v9085 = vmul.f32 %v9017, %v9044
    %v9086 = vmul.f32 %v9018, %v9044
    %v9087 = vmul.f32 %v9019, %v9044
    %v9088 = vmul.f32 %v9020, %v9044
    %v9089 = vmul.f32 %v9021, %v9044
    %v9090 = vmul.f32 %v9022, %v9044
    %v9091 = vmul.f32 %v9023, %v9044
    %v9092 = vmul.f32 %v9024, %v9044
    %v9093 = vmul.f32 %v9025, %v9044
    %v9094 = vmul.f32 %v9026, %v9044
    %v9095 = vmul.f32 %v9027, %v9044
    %v9096 = vmul.f32 %v9028, %v9044
    %v9097 = vmul.f32 %v9029, %v9044
    %v9098 = vmul.f32 %v9030, %v9044
    %v9099 = vmul.f32 %v9031, %v9044
    %v9100 = vmul.f32 %v9032, %v9044
    %v9101 = vmul.f32 %v9033, %v9044
    %v9102 = vmul.f32 %v9034, %v9044
    %v9103 = vmul.f32 %v9035, %v9044
    %v9104 = vmul.f32 %v9036, %v9044
    %v9105 = vmul.f32 %v9037, %v9044
    %v9106 = vmul.f32 %v9038, %v9044
    %v9107 = vmul.f32 %v9039, %v9044
    %v9108 = vmul.f32 %v9040, %v9044
    %v9110 = vlaneseq
    %v9111 = vshrl.u32 %v9110, 7
    %v9112 = vsub.s32 0, %v9111
    %v9113 = vrot.slane %v8767, %v9112
    %v9115 = vadd.f32 %v9045, %v9113
    %v9116 = vadd.f32 %v9046, %v9113
    %v9117 = vadd.f32 %v9047, %v9113
    %v9118 = vadd.f32 %v9048, %v9113
    %v9119 = vadd.f32 %v9049, %v9113
    %v9120 = vadd.f32 %v9050, %v9113
    %v9121 = vadd.f32 %v9051, %v9113
    %v9122 = vadd.f32 %v9052, %v9113
    %v9123 = vadd.f32 %v9053, %v9113
    %v9124 = vadd.f32 %v9054, %v9113
    %v9125 = vadd.f32 %v9055, %v9113
    %v9126 = vadd.f32 %v9056, %v9113
    %v9127 = vadd.f32 %v9057, %v9113
    %v9128 = vadd.f32 %v9058, %v9113
    %v9129 = vadd.f32 %v9059, %v9113
    %v9130 = vadd.f32 %v9060, %v9113
    %v9131 = vadd.f32 %v9061, %v9113
    %v9132 = vadd.f32 %v9062, %v9113
    %v9133 = vadd.f32 %v9063, %v9113
    %v9134 = vadd.f32 %v9064, %v9113
    %v9135 = vadd.f32 %v9065, %v9113
    %v9136 = vadd.f32 %v9066, %v9113
    %v9137 = vadd.f32 %v9067, %v9113
    %v9138 = vadd.f32 %v9068, %v9113
    %v9139 = vadd.f32 %v9069, %v9113
    %v9140 = vadd.f32 %v9070, %v9113
    %v9141 = vadd.f32 %v9071, %v9113
    %v9142 = vadd.f32 %v9072, %v9113
    %v9143 = vadd.f32 %v9073, %v9113
    %v9144 = vadd.f32 %v9074, %v9113
    %v9145 = vadd.f32 %v9075, %v9113
    %v9146 = vadd.f32 %v9076, %v9113
    %v9147 = vadd.f32 %v9077, %v9113
    %v9148 = vadd.f32 %v9078, %v9113
    %v9149 = vadd.f32 %v9079, %v9113
    %v9150 = vadd.f32 %v9080, %v9113
    %v9151 = vadd.f32 %v9081, %v9113
    %v9152 = vadd.f32 %v9082, %v9113
    %v9153 = vadd.f32 %v9083, %v9113
    %v9154 = vadd.f32 %v9084, %v9113
    %v9155 = vadd.f32 %v9085, %v9113
    %v9156 = vadd.f32 %v9086, %v9113
    %v9157 = vadd.f32 %v9087, %v9113
    %v9158 = vadd.f32 %v9088, %v9113
    %v9159 = vadd.f32 %v9089, %v9113
    %v9160 = vadd.f32 %v9090, %v9113
    %v9161 = vadd.f32 %v9091, %v9113
    %v9162 = vadd.f32 %v9092, %v9113
    %v9163 = vadd.f32 %v9093, %v9113
    %v9164 = vadd.f32 %v9094, %v9113
    %v9165 = vadd.f32 %v9095, %v9113
    %v9166 = vadd.f32 %v9096, %v9113
    %v9167 = vadd.f32 %v9097, %v9113
    %v9168 = vadd.f32 %v9098, %v9113
    %v9169 = vadd.f32 %v9099, %v9113
    %v9170 = vadd.f32 %v9100, %v9113
    %v9171 = vadd.f32 %v9101, %v9113
    %v9172 = vadd.f32 %v9102, %v9113
    %v9173 = vadd.f32 %v9103, %v9113
    %v9174 = vadd.f32 %v9104, %v9113
    %v9175 = vadd.f32 %v9105, %v9113
    %v9176 = vadd.f32 %v9106, %v9113
    %v9177 = vadd.f32 %v9107, %v9113
    %v9178 = vadd.f32 %v9108, %v9113
    %v9179 = vmax.f32 %v9115, 0.0
    %v9180 = vmax.f32 %v9116, 0.0
    %v9181 = vmax.f32 %v9117, 0.0
    %v9182 = vmax.f32 %v9118, 0.0
    %v9183 = vmax.f32 %v9119, 0.0
    %v9184 = vmax.f32 %v9120, 0.0
    %v9185 = vmax.f32 %v9121, 0.0
    %v9186 = vmax.f32 %v9122, 0.0
    %v9187 = vmax.f32 %v9123, 0.0
    %v9188 = vmax.f32 %v9124, 0.0
    %v9189 = vmax.f32 %v9125, 0.0
    %v9190 = vmax.f32 %v9126, 0.0
    %v9191 = vmax.f32 %v9127, 0.0
    %v9192 = vmax.f32 %v9128, 0.0
    %v9193 = vmax.f32 %v9129, 0.0
    %v9194 = vmax.f32 %v9130, 0.0
    %v9195 = vmax.f32 %v9131, 0.0
    %v9196 = vmax.f32 %v9132, 0.0
    %v9197 = vmax.f32 %v9133, 0.0
    %v9198 = vmax.f32 %v9134, 0.0
    %v9199 = vmax.f32 %v9135, 0.0
    %v9200 = vmax.f32 %v9136, 0.0
    %v9201 = vmax.f32 %v9137, 0.0
    %v9202 = vmax.f32 %v9138, 0.0
    %v9203 = vmax.f32 %v9139, 0.0
    %v9204 = vmax.f32 %v9140, 0.0
    %v9205 = vmax.f32 %v9141, 0.0
    %v9206 = vmax.f32 %v9142, 0.0
    %v9207 = vmax.f32 %v9143, 0.0
    %v9208 = vmax.f32 %v9144, 0.0
    %v9209 = vmax.f32 %v9145, 0.0
    %v9210 = vmax.f32 %v9146, 0.0
    %v9211 = vmax.f32 %v9147, 0.0
    %v9212 = vmax.f32 %v9148, 0.0
    %v9213 = vmax.f32 %v9149, 0.0
    %v9214 = vmax.f32 %v9150, 0.0
    %v9215 = vmax.f32 %v9151, 0.0
    %v9216 = vmax.f32 %v9152, 0.0
    %v9217 = vmax.f32 %v9153, 0.0
    %v9218 = vmax.f32 %v9154, 0.0
    %v9219 = vmax.f32 %v9155, 0.0
    %v9220 = vmax.f32 %v9156, 0.0
    %v9221 = vmax.f32 %v9157, 0.0
    %v9222 = vmax.f32 %v9158, 0.0
    %v9223 = vmax.f32 %v9159, 0.0
    %v9224 = vmax.f32 %v9160, 0.0
    %v9225 = vmax.f32 %v9161, 0.0
    %v9226 = vmax.f32 %v9162, 0.0
    %v9227 = vmax.f32 %v9163, 0.0
    %v9228 = vmax.f32 %v9164, 0.0
    %v9229 = vmax.f32 %v9165, 0.0
    %v9230 = vmax.f32 %v9166, 0.0
    %v9231 = vmax.f32 %v9167, 0.0
    %v9232 = vmax.f32 %v9168, 0.0
    %v9233 = vmax.f32 %v9169, 0.0
    %v9234 = vmax.f32 %v9170, 0.0
    %v9235 = vmax.f32 %v9171, 0.0
    %v9236 = vmax.f32 %v9172, 0.0
    %v9237 = vmax.f32 %v9173, 0.0
    %v9238 = vmax.f32 %v9174, 0.0
    %v9239 = vmax.f32 %v9175, 0.0
    %v9240 = vmax.f32 %v9176, 0.0
    %v9241 = vmax.f32 %v9177, 0.0
    %v9242 = vmax.f32 %v9178, 0.0
    %9243 = vst [vmem:[#allocation6] sm:$0xff] %v9179
    %9244 = vst [vmem:[#allocation6 + $0x8] sm:$0xff] %v9180
    %9245 = vst [vmem:[#allocation6 + $0x10] sm:$0xff] %v9181
    %9246 = vst [vmem:[#allocation6 + $0x18] sm:$0xff] %v9182
    %9247 = vst [vmem:[#allocation6 + $0x20] sm:$0xff] %v9183
    %9248 = vst [vmem:[#allocation6 + $0x28] sm:$0xff] %v9184
    %9249 = vst [vmem:[#allocation6 + $0x30] sm:$0xff] %v9185
    %9250 = vst [vmem:[#allocation6 + $0x38] sm:$0xff] %v9186
    %9251 = vst [vmem:[#allocation6 + $0x40] sm:$0xff] %v9187
    %9252 = vst [vmem:[#allocation6 + $0x48] sm:$0xff] %v9188
    %9253 = vst [vmem:[#allocation6 + $0x50] sm:$0xff] %v9189
    %9254 = vst [vmem:[#allocation6 + $0x58] sm:$0xff] %v9190
    %9255 = vst [vmem:[#allocation6 + $0x60] sm:$0xff] %v9191
    %9256 = vst [vmem:[#allocation6 + $0x68] sm:$0xff] %v9192
    %9257 = vst [vmem:[#allocation6 + $0x70] sm:$0xff] %v9193
    %9258 = vst [vmem:[#allocation6 + $0x78] sm:$0xff] %v9194
    %9259 = vst [vmem:[#allocation6 + $0x80] sm:$0xff] %v9195
    %9260 = vst [vmem:[#allocation6 + $0x88] sm:$0xff] %v9196
    %9261 = vst [vmem:[#allocation6 + $0x90] sm:$0xff] %v9197
    %9262 = vst [vmem:[#allocation6 + $0x98] sm:$0xff] %v9198
    %9263 = vst [vmem:[#allocation6 + $0xa0] sm:$0xff] %v9199
    %9264 = vst [vmem:[#allocation6 + $0xa8] sm:$0xff] %v9200
    %9265 = vst [vmem:[#allocation6 + $0xb0] sm:$0xff] %v9201
    %9266 = vst [vmem:[#allocation6 + $0xb8] sm:$0xff] %v9202
    %9267 = vst [vmem:[#allocation6 + $0xc0] sm:$0xff] %v9203
    %9268 = vst [vmem:[#allocation6 + $0xc8] sm:$0xff] %v9204
    %9269 = vst [vmem:[#allocation6 + $0xd0] sm:$0xff] %v9205
    %9270 = vst [vmem:[#allocation6 + $0xd8] sm:$0xff] %v9206
    %9271 = vst [vmem:[#allocation6 + $0xe0] sm:$0xff] %v9207
    %9272 = vst [vmem:[#allocation6 + $0xe8] sm:$0xff] %v9208
    %9273 = vst [vmem:[#allocation6 + $0xf0] sm:$0xff] %v9209
    %9274 = vst [vmem:[#allocation6 + $0xf8] sm:$0xff] %v9210
    %9275 = vst [vmem:[#allocation6 + $0x100] sm:$0xff] %v9211
    %9276 = vst [vmem:[#allocation6 + $0x108] sm:$0xff] %v9212
    %9277 = vst [vmem:[#allocation6 + $0x110] sm:$0xff] %v9213
    %9278 = vst [vmem:[#allocation6 + $0x118] sm:$0xff] %v9214
    %9279 = vst [vmem:[#allocation6 + $0x120] sm:$0xff] %v9215
    %9280 = vst [vmem:[#allocation6 + $0x128] sm:$0xff] %v9216
    %9281 = vst [vmem:[#allocation6 + $0x130] sm:$0xff] %v9217
    %9282 = vst [vmem:[#allocation6 + $0x138] sm:$0xff] %v9218
    %9283 = vst [vmem:[#allocation6 + $0x140] sm:$0xff] %v9219
    %9284 = vst [vmem:[#allocation6 + $0x148] sm:$0xff] %v9220
    %9285 = vst [vmem:[#allocation6 + $0x150] sm:$0xff] %v9221
    %9286 = vst [vmem:[#allocation6 + $0x158] sm:$0xff] %v9222
    %9287 = vst [vmem:[#allocation6 + $0x160] sm:$0xff] %v9223
    %9288 = vst [vmem:[#allocation6 + $0x168] sm:$0xff] %v9224
    %9289 = vst [vmem:[#allocation6 + $0x170] sm:$0xff] %v9225
    %9290 = vst [vmem:[#allocation6 + $0x178] sm:$0xff] %v9226
    %9291 = vst [vmem:[#allocation6 + $0x180] sm:$0xff] %v9227
    %9292 = vst [vmem:[#allocation6 + $0x188] sm:$0xff] %v9228
    %9293 = vst [vmem:[#allocation6 + $0x190] sm:$0xff] %v9229
    %9294 = vst [vmem:[#allocation6 + $0x198] sm:$0xff] %v9230
    %9295 = vst [vmem:[#allocation6 + $0x1a0] sm:$0xff] %v9231
    %9296 = vst [vmem:[#allocation6 + $0x1a8] sm:$0xff] %v9232
    %9297 = vst [vmem:[#allocation6 + $0x1b0] sm:$0xff] %v9233
    %9298 = vst [vmem:[#allocation6 + $0x1b8] sm:$0xff] %v9234
    %9299 = vst [vmem:[#allocation6 + $0x1c0] sm:$0xff] %v9235
    %9300 = vst [vmem:[#allocation6 + $0x1c8] sm:$0xff] %v9236
    %9301 = vst [vmem:[#allocation6 + $0x1d0] sm:$0xff] %v9237
    %9302 = vst [vmem:[#allocation6 + $0x1d8] sm:$0xff] %v9238
    %9303 = vst [vmem:[#allocation6 + $0x1e0] sm:$0xff] %v9239
    %9304 = vst [vmem:[#allocation6 + $0x1e8] sm:$0xff] %v9240
    %9305 = vst [vmem:[#allocation6 + $0x1f0] sm:$0xff] %v9241
    %9306 = vst [vmem:[#allocation6 + $0x1f8] sm:$0xff] %v9242
    // Predicated region
    $region30: #{tpu_custom_call.1} parent=1 // pred_check
      _
    $region31: #{tpu_custom_call.1} parent=1 // pred_check_branch
      %9308 = sbr.rel (0) target = $region33
    $region32: #{tpu_custom_call.1} parent=1 // pred_region
      %s9310 = ssub.s32 8192, 8192
      %9311 = vsyncadd [#allocation7], %s9310
      %s9312 = sshll.u32 [#allocation6], 4
      %s9313 = int_to_ptr.vmem [resolvable:$true] %s9312
      %9318 = dma.vmem_to_hbm [thread:$0]  %s9313, 8192, %s7, [#allocation7], 128, 128, 8
    $region33: #{tpu_custom_call.1} parent=1 // pred_fallthru
      _
    // Predicated region
    $region34: #{tpu_custom_call.1} parent=1 // pred_check
      _
    $region35: #{tpu_custom_call.1} parent=1 // pred_check_branch
      %9320 = sbr.rel (0) target = $region37
    $region36: #{tpu_custom_call.1} parent=1 // pred_region
      %9321 = dma.done [#allocation7], 8192
    $region37: #{tpu_custom_call.1} parent=1 // pred_fallthru
      _
    %9322 = vsyncpa [#allocation7], 1

</llo_original>
